<compile_context>
chip_gen: v7x
topology: tpu7x:2x2x1
jax: 0.10.0
libtpu: 0.0.40
codegen_flags: <defaults>
</compile_context>

<pallas_src>
import functools

import jax
import jax.numpy as jnp
from jax.experimental import pallas as pl
from jax.experimental.pallas import tpu as pltpu


def _leaky(v, slope=0.2):
    return jnp.where(v > 0, v, slope * v)


def pfrb_kernel(x_ref, w0_ref, b0_ref, w1_ref, b1_ref, w2_ref, b2_ref,
                out_ref, xpad_ref, x01_ref, *, H, W, bf, nc):
    """One batch element per grid step.

    x_ref    : (1, H, W, bf)      unpadded input, f32
    w0_ref   : (9, bf, bf)        per-tap block-diag grouped-conv0 weight, bf16
    b0_ref   : (1, bf)            f32
    w1_ref   : (bf, c)            1x1 conv weight, bf16
    b1_ref   : (1, c)             f32
    w2_ref   : (9, bf + c, bf)    per-tap [w2a block-diag ; w2b dense] weight, bf16
    b2_ref   : (1, bf)            f32
    out_ref  : (1, H, W, bf)
    xpad_ref : (H+2, W+2, bf)     f32 scratch: zero-bordered padded input
    x01_ref  : (H+2, W+2, bf+c)   f32 scratch: zero-bordered padded [x0 | x1]
    """
    c = bf // nc
    Hp, Wp = H + 2, W + 2
    HW = H * W
    f32 = jnp.float32
    bf16 = jnp.bfloat16

    # ---- Halo: zero only the 1-pixel border strips of the scratches.
    # The interiors are fully overwritten every grid step, so the border stays
    # zero forever; this is safe under "parallel" batch sharding (no reliance
    # on program_id == 0) and avoids re-zeroing the whole buffer each step.
    zrow0 = jnp.zeros((1, Wp, bf), f32)
    zcol0 = jnp.zeros((Hp, 1, bf), f32)
    xpad_ref[0:1, :, :] = zrow0
    xpad_ref[Hp - 1:Hp, :, :] = zrow0
    xpad_ref[:, 0:1, :] = zcol0
    xpad_ref[:, Wp - 1:Wp, :] = zcol0

    zrow1 = jnp.zeros((1, Wp, bf + c), f32)
    zcol1 = jnp.zeros((Hp, 1, bf + c), f32)
    x01_ref[0:1, :, :] = zrow1
    x01_ref[Hp - 1:Hp, :, :] = zrow1
    x01_ref[:, 0:1, :] = zcol1
    x01_ref[:, Wp - 1:Wp, :] = zcol1

    # Stage the input into the padded scratch interior (in-kernel padding).
    xpad_ref[1:H + 1, 1:W + 1, :] = x_ref[0]

    # Hoisted small operands.
    b0 = b0_ref[...]
    b1 = b1_ref[...]
    b2 = b2_ref[...]

    # ---- conv0 (grouped 3x3) as 9 whole-image matmuls: M = H*W, K = bf.
    acc0 = jnp.zeros((HW, bf), f32)
    for ky in range(3):
        for kx in range(3):
            lhs = xpad_ref[ky:ky + H, kx:kx + W, :].reshape(HW, bf)
            acc0 = acc0 + jnp.dot(lhs.astype(bf16), w0_ref[ky * 3 + kx],
                                  preferred_element_type=f32)
    x0 = _leaky(acc0 + b0)                                       # (HW, bf) f32

    # ---- conv1 (1x1): a single whole-image matmul.
    x1 = _leaky(jnp.dot(x0.astype(bf16), w1_ref[...],
                        preferred_element_type=f32) + b1)        # (HW, c) f32

    # Stash [x0 | x1] into the padded scratch. w2 was pre-permuted to this
    # channel order, so the reference module's per-group interleaved concat is
    # folded into the weight layout (no concat, smaller scratch).
    x01_ref[1:H + 1, 1:W + 1, 0:bf] = x0.reshape(H, W, bf)
    x01_ref[1:H + 1, 1:W + 1, bf:bf + c] = x1.reshape(H, W, c)

    # ---- conv2 (grouped 3x3 over [x0 | x1]) as 9 whole-image matmuls.
    acc2 = jnp.zeros((HW, bf), f32)
    for ky in range(3):
        for kx in range(3):
            lhs = x01_ref[ky:ky + H, kx:kx + W, :].reshape(HW, bf + c)
            acc2 = acc2 + jnp.dot(lhs.astype(bf16), w2_ref[ky * 3 + kx],
                                  preferred_element_type=f32)
    x2 = _leaky(acc2 + b2)                                       # (HW, bf) f32

    # ---- residual add; single whole-block store.
    out_ref[0] = (x_ref[0] + x2.reshape(H, W, bf)).astype(out_ref.dtype)


def pfrb_forward(x_nhwc, kernel_params, nc):
    """x_nhwc: (N, H, W, bf) float32 (unpadded). Returns (N, H, W, bf)."""
    N, H, W, bf = x_nhwc.shape
    c = bf // nc
    w0, b0, w1, b1, w2, b2 = kernel_params
    Hp, Wp = H + 2, W + 2

    kernel = functools.partial(pfrb_kernel, H=H, W=W, bf=bf, nc=nc)

    return pl.pallas_call(
        kernel,
        out_shape=jax.ShapeDtypeStruct((N, H, W, bf), x_nhwc.dtype),
        grid_spec=pltpu.PrefetchScalarGridSpec(
            num_scalar_prefetch=0,
            grid=(N,),
            in_specs=[
                pl.BlockSpec((1, H, W, bf), lambda n: (n, 0, 0, 0)),
                pl.BlockSpec((9, bf, bf), lambda n: (0, 0, 0)),
                pl.BlockSpec((1, bf), lambda n: (0, 0)),
                pl.BlockSpec((bf, c), lambda n: (0, 0)),
                pl.BlockSpec((1, c), lambda n: (0, 0)),
                pl.BlockSpec((9, bf + c, bf), lambda n: (0, 0, 0)),
                pl.BlockSpec((1, bf), lambda n: (0, 0)),
            ],
            out_specs=pl.BlockSpec((1, H, W, bf), lambda n: (n, 0, 0, 0)),
            scratch_shapes=[
                pltpu.VMEM((Hp, Wp, bf), jnp.float32),       # padded x
                pltpu.VMEM((Hp, Wp, bf + c), jnp.float32),   # padded [x0 | x1]
            ],
        ),
        compiler_params=pltpu.CompilerParams(
            dimension_semantics=("parallel",)),               # megacore (v7x)
    )(x_nhwc, w0, b0, w1, b1, w2, b2)


# ------------------------- parameter construction --------------------------

def init_params_pt_layout(key, bf, nc, dtype=jnp.float32):
    """Deterministic synthetic weights in PyTorch OIHW layout."""
    c = bf // nc
    k0, k1, k2, k3, k4, k5 = jax.random.split(key, 6)
    W0 = jax.random.normal(k0, (bf, c, 3, 3), dtype) * 0.1      # conv0 (grouped)
    b0 = jax.random.normal(k1, (bf,), dtype) * 0.1
    W1 = jax.random.normal(k2, (c, bf, 1, 1), dtype) * 0.1      # conv1 (1x1)
    b1 = jax.random.normal(k3, (c,), dtype) * 0.1
    W2 = jax.random.normal(k4, (bf, 2 * c, 3, 3), dtype) * 0.1  # conv2 (grouped)
    b2 = jax.random.normal(k5, (bf,), dtype) * 0.1
    return W0, b0, W1, b1, W2, b2


def to_kernel_params(W0, b0, W1, b1, W2, b2, bf, nc, compute_dtype=jnp.bfloat16):
    """OIHW grouped-conv weights -> per-tap matmul weights.

    w0: (9, bf, bf)       block-diagonal (grouped conv0).
    w1: (bf, c)           1x1 conv.
    w2: (9, bf + c, bf)   rows [0:bf]  = block-diag part acting on x0,
                          rows [bf: ]  = dense part acting on x1 (all groups),
                          i.e. the per-group [x0_g, x1] concat folded into the
                          weight so the kernel consumes plain [x0 | x1].
    """
    c = bf // nc
    w0_full = jnp.zeros((3, 3, bf, bf), jnp.float32)
    w2_full = jnp.zeros((3, 3, bf + c, bf), jnp.float32)
    for g in range(nc):
        sl = slice(g * c, (g + 1) * c)
        blk0 = jnp.transpose(W0[sl], (2, 3, 1, 0))              # (3,3,c_in,c_out)
        w0_full = w0_full.at[:, :, sl, sl].set(blk0)
        W2g = W2[sl]                                            # (c, 2c, 3, 3)
        blk2a = jnp.transpose(W2g[:, :c], (2, 3, 1, 0))         # acts on x0_g
        blk2b = jnp.transpose(W2g[:, c:], (2, 3, 1, 0))         # acts on x1
        w2_full = w2_full.at[:, :, sl, sl].set(blk2a)
        w2_full = w2_full.at[:, :, bf:, sl].set(blk2b)
    w1_k = jnp.transpose(W1[:, :, 0, 0], (1, 0))                # (bf, c)
    return (w0_full.reshape(9, bf, bf).astype(compute_dtype),
            b0.reshape(1, bf).astype(jnp.float32),
            w1_k.astype(compute_dtype),
            b1.reshape(1, c).astype(jnp.float32),
            w2_full.reshape(9, bf + c, bf).astype(compute_dtype),
            b2.reshape(1, bf).astype(jnp.float32))


# --------------------------- pure-JAX reference -----------------------------

def ref_forward(x_nhwc, W0, b0, W1, b1, W2, b2, nc):
    def conv(x, w, b, pad, groups):
        y = jax.lax.conv_general_dilated(
            x, w, window_strides=(1, 1), padding=[(pad, pad), (pad, pad)],
            dimension_numbers=('NHWC', 'OIHW', 'NHWC'),
            feature_group_count=groups,
            precision=jax.lax.Precision.HIGHEST)
        return y + b.reshape(1, 1, 1, -1)

    bf = x_nhwc.shape[-1]
    c = bf // nc
    x0 = _leaky(conv(x_nhwc, W0, b0, 1, nc))
    x1 = _leaky(conv(x0, W1, b1, 0, 1))
    parts = []
    for g in range(nc):
        parts.append(x0[..., g * c:(g + 1) * c])
        parts.append(x1)
    x2in = jnp.concatenate(parts, axis=-1)
    x2 = _leaky(conv(x2in, W2, b2, 1, nc))
    return x_nhwc + x2


if __name__ == "__main__":
    # Small shapes consistent with the module: bf must be divisible by nc.
    N, H, W, bf, nc = 2, 16, 16, 12, 3

    key = jax.random.PRNGKey(0)
    kx_, kp = jax.random.split(key)
    x = jax.random.normal(kx_, (N, H, W, bf), jnp.float32)   # NHWC

    pt_params = init_params_pt_layout(kp, bf, nc)
    kparams = to_kernel_params(*pt_params, bf=bf, nc=nc)

    out = pfrb_forward(x, kparams, nc)
    out = jax.block_until_ready(out)

    ref = ref_forward(x, *pt_params, nc=nc)
    max_err = float(jnp.max(jnp.abs(out - ref)))
    # Kernel uses bf16 MXU operands with f32 accumulation; reference is f32
    # HIGHEST precision, hence the slightly relaxed tolerance.
    assert jnp.allclose(out, ref, atol=3e-2, rtol=3e-2), f"max_err={max_err}"

    print("KERNEL_OK")
</pallas_src>

<mosaic_0001>
module attributes {stable_mosaic.version = 11 : i64} {
  func.func @pfrb_kernel(%arg0: i32, %arg1: memref<1x16x16x12xf32, #tpu.memory_space<vmem>>, %arg2: memref<9x12x12xbf16, #tpu.memory_space<vmem>>, %arg3: memref<1x12xf32, #tpu.memory_space<vmem>>, %arg4: memref<12x4xbf16, #tpu.memory_space<vmem>>, %arg5: memref<1x4xf32, #tpu.memory_space<vmem>>, %arg6: memref<9x16x12xbf16, #tpu.memory_space<vmem>>, %arg7: memref<1x12xf32, #tpu.memory_space<vmem>>, %arg8: memref<1x16x16x12xf32, #tpu.memory_space<vmem>>, %arg9: memref<18x18x12xf32, #tpu.memory_space<vmem>>, %arg10: memref<18x18x16xf32, #tpu.memory_space<vmem>>) attributes {dimension_semantics = [#tpu.dimension_semantics<parallel>], iteration_bounds = array<i64: 2>, scalar_prefetch = 0 : i64, scratch_operands = 2 : i64, tpu.core_type = #tpu.core_type<tc>, window_params = [{transform_indices = @transform_0, window_bounds = array<i64: 1, 16, 16, 12>}, {pipeline_mode = #tpu.pipeline_mode<synchronous>, transform_indices = @transform_1, window_bounds = array<i64: 9, 12, 12>}, {pipeline_mode = #tpu.pipeline_mode<synchronous>, transform_indices = @transform_2, window_bounds = array<i64: 1, 12>}, {pipeline_mode = #tpu.pipeline_mode<synchronous>, transform_indices = @transform_3, window_bounds = array<i64: 12, 4>}, {pipeline_mode = #tpu.pipeline_mode<synchronous>, transform_indices = @transform_4, window_bounds = array<i64: 1, 4>}, {pipeline_mode = #tpu.pipeline_mode<synchronous>, transform_indices = @transform_5, window_bounds = array<i64: 9, 16, 12>}, {pipeline_mode = #tpu.pipeline_mode<synchronous>, transform_indices = @transform_6, window_bounds = array<i64: 1, 12>}, {transform_indices = @transform_7, window_bounds = array<i64: 1, 16, 16, 12>}]} {
    %cst = arith.constant 0.000000e+00 : f32
    %0 = vector.broadcast %cst : f32 to vector<1x18x12xf32>
    %cst_0 = arith.constant 0.000000e+00 : f32
    %1 = vector.broadcast %cst_0 : f32 to vector<18x1x12xf32>
    %c0 = arith.constant 0 : index
    %c0_1 = arith.constant 0 : index
    %c0_2 = arith.constant 0 : index
    %2 = vector.load %arg9[%c0, %c0_1, %c0_2] : memref<18x18x12xf32, #tpu.memory_space<vmem>>, vector<1x18x12xf32>
    tpu.vector_store %arg9[%c0, %c0_1, %c0_2], %0 {strides = array<i32>} : memref<18x18x12xf32, #tpu.memory_space<vmem>>, vector<1x18x12xf32>,
    %c17 = arith.constant 17 : index
    %c0_3 = arith.constant 0 : index
    %c0_4 = arith.constant 0 : index
    %3 = vector.load %arg9[%c17, %c0_3, %c0_4] : memref<18x18x12xf32, #tpu.memory_space<vmem>>, vector<1x18x12xf32>
    tpu.vector_store %arg9[%c17, %c0_3, %c0_4], %0 {strides = array<i32>} : memref<18x18x12xf32, #tpu.memory_space<vmem>>, vector<1x18x12xf32>,
    %c0_5 = arith.constant 0 : index
    %c0_6 = arith.constant 0 : index
    %c0_7 = arith.constant 0 : index
    %4 = vector.load %arg9[%c0_5, %c0_6, %c0_7] : memref<18x18x12xf32, #tpu.memory_space<vmem>>, vector<18x1x12xf32>
    tpu.vector_store %arg9[%c0_5, %c0_6, %c0_7], %1 {strides = array<i32>} : memref<18x18x12xf32, #tpu.memory_space<vmem>>, vector<18x1x12xf32>,
    %c0_8 = arith.constant 0 : index
    %c17_9 = arith.constant 17 : index
    %c0_10 = arith.constant 0 : index
    %5 = vector.load %arg9[%c0_8, %c17_9, %c0_10] : memref<18x18x12xf32, #tpu.memory_space<vmem>>, vector<18x1x12xf32>
    tpu.vector_store %arg9[%c0_8, %c17_9, %c0_10], %1 {strides = array<i32>} : memref<18x18x12xf32, #tpu.memory_space<vmem>>, vector<18x1x12xf32>,
    %cst_11 = arith.constant 0.000000e+00 : f32
    %6 = vector.broadcast %cst_11 : f32 to vector<1x18x16xf32>
    %cst_12 = arith.constant 0.000000e+00 : f32
    %7 = vector.broadcast %cst_12 : f32 to vector<18x1x16xf32>
    %c0_13 = arith.constant 0 : index
    %c0_14 = arith.constant 0 : index
    %c0_15 = arith.constant 0 : index
    %8 = vector.load %arg10[%c0_13, %c0_14, %c0_15] : memref<18x18x16xf32, #tpu.memory_space<vmem>>, vector<1x18x16xf32>
    tpu.vector_store %arg10[%c0_13, %c0_14, %c0_15], %6 {strides = array<i32>} : memref<18x18x16xf32, #tpu.memory_space<vmem>>, vector<1x18x16xf32>,
    %c17_16 = arith.constant 17 : index
    %c0_17 = arith.constant 0 : index
    %c0_18 = arith.constant 0 : index
    %9 = vector.load %arg10[%c17_16, %c0_17, %c0_18] : memref<18x18x16xf32, #tpu.memory_space<vmem>>, vector<1x18x16xf32>
    tpu.vector_store %arg10[%c17_16, %c0_17, %c0_18], %6 {strides = array<i32>} : memref<18x18x16xf32, #tpu.memory_space<vmem>>, vector<1x18x16xf32>,
    %c0_19 = arith.constant 0 : index
    %c0_20 = arith.constant 0 : index
    %c0_21 = arith.constant 0 : index
    %10 = vector.load %arg10[%c0_19, %c0_20, %c0_21] : memref<18x18x16xf32, #tpu.memory_space<vmem>>, vector<18x1x16xf32>
    tpu.vector_store %arg10[%c0_19, %c0_20, %c0_21], %7 {strides = array<i32>} : memref<18x18x16xf32, #tpu.memory_space<vmem>>, vector<18x1x16xf32>,
    %c0_22 = arith.constant 0 : index
    %c17_23 = arith.constant 17 : index
    %c0_24 = arith.constant 0 : index
    %11 = vector.load %arg10[%c0_22, %c17_23, %c0_24] : memref<18x18x16xf32, #tpu.memory_space<vmem>>, vector<18x1x16xf32>
    tpu.vector_store %arg10[%c0_22, %c17_23, %c0_24], %7 {strides = array<i32>} : memref<18x18x16xf32, #tpu.memory_space<vmem>>, vector<18x1x16xf32>,
    %c0_25 = arith.constant 0 : index
    %c0_26 = arith.constant 0 : index
    %c0_27 = arith.constant 0 : index
    %c0_28 = arith.constant 0 : index
    %12 = vector.load %arg1[%c0_25, %c0_26, %c0_27, %c0_28] : memref<1x16x16x12xf32, #tpu.memory_space<vmem>>, vector<1x16x16x12xf32>
    %13 = vector.shape_cast %12 : vector<1x16x16x12xf32> to vector<16x16x12xf32>
    %c1 = arith.constant 1 : index
    %c1_29 = arith.constant 1 : index
    %c0_30 = arith.constant 0 : index
    %14 = vector.load %arg9[%c1, %c1_29, %c0_30] : memref<18x18x12xf32, #tpu.memory_space<vmem>>, vector<16x16x12xf32>
    tpu.vector_store %arg9[%c1, %c1_29, %c0_30], %13 {strides = array<i32>} : memref<18x18x12xf32, #tpu.memory_space<vmem>>, vector<16x16x12xf32>,
    %c0_31 = arith.constant 0 : index
    %c0_32 = arith.constant 0 : index
    %15 = vector.load %arg3[%c0_31, %c0_32] : memref<1x12xf32, #tpu.memory_space<vmem>>, vector<1x12xf32>
    %c0_33 = arith.constant 0 : index
    %c0_34 = arith.constant 0 : index
    %16 = vector.load %arg5[%c0_33, %c0_34] : memref<1x4xf32, #tpu.memory_space<vmem>>, vector<1x4xf32>
    %c0_35 = arith.constant 0 : index
    %c0_36 = arith.constant 0 : index
    %17 = vector.load %arg7[%c0_35, %c0_36] : memref<1x12xf32, #tpu.memory_space<vmem>>, vector<1x12xf32>
    %cst_37 = arith.constant 0.000000e+00 : f32
    %18 = vector.broadcast %cst_37 : f32 to vector<256x12xf32>
    %c0_38 = arith.constant 0 : index
    %c0_39 = arith.constant 0 : index
    %c0_40 = arith.constant 0 : index
    %19 = vector.load %arg9[%c0_38, %c0_39, %c0_40] : memref<18x18x12xf32, #tpu.memory_space<vmem>>, vector<16x16x12xf32>
    %20 = vector.shape_cast %19 : vector<16x16x12xf32> to vector<256x12xf32>
    %21 = arith.truncf %20 : vector<256x12xf32> to vector<256x12xbf16>
    %c0_41 = arith.constant 0 : index
    %c0_42 = arith.constant 0 : index
    %c0_43 = arith.constant 0 : index
    %22 = vector.load %arg2[%c0_41, %c0_42, %c0_43] : memref<9x12x12xbf16, #tpu.memory_space<vmem>>, vector<1x12x12xbf16>
    %23 = vector.shape_cast %22 : vector<1x12x12xbf16> to vector<12x12xbf16>
    %cst_44 = arith.constant dense<0.000000e+00> : vector<256x12xf32>
    %24 = tpu.matmul %21, %23, %cst_44 {dimension_numbers = #tpu.dot_dimension_numbers<[1], [0], [0], [1], [0, 0, 1, 1], [], []>} : vector<256x12xbf16>, vector<12x12xbf16>, vector<256x12xf32> -> vector<256x12xf32>
    %25 = arith.addf %18, %24 : vector<256x12xf32>
    %c0_45 = arith.constant 0 : index
    %c1_46 = arith.constant 1 : index
    %c0_47 = arith.constant 0 : index
    %26 = vector.load %arg9[%c0_45, %c1_46, %c0_47] : memref<18x18x12xf32, #tpu.memory_space<vmem>>, vector<16x16x12xf32>
    %27 = vector.shape_cast %26 : vector<16x16x12xf32> to vector<256x12xf32>
    %28 = arith.truncf %27 : vector<256x12xf32> to vector<256x12xbf16>
    %c1_48 = arith.constant 1 : index
    %c0_49 = arith.constant 0 : index
    %c0_50 = arith.constant 0 : index
    %29 = vector.load %arg2[%c1_48, %c0_49, %c0_50] : memref<9x12x12xbf16, #tpu.memory_space<vmem>>, vector<1x12x12xbf16>
    %30 = vector.shape_cast %29 : vector<1x12x12xbf16> to vector<12x12xbf16>
    %cst_51 = arith.constant dense<0.000000e+00> : vector<256x12xf32>
    %31 = tpu.matmul %28, %30, %cst_51 {dimension_numbers = #tpu.dot_dimension_numbers<[1], [0], [0], [1], [0, 0, 1, 1], [], []>} : vector<256x12xbf16>, vector<12x12xbf16>, vector<256x12xf32> -> vector<256x12xf32>
    %32 = arith.addf %25, %31 : vector<256x12xf32>
    %c0_52 = arith.constant 0 : index
    %c2 = arith.constant 2 : index
    %c0_53 = arith.constant 0 : index
    %33 = vector.load %arg9[%c0_52, %c2, %c0_53] : memref<18x18x12xf32, #tpu.memory_space<vmem>>, vector<16x16x12xf32>
    %34 = vector.shape_cast %33 : vector<16x16x12xf32> to vector<256x12xf32>
    %35 = arith.truncf %34 : vector<256x12xf32> to vector<256x12xbf16>
    %c2_54 = arith.constant 2 : index
    %c0_55 = arith.constant 0 : index
    %c0_56 = arith.constant 0 : index
    %36 = vector.load %arg2[%c2_54, %c0_55, %c0_56] : memref<9x12x12xbf16, #tpu.memory_space<vmem>>, vector<1x12x12xbf16>
    %37 = vector.shape_cast %36 : vector<1x12x12xbf16> to vector<12x12xbf16>
    %cst_57 = arith.constant dense<0.000000e+00> : vector<256x12xf32>
    %38 = tpu.matmul %35, %37, %cst_57 {dimension_numbers = #tpu.dot_dimension_numbers<[1], [0], [0], [1], [0, 0, 1, 1], [], []>} : vector<256x12xbf16>, vector<12x12xbf16>, vector<256x12xf32> -> vector<256x12xf32>
    %39 = arith.addf %32, %38 : vector<256x12xf32>
    %c1_58 = arith.constant 1 : index
    %c0_59 = arith.constant 0 : index
    %c0_60 = arith.constant 0 : index
    %40 = vector.load %arg9[%c1_58, %c0_59, %c0_60] : memref<18x18x12xf32, #tpu.memory_space<vmem>>, vector<16x16x12xf32>
    %41 = vector.shape_cast %40 : vector<16x16x12xf32> to vector<256x12xf32>
    %42 = arith.truncf %41 : vector<256x12xf32> to vector<256x12xbf16>
    %c3 = arith.constant 3 : index
    %c0_61 = arith.constant 0 : index
    %c0_62 = arith.constant 0 : index
    %43 = vector.load %arg2[%c3, %c0_61, %c0_62] : memref<9x12x12xbf16, #tpu.memory_space<vmem>>, vector<1x12x12xbf16>
    %44 = vector.shape_cast %43 : vector<1x12x12xbf16> to vector<12x12xbf16>
    %cst_63 = arith.constant dense<0.000000e+00> : vector<256x12xf32>
    %45 = tpu.matmul %42, %44, %cst_63 {dimension_numbers = #tpu.dot_dimension_numbers<[1], [0], [0], [1], [0, 0, 1, 1], [], []>} : vector<256x12xbf16>, vector<12x12xbf16>, vector<256x12xf32> -> vector<256x12xf32>
    %46 = arith.addf %39, %45 : vector<256x12xf32>
    %c1_64 = arith.constant 1 : index
    %c1_65 = arith.constant 1 : index
    %c0_66 = arith.constant 0 : index
    %47 = vector.load %arg9[%c1_64, %c1_65, %c0_66] : memref<18x18x12xf32, #tpu.memory_space<vmem>>, vector<16x16x12xf32>
    %48 = vector.shape_cast %47 : vector<16x16x12xf32> to vector<256x12xf32>
    %49 = arith.truncf %48 : vector<256x12xf32> to vector<256x12xbf16>
    %c4 = arith.constant 4 : index
    %c0_67 = arith.constant 0 : index
    %c0_68 = arith.constant 0 : index
    %50 = vector.load %arg2[%c4, %c0_67, %c0_68] : memref<9x12x12xbf16, #tpu.memory_space<vmem>>, vector<1x12x12xbf16>
    %51 = vector.shape_cast %50 : vector<1x12x12xbf16> to vector<12x12xbf16>
    %cst_69 = arith.constant dense<0.000000e+00> : vector<256x12xf32>
    %52 = tpu.matmul %49, %51, %cst_69 {dimension_numbers = #tpu.dot_dimension_numbers<[1], [0], [0], [1], [0, 0, 1, 1], [], []>} : vector<256x12xbf16>, vector<12x12xbf16>, vector<256x12xf32> -> vector<256x12xf32>
    %53 = arith.addf %46, %52 : vector<256x12xf32>
    %c1_70 = arith.constant 1 : index
    %c2_71 = arith.constant 2 : index
    %c0_72 = arith.constant 0 : index
    %54 = vector.load %arg9[%c1_70, %c2_71, %c0_72] : memref<18x18x12xf32, #tpu.memory_space<vmem>>, vector<16x16x12xf32>
    %55 = vector.shape_cast %54 : vector<16x16x12xf32> to vector<256x12xf32>
    %56 = arith.truncf %55 : vector<256x12xf32> to vector<256x12xbf16>
    %c5 = arith.constant 5 : index
    %c0_73 = arith.constant 0 : index
    %c0_74 = arith.constant 0 : index
    %57 = vector.load %arg2[%c5, %c0_73, %c0_74] : memref<9x12x12xbf16, #tpu.memory_space<vmem>>, vector<1x12x12xbf16>
    %58 = vector.shape_cast %57 : vector<1x12x12xbf16> to vector<12x12xbf16>
    %cst_75 = arith.constant dense<0.000000e+00> : vector<256x12xf32>
    %59 = tpu.matmul %56, %58, %cst_75 {dimension_numbers = #tpu.dot_dimension_numbers<[1], [0], [0], [1], [0, 0, 1, 1], [], []>} : vector<256x12xbf16>, vector<12x12xbf16>, vector<256x12xf32> -> vector<256x12xf32>
    %60 = arith.addf %53, %59 : vector<256x12xf32>
    %c2_76 = arith.constant 2 : index
    %c0_77 = arith.constant 0 : index
    %c0_78 = arith.constant 0 : index
    %61 = vector.load %arg9[%c2_76, %c0_77, %c0_78] : memref<18x18x12xf32, #tpu.memory_space<vmem>>, vector<16x16x12xf32>
    %62 = vector.shape_cast %61 : vector<16x16x12xf32> to vector<256x12xf32>
    %63 = arith.truncf %62 : vector<256x12xf32> to vector<256x12xbf16>
    %c6 = arith.constant 6 : index
    %c0_79 = arith.constant 0 : index
    %c0_80 = arith.constant 0 : index
    %64 = vector.load %arg2[%c6, %c0_79, %c0_80] : memref<9x12x12xbf16, #tpu.memory_space<vmem>>, vector<1x12x12xbf16>
    %65 = vector.shape_cast %64 : vector<1x12x12xbf16> to vector<12x12xbf16>
    %cst_81 = arith.constant dense<0.000000e+00> : vector<256x12xf32>
    %66 = tpu.matmul %63, %65, %cst_81 {dimension_numbers = #tpu.dot_dimension_numbers<[1], [0], [0], [1], [0, 0, 1, 1], [], []>} : vector<256x12xbf16>, vector<12x12xbf16>, vector<256x12xf32> -> vector<256x12xf32>
    %67 = arith.addf %60, %66 : vector<256x12xf32>
    %c2_82 = arith.constant 2 : index
    %c1_83 = arith.constant 1 : index
    %c0_84 = arith.constant 0 : index
    %68 = vector.load %arg9[%c2_82, %c1_83, %c0_84] : memref<18x18x12xf32, #tpu.memory_space<vmem>>, vector<16x16x12xf32>
    %69 = vector.shape_cast %68 : vector<16x16x12xf32> to vector<256x12xf32>
    %70 = arith.truncf %69 : vector<256x12xf32> to vector<256x12xbf16>
    %c7 = arith.constant 7 : index
    %c0_85 = arith.constant 0 : index
    %c0_86 = arith.constant 0 : index
    %71 = vector.load %arg2[%c7, %c0_85, %c0_86] : memref<9x12x12xbf16, #tpu.memory_space<vmem>>, vector<1x12x12xbf16>
    %72 = vector.shape_cast %71 : vector<1x12x12xbf16> to vector<12x12xbf16>
    %cst_87 = arith.constant dense<0.000000e+00> : vector<256x12xf32>
    %73 = tpu.matmul %70, %72, %cst_87 {dimension_numbers = #tpu.dot_dimension_numbers<[1], [0], [0], [1], [0, 0, 1, 1], [], []>} : vector<256x12xbf16>, vector<12x12xbf16>, vector<256x12xf32> -> vector<256x12xf32>
    %74 = arith.addf %67, %73 : vector<256x12xf32>
    %c2_88 = arith.constant 2 : index
    %c2_89 = arith.constant 2 : index
    %c0_90 = arith.constant 0 : index
    %75 = vector.load %arg9[%c2_88, %c2_89, %c0_90] : memref<18x18x12xf32, #tpu.memory_space<vmem>>, vector<16x16x12xf32>
    %76 = vector.shape_cast %75 : vector<16x16x12xf32> to vector<256x12xf32>
    %77 = arith.truncf %76 : vector<256x12xf32> to vector<256x12xbf16>
    %c8 = arith.constant 8 : index
    %c0_91 = arith.constant 0 : index
    %c0_92 = arith.constant 0 : index
    %78 = vector.load %arg2[%c8, %c0_91, %c0_92] : memref<9x12x12xbf16, #tpu.memory_space<vmem>>, vector<1x12x12xbf16>
    %79 = vector.shape_cast %78 : vector<1x12x12xbf16> to vector<12x12xbf16>
    %cst_93 = arith.constant dense<0.000000e+00> : vector<256x12xf32>
    %80 = tpu.matmul %77, %79, %cst_93 {dimension_numbers = #tpu.dot_dimension_numbers<[1], [0], [0], [1], [0, 0, 1, 1], [], []>} : vector<256x12xbf16>, vector<12x12xbf16>, vector<256x12xf32> -> vector<256x12xf32>
    %81 = arith.addf %74, %80 : vector<256x12xf32>
    %82 = vector.broadcast %15 : vector<1x12xf32> to vector<256x12xf32>
    %83 = arith.addf %81, %82 : vector<256x12xf32>
    %cst_94 = arith.constant 0.000000e+00 : f32
    %84 = vector.broadcast %cst_94 : f32 to vector<256x12xf32>
    %85 = arith.cmpf ogt, %83, %84 : vector<256x12xf32>
    %cst_95 = arith.constant 2.000000e-01 : f32
    %86 = vector.broadcast %cst_95 : f32 to vector<256x12xf32>
    %87 = arith.mulf %86, %83 : vector<256x12xf32>
    %88 = arith.select %85, %83, %87 : vector<256x12xi1>, vector<256x12xf32>
    %89 = arith.truncf %88 : vector<256x12xf32> to vector<256x12xbf16>
    %c0_96 = arith.constant 0 : index
    %c0_97 = arith.constant 0 : index
    %90 = vector.load %arg4[%c0_96, %c0_97] : memref<12x4xbf16, #tpu.memory_space<vmem>>, vector<12x4xbf16>
    %cst_98 = arith.constant dense<0.000000e+00> : vector<256x4xf32>
    %91 = tpu.matmul %89, %90, %cst_98 {dimension_numbers = #tpu.dot_dimension_numbers<[1], [0], [0], [1], [0, 0, 1, 1], [], []>} : vector<256x12xbf16>, vector<12x4xbf16>, vector<256x4xf32> -> vector<256x4xf32>
    %92 = vector.broadcast %16 : vector<1x4xf32> to vector<256x4xf32>
    %93 = arith.addf %91, %92 : vector<256x4xf32>
    %cst_99 = arith.constant 0.000000e+00 : f32
    %94 = vector.broadcast %cst_99 : f32 to vector<256x4xf32>
    %95 = arith.cmpf ogt, %93, %94 : vector<256x4xf32>
    %cst_100 = arith.constant 2.000000e-01 : f32
    %96 = vector.broadcast %cst_100 : f32 to vector<256x4xf32>
    %97 = arith.mulf %96, %93 : vector<256x4xf32>
    %98 = arith.select %95, %93, %97 : vector<256x4xi1>, vector<256x4xf32>
    %99 = vector.shape_cast %88 : vector<256x12xf32> to vector<16x16x12xf32>
    %c1_101 = arith.constant 1 : index
    %c1_102 = arith.constant 1 : index
    %c0_103 = arith.constant 0 : index
    %100 = vector.load %arg10[%c1_101, %c1_102, %c0_103] : memref<18x18x16xf32, #tpu.memory_space<vmem>>, vector<16x16x12xf32>
    tpu.vector_store %arg10[%c1_101, %c1_102, %c0_103], %99 {strides = array<i32>} : memref<18x18x16xf32, #tpu.memory_space<vmem>>, vector<16x16x12xf32>,
    %101 = vector.shape_cast %98 : vector<256x4xf32> to vector<16x16x4xf32>
    %c1_104 = arith.constant 1 : index
    %c1_105 = arith.constant 1 : index
    %c12 = arith.constant 12 : index
    %102 = vector.load %arg10[%c1_104, %c1_105, %c12] : memref<18x18x16xf32, #tpu.memory_space<vmem>>, vector<16x16x4xf32>
    tpu.vector_store %arg10[%c1_104, %c1_105, %c12], %101 {strides = array<i32>} : memref<18x18x16xf32, #tpu.memory_space<vmem>>, vector<16x16x4xf32>,
    %cst_106 = arith.constant 0.000000e+00 : f32
    %103 = vector.broadcast %cst_106 : f32 to vector<256x12xf32>
    %c0_107 = arith.constant 0 : index
    %c0_108 = arith.constant 0 : index
    %c0_109 = arith.constant 0 : index
    %104 = vector.load %arg10[%c0_107, %c0_108, %c0_109] : memref<18x18x16xf32, #tpu.memory_space<vmem>>, vector<16x16x16xf32>
    %105 = vector.shape_cast %104 : vector<16x16x16xf32> to vector<256x16xf32>
    %106 = arith.truncf %105 : vector<256x16xf32> to vector<256x16xbf16>
    %c0_110 = arith.constant 0 : index
    %c0_111 = arith.constant 0 : index
    %c0_112 = arith.constant 0 : index
    %107 = vector.load %arg6[%c0_110, %c0_111, %c0_112] : memref<9x16x12xbf16, #tpu.memory_space<vmem>>, vector<1x16x12xbf16>
    %108 = vector.shape_cast %107 : vector<1x16x12xbf16> to vector<16x12xbf16>
    %cst_113 = arith.constant dense<0.000000e+00> : vector<256x12xf32>
    %109 = tpu.matmul %106, %108, %cst_113 {dimension_numbers = #tpu.dot_dimension_numbers<[1], [0], [0], [1], [0, 0, 1, 1], [], []>} : vector<256x16xbf16>, vector<16x12xbf16>, vector<256x12xf32> -> vector<256x12xf32>
    %110 = arith.addf %103, %109 : vector<256x12xf32>
    %c0_114 = arith.constant 0 : index
    %c1_115 = arith.constant 1 : index
    %c0_116 = arith.constant 0 : index
    %111 = vector.load %arg10[%c0_114, %c1_115, %c0_116] : memref<18x18x16xf32, #tpu.memory_space<vmem>>, vector<16x16x16xf32>
    %112 = vector.shape_cast %111 : vector<16x16x16xf32> to vector<256x16xf32>
    %113 = arith.truncf %112 : vector<256x16xf32> to vector<256x16xbf16>
    %c1_117 = arith.constant 1 : index
    %c0_118 = arith.constant 0 : index
    %c0_119 = arith.constant 0 : index
    %114 = vector.load %arg6[%c1_117, %c0_118, %c0_119] : memref<9x16x12xbf16, #tpu.memory_space<vmem>>, vector<1x16x12xbf16>
    %115 = vector.shape_cast %114 : vector<1x16x12xbf16> to vector<16x12xbf16>
    %cst_120 = arith.constant dense<0.000000e+00> : vector<256x12xf32>
    %116 = tpu.matmul %113, %115, %cst_120 {dimension_numbers = #tpu.dot_dimension_numbers<[1], [0], [0], [1], [0, 0, 1, 1], [], []>} : vector<256x16xbf16>, vector<16x12xbf16>, vector<256x12xf32> -> vector<256x12xf32>
    %117 = arith.addf %110, %116 : vector<256x12xf32>
    %c0_121 = arith.constant 0 : index
    %c2_122 = arith.constant 2 : index
    %c0_123 = arith.constant 0 : index
    %118 = vector.load %arg10[%c0_121, %c2_122, %c0_123] : memref<18x18x16xf32, #tpu.memory_space<vmem>>, vector<16x16x16xf32>
    %119 = vector.shape_cast %118 : vector<16x16x16xf32> to vector<256x16xf32>
    %120 = arith.truncf %119 : vector<256x16xf32> to vector<256x16xbf16>
    %c2_124 = arith.constant 2 : index
    %c0_125 = arith.constant 0 : index
    %c0_126 = arith.constant 0 : index
    %121 = vector.load %arg6[%c2_124, %c0_125, %c0_126] : memref<9x16x12xbf16, #tpu.memory_space<vmem>>, vector<1x16x12xbf16>
    %122 = vector.shape_cast %121 : vector<1x16x12xbf16> to vector<16x12xbf16>
    %cst_127 = arith.constant dense<0.000000e+00> : vector<256x12xf32>
    %123 = tpu.matmul %120, %122, %cst_127 {dimension_numbers = #tpu.dot_dimension_numbers<[1], [0], [0], [1], [0, 0, 1, 1], [], []>} : vector<256x16xbf16>, vector<16x12xbf16>, vector<256x12xf32> -> vector<256x12xf32>
    %124 = arith.addf %117, %123 : vector<256x12xf32>
    %c1_128 = arith.constant 1 : index
    %c0_129 = arith.constant 0 : index
    %c0_130 = arith.constant 0 : index
    %125 = vector.load %arg10[%c1_128, %c0_129, %c0_130] : memref<18x18x16xf32, #tpu.memory_space<vmem>>, vector<16x16x16xf32>
    %126 = vector.shape_cast %125 : vector<16x16x16xf32> to vector<256x16xf32>
    %127 = arith.truncf %126 : vector<256x16xf32> to vector<256x16xbf16>
    %c3_131 = arith.constant 3 : index
    %c0_132 = arith.constant 0 : index
    %c0_133 = arith.constant 0 : index
    %128 = vector.load %arg6[%c3_131, %c0_132, %c0_133] : memref<9x16x12xbf16, #tpu.memory_space<vmem>>, vector<1x16x12xbf16>
    %129 = vector.shape_cast %128 : vector<1x16x12xbf16> to vector<16x12xbf16>
    %cst_134 = arith.constant dense<0.000000e+00> : vector<256x12xf32>
    %130 = tpu.matmul %127, %129, %cst_134 {dimension_numbers = #tpu.dot_dimension_numbers<[1], [0], [0], [1], [0, 0, 1, 1], [], []>} : vector<256x16xbf16>, vector<16x12xbf16>, vector<256x12xf32> -> vector<256x12xf32>
    %131 = arith.addf %124, %130 : vector<256x12xf32>
    %c1_135 = arith.constant 1 : index
    %c1_136 = arith.constant 1 : index
    %c0_137 = arith.constant 0 : index
    %132 = vector.load %arg10[%c1_135, %c1_136, %c0_137] : memref<18x18x16xf32, #tpu.memory_space<vmem>>, vector<16x16x16xf32>
    %133 = vector.shape_cast %132 : vector<16x16x16xf32> to vector<256x16xf32>
    %134 = arith.truncf %133 : vector<256x16xf32> to vector<256x16xbf16>
    %c4_138 = arith.constant 4 : index
    %c0_139 = arith.constant 0 : index
    %c0_140 = arith.constant 0 : index
    %135 = vector.load %arg6[%c4_138, %c0_139, %c0_140] : memref<9x16x12xbf16, #tpu.memory_space<vmem>>, vector<1x16x12xbf16>
    %136 = vector.shape_cast %135 : vector<1x16x12xbf16> to vector<16x12xbf16>
    %cst_141 = arith.constant dense<0.000000e+00> : vector<256x12xf32>
    %137 = tpu.matmul %134, %136, %cst_141 {dimension_numbers = #tpu.dot_dimension_numbers<[1], [0], [0], [1], [0, 0, 1, 1], [], []>} : vector<256x16xbf16>, vector<16x12xbf16>, vector<256x12xf32> -> vector<256x12xf32>
    %138 = arith.addf %131, %137 : vector<256x12xf32>
    %c1_142 = arith.constant 1 : index
    %c2_143 = arith.constant 2 : index
    %c0_144 = arith.constant 0 : index
    %139 = vector.load %arg10[%c1_142, %c2_143, %c0_144] : memref<18x18x16xf32, #tpu.memory_space<vmem>>, vector<16x16x16xf32>
    %140 = vector.shape_cast %139 : vector<16x16x16xf32> to vector<256x16xf32>
    %141 = arith.truncf %140 : vector<256x16xf32> to vector<256x16xbf16>
    %c5_145 = arith.constant 5 : index
    %c0_146 = arith.constant 0 : index
    %c0_147 = arith.constant 0 : index
    %142 = vector.load %arg6[%c5_145, %c0_146, %c0_147] : memref<9x16x12xbf16, #tpu.memory_space<vmem>>, vector<1x16x12xbf16>
    %143 = vector.shape_cast %142 : vector<1x16x12xbf16> to vector<16x12xbf16>
    %cst_148 = arith.constant dense<0.000000e+00> : vector<256x12xf32>
    %144 = tpu.matmul %141, %143, %cst_148 {dimension_numbers = #tpu.dot_dimension_numbers<[1], [0], [0], [1], [0, 0, 1, 1], [], []>} : vector<256x16xbf16>, vector<16x12xbf16>, vector<256x12xf32> -> vector<256x12xf32>
    %145 = arith.addf %138, %144 : vector<256x12xf32>
    %c2_149 = arith.constant 2 : index
    %c0_150 = arith.constant 0 : index
    %c0_151 = arith.constant 0 : index
    %146 = vector.load %arg10[%c2_149, %c0_150, %c0_151] : memref<18x18x16xf32, #tpu.memory_space<vmem>>, vector<16x16x16xf32>
    %147 = vector.shape_cast %146 : vector<16x16x16xf32> to vector<256x16xf32>
    %148 = arith.truncf %147 : vector<256x16xf32> to vector<256x16xbf16>
    %c6_152 = arith.constant 6 : index
    %c0_153 = arith.constant 0 : index
    %c0_154 = arith.constant 0 : index
    %149 = vector.load %arg6[%c6_152, %c0_153, %c0_154] : memref<9x16x12xbf16, #tpu.memory_space<vmem>>, vector<1x16x12xbf16>
    %150 = vector.shape_cast %149 : vector<1x16x12xbf16> to vector<16x12xbf16>
    %cst_155 = arith.constant dense<0.000000e+00> : vector<256x12xf32>
    %151 = tpu.matmul %148, %150, %cst_155 {dimension_numbers = #tpu.dot_dimension_numbers<[1], [0], [0], [1], [0, 0, 1, 1], [], []>} : vector<256x16xbf16>, vector<16x12xbf16>, vector<256x12xf32> -> vector<256x12xf32>
    %152 = arith.addf %145, %151 : vector<256x12xf32>
    %c2_156 = arith.constant 2 : index
    %c1_157 = arith.constant 1 : index
    %c0_158 = arith.constant 0 : index
    %153 = vector.load %arg10[%c2_156, %c1_157, %c0_158] : memref<18x18x16xf32, #tpu.memory_space<vmem>>, vector<16x16x16xf32>
    %154 = vector.shape_cast %153 : vector<16x16x16xf32> to vector<256x16xf32>
    %155 = arith.truncf %154 : vector<256x16xf32> to vector<256x16xbf16>
    %c7_159 = arith.constant 7 : index
    %c0_160 = arith.constant 0 : index
    %c0_161 = arith.constant 0 : index
    %156 = vector.load %arg6[%c7_159, %c0_160, %c0_161] : memref<9x16x12xbf16, #tpu.memory_space<vmem>>, vector<1x16x12xbf16>
    %157 = vector.shape_cast %156 : vector<1x16x12xbf16> to vector<16x12xbf16>
    %cst_162 = arith.constant dense<0.000000e+00> : vector<256x12xf32>
    %158 = tpu.matmul %155, %157, %cst_162 {dimension_numbers = #tpu.dot_dimension_numbers<[1], [0], [0], [1], [0, 0, 1, 1], [], []>} : vector<256x16xbf16>, vector<16x12xbf16>, vector<256x12xf32> -> vector<256x12xf32>
    %159 = arith.addf %152, %158 : vector<256x12xf32>
    %c2_163 = arith.constant 2 : index
    %c2_164 = arith.constant 2 : index
    %c0_165 = arith.constant 0 : index
    %160 = vector.load %arg10[%c2_163, %c2_164, %c0_165] : memref<18x18x16xf32, #tpu.memory_space<vmem>>, vector<16x16x16xf32>
    %161 = vector.shape_cast %160 : vector<16x16x16xf32> to vector<256x16xf32>
    %162 = arith.truncf %161 : vector<256x16xf32> to vector<256x16xbf16>
    %c8_166 = arith.constant 8 : index
    %c0_167 = arith.constant 0 : index
    %c0_168 = arith.constant 0 : index
    %163 = vector.load %arg6[%c8_166, %c0_167, %c0_168] : memref<9x16x12xbf16, #tpu.memory_space<vmem>>, vector<1x16x12xbf16>
    %164 = vector.shape_cast %163 : vector<1x16x12xbf16> to vector<16x12xbf16>
    %cst_169 = arith.constant dense<0.000000e+00> : vector<256x12xf32>
    %165 = tpu.matmul %162, %164, %cst_169 {dimension_numbers = #tpu.dot_dimension_numbers<[1], [0], [0], [1], [0, 0, 1, 1], [], []>} : vector<256x16xbf16>, vector<16x12xbf16>, vector<256x12xf32> -> vector<256x12xf32>
    %166 = arith.addf %159, %165 : vector<256x12xf32>
    %167 = vector.broadcast %17 : vector<1x12xf32> to vector<256x12xf32>
    %168 = arith.addf %166, %167 : vector<256x12xf32>
    %cst_170 = arith.constant 0.000000e+00 : f32
    %169 = vector.broadcast %cst_170 : f32 to vector<256x12xf32>
    %170 = arith.cmpf ogt, %168, %169 : vector<256x12xf32>
    %cst_171 = arith.constant 2.000000e-01 : f32
    %171 = vector.broadcast %cst_171 : f32 to vector<256x12xf32>
    %172 = arith.mulf %171, %168 : vector<256x12xf32>
    %173 = arith.select %170, %168, %172 : vector<256x12xi1>, vector<256x12xf32>
    %c0_172 = arith.constant 0 : index
    %c0_173 = arith.constant 0 : index
    %c0_174 = arith.constant 0 : index
    %c0_175 = arith.constant 0 : index
    %174 = vector.load %arg1[%c0_172, %c0_173, %c0_174, %c0_175] : memref<1x16x16x12xf32, #tpu.memory_space<vmem>>, vector<1x16x16x12xf32>
    %175 = vector.shape_cast %174 : vector<1x16x16x12xf32> to vector<16x16x12xf32>
    %176 = vector.shape_cast %173 : vector<256x12xf32> to vector<16x16x12xf32>
    %177 = arith.addf %175, %176 : vector<16x16x12xf32>
    %c0_176 = arith.constant 0 : index
    %c0_177 = arith.constant 0 : index
    %c0_178 = arith.constant 0 : index
    %c0_179 = arith.constant 0 : index
    %178 = vector.load %arg8[%c0_176, %c0_177, %c0_178, %c0_179] : memref<1x16x16x12xf32, #tpu.memory_space<vmem>>, vector<1x16x16x12xf32>
    %179 = vector.shape_cast %178 : vector<1x16x16x12xf32> to vector<16x16x12xf32>
    %180 = vector.shape_cast %177 : vector<16x16x12xf32> to vector<1x16x16x12xf32>
    tpu.vector_store %arg8[%c0_176, %c0_177, %c0_178, %c0_179], %180 {strides = array<i32>} : memref<1x16x16x12xf32, #tpu.memory_space<vmem>>, vector<1x16x16x12xf32>,
    return
  }
  func.func @transform_0(%arg0: i32) -> (i32, i32, i32, i32) {
    %c0_i32 = arith.constant 0 : i32
    %c0_i32_0 = arith.constant 0 : i32
    %c0_i32_1 = arith.constant 0 : i32
    %c0_i32_2 = arith.constant 0 : i32
    return %arg0, %c0_i32, %c0_i32_0, %c0_i32_1 : i32, i32, i32, i32
  }
  func.func @transform_1(%arg0: i32) -> (i32, i32, i32) {
    %c0_i32 = arith.constant 0 : i32
    %c0_i32_0 = arith.constant 0 : i32
    %c0_i32_1 = arith.constant 0 : i32
    %c0_i32_2 = arith.constant 0 : i32
    return %c0_i32, %c0_i32_0, %c0_i32_1 : i32, i32, i32
  }
  func.func @transform_2(%arg0: i32) -> (i32, i32) {
    %c0_i32 = arith.constant 0 : i32
    %c0_i32_0 = arith.constant 0 : i32
    %c0_i32_1 = arith.constant 0 : i32
    return %c0_i32, %c0_i32_0 : i32, i32
  }
  func.func @transform_3(%arg0: i32) -> (i32, i32) {
    %c0_i32 = arith.constant 0 : i32
    %c0_i32_0 = arith.constant 0 : i32
    %c0_i32_1 = arith.constant 0 : i32
    return %c0_i32, %c0_i32_0 : i32, i32
  }
  func.func @transform_4(%arg0: i32) -> (i32, i32) {
    %c0_i32 = arith.constant 0 : i32
    %c0_i32_0 = arith.constant 0 : i32
    %c0_i32_1 = arith.constant 0 : i32
    return %c0_i32, %c0_i32_0 : i32, i32
  }
  func.func @transform_5(%arg0: i32) -> (i32, i32, i32) {
    %c0_i32 = arith.constant 0 : i32
    %c0_i32_0 = arith.constant 0 : i32
    %c0_i32_1 = arith.constant 0 : i32
    %c0_i32_2 = arith.constant 0 : i32
    return %c0_i32, %c0_i32_0, %c0_i32_1 : i32, i32, i32
  }
  func.func @transform_6(%arg0: i32) -> (i32, i32) {
    %c0_i32 = arith.constant 0 : i32
    %c0_i32_0 = arith.constant 0 : i32
    %c0_i32_1 = arith.constant 0 : i32
    return %c0_i32, %c0_i32_0 : i32, i32
  }
  func.func @transform_7(%arg0: i32) -> (i32, i32, i32, i32) {
    %c0_i32 = arith.constant 0 : i32
    %c0_i32_0 = arith.constant 0 : i32
    %c0_i32_1 = arith.constant 0 : i32
    %c0_i32_2 = arith.constant 0 : i32
    return %arg0, %c0_i32, %c0_i32_0, %c0_i32_1 : i32, i32, i32, i32
  }
}

</mosaic_0001>

<llo_original>
// kernel: tpu_custom_call.1
$region0: #{tpu_custom_call.1}
  #allocation0 [shape = 'u32[]', space=smem, size = 0x4, offset = 0x4, fixed_abs, tag = 'smem constant byte address 0x4 - core index']
  #allocation1 [shape = 'u32[144,128]{1,0:T(1,128)}', space=vmem, size = 0x12000, scoped, tag = 'internal scratch']
  #allocation2 [shape = 'f32[18,18,12]{2,1,0:T(8,128)}', space=vmem, size = 0x36000, scoped, tag = 'scratch operand']
  #allocation3 [shape = 'f32[18,18,16]{2,1,0:T(8,128)}', space=vmem, size = 0x36000, scoped, tag = 'scratch operand']
  %s0 = inlined_call_operand.vmem [shape: f32[2,16,16,12], index: 0, kind: input, shape index: {}]
  %s1 = inlined_call_operand.vmem [shape: bf16[9,12,12], index: 1, kind: input, shape index: {}]
  %s2 = inlined_call_operand.vmem [shape: f32[1,12], index: 2, kind: input, shape index: {}]
  %s3 = inlined_call_operand.vmem [shape: bf16[12,4], index: 3, kind: input, shape index: {}]
  %s4 = inlined_call_operand.vmem [shape: f32[1,4], index: 4, kind: input, shape index: {}]
  %s5 = inlined_call_operand.vmem [shape: bf16[9,16,12], index: 5, kind: input, shape index: {}]
  %s6 = inlined_call_operand.vmem [shape: f32[1,12], index: 6, kind: input, shape index: {}]
  %s7 = inlined_call_operand.vmem [shape: f32[2,16,16,12], index: 7, kind: output, shape index: {}]
  %s8 = sld [smem:[#allocation0]]
  $region61: #{tpu_custom_call.1} parent=0
    _
  %s10 = ssub.s32 1, %s8
  %s11 = scalar_select 0, %s10, %s8
  loop: start=0, step=1, limit=4
  $region2: #{tpu_custom_call.1} parent=0 // loop_pre_header
    _
  $region3: #{tpu_custom_call.1} parent=0 // loop_header
    %s13 = sphi 0, %s17
    %p14 = scmp.ge.s32.totalorder %s13, 4
    %s23 = sphi 0, %s25
    %s26 = sphi 0, %s23
    %s27 = sphi 0, %s26
    %s43 = sphi 0, %s27
    %s47 = sphi 0, %s47
    %s49 = sphi 0, %s47
    %s50 = sphi 0, %s49
    %s64 = sphi 0, %s50
    %s68 = sphi 0, %s68
    %s70 = sphi 0, %s68
    %s71 = sphi 0, %s70
    %s85 = sphi 0, %s71
    %s89 = sphi 0, %s89
    %s91 = sphi 0, %s89
    %s92 = sphi 0, %s91
    %s106 = sphi 0, %s92
    %s110 = sphi 0, %s110
    %s112 = sphi 0, %s110
    %s113 = sphi 0, %s112
    %s127 = sphi 0, %s113
    %s131 = sphi 0, %s131
    %s133 = sphi 0, %s131
    %s134 = sphi 0, %s133
    %s148 = sphi 0, %s134
    %s152 = sphi 0, %s152
    %s154 = sphi 0, %s152
    %s155 = sphi 0, %s154
    %s169 = sphi 0, %s155
    %s175 = sphi 0, %s177
    %s178 = sphi 0, %s175
    %s179 = sphi 0, %s178
    %s195 = sphi 0, %s179
  $region4: #{tpu_custom_call.1} parent=0 // loop_header_branch
    %16 = sbr.rel (%p14) target = $region8
  $region5: #{tpu_custom_call.1} parent=0 // loop_body
    %s18 = ssub.s32 %s13, 1
    %s19 = ssub.s32 %s13, 2
    %s20 = sadd.s32 %s13, 1
    %s21 = ssub.s32 %s13, %s20
    %p22 = scmp.eq.s32.totalorder %s21, 0
    %s24 = sadd.s32 %s23, 1
    %s25 = scalar_select %p22, %s23, %s24
    %p28 = pneg %p22
    %p29 = scmp.eq.s32.totalorder %s13, 1
    %p30 = por %p28, %p29
    %p31 = scmp.ne.s32.totalorder %s23, %s26
    %p32 = scmp.eq.s32.totalorder %s13, 0
    %p33 = por %p31, %p32
    %p34 = scmp.ne.s32.totalorder %s23, %s26
    %p35 = scmp.eq.s32.totalorder %s18, 1
    %p36 = por %p34, %p35
    %p37 = scmp.ne.s32.totalorder %s26, %s27
    %p38 = scmp.eq.s32.totalorder %s18, 0
    %p39 = por %p37, %p38
    %p40 = scmp.ne.s32.totalorder %s26, %s27
    %p41 = scmp.eq.s32.totalorder %s19, 1
    %p42 = por %p40, %p41
    %p44 = scmp.ne.s32.totalorder %s27, %s43
    %p45 = scmp.eq.s32.totalorder %s19, 0
    %p46 = por %p44, %p45
    %s48 = sadd.s32 %s47, 1
    %p51 = scmp.eq.s32.totalorder %s13, 1
    %p52 = scmp.ne.s32.totalorder %s47, %s49
    %p53 = scmp.eq.s32.totalorder %s13, 0
    %p54 = por %p52, %p53
    %p55 = scmp.ne.s32.totalorder %s47, %s49
    %p56 = scmp.eq.s32.totalorder %s18, 1
    %p57 = por %p55, %p56
    %p58 = scmp.ne.s32.totalorder %s49, %s50
    %p59 = scmp.eq.s32.totalorder %s18, 0
    %p60 = por %p58, %p59
    %p61 = scmp.ne.s32.totalorder %s49, %s50
    %p62 = scmp.eq.s32.totalorder %s19, 1
    %p63 = por %p61, %p62
    %p65 = scmp.ne.s32.totalorder %s50, %s64
    %p66 = scmp.eq.s32.totalorder %s19, 0
    %p67 = por %p65, %p66
    %s69 = sadd.s32 %s68, 1
    %p72 = scmp.eq.s32.totalorder %s13, 1
    %p73 = scmp.ne.s32.totalorder %s68, %s70
    %p74 = scmp.eq.s32.totalorder %s13, 0
    %p75 = por %p73, %p74
    %p76 = scmp.ne.s32.totalorder %s68, %s70
    %p77 = scmp.eq.s32.totalorder %s18, 1
    %p78 = por %p76, %p77
    %p79 = scmp.ne.s32.totalorder %s70, %s71
    %p80 = scmp.eq.s32.totalorder %s18, 0
    %p81 = por %p79, %p80
    %p82 = scmp.ne.s32.totalorder %s70, %s71
    %p83 = scmp.eq.s32.totalorder %s19, 1
    %p84 = por %p82, %p83
    %p86 = scmp.ne.s32.totalorder %s71, %s85
    %p87 = scmp.eq.s32.totalorder %s19, 0
    %p88 = por %p86, %p87
    %s90 = sadd.s32 %s89, 1
    %p93 = scmp.eq.s32.totalorder %s13, 1
    %p94 = scmp.ne.s32.totalorder %s89, %s91
    %p95 = scmp.eq.s32.totalorder %s13, 0
    %p96 = por %p94, %p95
    %p97 = scmp.ne.s32.totalorder %s89, %s91
    %p98 = scmp.eq.s32.totalorder %s18, 1
    %p99 = por %p97, %p98
    %p100 = scmp.ne.s32.totalorder %s91, %s92
    %p101 = scmp.eq.s32.totalorder %s18, 0
    %p102 = por %p100, %p101
    %p103 = scmp.ne.s32.totalorder %s91, %s92
    %p104 = scmp.eq.s32.totalorder %s19, 1
    %p105 = por %p103, %p104
    %p107 = scmp.ne.s32.totalorder %s92, %s106
    %p108 = scmp.eq.s32.totalorder %s19, 0
    %p109 = por %p107, %p108
    %s111 = sadd.s32 %s110, 1
    %p114 = scmp.eq.s32.totalorder %s13, 1
    %p115 = scmp.ne.s32.totalorder %s110, %s112
    %p116 = scmp.eq.s32.totalorder %s13, 0
    %p117 = por %p115, %p116
    %p118 = scmp.ne.s32.totalorder %s110, %s112
    %p119 = scmp.eq.s32.totalorder %s18, 1
    %p120 = por %p118, %p119
    %p121 = scmp.ne.s32.totalorder %s112, %s113
    %p122 = scmp.eq.s32.totalorder %s18, 0
    %p123 = por %p121, %p122
    %p124 = scmp.ne.s32.totalorder %s112, %s113
    %p125 = scmp.eq.s32.totalorder %s19, 1
    %p126 = por %p124, %p125
    %p128 = scmp.ne.s32.totalorder %s113, %s127
    %p129 = scmp.eq.s32.totalorder %s19, 0
    %p130 = por %p128, %p129
    %s132 = sadd.s32 %s131, 1
    %p135 = scmp.eq.s32.totalorder %s13, 1
    %p136 = scmp.ne.s32.totalorder %s131, %s133
    %p137 = scmp.eq.s32.totalorder %s13, 0
    %p138 = por %p136, %p137
    %p139 = scmp.ne.s32.totalorder %s131, %s133
    %p140 = scmp.eq.s32.totalorder %s18, 1
    %p141 = por %p139, %p140
    %p142 = scmp.ne.s32.totalorder %s133, %s134
    %p143 = scmp.eq.s32.totalorder %s18, 0
    %p144 = por %p142, %p143
    %p145 = scmp.ne.s32.totalorder %s133, %s134
    %p146 = scmp.eq.s32.totalorder %s19, 1
    %p147 = por %p145, %p146
    %p149 = scmp.ne.s32.totalorder %s134, %s148
    %p150 = scmp.eq.s32.totalorder %s19, 0
    %p151 = por %p149, %p150
    %s153 = sadd.s32 %s152, 1
    %p156 = scmp.eq.s32.totalorder %s13, 1
    %p157 = scmp.ne.s32.totalorder %s152, %s154
    %p158 = scmp.eq.s32.totalorder %s13, 0
    %p159 = por %p157, %p158
    %p160 = scmp.ne.s32.totalorder %s152, %s154
    %p161 = scmp.eq.s32.totalorder %s18, 1
    %p162 = por %p160, %p161
    %p163 = scmp.ne.s32.totalorder %s154, %s155
    %p164 = scmp.eq.s32.totalorder %s18, 0
    %p165 = por %p163, %p164
    %p166 = scmp.ne.s32.totalorder %s154, %s155
    %p167 = scmp.eq.s32.totalorder %s19, 1
    %p168 = por %p166, %p167
    %p170 = scmp.ne.s32.totalorder %s155, %s169
    %p171 = scmp.eq.s32.totalorder %s19, 0
    %p172 = por %p170, %p171
    %s173 = ssub.s32 %s13, %s20
    %p174 = scmp.eq.s32.totalorder %s173, 0
    %s176 = sadd.s32 %s175, 1
    %s177 = scalar_select %p174, %s175, %s176
    %p180 = pneg %p174
    %p181 = scmp.eq.s32.totalorder %s13, 1
    %p182 = por %p180, %p181
    %p183 = scmp.ne.s32.totalorder %s175, %s178
    %p184 = scmp.eq.s32.totalorder %s13, 0
    %p185 = por %p183, %p184
    %p186 = scmp.ne.s32.totalorder %s175, %s178
    %p187 = scmp.eq.s32.totalorder %s18, 1
    %p188 = por %p186, %p187
    %p189 = scmp.ne.s32.totalorder %s178, %s179
    %p190 = scmp.eq.s32.totalorder %s18, 0
    %p191 = por %p189, %p190
    %p192 = scmp.ne.s32.totalorder %s178, %s179
    %p193 = scmp.eq.s32.totalorder %s19, 1
    %p194 = por %p192, %p193
    %p196 = scmp.ne.s32.totalorder %s179, %s195
    %p197 = scmp.eq.s32.totalorder %s19, 0
    %p198 = por %p196, %p197
    %p199 = scmp.le.s32.totalorder 1, %s13
    %p200 = scmp.lt.s32.totalorder %s13, 3
    %p201 = pnand %p199, %p200
    %p202 = pneg %p201
    // Predicated region
    $region9: #{tpu_custom_call.1} parent=5 // pred_check
      _
    $region10: #{tpu_custom_call.1} parent=5 // pred_check_branch
      %204 = sbr.rel (%p201) target = $region12
    $region11: #{tpu_custom_call.1} parent=5 // pred_region
      %s205 = ssub.s32 %s13, 1
      // Predicated region
      $region13: #{tpu_custom_call.1} parent=11 // pred_check
        %p206 = pneg %p60
      $region14: #{tpu_custom_call.1} parent=11 // pred_check_branch
        %208 = sbr.rel (%p206) target = $region16
      $region15: #{tpu_custom_call.1} parent=11 // pred_region
        _
      $region16: #{tpu_custom_call.1} parent=11 // pred_fallthru
        _
      // Predicated region
      $region17: #{tpu_custom_call.1} parent=11 // pred_check
        %p209 = pneg %p81
      $region18: #{tpu_custom_call.1} parent=11 // pred_check_branch
        %211 = sbr.rel (%p209) target = $region20
      $region19: #{tpu_custom_call.1} parent=11 // pred_region
        _
      $region20: #{tpu_custom_call.1} parent=11 // pred_fallthru
        _
      // Predicated region
      $region21: #{tpu_custom_call.1} parent=11 // pred_check
        %p212 = pneg %p102
      $region22: #{tpu_custom_call.1} parent=11 // pred_check_branch
        %214 = sbr.rel (%p212) target = $region24
      $region23: #{tpu_custom_call.1} parent=11 // pred_region
        _
      $region24: #{tpu_custom_call.1} parent=11 // pred_fallthru
        _
      // Predicated region
      $region25: #{tpu_custom_call.1} parent=11 // pred_check
        %p215 = pneg %p123
      $region26: #{tpu_custom_call.1} parent=11 // pred_check_branch
        %217 = sbr.rel (%p215) target = $region28
      $region27: #{tpu_custom_call.1} parent=11 // pred_region
        _
      $region28: #{tpu_custom_call.1} parent=11 // pred_fallthru
        _
      // Predicated region
      $region29: #{tpu_custom_call.1} parent=11 // pred_check
        %p218 = pneg %p144
      $region30: #{tpu_custom_call.1} parent=11 // pred_check_branch
        %220 = sbr.rel (%p218) target = $region32
      $region31: #{tpu_custom_call.1} parent=11 // pred_region
        _
      $region32: #{tpu_custom_call.1} parent=11 // pred_fallthru
        _
      // Predicated region
      $region33: #{tpu_custom_call.1} parent=11 // pred_check
        %p221 = pneg %p165
      $region34: #{tpu_custom_call.1} parent=11 // pred_check_branch
        %223 = sbr.rel (%p221) target = $region36
      $region35: #{tpu_custom_call.1} parent=11 // pred_region
        _
      $region36: #{tpu_custom_call.1} parent=11 // pred_fallthru
        _
    $region12: #{tpu_custom_call.1} parent=5 // pred_fallthru
      _
    %p224 = scmp.lt.s32.totalorder %s13, 2
    // Predicated region
    $region37: #{tpu_custom_call.1} parent=5 // pred_check
      %p225 = pneg %p224
    $region38: #{tpu_custom_call.1} parent=5 // pred_check_branch
      %227 = sbr.rel (%p225) target = $region40
    $region39: #{tpu_custom_call.1} parent=5 // pred_region
      // Predicated region
      $region41: #{tpu_custom_call.1} parent=39 // pred_check
        %p228 = pneg %p33
      $region42: #{tpu_custom_call.1} parent=39 // pred_check_branch
        %230 = sbr.rel (%p228) target = $region44
      $region43: #{tpu_custom_call.1} parent=39 // pred_region
        %p231 = scmp.lt.s32.totalorder %s13, 1
        %s232 = scalar_select %p231, %s13, 1
        %s233 = smul.addr %s232, 32
        %s234 = smul.addr %s233, 8
        %s235 = scalar_lea.vmem %s0, %s234
      $region44: #{tpu_custom_call.1} parent=39 // pred_fallthru
        _
    $region40: #{tpu_custom_call.1} parent=5 // pred_fallthru
      _
    %p236 = scmp.le.s32.totalorder 1, %s13
    %p237 = scmp.lt.s32.totalorder %s13, 3
    %p238 = pnand %p236, %p237
    %p239 = pneg %p238
    // Predicated region
    $region45: #{tpu_custom_call.1} parent=5 // pred_check
      _
    $region46: #{tpu_custom_call.1} parent=5 // pred_check_branch
      %241 = sbr.rel (%p238) target = $region48
    $region47: #{tpu_custom_call.1} parent=5 // pred_region
      %s242 = ssub.s32 %s13, 1
      %p243 = scmp.lt.s32.totalorder %s18, 1
      %s244 = scalar_select %p243, %s18, 1
      %s245 = smul.addr %s244, 32
      %s246 = smul.addr %s245, 8
      %s247 = scalar_lea.vmem %s0, %s246
      %p248 = pneg %p39
      %p249 = pneg %p36
      %p250 = pneg %p60
      %p251 = pneg %p57
      %p252 = pneg %p81
      %p253 = pneg %p78
      %p254 = pneg %p102
      %p255 = pneg %p99
      %p256 = pneg %p123
      %p257 = pneg %p120
      %p258 = pneg %p144
      %p259 = pneg %p141
      %p260 = pneg %p165
      %p261 = pneg %p162
      %p262 = pneg %p191
      %p263 = pneg %p188
      %p264 = scmp.lt.s32.totalorder %s18, 1
      %s265 = scalar_select %p264, %s18, 1
      %s266 = smul.addr %s265, 32
      %s267 = smul.addr %s266, 8
      %s268 = scalar_lea.vmem %s7, %s267
      %p269 = scmp.lt.s32.totalorder %s18, 1
      %s270 = scalar_select %p269, %s18, 1
      %s271 = smul.addr %s270, 32
      %s272 = smul.addr %s271, 8
      %s273 = scalar_lea.vmem %s0, %s272
      %p274 = scmp.lt.s32.totalorder %s18, 1
      %s275 = scalar_select %p274, %s18, 1
      %s276 = smul.addr %s275, 32
      %s277 = smul.addr %s276, 8
      %s278 = scalar_lea.vmem %s7, %s277
      %vm280 = vcmask 97280
      %281 = vst.msk [vmem:[#allocation2] sm:$0xff] %vm280, 0.0
      %282 = vst.msk [vmem:[#allocation2 + $0x8] sm:$0xff] %vm280, 0.0
      %vm283 = vcmask 91136
      %284 = vst.msk [vmem:[#allocation2 + $0x10] sm:$0x3] %vm283, 0.0
      %s285 = scalar_lea.vmem [#allocation2], 408
      %286 = vst.msk [vmem:[%s285] sm:$0xff] %vm280, 0.0
      %287 = vst.msk [vmem:[%s285 + $0x8] sm:$0xff] %vm280, 0.0
      %288 = vst.msk [vmem:[%s285 + $0x10] sm:$0x3] %vm283, 0.0
      %vm289 = vcmask 90112
      %290 = vst.msk [vmem:[#allocation2] sm:$0x1] %vm289, 0.0
      %291 = vst.msk [vmem:[#allocation2 + $0x18] sm:$0x1] %vm289, 0.0
      %292 = vst.msk [vmem:[#allocation2 + $0x30] sm:$0x1] %vm289, 0.0
      %293 = vst.msk [vmem:[#allocation2 + $0x48] sm:$0x1] %vm289, 0.0
      %294 = vst.msk [vmem:[#allocation2 + $0x60] sm:$0x1] %vm289, 0.0
      %295 = vst.msk [vmem:[#allocation2 + $0x78] sm:$0x1] %vm289, 0.0
      %296 = vst.msk [vmem:[#allocation2 + $0x90] sm:$0x1] %vm289, 0.0
      %297 = vst.msk [vmem:[#allocation2 + $0xa8] sm:$0x1] %vm289, 0.0
      %298 = vst.msk [vmem:[#allocation2 + $0xc0] sm:$0x1] %vm289, 0.0
      %299 = vst.msk [vmem:[#allocation2 + $0xd8] sm:$0x1] %vm289, 0.0
      %300 = vst.msk [vmem:[#allocation2 + $0xf0] sm:$0x1] %vm289, 0.0
      %301 = vst.msk [vmem:[#allocation2 + $0x108] sm:$0x1] %vm289, 0.0
      %302 = vst.msk [vmem:[#allocation2 + $0x120] sm:$0x1] %vm289, 0.0
      %303 = vst.msk [vmem:[#allocation2 + $0x138] sm:$0x1] %vm289, 0.0
      %304 = vst.msk [vmem:[#allocation2 + $0x150] sm:$0x1] %vm289, 0.0
      %305 = vst.msk [vmem:[#allocation2 + $0x168] sm:$0x1] %vm289, 0.0
      %306 = vst.msk [vmem:[#allocation2 + $0x180] sm:$0x1] %vm289, 0.0
      %307 = vst.msk [vmem:[#allocation2 + $0x198] sm:$0x1] %vm289, 0.0
      %308 = vst.msk [vmem:[#allocation2 + $0x11] sm:$0x1] %vm289, 0.0
      %309 = vst.msk [vmem:[#allocation2 + $0x29] sm:$0x1] %vm289, 0.0
      %310 = vst.msk [vmem:[#allocation2 + $0x41] sm:$0x1] %vm289, 0.0
      %311 = vst.msk [vmem:[#allocation2 + $0x59] sm:$0x1] %vm289, 0.0
      %312 = vst.msk [vmem:[#allocation2 + $0x71] sm:$0x1] %vm289, 0.0
      %313 = vst.msk [vmem:[#allocation2 + $0x89] sm:$0x1] %vm289, 0.0
      %314 = vst.msk [vmem:[#allocation2 + $0xa1] sm:$0x1] %vm289, 0.0
      %315 = vst.msk [vmem:[#allocation2 + $0xb9] sm:$0x1] %vm289, 0.0
      %316 = vst.msk [vmem:[#allocation2 + $0xd1] sm:$0x1] %vm289, 0.0
      %317 = vst.msk [vmem:[#allocation2 + $0xe9] sm:$0x1] %vm289, 0.0
      %318 = vst.msk [vmem:[#allocation2 + $0x101] sm:$0x1] %vm289, 0.0
      %319 = vst.msk [vmem:[#allocation2 + $0x119] sm:$0x1] %vm289, 0.0
      %320 = vst.msk [vmem:[#allocation2 + $0x131] sm:$0x1] %vm289, 0.0
      %321 = vst.msk [vmem:[#allocation2 + $0x149] sm:$0x1] %vm289, 0.0
      %322 = vst.msk [vmem:[#allocation2 + $0x161] sm:$0x1] %vm289, 0.0
      %323 = vst.msk [vmem:[#allocation2 + $0x179] sm:$0x1] %vm289, 0.0
      %324 = vst.msk [vmem:[#allocation2 + $0x191] sm:$0x1] %vm289, 0.0
      %325 = vst.msk [vmem:[#allocation2 + $0x1a9] sm:$0x1] %vm289, 0.0
      %vm326 = vcmask 130048
      %327 = vst.msk [vmem:[#allocation3] sm:$0xff] %vm326, 0.0
      %328 = vst.msk [vmem:[#allocation3 + $0x8] sm:$0xff] %vm326, 0.0
      %vm329 = vcmask 123904
      %330 = vst.msk [vmem:[#allocation3 + $0x10] sm:$0x3] %vm329, 0.0
      %s331 = scalar_lea.vmem [#allocation3], 408
      %332 = vst.msk [vmem:[%s331] sm:$0xff] %vm326, 0.0
      %333 = vst.msk [vmem:[%s331 + $0x8] sm:$0xff] %vm326, 0.0
      %334 = vst.msk [vmem:[%s331 + $0x10] sm:$0x3] %vm329, 0.0
      %vm335 = vcmask 122880
      %336 = vst.msk [vmem:[#allocation3] sm:$0x1] %vm335, 0.0
      %337 = vst.msk [vmem:[#allocation3 + $0x18] sm:$0x1] %vm335, 0.0
      %338 = vst.msk [vmem:[#allocation3 + $0x30] sm:$0x1] %vm335, 0.0
      %339 = vst.msk [vmem:[#allocation3 + $0x48] sm:$0x1] %vm335, 0.0
      %340 = vst.msk [vmem:[#allocation3 + $0x60] sm:$0x1] %vm335, 0.0
      %341 = vst.msk [vmem:[#allocation3 + $0x78] sm:$0x1] %vm335, 0.0
      %342 = vst.msk [vmem:[#allocation3 + $0x90] sm:$0x1] %vm335, 0.0
      %343 = vst.msk [vmem:[#allocation3 + $0xa8] sm:$0x1] %vm335, 0.0
      %344 = vst.msk [vmem:[#allocation3 + $0xc0] sm:$0x1] %vm335, 0.0
      %345 = vst.msk [vmem:[#allocation3 + $0xd8] sm:$0x1] %vm335, 0.0
      %346 = vst.msk [vmem:[#allocation3 + $0xf0] sm:$0x1] %vm335, 0.0
      %347 = vst.msk [vmem:[#allocation3 + $0x108] sm:$0x1] %vm335, 0.0
      %348 = vst.msk [vmem:[#allocation3 + $0x120] sm:$0x1] %vm335, 0.0
      %349 = vst.msk [vmem:[#allocation3 + $0x138] sm:$0x1] %vm335, 0.0
      %350 = vst.msk [vmem:[#allocation3 + $0x150] sm:$0x1] %vm335, 0.0
      %351 = vst.msk [vmem:[#allocation3 + $0x168] sm:$0x1] %vm335, 0.0
      %352 = vst.msk [vmem:[#allocation3 + $0x180] sm:$0x1] %vm335, 0.0
      %353 = vst.msk [vmem:[#allocation3 + $0x198] sm:$0x1] %vm335, 0.0
      %354 = vst.msk [vmem:[#allocation3 + $0x11] sm:$0x1] %vm335, 0.0
      %355 = vst.msk [vmem:[#allocation3 + $0x29] sm:$0x1] %vm335, 0.0
      %356 = vst.msk [vmem:[#allocation3 + $0x41] sm:$0x1] %vm335, 0.0
      %357 = vst.msk [vmem:[#allocation3 + $0x59] sm:$0x1] %vm335, 0.0
      %358 = vst.msk [vmem:[#allocation3 + $0x71] sm:$0x1] %vm335, 0.0
      %359 = vst.msk [vmem:[#allocation3 + $0x89] sm:$0x1] %vm335, 0.0
      %360 = vst.msk [vmem:[#allocation3 + $0xa1] sm:$0x1] %vm335, 0.0
      %361 = vst.msk [vmem:[#allocation3 + $0xb9] sm:$0x1] %vm335, 0.0
      %362 = vst.msk [vmem:[#allocation3 + $0xd1] sm:$0x1] %vm335, 0.0
      %363 = vst.msk [vmem:[#allocation3 + $0xe9] sm:$0x1] %vm335, 0.0
      %364 = vst.msk [vmem:[#allocation3 + $0x101] sm:$0x1] %vm335, 0.0
      %365 = vst.msk [vmem:[#allocation3 + $0x119] sm:$0x1] %vm335, 0.0
      %366 = vst.msk [vmem:[#allocation3 + $0x131] sm:$0x1] %vm335, 0.0
      %367 = vst.msk [vmem:[#allocation3 + $0x149] sm:$0x1] %vm335, 0.0
      %368 = vst.msk [vmem:[#allocation3 + $0x161] sm:$0x1] %vm335, 0.0
      %369 = vst.msk [vmem:[#allocation3 + $0x179] sm:$0x1] %vm335, 0.0
      %370 = vst.msk [vmem:[#allocation3 + $0x191] sm:$0x1] %vm335, 0.0
      %371 = vst.msk [vmem:[#allocation3 + $0x1a9] sm:$0x1] %vm335, 0.0
      %v372 = vld [vmem:[%s273] sm:$0xff]
      %v373 = vld [vmem:[%s273 + $0x8] sm:$0xff]
      %v374 = vld [vmem:[%s273 + $0x10] sm:$0xff]
      %v375 = vld [vmem:[%s273 + $0x18] sm:$0xff]
      %v376 = vld [vmem:[%s273 + $0x20] sm:$0xff]
      %v377 = vld [vmem:[%s273 + $0x28] sm:$0xff]
      %v378 = vld [vmem:[%s273 + $0x30] sm:$0xff]
      %v379 = vld [vmem:[%s273 + $0x38] sm:$0xff]
      %v380 = vld [vmem:[%s273 + $0x40] sm:$0xff]
      %v381 = vld [vmem:[%s273 + $0x48] sm:$0xff]
      %v382 = vld [vmem:[%s273 + $0x50] sm:$0xff]
      %v383 = vld [vmem:[%s273 + $0x58] sm:$0xff]
      %v384 = vld [vmem:[%s273 + $0x60] sm:$0xff]
      %v385 = vld [vmem:[%s273 + $0x68] sm:$0xff]
      %v386 = vld [vmem:[%s273 + $0x70] sm:$0xff]
      %v387 = vld [vmem:[%s273 + $0x78] sm:$0xff]
      %v388 = vld [vmem:[%s273 + $0x80] sm:$0xff]
      %v389 = vld [vmem:[%s273 + $0x88] sm:$0xff]
      %v390 = vld [vmem:[%s273 + $0x90] sm:$0xff]
      %v391 = vld [vmem:[%s273 + $0x98] sm:$0xff]
      %v392 = vld [vmem:[%s273 + $0xa0] sm:$0xff]
      %v393 = vld [vmem:[%s273 + $0xa8] sm:$0xff]
      %v394 = vld [vmem:[%s273 + $0xb0] sm:$0xff]
      %v395 = vld [vmem:[%s273 + $0xb8] sm:$0xff]
      %v396 = vld [vmem:[%s273 + $0xc0] sm:$0xff]
      %v397 = vld [vmem:[%s273 + $0xc8] sm:$0xff]
      %v398 = vld [vmem:[%s273 + $0xd0] sm:$0xff]
      %v399 = vld [vmem:[%s273 + $0xd8] sm:$0xff]
      %v400 = vld [vmem:[%s273 + $0xe0] sm:$0xff]
      %v401 = vld [vmem:[%s273 + $0xe8] sm:$0xff]
      %v402 = vld [vmem:[%s273 + $0xf0] sm:$0xff]
      %v403 = vld [vmem:[%s273 + $0xf8] sm:$0xff]
      %s404 = scalar_lea.vmem [#allocation2], 24
      %405 = vst.msk [vmem:[%s404 + $0x1] sm:$0xff] %vm280, %v372
      %406 = vst.msk [vmem:[%s404 + $0x9] sm:$0xff] %vm280, %v373
      %407 = vst.msk [vmem:[%s404 + $0x19] sm:$0xff] %vm280, %v374
      %408 = vst.msk [vmem:[%s404 + $0x21] sm:$0xff] %vm280, %v375
      %409 = vst.msk [vmem:[%s404 + $0x31] sm:$0xff] %vm280, %v376
      %410 = vst.msk [vmem:[%s404 + $0x39] sm:$0xff] %vm280, %v377
      %411 = vst.msk [vmem:[%s404 + $0x49] sm:$0xff] %vm280, %v378
      %412 = vst.msk [vmem:[%s404 + $0x51] sm:$0xff] %vm280, %v379
      %413 = vst.msk [vmem:[%s404 + $0x61] sm:$0xff] %vm280, %v380
      %414 = vst.msk [vmem:[%s404 + $0x69] sm:$0xff] %vm280, %v381
      %415 = vst.msk [vmem:[%s404 + $0x79] sm:$0xff] %vm280, %v382
      %416 = vst.msk [vmem:[%s404 + $0x81] sm:$0xff] %vm280, %v383
      %417 = vst.msk [vmem:[%s404 + $0x91] sm:$0xff] %vm280, %v384
      %418 = vst.msk [vmem:[%s404 + $0x99] sm:$0xff] %vm280, %v385
      %419 = vst.msk [vmem:[%s404 + $0xa9] sm:$0xff] %vm280, %v386
      %420 = vst.msk [vmem:[%s404 + $0xb1] sm:$0xff] %vm280, %v387
      %421 = vst.msk [vmem:[%s404 + $0xc1] sm:$0xff] %vm280, %v388
      %422 = vst.msk [vmem:[%s404 + $0xc9] sm:$0xff] %vm280, %v389
      %423 = vst.msk [vmem:[%s404 + $0xd9] sm:$0xff] %vm280, %v390
      %424 = vst.msk [vmem:[%s404 + $0xe1] sm:$0xff] %vm280, %v391
      %425 = vst.msk [vmem:[%s404 + $0xf1] sm:$0xff] %vm280, %v392
      %426 = vst.msk [vmem:[%s404 + $0xf9] sm:$0xff] %vm280, %v393
      %427 = vst.msk [vmem:[%s404 + $0x109] sm:$0xff] %vm280, %v394
      %428 = vst.msk [vmem:[%s404 + $0x111] sm:$0xff] %vm280, %v395
      %429 = vst.msk [vmem:[%s404 + $0x121] sm:$0xff] %vm280, %v396
      %430 = vst.msk [vmem:[%s404 + $0x129] sm:$0xff] %vm280, %v397
      %431 = vst.msk [vmem:[%s404 + $0x139] sm:$0xff] %vm280, %v398
      %432 = vst.msk [vmem:[%s404 + $0x141] sm:$0xff] %vm280, %v399
      %433 = vst.msk [vmem:[%s404 + $0x151] sm:$0xff] %vm280, %v400
      %434 = vst.msk [vmem:[%s404 + $0x159] sm:$0xff] %vm280, %v401
      %435 = vst.msk [vmem:[%s404 + $0x169] sm:$0xff] %vm280, %v402
      %436 = vst.msk [vmem:[%s404 + $0x171] sm:$0xff] %vm280, %v403
      %v437 = vld [vmem:[%s2] sm:$0x1]
      %v438 = vld [vmem:[%s4] sm:$0x1]
      %v439 = vld [vmem:[%s6] sm:$0x1]
      %v440 = vld [vmem:[#allocation2] sm:$0xff]
      %v441 = vld [vmem:[#allocation2 + $0x8] sm:$0xff]
      %v442 = vld [vmem:[#allocation2 + $0x18] sm:$0xff]
      %v443 = vld [vmem:[#allocation2 + $0x20] sm:$0xff]
      %v444 = vld [vmem:[#allocation2 + $0x30] sm:$0xff]
      %v445 = vld [vmem:[#allocation2 + $0x38] sm:$0xff]
      %v446 = vld [vmem:[#allocation2 + $0x48] sm:$0xff]
      %v447 = vld [vmem:[#allocation2 + $0x50] sm:$0xff]
      %v448 = vld [vmem:[#allocation2 + $0x60] sm:$0xff]
      %v449 = vld [vmem:[#allocation2 + $0x68] sm:$0xff]
      %v450 = vld [vmem:[#allocation2 + $0x78] sm:$0xff]
      %v451 = vld [vmem:[#allocation2 + $0x80] sm:$0xff]
      %v452 = vld [vmem:[#allocation2 + $0x90] sm:$0xff]
      %v453 = vld [vmem:[#allocation2 + $0x98] sm:$0xff]
      %v454 = vld [vmem:[#allocation2 + $0xa8] sm:$0xff]
      %v455 = vld [vmem:[#allocation2 + $0xb0] sm:$0xff]
      %v456 = vld [vmem:[#allocation2 + $0xc0] sm:$0xff]
      %v457 = vld [vmem:[#allocation2 + $0xc8] sm:$0xff]
      %v458 = vld [vmem:[#allocation2 + $0xd8] sm:$0xff]
      %v459 = vld [vmem:[#allocation2 + $0xe0] sm:$0xff]
      %v460 = vld [vmem:[#allocation2 + $0xf0] sm:$0xff]
      %v461 = vld [vmem:[#allocation2 + $0xf8] sm:$0xff]
      %v462 = vld [vmem:[#allocation2 + $0x108] sm:$0xff]
      %v463 = vld [vmem:[#allocation2 + $0x110] sm:$0xff]
      %v464 = vld [vmem:[#allocation2 + $0x120] sm:$0xff]
      %v465 = vld [vmem:[#allocation2 + $0x128] sm:$0xff]
      %v466 = vld [vmem:[#allocation2 + $0x138] sm:$0xff]
      %v467 = vld [vmem:[#allocation2 + $0x140] sm:$0xff]
      %v468 = vld [vmem:[#allocation2 + $0x150] sm:$0xff]
      %v469 = vld [vmem:[#allocation2 + $0x158] sm:$0xff]
      %v470 = vld [vmem:[#allocation2 + $0x168] sm:$0xff]
      %v471 = vld [vmem:[#allocation2 + $0x170] sm:$0xff]
      %v472 = vpack.c.bf16 %v441, %v440
      %v473 = vpack.c.bf16 %v443, %v442
      %v474 = vpack.c.bf16 %v445, %v444
      %v475 = vpack.c.bf16 %v447, %v446
      %v476 = vpack.c.bf16 %v449, %v448
      %v477 = vpack.c.bf16 %v451, %v450
      %v478 = vpack.c.bf16 %v453, %v452
      %v479 = vpack.c.bf16 %v455, %v454
      %v480 = vpack.c.bf16 %v457, %v456
      %v481 = vpack.c.bf16 %v459, %v458
      %v482 = vpack.c.bf16 %v461, %v460
      %v483 = vpack.c.bf16 %v463, %v462
      %v484 = vpack.c.bf16 %v465, %v464
      %v485 = vpack.c.bf16 %v467, %v466
      %v486 = vpack.c.bf16 %v469, %v468
      %v487 = vpack.c.bf16 %v471, %v470
      %v488 = vld [vmem:[%s1] sm:$0xf]
      %v489 = vld [vmem:[%s1 + $0x4] sm:$0x3]
      %v490 = vld [vmem:[#allocation2 + $0x1] sm:$0xff]
      %v491 = vld [vmem:[#allocation2 + $0x9] sm:$0xff]
      %v492 = vld [vmem:[#allocation2 + $0x19] sm:$0xff]
      %v493 = vld [vmem:[#allocation2 + $0x21] sm:$0xff]
      %v494 = vld [vmem:[#allocation2 + $0x31] sm:$0xff]
      %v495 = vld [vmem:[#allocation2 + $0x39] sm:$0xff]
      %v496 = vld [vmem:[#allocation2 + $0x49] sm:$0xff]
      %v497 = vld [vmem:[#allocation2 + $0x51] sm:$0xff]
      %v498 = vld [vmem:[#allocation2 + $0x61] sm:$0xff]
      %v499 = vld [vmem:[#allocation2 + $0x69] sm:$0xff]
      %v500 = vld [vmem:[#allocation2 + $0x79] sm:$0xff]
      %v501 = vld [vmem:[#allocation2 + $0x81] sm:$0xff]
      %v502 = vld [vmem:[#allocation2 + $0x91] sm:$0xff]
      %v503 = vld [vmem:[#allocation2 + $0x99] sm:$0xff]
      %v504 = vld [vmem:[#allocation2 + $0xa9] sm:$0xff]
      %v505 = vld [vmem:[#allocation2 + $0xb1] sm:$0xff]
      %v506 = vld [vmem:[#allocation2 + $0xc1] sm:$0xff]
      %v507 = vld [vmem:[#allocation2 + $0xc9] sm:$0xff]
      %v508 = vld [vmem:[#allocation2 + $0xd9] sm:$0xff]
      %v509 = vld [vmem:[#allocation2 + $0xe1] sm:$0xff]
      %v510 = vld [vmem:[#allocation2 + $0xf1] sm:$0xff]
      %v511 = vld [vmem:[#allocation2 + $0xf9] sm:$0xff]
      %v512 = vld [vmem:[#allocation2 + $0x109] sm:$0xff]
      %v513 = vld [vmem:[#allocation2 + $0x111] sm:$0xff]
      %v514 = vld [vmem:[#allocation2 + $0x121] sm:$0xff]
      %v515 = vld [vmem:[#allocation2 + $0x129] sm:$0xff]
      %v516 = vld [vmem:[#allocation2 + $0x139] sm:$0xff]
      %v517 = vld [vmem:[#allocation2 + $0x141] sm:$0xff]
      %v518 = vld [vmem:[#allocation2 + $0x151] sm:$0xff]
      %v519 = vld [vmem:[#allocation2 + $0x159] sm:$0xff]
      %v520 = vld [vmem:[#allocation2 + $0x169] sm:$0xff]
      %v521 = vld [vmem:[#allocation2 + $0x171] sm:$0xff]
      %v522 = vpack.c.bf16 %v491, %v490
      %v523 = vpack.c.bf16 %v493, %v492
      %v524 = vpack.c.bf16 %v495, %v494
      %v525 = vpack.c.bf16 %v497, %v496
      %v526 = vpack.c.bf16 %v499, %v498
      %v527 = vpack.c.bf16 %v501, %v500
      %v528 = vpack.c.bf16 %v503, %v502
      %v529 = vpack.c.bf16 %v505, %v504
      %v530 = vpack.c.bf16 %v507, %v506
      %v531 = vpack.c.bf16 %v509, %v508
      %v532 = vpack.c.bf16 %v511, %v510
      %v533 = vpack.c.bf16 %v513, %v512
      %v534 = vpack.c.bf16 %v515, %v514
      %v535 = vpack.c.bf16 %v517, %v516
      %v536 = vpack.c.bf16 %v519, %v518
      %v537 = vpack.c.bf16 %v521, %v520
      %s538 = scalar_lea.vmem %s1, 8
      %v539 = vld [vmem:[%s538] sm:$0xf]
      %v540 = vld [vmem:[%s538 + $0x4] sm:$0x3]
      %v543 = vunpack.c.l.b16 %v539
      %v544 = vunpack.c.l.b16 %v540
      %v545 = vpack.c.b16 %v544, %v543
      %v547 = vsel %vm280, %v522, 0
      %v550 = vsel %vm280, %v523, 0
      %v553 = vsel %vm280, %v524, 0
      %v556 = vsel %vm280, %v525, 0
      %v559 = vsel %vm280, %v526, 0
      %v562 = vsel %vm280, %v527, 0
      %v565 = vsel %vm280, %v528, 0
      %v568 = vsel %vm280, %v529, 0
      %v571 = vsel %vm280, %v530, 0
      %v574 = vsel %vm280, %v531, 0
      %v577 = vsel %vm280, %v532, 0
      %v580 = vsel %vm280, %v533, 0
      %v583 = vsel %vm280, %v534, 0
      %v586 = vsel %vm280, %v535, 0
      %v589 = vsel %vm280, %v536, 0
      %v592 = vsel %vm280, %v537, 0
      %vm594 = vcmask 1045504
      %v596 = vsel %vm594, %v545, 0
      %598 = vmatprep.subr.bf16.mxu0 0
      %599 = vmatpush1.bf16.msra.mxu0 %v596
      %600 = vmatprep.subr.bf16.mxu0 0
      %601 = vmatpush1.bf16.msra.mxu0 0
      %602 = vmatprep.subr.bf16.mxu0 0
      %603 = vmatpush1.bf16.msra.mxu0 0
      %604 = vmatprep.subr.bf16.mxu0 0
      %605 = vmatpush1.bf16.msra.mxu0 0
      %606 = vmatprep.subr.bf16.mxu0 0
      %607 = vmatpush1.bf16.msra.mxu0 0
      %608 = vmatprep.subr.bf16.mxu0 0
      %609 = vmatpush1.bf16.msra.mxu0 0
      %610 = vmatprep.subr.bf16.mxu0 0
      %611 = vmatpush1.bf16.msra.mxu0 0
      %612 = vmatprep.subr.bf16.mxu0 0
      %613 = vmatpush1.bf16.msra.mxu0 0
      %614 = vmatprep.subr.bf16.mxu0 0
      %615 = vmatpush1.bf16.msra.mxu0 0
      %616 = vmatprep.subr.bf16.mxu0 0
      %617 = vmatpush1.bf16.msra.mxu0 0
      %618 = vmatprep.subr.bf16.mxu0 0
      %619 = vmatpush1.bf16.msra.mxu0 0
      %620 = vmatprep.subr.bf16.mxu0 0
      %621 = vmatpush1.bf16.msra.mxu0 0
      %622 = vmatprep.subr.bf16.mxu0 0
      %623 = vmatpush1.bf16.msra.mxu0 0
      %624 = vmatprep.subr.bf16.mxu0 0
      %625 = vmatpush1.bf16.msra.mxu0 0
      %626 = vmatprep.subr.bf16.mxu0 0
      %627 = vmatpush1.bf16.msra.mxu0 0
      %628 = vmatprep.subr.bf16.mxu0 0
      %629 = vmatpush1.bf16.msra.mxu0 0
      %630 = vmatprep.mubr.bf16.mxu0 0
      %631 = vmatmul.mubr.bf16.gmra.mrb[0].mxu0 %v547
      %v632 = vpop.f32.mrb[0].mxu0
      %v633 = vadd.f32 0.0, %v632
      %v634 = vpop.f32.mrb[0].mxu0
      %v635 = vpop.f32.mrb[0].mxu0
      %v636 = vadd.f32 0.0, %v635
      %v637 = vpop.f32.mrb[0].mxu0
      %638 = vmatprep.mubr.bf16.mxu0 0
      %639 = vmatmul.mubr.bf16.gmra.mrb[0].mxu0 %v550
      %v640 = vpop.f32.mrb[0].mxu0
      %v641 = vadd.f32 0.0, %v640
      %v642 = vpop.f32.mrb[0].mxu0
      %v643 = vpop.f32.mrb[0].mxu0
      %v644 = vadd.f32 0.0, %v643
      %v645 = vpop.f32.mrb[0].mxu0
      %646 = vmatprep.mubr.bf16.mxu0 0
      %647 = vmatmul.mubr.bf16.gmra.mrb[0].mxu0 %v553
      %v648 = vpop.f32.mrb[0].mxu0
      %v649 = vadd.f32 0.0, %v648
      %v650 = vpop.f32.mrb[0].mxu0
      %v651 = vpop.f32.mrb[0].mxu0
      %v652 = vadd.f32 0.0, %v651
      %v653 = vpop.f32.mrb[0].mxu0
      %654 = vmatprep.mubr.bf16.mxu0 0
      %655 = vmatmul.mubr.bf16.gmra.mrb[0].mxu0 %v556
      %v656 = vpop.f32.mrb[0].mxu0
      %v657 = vadd.f32 0.0, %v656
      %v658 = vpop.f32.mrb[0].mxu0
      %v659 = vpop.f32.mrb[0].mxu0
      %v660 = vadd.f32 0.0, %v659
      %v661 = vpop.f32.mrb[0].mxu0
      %662 = vmatprep.mubr.bf16.mxu0 0
      %663 = vmatmul.mubr.bf16.gmra.mrb[0].mxu0 %v559
      %v664 = vpop.f32.mrb[0].mxu0
      %v665 = vadd.f32 0.0, %v664
      %v666 = vpop.f32.mrb[0].mxu0
      %v667 = vpop.f32.mrb[0].mxu0
      %v668 = vadd.f32 0.0, %v667
      %v669 = vpop.f32.mrb[0].mxu0
      %670 = vmatprep.mubr.bf16.mxu0 0
      %671 = vmatmul.mubr.bf16.gmra.mrb[0].mxu0 %v562
      %v672 = vpop.f32.mrb[0].mxu0
      %v673 = vadd.f32 0.0, %v672
      %v674 = vpop.f32.mrb[0].mxu0
      %v675 = vpop.f32.mrb[0].mxu0
      %v676 = vadd.f32 0.0, %v675
      %v677 = vpop.f32.mrb[0].mxu0
      %678 = vmatprep.mubr.bf16.mxu0 0
      %679 = vmatmul.mubr.bf16.gmra.mrb[0].mxu0 %v565
      %v680 = vpop.f32.mrb[0].mxu0
      %v681 = vadd.f32 0.0, %v680
      %v682 = vpop.f32.mrb[0].mxu0
      %v683 = vpop.f32.mrb[0].mxu0
      %v684 = vadd.f32 0.0, %v683
      %v685 = vpop.f32.mrb[0].mxu0
      %686 = vmatprep.mubr.bf16.mxu0 0
      %687 = vmatmul.mubr.bf16.gmra.mrb[0].mxu0 %v568
      %v688 = vpop.f32.mrb[0].mxu0
      %v689 = vadd.f32 0.0, %v688
      %v690 = vpop.f32.mrb[0].mxu0
      %v691 = vpop.f32.mrb[0].mxu0
      %v692 = vadd.f32 0.0, %v691
      %v693 = vpop.f32.mrb[0].mxu0
      %694 = vmatprep.mubr.bf16.mxu0 0
      %695 = vmatmul.mubr.bf16.gmra.mrb[0].mxu0 %v571
      %v696 = vpop.f32.mrb[0].mxu0
      %v697 = vadd.f32 0.0, %v696
      %v698 = vpop.f32.mrb[0].mxu0
      %v699 = vpop.f32.mrb[0].mxu0
      %v700 = vadd.f32 0.0, %v699
      %v701 = vpop.f32.mrb[0].mxu0
      %702 = vmatprep.mubr.bf16.mxu0 0
      %703 = vmatmul.mubr.bf16.gmra.mrb[0].mxu0 %v574
      %v704 = vpop.f32.mrb[0].mxu0
      %v705 = vadd.f32 0.0, %v704
      %v706 = vpop.f32.mrb[0].mxu0
      %v707 = vpop.f32.mrb[0].mxu0
      %v708 = vadd.f32 0.0, %v707
      %v709 = vpop.f32.mrb[0].mxu0
      %710 = vmatprep.mubr.bf16.mxu0 0
      %711 = vmatmul.mubr.bf16.gmra.mrb[0].mxu0 %v577
      %v712 = vpop.f32.mrb[0].mxu0
      %v713 = vadd.f32 0.0, %v712
      %v714 = vpop.f32.mrb[0].mxu0
      %v715 = vpop.f32.mrb[0].mxu0
      %v716 = vadd.f32 0.0, %v715
      %v717 = vpop.f32.mrb[0].mxu0
      %718 = vmatprep.mubr.bf16.mxu0 0
      %719 = vmatmul.mubr.bf16.gmra.mrb[0].mxu0 %v580
      %v720 = vpop.f32.mrb[0].mxu0
      %v721 = vadd.f32 0.0, %v720
      %v722 = vpop.f32.mrb[0].mxu0
      %v723 = vpop.f32.mrb[0].mxu0
      %v724 = vadd.f32 0.0, %v723
      %v725 = vpop.f32.mrb[0].mxu0
      %726 = vmatprep.mubr.bf16.mxu0 0
      %727 = vmatmul.mubr.bf16.gmra.mrb[0].mxu0 %v583
      %v728 = vpop.f32.mrb[0].mxu0
      %v729 = vadd.f32 0.0, %v728
      %v730 = vpop.f32.mrb[0].mxu0
      %v731 = vpop.f32.mrb[0].mxu0
      %v732 = vadd.f32 0.0, %v731
      %v733 = vpop.f32.mrb[0].mxu0
      %734 = vmatprep.mubr.bf16.mxu0 0
      %735 = vmatmul.mubr.bf16.gmra.mrb[0].mxu0 %v586
      %v736 = vpop.f32.mrb[0].mxu0
      %v737 = vadd.f32 0.0, %v736
      %v738 = vpop.f32.mrb[0].mxu0
      %v739 = vpop.f32.mrb[0].mxu0
      %v740 = vadd.f32 0.0, %v739
      %v741 = vpop.f32.mrb[0].mxu0
      %742 = vmatprep.mubr.bf16.mxu0 0
      %743 = vmatmul.mubr.bf16.gmra.mrb[0].mxu0 %v589
      %v744 = vpop.f32.mrb[0].mxu0
      %v745 = vadd.f32 0.0, %v744
      %v746 = vpop.f32.mrb[0].mxu0
      %v747 = vpop.f32.mrb[0].mxu0
      %v748 = vadd.f32 0.0, %v747
      %v749 = vpop.f32.mrb[0].mxu0
      %750 = vmatprep.mubr.bf16.mxu0 0
      %751 = vmatmul.mubr.bf16.gmra.mrb[0].mxu0 %v592
      %v752 = vpop.f32.mrb[0].mxu0
      %v753 = vadd.f32 0.0, %v752
      %v754 = vpop.f32.mrb[0].mxu0
      %v755 = vpop.f32.mrb[0].mxu0
      %v756 = vadd.f32 0.0, %v755
      %v757 = vpop.f32.mrb[0].mxu0
      %758 = vdwg.mxu0
      %v761 = vunpack.c.l.b16 %v488
      %v762 = vunpack.c.l.b16 %v489
      %v763 = vpack.c.b16 %v762, %v761
      %v765 = vsel %vm280, %v472, 0
      %v768 = vsel %vm280, %v473, 0
      %v771 = vsel %vm280, %v474, 0
      %v774 = vsel %vm280, %v475, 0
      %v777 = vsel %vm280, %v476, 0
      %v780 = vsel %vm280, %v477, 0
      %v783 = vsel %vm280, %v478, 0
      %v786 = vsel %vm280, %v479, 0
      %v789 = vsel %vm280, %v480, 0
      %v792 = vsel %vm280, %v481, 0
      %v795 = vsel %vm280, %v482, 0
      %v798 = vsel %vm280, %v483, 0
      %v801 = vsel %vm280, %v484, 0
      %v804 = vsel %vm280, %v485, 0
      %v807 = vsel %vm280, %v486, 0
      %v810 = vsel %vm280, %v487, 0
      %v813 = vsel %vm594, %v763, 0
      %815 = vmatprep.subr.bf16.mxu0 0
      %816 = vmatpush1.bf16.msra.mxu0 %v813
      %817 = vmatprep.subr.bf16.mxu0 0
      %818 = vmatpush1.bf16.msra.mxu0 0
      %819 = vmatprep.subr.bf16.mxu0 0
      %820 = vmatpush1.bf16.msra.mxu0 0
      %821 = vmatprep.subr.bf16.mxu0 0
      %822 = vmatpush1.bf16.msra.mxu0 0
      %823 = vmatprep.subr.bf16.mxu0 0
      %824 = vmatpush1.bf16.msra.mxu0 0
      %825 = vmatprep.subr.bf16.mxu0 0
      %826 = vmatpush1.bf16.msra.mxu0 0
      %827 = vmatprep.subr.bf16.mxu0 0
      %828 = vmatpush1.bf16.msra.mxu0 0
      %829 = vmatprep.subr.bf16.mxu0 0
      %830 = vmatpush1.bf16.msra.mxu0 0
      %831 = vmatprep.subr.bf16.mxu0 0
      %832 = vmatpush1.bf16.msra.mxu0 0
      %833 = vmatprep.subr.bf16.mxu0 0
      %834 = vmatpush1.bf16.msra.mxu0 0
      %835 = vmatprep.subr.bf16.mxu0 0
      %836 = vmatpush1.bf16.msra.mxu0 0
      %837 = vmatprep.subr.bf16.mxu0 0
      %838 = vmatpush1.bf16.msra.mxu0 0
      %839 = vmatprep.subr.bf16.mxu0 0
      %840 = vmatpush1.bf16.msra.mxu0 0
      %841 = vmatprep.subr.bf16.mxu0 0
      %842 = vmatpush1.bf16.msra.mxu0 0
      %843 = vmatprep.subr.bf16.mxu0 0
      %844 = vmatpush1.bf16.msra.mxu0 0
      %845 = vmatprep.subr.bf16.mxu0 0
      %846 = vmatpush1.bf16.msra.mxu0 0
      %847 = vmatprep.mubr.bf16.mxu0 0
      %848 = vmatmul.mubr.bf16.gmra.mrb[0].mxu0 %v765
      %v849 = vpop.f32.mrb[0].mxu0
      %v850 = vadd.f32 %v633, %v849
      %v851 = vpop.f32.mrb[0].mxu0
      %v852 = vpop.f32.mrb[0].mxu0
      %v853 = vadd.f32 %v636, %v852
      %v854 = vpop.f32.mrb[0].mxu0
      %855 = vmatprep.mubr.bf16.mxu0 0
      %856 = vmatmul.mubr.bf16.gmra.mrb[0].mxu0 %v768
      %v857 = vpop.f32.mrb[0].mxu0
      %v858 = vadd.f32 %v641, %v857
      %v859 = vpop.f32.mrb[0].mxu0
      %v860 = vpop.f32.mrb[0].mxu0
      %v861 = vadd.f32 %v644, %v860
      %v862 = vpop.f32.mrb[0].mxu0
      %863 = vmatprep.mubr.bf16.mxu0 0
      %864 = vmatmul.mubr.bf16.gmra.mrb[0].mxu0 %v771
      %v865 = vpop.f32.mrb[0].mxu0
      %v866 = vadd.f32 %v649, %v865
      %v867 = vpop.f32.mrb[0].mxu0
      %v868 = vpop.f32.mrb[0].mxu0
      %v869 = vadd.f32 %v652, %v868
      %v870 = vpop.f32.mrb[0].mxu0
      %871 = vmatprep.mubr.bf16.mxu0 0
      %872 = vmatmul.mubr.bf16.gmra.mrb[0].mxu0 %v774
      %v873 = vpop.f32.mrb[0].mxu0
      %v874 = vadd.f32 %v657, %v873
      %v875 = vpop.f32.mrb[0].mxu0
      %v876 = vpop.f32.mrb[0].mxu0
      %v877 = vadd.f32 %v660, %v876
      %v878 = vpop.f32.mrb[0].mxu0
      %879 = vmatprep.mubr.bf16.mxu0 0
      %880 = vmatmul.mubr.bf16.gmra.mrb[0].mxu0 %v777
      %v881 = vpop.f32.mrb[0].mxu0
      %v882 = vadd.f32 %v665, %v881
      %v883 = vpop.f32.mrb[0].mxu0
      %v884 = vpop.f32.mrb[0].mxu0
      %v885 = vadd.f32 %v668, %v884
      %v886 = vpop.f32.mrb[0].mxu0
      %887 = vmatprep.mubr.bf16.mxu0 0
      %888 = vmatmul.mubr.bf16.gmra.mrb[0].mxu0 %v780
      %v889 = vpop.f32.mrb[0].mxu0
      %v890 = vadd.f32 %v673, %v889
      %v891 = vpop.f32.mrb[0].mxu0
      %v892 = vpop.f32.mrb[0].mxu0
      %v893 = vadd.f32 %v676, %v892
      %v894 = vpop.f32.mrb[0].mxu0
      %895 = vmatprep.mubr.bf16.mxu0 0
      %896 = vmatmul.mubr.bf16.gmra.mrb[0].mxu0 %v783
      %v897 = vpop.f32.mrb[0].mxu0
      %v898 = vadd.f32 %v681, %v897
      %v899 = vpop.f32.mrb[0].mxu0
      %v900 = vpop.f32.mrb[0].mxu0
      %v901 = vadd.f32 %v684, %v900
      %v902 = vpop.f32.mrb[0].mxu0
      %903 = vmatprep.mubr.bf16.mxu0 0
      %904 = vmatmul.mubr.bf16.gmra.mrb[0].mxu0 %v786
      %v905 = vpop.f32.mrb[0].mxu0
      %v906 = vadd.f32 %v689, %v905
      %v907 = vpop.f32.mrb[0].mxu0
      %v908 = vpop.f32.mrb[0].mxu0
      %v909 = vadd.f32 %v692, %v908
      %v910 = vpop.f32.mrb[0].mxu0
      %911 = vmatprep.mubr.bf16.mxu0 0
      %912 = vmatmul.mubr.bf16.gmra.mrb[0].mxu0 %v789
      %v913 = vpop.f32.mrb[0].mxu0
      %v914 = vadd.f32 %v697, %v913
      %v915 = vpop.f32.mrb[0].mxu0
      %v916 = vpop.f32.mrb[0].mxu0
      %v917 = vadd.f32 %v700, %v916
      %v918 = vpop.f32.mrb[0].mxu0
      %919 = vmatprep.mubr.bf16.mxu0 0
      %920 = vmatmul.mubr.bf16.gmra.mrb[0].mxu0 %v792
      %v921 = vpop.f32.mrb[0].mxu0
      %v922 = vadd.f32 %v705, %v921
      %v923 = vpop.f32.mrb[0].mxu0
      %v924 = vpop.f32.mrb[0].mxu0
      %v925 = vadd.f32 %v708, %v924
      %v926 = vpop.f32.mrb[0].mxu0
      %927 = vmatprep.mubr.bf16.mxu0 0
      %928 = vmatmul.mubr.bf16.gmra.mrb[0].mxu0 %v795
      %v929 = vpop.f32.mrb[0].mxu0
      %v930 = vadd.f32 %v713, %v929
      %v931 = vpop.f32.mrb[0].mxu0
      %v932 = vpop.f32.mrb[0].mxu0
      %v933 = vadd.f32 %v716, %v932
      %v934 = vpop.f32.mrb[0].mxu0
      %935 = vmatprep.mubr.bf16.mxu0 0
      %936 = vmatmul.mubr.bf16.gmra.mrb[0].mxu0 %v798
      %v937 = vpop.f32.mrb[0].mxu0
      %v938 = vadd.f32 %v721, %v937
      %v939 = vpop.f32.mrb[0].mxu0
      %v940 = vpop.f32.mrb[0].mxu0
      %v941 = vadd.f32 %v724, %v940
      %v942 = vpop.f32.mrb[0].mxu0
      %943 = vmatprep.mubr.bf16.mxu0 0
      %944 = vmatmul.mubr.bf16.gmra.mrb[0].mxu0 %v801
      %v945 = vpop.f32.mrb[0].mxu0
      %v946 = vadd.f32 %v729, %v945
      %v947 = vpop.f32.mrb[0].mxu0
      %v948 = vpop.f32.mrb[0].mxu0
      %v949 = vadd.f32 %v732, %v948
      %v950 = vpop.f32.mrb[0].mxu0
      %951 = vmatprep.mubr.bf16.mxu0 0
      %952 = vmatmul.mubr.bf16.gmra.mrb[0].mxu0 %v804
      %v953 = vpop.f32.mrb[0].mxu0
      %v954 = vadd.f32 %v737, %v953
      %v955 = vpop.f32.mrb[0].mxu0
      %v956 = vpop.f32.mrb[0].mxu0
      %v957 = vadd.f32 %v740, %v956
      %v958 = vpop.f32.mrb[0].mxu0
      %959 = vmatprep.mubr.bf16.mxu0 0
      %960 = vmatmul.mubr.bf16.gmra.mrb[0].mxu0 %v807
      %v961 = vpop.f32.mrb[0].mxu0
      %v962 = vadd.f32 %v745, %v961
      %v963 = vpop.f32.mrb[0].mxu0
      %v964 = vpop.f32.mrb[0].mxu0
      %v965 = vadd.f32 %v748, %v964
      %v966 = vpop.f32.mrb[0].mxu0
      %967 = vmatprep.mubr.bf16.mxu0 0
      %968 = vmatmul.mubr.bf16.gmra.mrb[0].mxu0 %v810
      %v969 = vpop.f32.mrb[0].mxu0
      %v970 = vadd.f32 %v753, %v969
      %v971 = vpop.f32.mrb[0].mxu0
      %v972 = vpop.f32.mrb[0].mxu0
      %v973 = vadd.f32 %v756, %v972
      %v974 = vpop.f32.mrb[0].mxu0
      %975 = vdwg.mxu0
      %v976 = vld [vmem:[#allocation2 + $0x2] sm:$0xff]
      %v977 = vld [vmem:[#allocation2 + $0xa] sm:$0xff]
      %v978 = vld [vmem:[#allocation2 + $0x1a] sm:$0xff]
      %v979 = vld [vmem:[#allocation2 + $0x22] sm:$0xff]
      %v980 = vld [vmem:[#allocation2 + $0x32] sm:$0xff]
      %v981 = vld [vmem:[#allocation2 + $0x3a] sm:$0xff]
      %v982 = vld [vmem:[#allocation2 + $0x4a] sm:$0xff]
      %v983 = vld [vmem:[#allocation2 + $0x52] sm:$0xff]
      %v984 = vld [vmem:[#allocation2 + $0x62] sm:$0xff]
      %v985 = vld [vmem:[#allocation2 + $0x6a] sm:$0xff]
      %v986 = vld [vmem:[#allocation2 + $0x7a] sm:$0xff]
      %v987 = vld [vmem:[#allocation2 + $0x82] sm:$0xff]
      %v988 = vld [vmem:[#allocation2 + $0x92] sm:$0xff]
      %v989 = vld [vmem:[#allocation2 + $0x9a] sm:$0xff]
      %v990 = vld [vmem:[#allocation2 + $0xaa] sm:$0xff]
      %v991 = vld [vmem:[#allocation2 + $0xb2] sm:$0xff]
      %v992 = vld [vmem:[#allocation2 + $0xc2] sm:$0xff]
      %v993 = vld [vmem:[#allocation2 + $0xca] sm:$0xff]
      %v994 = vld [vmem:[#allocation2 + $0xda] sm:$0xff]
      %v995 = vld [vmem:[#allocation2 + $0xe2] sm:$0xff]
      %v996 = vld [vmem:[#allocation2 + $0xf2] sm:$0xff]
      %v997 = vld [vmem:[#allocation2 + $0xfa] sm:$0xff]
      %v998 = vld [vmem:[#allocation2 + $0x10a] sm:$0xff]
      %v999 = vld [vmem:[#allocation2 + $0x112] sm:$0xff]
      %v1000 = vld [vmem:[#allocation2 + $0x122] sm:$0xff]
      %v1001 = vld [vmem:[#allocation2 + $0x12a] sm:$0xff]
      %v1002 = vld [vmem:[#allocation2 + $0x13a] sm:$0xff]
      %v1003 = vld [vmem:[#allocation2 + $0x142] sm:$0xff]
      %v1004 = vld [vmem:[#allocation2 + $0x152] sm:$0xff]
      %v1005 = vld [vmem:[#allocation2 + $0x15a] sm:$0xff]
      %v1006 = vld [vmem:[#allocation2 + $0x16a] sm:$0xff]
      %v1007 = vld [vmem:[#allocation2 + $0x172] sm:$0xff]
      %v1008 = vpack.c.bf16 %v977, %v976
      %v1009 = vpack.c.bf16 %v979, %v978
      %v1010 = vpack.c.bf16 %v981, %v980
      %v1011 = vpack.c.bf16 %v983, %v982
      %v1012 = vpack.c.bf16 %v985, %v984
      %v1013 = vpack.c.bf16 %v987, %v986
      %v1014 = vpack.c.bf16 %v989, %v988
      %v1015 = vpack.c.bf16 %v991, %v990
      %v1016 = vpack.c.bf16 %v993, %v992
      %v1017 = vpack.c.bf16 %v995, %v994
      %v1018 = vpack.c.bf16 %v997, %v996
      %v1019 = vpack.c.bf16 %v999, %v998
      %v1020 = vpack.c.bf16 %v1001, %v1000
      %v1021 = vpack.c.bf16 %v1003, %v1002
      %v1022 = vpack.c.bf16 %v1005, %v1004
      %v1023 = vpack.c.bf16 %v1007, %v1006
      %s1024 = scalar_lea.vmem %s1, 16
      %v1025 = vld [vmem:[%s1024] sm:$0xf]
      %v1026 = vld [vmem:[%s1024 + $0x4] sm:$0x3]
      %v1029 = vunpack.c.l.b16 %v1025
      %v1030 = vunpack.c.l.b16 %v1026
      %v1031 = vpack.c.b16 %v1030, %v1029
      %v1033 = vsel %vm280, %v1008, 0
      %v1036 = vsel %vm280, %v1009, 0
      %v1039 = vsel %vm280, %v1010, 0
      %v1042 = vsel %vm280, %v1011, 0
      %v1045 = vsel %vm280, %v1012, 0
      %v1048 = vsel %vm280, %v1013, 0
      %v1051 = vsel %vm280, %v1014, 0
      %v1054 = vsel %vm280, %v1015, 0
      %v1057 = vsel %vm280, %v1016, 0
      %v1060 = vsel %vm280, %v1017, 0
      %v1063 = vsel %vm280, %v1018, 0
      %v1066 = vsel %vm280, %v1019, 0
      %v1069 = vsel %vm280, %v1020, 0
      %v1072 = vsel %vm280, %v1021, 0
      %v1075 = vsel %vm280, %v1022, 0
      %v1078 = vsel %vm280, %v1023, 0
      %v1081 = vsel %vm594, %v1031, 0
      %1083 = vmatprep.subr.bf16.mxu0 0
      %1084 = vmatpush1.bf16.msra.mxu0 %v1081
      %1085 = vmatprep.subr.bf16.mxu0 0
      %1086 = vmatpush1.bf16.msra.mxu0 0
      %1087 = vmatprep.subr.bf16.mxu0 0
      %1088 = vmatpush1.bf16.msra.mxu0 0
      %1089 = vmatprep.subr.bf16.mxu0 0
      %1090 = vmatpush1.bf16.msra.mxu0 0
      %1091 = vmatprep.subr.bf16.mxu0 0
      %1092 = vmatpush1.bf16.msra.mxu0 0
      %1093 = vmatprep.subr.bf16.mxu0 0
      %1094 = vmatpush1.bf16.msra.mxu0 0
      %1095 = vmatprep.subr.bf16.mxu0 0
      %1096 = vmatpush1.bf16.msra.mxu0 0
      %1097 = vmatprep.subr.bf16.mxu0 0
      %1098 = vmatpush1.bf16.msra.mxu0 0
      %1099 = vmatprep.subr.bf16.mxu0 0
      %1100 = vmatpush1.bf16.msra.mxu0 0
      %1101 = vmatprep.subr.bf16.mxu0 0
      %1102 = vmatpush1.bf16.msra.mxu0 0
      %1103 = vmatprep.subr.bf16.mxu0 0
      %1104 = vmatpush1.bf16.msra.mxu0 0
      %1105 = vmatprep.subr.bf16.mxu0 0
      %1106 = vmatpush1.bf16.msra.mxu0 0
      %1107 = vmatprep.subr.bf16.mxu0 0
      %1108 = vmatpush1.bf16.msra.mxu0 0
      %1109 = vmatprep.subr.bf16.mxu0 0
      %1110 = vmatpush1.bf16.msra.mxu0 0
      %1111 = vmatprep.subr.bf16.mxu0 0
      %1112 = vmatpush1.bf16.msra.mxu0 0
      %1113 = vmatprep.subr.bf16.mxu0 0
      %1114 = vmatpush1.bf16.msra.mxu0 0
      %1115 = vmatprep.mubr.bf16.mxu0 0
      %1116 = vmatmul.mubr.bf16.gmra.mrb[0].mxu0 %v1033
      %v1117 = vpop.f32.mrb[0].mxu0
      %v1118 = vadd.f32 0.0, %v1117
      %v1119 = vpop.f32.mrb[0].mxu0
      %v1120 = vpop.f32.mrb[0].mxu0
      %v1121 = vadd.f32 0.0, %v1120
      %v1122 = vpop.f32.mrb[0].mxu0
      %1123 = vmatprep.mubr.bf16.mxu0 0
      %1124 = vmatmul.mubr.bf16.gmra.mrb[0].mxu0 %v1036
      %v1125 = vpop.f32.mrb[0].mxu0
      %v1126 = vadd.f32 0.0, %v1125
      %v1127 = vpop.f32.mrb[0].mxu0
      %v1128 = vpop.f32.mrb[0].mxu0
      %v1129 = vadd.f32 0.0, %v1128
      %v1130 = vpop.f32.mrb[0].mxu0
      %1131 = vmatprep.mubr.bf16.mxu0 0
      %1132 = vmatmul.mubr.bf16.gmra.mrb[0].mxu0 %v1039
      %v1133 = vpop.f32.mrb[0].mxu0
      %v1134 = vadd.f32 0.0, %v1133
      %v1135 = vpop.f32.mrb[0].mxu0
      %v1136 = vpop.f32.mrb[0].mxu0
      %v1137 = vadd.f32 0.0, %v1136
      %v1138 = vpop.f32.mrb[0].mxu0
      %1139 = vmatprep.mubr.bf16.mxu0 0
      %1140 = vmatmul.mubr.bf16.gmra.mrb[0].mxu0 %v1042
      %v1141 = vpop.f32.mrb[0].mxu0
      %v1142 = vadd.f32 0.0, %v1141
      %v1143 = vpop.f32.mrb[0].mxu0
      %v1144 = vpop.f32.mrb[0].mxu0
      %v1145 = vadd.f32 0.0, %v1144
      %v1146 = vpop.f32.mrb[0].mxu0
      %1147 = vmatprep.mubr.bf16.mxu0 0
      %1148 = vmatmul.mubr.bf16.gmra.mrb[0].mxu0 %v1045
      %v1149 = vpop.f32.mrb[0].mxu0
      %v1150 = vadd.f32 0.0, %v1149
      %v1151 = vpop.f32.mrb[0].mxu0
      %v1152 = vpop.f32.mrb[0].mxu0
      %v1153 = vadd.f32 0.0, %v1152
      %v1154 = vpop.f32.mrb[0].mxu0
      %1155 = vmatprep.mubr.bf16.mxu0 0
      %1156 = vmatmul.mubr.bf16.gmra.mrb[0].mxu0 %v1048
      %v1157 = vpop.f32.mrb[0].mxu0
      %v1158 = vadd.f32 0.0, %v1157
      %v1159 = vpop.f32.mrb[0].mxu0
      %v1160 = vpop.f32.mrb[0].mxu0
      %v1161 = vadd.f32 0.0, %v1160
      %v1162 = vpop.f32.mrb[0].mxu0
      %1163 = vmatprep.mubr.bf16.mxu0 0
      %1164 = vmatmul.mubr.bf16.gmra.mrb[0].mxu0 %v1051
      %v1165 = vpop.f32.mrb[0].mxu0
      %v1166 = vadd.f32 0.0, %v1165
      %v1167 = vpop.f32.mrb[0].mxu0
      %v1168 = vpop.f32.mrb[0].mxu0
      %v1169 = vadd.f32 0.0, %v1168
      %v1170 = vpop.f32.mrb[0].mxu0
      %1171 = vmatprep.mubr.bf16.mxu0 0
      %1172 = vmatmul.mubr.bf16.gmra.mrb[0].mxu0 %v1054
      %v1173 = vpop.f32.mrb[0].mxu0
      %v1174 = vadd.f32 0.0, %v1173
      %v1175 = vpop.f32.mrb[0].mxu0
      %v1176 = vpop.f32.mrb[0].mxu0
      %v1177 = vadd.f32 0.0, %v1176
      %v1178 = vpop.f32.mrb[0].mxu0
      %1179 = vmatprep.mubr.bf16.mxu0 0
      %1180 = vmatmul.mubr.bf16.gmra.mrb[0].mxu0 %v1057
      %v1181 = vpop.f32.mrb[0].mxu0
      %v1182 = vadd.f32 0.0, %v1181
      %v1183 = vpop.f32.mrb[0].mxu0
      %v1184 = vpop.f32.mrb[0].mxu0
      %v1185 = vadd.f32 0.0, %v1184
      %v1186 = vpop.f32.mrb[0].mxu0
      %1187 = vmatprep.mubr.bf16.mxu0 0
      %1188 = vmatmul.mubr.bf16.gmra.mrb[0].mxu0 %v1060
      %v1189 = vpop.f32.mrb[0].mxu0
      %v1190 = vadd.f32 0.0, %v1189
      %v1191 = vpop.f32.mrb[0].mxu0
      %v1192 = vpop.f32.mrb[0].mxu0
      %v1193 = vadd.f32 0.0, %v1192
      %v1194 = vpop.f32.mrb[0].mxu0
      %1195 = vmatprep.mubr.bf16.mxu0 0
      %1196 = vmatmul.mubr.bf16.gmra.mrb[0].mxu0 %v1063
      %v1197 = vpop.f32.mrb[0].mxu0
      %v1198 = vadd.f32 0.0, %v1197
      %v1199 = vpop.f32.mrb[0].mxu0
      %v1200 = vpop.f32.mrb[0].mxu0
      %v1201 = vadd.f32 0.0, %v1200
      %v1202 = vpop.f32.mrb[0].mxu0
      %1203 = vmatprep.mubr.bf16.mxu0 0
      %1204 = vmatmul.mubr.bf16.gmra.mrb[0].mxu0 %v1066
      %v1205 = vpop.f32.mrb[0].mxu0
      %v1206 = vadd.f32 0.0, %v1205
      %v1207 = vpop.f32.mrb[0].mxu0
      %v1208 = vpop.f32.mrb[0].mxu0
      %v1209 = vadd.f32 0.0, %v1208
      %v1210 = vpop.f32.mrb[0].mxu0
      %1211 = vmatprep.mubr.bf16.mxu0 0
      %1212 = vmatmul.mubr.bf16.gmra.mrb[0].mxu0 %v1069
      %v1213 = vpop.f32.mrb[0].mxu0
      %v1214 = vadd.f32 0.0, %v1213
      %v1215 = vpop.f32.mrb[0].mxu0
      %v1216 = vpop.f32.mrb[0].mxu0
      %v1217 = vadd.f32 0.0, %v1216
      %v1218 = vpop.f32.mrb[0].mxu0
      %1219 = vmatprep.mubr.bf16.mxu0 0
      %1220 = vmatmul.mubr.bf16.gmra.mrb[0].mxu0 %v1072
      %v1221 = vpop.f32.mrb[0].mxu0
      %v1222 = vadd.f32 0.0, %v1221
      %v1223 = vpop.f32.mrb[0].mxu0
      %v1224 = vpop.f32.mrb[0].mxu0
      %v1225 = vadd.f32 0.0, %v1224
      %v1226 = vpop.f32.mrb[0].mxu0
      %1227 = vmatprep.mubr.bf16.mxu0 0
      %1228 = vmatmul.mubr.bf16.gmra.mrb[0].mxu0 %v1075
      %v1229 = vpop.f32.mrb[0].mxu0
      %v1230 = vadd.f32 0.0, %v1229
      %v1231 = vpop.f32.mrb[0].mxu0
      %v1232 = vpop.f32.mrb[0].mxu0
      %v1233 = vadd.f32 0.0, %v1232
      %v1234 = vpop.f32.mrb[0].mxu0
      %1235 = vmatprep.mubr.bf16.mxu0 0
      %1236 = vmatmul.mubr.bf16.gmra.mrb[0].mxu0 %v1078
      %v1237 = vpop.f32.mrb[0].mxu0
      %v1238 = vadd.f32 0.0, %v1237
      %v1239 = vpop.f32.mrb[0].mxu0
      %v1240 = vpop.f32.mrb[0].mxu0
      %v1241 = vadd.f32 0.0, %v1240
      %v1242 = vpop.f32.mrb[0].mxu0
      %1243 = vdwg.mxu0
      %v1244 = vadd.f32 %v850, %v1118
      %v1245 = vadd.f32 %v853, %v1121
      %v1246 = vadd.f32 %v858, %v1126
      %v1247 = vadd.f32 %v861, %v1129
      %v1248 = vadd.f32 %v866, %v1134
      %v1249 = vadd.f32 %v869, %v1137
      %v1250 = vadd.f32 %v874, %v1142
      %v1251 = vadd.f32 %v877, %v1145
      %v1252 = vadd.f32 %v882, %v1150
      %v1253 = vadd.f32 %v885, %v1153
      %v1254 = vadd.f32 %v890, %v1158
      %v1255 = vadd.f32 %v893, %v1161
      %v1256 = vadd.f32 %v898, %v1166
      %v1257 = vadd.f32 %v901, %v1169
      %v1258 = vadd.f32 %v906, %v1174
      %v1259 = vadd.f32 %v909, %v1177
      %v1260 = vadd.f32 %v914, %v1182
      %v1261 = vadd.f32 %v917, %v1185
      %v1262 = vadd.f32 %v922, %v1190
      %v1263 = vadd.f32 %v925, %v1193
      %v1264 = vadd.f32 %v930, %v1198
      %v1265 = vadd.f32 %v933, %v1201
      %v1266 = vadd.f32 %v938, %v1206
      %v1267 = vadd.f32 %v941, %v1209
      %v1268 = vadd.f32 %v946, %v1214
      %v1269 = vadd.f32 %v949, %v1217
      %v1270 = vadd.f32 %v954, %v1222
      %v1271 = vadd.f32 %v957, %v1225
      %v1272 = vadd.f32 %v962, %v1230
      %v1273 = vadd.f32 %v965, %v1233
      %v1274 = vadd.f32 %v970, %v1238
      %v1275 = vadd.f32 %v973, %v1241
      %v1276 = vld [vmem:[%s404] sm:$0xff]
      %v1277 = vld [vmem:[%s404 + $0x8] sm:$0xff]
      %v1278 = vld [vmem:[%s404 + $0x18] sm:$0xff]
      %v1279 = vld [vmem:[%s404 + $0x20] sm:$0xff]
      %v1280 = vld [vmem:[%s404 + $0x30] sm:$0xff]
      %v1281 = vld [vmem:[%s404 + $0x38] sm:$0xff]
      %v1282 = vld [vmem:[%s404 + $0x48] sm:$0xff]
      %v1283 = vld [vmem:[%s404 + $0x50] sm:$0xff]
      %v1284 = vld [vmem:[%s404 + $0x60] sm:$0xff]
      %v1285 = vld [vmem:[%s404 + $0x68] sm:$0xff]
      %v1286 = vld [vmem:[%s404 + $0x78] sm:$0xff]
      %v1287 = vld [vmem:[%s404 + $0x80] sm:$0xff]
      %v1288 = vld [vmem:[%s404 + $0x90] sm:$0xff]
      %v1289 = vld [vmem:[%s404 + $0x98] sm:$0xff]
      %v1290 = vld [vmem:[%s404 + $0xa8] sm:$0xff]
      %v1291 = vld [vmem:[%s404 + $0xb0] sm:$0xff]
      %v1292 = vld [vmem:[%s404 + $0xc0] sm:$0xff]
      %v1293 = vld [vmem:[%s404 + $0xc8] sm:$0xff]
      %v1294 = vld [vmem:[%s404 + $0xd8] sm:$0xff]
      %v1295 = vld [vmem:[%s404 + $0xe0] sm:$0xff]
      %v1296 = vld [vmem:[%s404 + $0xf0] sm:$0xff]
      %v1297 = vld [vmem:[%s404 + $0xf8] sm:$0xff]
      %v1298 = vld [vmem:[%s404 + $0x108] sm:$0xff]
      %v1299 = vld [vmem:[%s404 + $0x110] sm:$0xff]
      %v1300 = vld [vmem:[%s404 + $0x120] sm:$0xff]
      %v1301 = vld [vmem:[%s404 + $0x128] sm:$0xff]
      %v1302 = vld [vmem:[%s404 + $0x138] sm:$0xff]
      %v1303 = vld [vmem:[%s404 + $0x140] sm:$0xff]
      %v1304 = vld [vmem:[%s404 + $0x150] sm:$0xff]
      %v1305 = vld [vmem:[%s404 + $0x158] sm:$0xff]
      %v1306 = vld [vmem:[%s404 + $0x168] sm:$0xff]
      %v1307 = vld [vmem:[%s404 + $0x170] sm:$0xff]
      %v1308 = vpack.c.bf16 %v1277, %v1276
      %v1309 = vpack.c.bf16 %v1279, %v1278
      %v1310 = vpack.c.bf16 %v1281, %v1280
      %v1311 = vpack.c.bf16 %v1283, %v1282
      %v1312 = vpack.c.bf16 %v1285, %v1284
      %v1313 = vpack.c.bf16 %v1287, %v1286
      %v1314 = vpack.c.bf16 %v1289, %v1288
      %v1315 = vpack.c.bf16 %v1291, %v1290
      %v1316 = vpack.c.bf16 %v1293, %v1292
      %v1317 = vpack.c.bf16 %v1295, %v1294
      %v1318 = vpack.c.bf16 %v1297, %v1296
      %v1319 = vpack.c.bf16 %v1299, %v1298
      %v1320 = vpack.c.bf16 %v1301, %v1300
      %v1321 = vpack.c.bf16 %v1303, %v1302
      %v1322 = vpack.c.bf16 %v1305, %v1304
      %v1323 = vpack.c.bf16 %v1307, %v1306
      %s1324 = scalar_lea.vmem %s1, 24
      %v1325 = vld [vmem:[%s1324] sm:$0xf]
      %v1326 = vld [vmem:[%s1324 + $0x4] sm:$0x3]
      %v1329 = vunpack.c.l.b16 %v1325
      %v1330 = vunpack.c.l.b16 %v1326
      %v1331 = vpack.c.b16 %v1330, %v1329
      %v1333 = vsel %vm280, %v1308, 0
      %v1336 = vsel %vm280, %v1309, 0
      %v1339 = vsel %vm280, %v1310, 0
      %v1342 = vsel %vm280, %v1311, 0
      %v1345 = vsel %vm280, %v1312, 0
      %v1348 = vsel %vm280, %v1313, 0
      %v1351 = vsel %vm280, %v1314, 0
      %v1354 = vsel %vm280, %v1315, 0
      %v1357 = vsel %vm280, %v1316, 0
      %v1360 = vsel %vm280, %v1317, 0
      %v1363 = vsel %vm280, %v1318, 0
      %v1366 = vsel %vm280, %v1319, 0
      %v1369 = vsel %vm280, %v1320, 0
      %v1372 = vsel %vm280, %v1321, 0
      %v1375 = vsel %vm280, %v1322, 0
      %v1378 = vsel %vm280, %v1323, 0
      %v1381 = vsel %vm594, %v1331, 0
      %1383 = vmatprep.subr.bf16.mxu0 0
      %1384 = vmatpush1.bf16.msra.mxu0 %v1381
      %1385 = vmatprep.subr.bf16.mxu0 0
      %1386 = vmatpush1.bf16.msra.mxu0 0
      %1387 = vmatprep.subr.bf16.mxu0 0
      %1388 = vmatpush1.bf16.msra.mxu0 0
      %1389 = vmatprep.subr.bf16.mxu0 0
      %1390 = vmatpush1.bf16.msra.mxu0 0
      %1391 = vmatprep.subr.bf16.mxu0 0
      %1392 = vmatpush1.bf16.msra.mxu0 0
      %1393 = vmatprep.subr.bf16.mxu0 0
      %1394 = vmatpush1.bf16.msra.mxu0 0
      %1395 = vmatprep.subr.bf16.mxu0 0
      %1396 = vmatpush1.bf16.msra.mxu0 0
      %1397 = vmatprep.subr.bf16.mxu0 0
      %1398 = vmatpush1.bf16.msra.mxu0 0
      %1399 = vmatprep.subr.bf16.mxu0 0
      %1400 = vmatpush1.bf16.msra.mxu0 0
      %1401 = vmatprep.subr.bf16.mxu0 0
      %1402 = vmatpush1.bf16.msra.mxu0 0
      %1403 = vmatprep.subr.bf16.mxu0 0
      %1404 = vmatpush1.bf16.msra.mxu0 0
      %1405 = vmatprep.subr.bf16.mxu0 0
      %1406 = vmatpush1.bf16.msra.mxu0 0
      %1407 = vmatprep.subr.bf16.mxu0 0
      %1408 = vmatpush1.bf16.msra.mxu0 0
      %1409 = vmatprep.subr.bf16.mxu0 0
      %1410 = vmatpush1.bf16.msra.mxu0 0
      %1411 = vmatprep.subr.bf16.mxu0 0
      %1412 = vmatpush1.bf16.msra.mxu0 0
      %1413 = vmatprep.subr.bf16.mxu0 0
      %1414 = vmatpush1.bf16.msra.mxu0 0
      %1415 = vmatprep.mubr.bf16.mxu0 0
      %1416 = vmatmul.mubr.bf16.gmra.mrb[0].mxu0 %v1333
      %v1417 = vpop.f32.mrb[0].mxu0
      %v1418 = vadd.f32 0.0, %v1417
      %v1419 = vpop.f32.mrb[0].mxu0
      %v1420 = vpop.f32.mrb[0].mxu0
      %v1421 = vadd.f32 0.0, %v1420
      %v1422 = vpop.f32.mrb[0].mxu0
      %1423 = vmatprep.mubr.bf16.mxu0 0
      %1424 = vmatmul.mubr.bf16.gmra.mrb[0].mxu0 %v1336
      %v1425 = vpop.f32.mrb[0].mxu0
      %v1426 = vadd.f32 0.0, %v1425
      %v1427 = vpop.f32.mrb[0].mxu0
      %v1428 = vpop.f32.mrb[0].mxu0
      %v1429 = vadd.f32 0.0, %v1428
      %v1430 = vpop.f32.mrb[0].mxu0
      %1431 = vmatprep.mubr.bf16.mxu0 0
      %1432 = vmatmul.mubr.bf16.gmra.mrb[0].mxu0 %v1339
      %v1433 = vpop.f32.mrb[0].mxu0
      %v1434 = vadd.f32 0.0, %v1433
      %v1435 = vpop.f32.mrb[0].mxu0
      %v1436 = vpop.f32.mrb[0].mxu0
      %v1437 = vadd.f32 0.0, %v1436
      %v1438 = vpop.f32.mrb[0].mxu0
      %1439 = vmatprep.mubr.bf16.mxu0 0
      %1440 = vmatmul.mubr.bf16.gmra.mrb[0].mxu0 %v1342
      %v1441 = vpop.f32.mrb[0].mxu0
      %v1442 = vadd.f32 0.0, %v1441
      %v1443 = vpop.f32.mrb[0].mxu0
      %v1444 = vpop.f32.mrb[0].mxu0
      %v1445 = vadd.f32 0.0, %v1444
      %v1446 = vpop.f32.mrb[0].mxu0
      %1447 = vmatprep.mubr.bf16.mxu0 0
      %1448 = vmatmul.mubr.bf16.gmra.mrb[0].mxu0 %v1345
      %v1449 = vpop.f32.mrb[0].mxu0
      %v1450 = vadd.f32 0.0, %v1449
      %v1451 = vpop.f32.mrb[0].mxu0
      %v1452 = vpop.f32.mrb[0].mxu0
      %v1453 = vadd.f32 0.0, %v1452
      %v1454 = vpop.f32.mrb[0].mxu0
      %1455 = vmatprep.mubr.bf16.mxu0 0
      %1456 = vmatmul.mubr.bf16.gmra.mrb[0].mxu0 %v1348
      %v1457 = vpop.f32.mrb[0].mxu0
      %v1458 = vadd.f32 0.0, %v1457
      %v1459 = vpop.f32.mrb[0].mxu0
      %v1460 = vpop.f32.mrb[0].mxu0
      %v1461 = vadd.f32 0.0, %v1460
      %v1462 = vpop.f32.mrb[0].mxu0
      %1463 = vmatprep.mubr.bf16.mxu0 0
      %1464 = vmatmul.mubr.bf16.gmra.mrb[0].mxu0 %v1351
      %v1465 = vpop.f32.mrb[0].mxu0
      %v1466 = vadd.f32 0.0, %v1465
      %v1467 = vpop.f32.mrb[0].mxu0
      %v1468 = vpop.f32.mrb[0].mxu0
      %v1469 = vadd.f32 0.0, %v1468
      %v1470 = vpop.f32.mrb[0].mxu0
      %1471 = vmatprep.mubr.bf16.mxu0 0
      %1472 = vmatmul.mubr.bf16.gmra.mrb[0].mxu0 %v1354
      %v1473 = vpop.f32.mrb[0].mxu0
      %v1474 = vadd.f32 0.0, %v1473
      %v1475 = vpop.f32.mrb[0].mxu0
      %v1476 = vpop.f32.mrb[0].mxu0
      %v1477 = vadd.f32 0.0, %v1476
      %v1478 = vpop.f32.mrb[0].mxu0
      %1479 = vmatprep.mubr.bf16.mxu0 0
      %1480 = vmatmul.mubr.bf16.gmra.mrb[0].mxu0 %v1357
      %v1481 = vpop.f32.mrb[0].mxu0
      %v1482 = vadd.f32 0.0, %v1481
      %v1483 = vpop.f32.mrb[0].mxu0
      %v1484 = vpop.f32.mrb[0].mxu0
      %v1485 = vadd.f32 0.0, %v1484
      %v1486 = vpop.f32.mrb[0].mxu0
      %1487 = vmatprep.mubr.bf16.mxu0 0
      %1488 = vmatmul.mubr.bf16.gmra.mrb[0].mxu0 %v1360
      %v1489 = vpop.f32.mrb[0].mxu0
      %v1490 = vadd.f32 0.0, %v1489
      %v1491 = vpop.f32.mrb[0].mxu0
      %v1492 = vpop.f32.mrb[0].mxu0
      %v1493 = vadd.f32 0.0, %v1492
      %v1494 = vpop.f32.mrb[0].mxu0
      %1495 = vmatprep.mubr.bf16.mxu0 0
      %1496 = vmatmul.mubr.bf16.gmra.mrb[0].mxu0 %v1363
      %v1497 = vpop.f32.mrb[0].mxu0
      %v1498 = vadd.f32 0.0, %v1497
      %v1499 = vpop.f32.mrb[0].mxu0
      %v1500 = vpop.f32.mrb[0].mxu0
      %v1501 = vadd.f32 0.0, %v1500
      %v1502 = vpop.f32.mrb[0].mxu0
      %1503 = vmatprep.mubr.bf16.mxu0 0
      %1504 = vmatmul.mubr.bf16.gmra.mrb[0].mxu0 %v1366
      %v1505 = vpop.f32.mrb[0].mxu0
      %v1506 = vadd.f32 0.0, %v1505
      %v1507 = vpop.f32.mrb[0].mxu0
      %v1508 = vpop.f32.mrb[0].mxu0
      %v1509 = vadd.f32 0.0, %v1508
      %v1510 = vpop.f32.mrb[0].mxu0
      %1511 = vmatprep.mubr.bf16.mxu0 0
      %1512 = vmatmul.mubr.bf16.gmra.mrb[0].mxu0 %v1369
      %v1513 = vpop.f32.mrb[0].mxu0
      %v1514 = vadd.f32 0.0, %v1513
      %v1515 = vpop.f32.mrb[0].mxu0
      %v1516 = vpop.f32.mrb[0].mxu0
      %v1517 = vadd.f32 0.0, %v1516
      %v1518 = vpop.f32.mrb[0].mxu0
      %1519 = vmatprep.mubr.bf16.mxu0 0
      %1520 = vmatmul.mubr.bf16.gmra.mrb[0].mxu0 %v1372
      %v1521 = vpop.f32.mrb[0].mxu0
      %v1522 = vadd.f32 0.0, %v1521
      %v1523 = vpop.f32.mrb[0].mxu0
      %v1524 = vpop.f32.mrb[0].mxu0
      %v1525 = vadd.f32 0.0, %v1524
      %v1526 = vpop.f32.mrb[0].mxu0
      %1527 = vmatprep.mubr.bf16.mxu0 0
      %1528 = vmatmul.mubr.bf16.gmra.mrb[0].mxu0 %v1375
      %v1529 = vpop.f32.mrb[0].mxu0
      %v1530 = vadd.f32 0.0, %v1529
      %v1531 = vpop.f32.mrb[0].mxu0
      %v1532 = vpop.f32.mrb[0].mxu0
      %v1533 = vadd.f32 0.0, %v1532
      %v1534 = vpop.f32.mrb[0].mxu0
      %1535 = vmatprep.mubr.bf16.mxu0 0
      %1536 = vmatmul.mubr.bf16.gmra.mrb[0].mxu0 %v1378
      %v1537 = vpop.f32.mrb[0].mxu0
      %v1538 = vadd.f32 0.0, %v1537
      %v1539 = vpop.f32.mrb[0].mxu0
      %v1540 = vpop.f32.mrb[0].mxu0
      %v1541 = vadd.f32 0.0, %v1540
      %v1542 = vpop.f32.mrb[0].mxu0
      %1543 = vdwg.mxu0
      %v1544 = vadd.f32 %v1244, %v1418
      %v1545 = vadd.f32 %v1245, %v1421
      %v1546 = vadd.f32 %v1246, %v1426
      %v1547 = vadd.f32 %v1247, %v1429
      %v1548 = vadd.f32 %v1248, %v1434
      %v1549 = vadd.f32 %v1249, %v1437
      %v1550 = vadd.f32 %v1250, %v1442
      %v1551 = vadd.f32 %v1251, %v1445
      %v1552 = vadd.f32 %v1252, %v1450
      %v1553 = vadd.f32 %v1253, %v1453
      %v1554 = vadd.f32 %v1254, %v1458
      %v1555 = vadd.f32 %v1255, %v1461
      %v1556 = vadd.f32 %v1256, %v1466
      %v1557 = vadd.f32 %v1257, %v1469
      %v1558 = vadd.f32 %v1258, %v1474
      %v1559 = vadd.f32 %v1259, %v1477
      %v1560 = vadd.f32 %v1260, %v1482
      %v1561 = vadd.f32 %v1261, %v1485
      %v1562 = vadd.f32 %v1262, %v1490
      %v1563 = vadd.f32 %v1263, %v1493
      %v1564 = vadd.f32 %v1264, %v1498
      %v1565 = vadd.f32 %v1265, %v1501
      %v1566 = vadd.f32 %v1266, %v1506
      %v1567 = vadd.f32 %v1267, %v1509
      %v1568 = vadd.f32 %v1268, %v1514
      %v1569 = vadd.f32 %v1269, %v1517
      %v1570 = vadd.f32 %v1270, %v1522
      %v1571 = vadd.f32 %v1271, %v1525
      %v1572 = vadd.f32 %v1272, %v1530
      %v1573 = vadd.f32 %v1273, %v1533
      %v1574 = vadd.f32 %v1274, %v1538
      %v1575 = vadd.f32 %v1275, %v1541
      %v1576 = vld [vmem:[%s404 + $0x1] sm:$0xff]
      %v1577 = vld [vmem:[%s404 + $0x9] sm:$0xff]
      %v1578 = vld [vmem:[%s404 + $0x19] sm:$0xff]
      %v1579 = vld [vmem:[%s404 + $0x21] sm:$0xff]
      %v1580 = vld [vmem:[%s404 + $0x31] sm:$0xff]
      %v1581 = vld [vmem:[%s404 + $0x39] sm:$0xff]
      %v1582 = vld [vmem:[%s404 + $0x49] sm:$0xff]
      %v1583 = vld [vmem:[%s404 + $0x51] sm:$0xff]
      %v1584 = vld [vmem:[%s404 + $0x61] sm:$0xff]
      %v1585 = vld [vmem:[%s404 + $0x69] sm:$0xff]
      %v1586 = vld [vmem:[%s404 + $0x79] sm:$0xff]
      %v1587 = vld [vmem:[%s404 + $0x81] sm:$0xff]
      %v1588 = vld [vmem:[%s404 + $0x91] sm:$0xff]
      %v1589 = vld [vmem:[%s404 + $0x99] sm:$0xff]
      %v1590 = vld [vmem:[%s404 + $0xa9] sm:$0xff]
      %v1591 = vld [vmem:[%s404 + $0xb1] sm:$0xff]
      %v1592 = vld [vmem:[%s404 + $0xc1] sm:$0xff]
      %v1593 = vld [vmem:[%s404 + $0xc9] sm:$0xff]
      %v1594 = vld [vmem:[%s404 + $0xd9] sm:$0xff]
      %v1595 = vld [vmem:[%s404 + $0xe1] sm:$0xff]
      %v1596 = vld [vmem:[%s404 + $0xf1] sm:$0xff]
      %v1597 = vld [vmem:[%s404 + $0xf9] sm:$0xff]
      %v1598 = vld [vmem:[%s404 + $0x109] sm:$0xff]
      %v1599 = vld [vmem:[%s404 + $0x111] sm:$0xff]
      %v1600 = vld [vmem:[%s404 + $0x121] sm:$0xff]
      %v1601 = vld [vmem:[%s404 + $0x129] sm:$0xff]
      %v1602 = vld [vmem:[%s404 + $0x139] sm:$0xff]
      %v1603 = vld [vmem:[%s404 + $0x141] sm:$0xff]
      %v1604 = vld [vmem:[%s404 + $0x151] sm:$0xff]
      %v1605 = vld [vmem:[%s404 + $0x159] sm:$0xff]
      %v1606 = vld [vmem:[%s404 + $0x169] sm:$0xff]
      %v1607 = vld [vmem:[%s404 + $0x171] sm:$0xff]
      %v1608 = vpack.c.bf16 %v1577, %v1576
      %v1609 = vpack.c.bf16 %v1579, %v1578
      %v1610 = vpack.c.bf16 %v1581, %v1580
      %v1611 = vpack.c.bf16 %v1583, %v1582
      %v1612 = vpack.c.bf16 %v1585, %v1584
      %v1613 = vpack.c.bf16 %v1587, %v1586
      %v1614 = vpack.c.bf16 %v1589, %v1588
      %v1615 = vpack.c.bf16 %v1591, %v1590
      %v1616 = vpack.c.bf16 %v1593, %v1592
      %v1617 = vpack.c.bf16 %v1595, %v1594
      %v1618 = vpack.c.bf16 %v1597, %v1596
      %v1619 = vpack.c.bf16 %v1599, %v1598
      %v1620 = vpack.c.bf16 %v1601, %v1600
      %v1621 = vpack.c.bf16 %v1603, %v1602
      %v1622 = vpack.c.bf16 %v1605, %v1604
      %v1623 = vpack.c.bf16 %v1607, %v1606
      %s1624 = scalar_lea.vmem %s1, 32
      %v1625 = vld [vmem:[%s1624] sm:$0xf]
      %v1626 = vld [vmem:[%s1624 + $0x4] sm:$0x3]
      %v1629 = vunpack.c.l.b16 %v1625
      %v1630 = vunpack.c.l.b16 %v1626
      %v1631 = vpack.c.b16 %v1630, %v1629
      %v1633 = vsel %vm280, %v1608, 0
      %v1636 = vsel %vm280, %v1609, 0
      %v1639 = vsel %vm280, %v1610, 0
      %v1642 = vsel %vm280, %v1611, 0
      %v1645 = vsel %vm280, %v1612, 0
      %v1648 = vsel %vm280, %v1613, 0
      %v1651 = vsel %vm280, %v1614, 0
      %v1654 = vsel %vm280, %v1615, 0
      %v1657 = vsel %vm280, %v1616, 0
      %v1660 = vsel %vm280, %v1617, 0
      %v1663 = vsel %vm280, %v1618, 0
      %v1666 = vsel %vm280, %v1619, 0
      %v1669 = vsel %vm280, %v1620, 0
      %v1672 = vsel %vm280, %v1621, 0
      %v1675 = vsel %vm280, %v1622, 0
      %v1678 = vsel %vm280, %v1623, 0
      %v1681 = vsel %vm594, %v1631, 0
      %1683 = vmatprep.subr.bf16.mxu0 0
      %1684 = vmatpush1.bf16.msra.mxu0 %v1681
      %1685 = vmatprep.subr.bf16.mxu0 0
      %1686 = vmatpush1.bf16.msra.mxu0 0
      %1687 = vmatprep.subr.bf16.mxu0 0
      %1688 = vmatpush1.bf16.msra.mxu0 0
      %1689 = vmatprep.subr.bf16.mxu0 0
      %1690 = vmatpush1.bf16.msra.mxu0 0
      %1691 = vmatprep.subr.bf16.mxu0 0
      %1692 = vmatpush1.bf16.msra.mxu0 0
      %1693 = vmatprep.subr.bf16.mxu0 0
      %1694 = vmatpush1.bf16.msra.mxu0 0
      %1695 = vmatprep.subr.bf16.mxu0 0
      %1696 = vmatpush1.bf16.msra.mxu0 0
      %1697 = vmatprep.subr.bf16.mxu0 0
      %1698 = vmatpush1.bf16.msra.mxu0 0
      %1699 = vmatprep.subr.bf16.mxu0 0
      %1700 = vmatpush1.bf16.msra.mxu0 0
      %1701 = vmatprep.subr.bf16.mxu0 0
      %1702 = vmatpush1.bf16.msra.mxu0 0
      %1703 = vmatprep.subr.bf16.mxu0 0
      %1704 = vmatpush1.bf16.msra.mxu0 0
      %1705 = vmatprep.subr.bf16.mxu0 0
      %1706 = vmatpush1.bf16.msra.mxu0 0
      %1707 = vmatprep.subr.bf16.mxu0 0
      %1708 = vmatpush1.bf16.msra.mxu0 0
      %1709 = vmatprep.subr.bf16.mxu0 0
      %1710 = vmatpush1.bf16.msra.mxu0 0
      %1711 = vmatprep.subr.bf16.mxu0 0
      %1712 = vmatpush1.bf16.msra.mxu0 0
      %1713 = vmatprep.subr.bf16.mxu0 0
      %1714 = vmatpush1.bf16.msra.mxu0 0
      %1715 = vmatprep.mubr.bf16.mxu0 0
      %1716 = vmatmul.mubr.bf16.gmra.mrb[0].mxu0 %v1633
      %v1717 = vpop.f32.mrb[0].mxu0
      %v1718 = vadd.f32 0.0, %v1717
      %v1719 = vpop.f32.mrb[0].mxu0
      %v1720 = vpop.f32.mrb[0].mxu0
      %v1721 = vadd.f32 0.0, %v1720
      %v1722 = vpop.f32.mrb[0].mxu0
      %1723 = vmatprep.mubr.bf16.mxu0 0
      %1724 = vmatmul.mubr.bf16.gmra.mrb[0].mxu0 %v1636
      %v1725 = vpop.f32.mrb[0].mxu0
      %v1726 = vadd.f32 0.0, %v1725
      %v1727 = vpop.f32.mrb[0].mxu0
      %v1728 = vpop.f32.mrb[0].mxu0
      %v1729 = vadd.f32 0.0, %v1728
      %v1730 = vpop.f32.mrb[0].mxu0
      %1731 = vmatprep.mubr.bf16.mxu0 0
      %1732 = vmatmul.mubr.bf16.gmra.mrb[0].mxu0 %v1639
      %v1733 = vpop.f32.mrb[0].mxu0
      %v1734 = vadd.f32 0.0, %v1733
      %v1735 = vpop.f32.mrb[0].mxu0
      %v1736 = vpop.f32.mrb[0].mxu0
      %v1737 = vadd.f32 0.0, %v1736
      %v1738 = vpop.f32.mrb[0].mxu0
      %1739 = vmatprep.mubr.bf16.mxu0 0
      %1740 = vmatmul.mubr.bf16.gmra.mrb[0].mxu0 %v1642
      %v1741 = vpop.f32.mrb[0].mxu0
      %v1742 = vadd.f32 0.0, %v1741
      %v1743 = vpop.f32.mrb[0].mxu0
      %v1744 = vpop.f32.mrb[0].mxu0
      %v1745 = vadd.f32 0.0, %v1744
      %v1746 = vpop.f32.mrb[0].mxu0
      %1747 = vmatprep.mubr.bf16.mxu0 0
      %1748 = vmatmul.mubr.bf16.gmra.mrb[0].mxu0 %v1645
      %v1749 = vpop.f32.mrb[0].mxu0
      %v1750 = vadd.f32 0.0, %v1749
      %v1751 = vpop.f32.mrb[0].mxu0
      %v1752 = vpop.f32.mrb[0].mxu0
      %v1753 = vadd.f32 0.0, %v1752
      %v1754 = vpop.f32.mrb[0].mxu0
      %1755 = vmatprep.mubr.bf16.mxu0 0
      %1756 = vmatmul.mubr.bf16.gmra.mrb[0].mxu0 %v1648
      %v1757 = vpop.f32.mrb[0].mxu0
      %v1758 = vadd.f32 0.0, %v1757
      %v1759 = vpop.f32.mrb[0].mxu0
      %v1760 = vpop.f32.mrb[0].mxu0
      %v1761 = vadd.f32 0.0, %v1760
      %v1762 = vpop.f32.mrb[0].mxu0
      %1763 = vmatprep.mubr.bf16.mxu0 0
      %1764 = vmatmul.mubr.bf16.gmra.mrb[0].mxu0 %v1651
      %v1765 = vpop.f32.mrb[0].mxu0
      %v1766 = vadd.f32 0.0, %v1765
      %v1767 = vpop.f32.mrb[0].mxu0
      %v1768 = vpop.f32.mrb[0].mxu0
      %v1769 = vadd.f32 0.0, %v1768
      %v1770 = vpop.f32.mrb[0].mxu0
      %1771 = vmatprep.mubr.bf16.mxu0 0
      %1772 = vmatmul.mubr.bf16.gmra.mrb[0].mxu0 %v1654
      %v1773 = vpop.f32.mrb[0].mxu0
      %v1774 = vadd.f32 0.0, %v1773
      %v1775 = vpop.f32.mrb[0].mxu0
      %v1776 = vpop.f32.mrb[0].mxu0
      %v1777 = vadd.f32 0.0, %v1776
      %v1778 = vpop.f32.mrb[0].mxu0
      %1779 = vmatprep.mubr.bf16.mxu0 0
      %1780 = vmatmul.mubr.bf16.gmra.mrb[0].mxu0 %v1657
      %v1781 = vpop.f32.mrb[0].mxu0
      %v1782 = vadd.f32 0.0, %v1781
      %v1783 = vpop.f32.mrb[0].mxu0
      %v1784 = vpop.f32.mrb[0].mxu0
      %v1785 = vadd.f32 0.0, %v1784
      %v1786 = vpop.f32.mrb[0].mxu0
      %1787 = vmatprep.mubr.bf16.mxu0 0
      %1788 = vmatmul.mubr.bf16.gmra.mrb[0].mxu0 %v1660
      %v1789 = vpop.f32.mrb[0].mxu0
      %v1790 = vadd.f32 0.0, %v1789
      %v1791 = vpop.f32.mrb[0].mxu0
      %v1792 = vpop.f32.mrb[0].mxu0
      %v1793 = vadd.f32 0.0, %v1792
      %v1794 = vpop.f32.mrb[0].mxu0
      %1795 = vmatprep.mubr.bf16.mxu0 0
      %1796 = vmatmul.mubr.bf16.gmra.mrb[0].mxu0 %v1663
      %v1797 = vpop.f32.mrb[0].mxu0
      %v1798 = vadd.f32 0.0, %v1797
      %v1799 = vpop.f32.mrb[0].mxu0
      %v1800 = vpop.f32.mrb[0].mxu0
      %v1801 = vadd.f32 0.0, %v1800
      %v1802 = vpop.f32.mrb[0].mxu0
      %1803 = vmatprep.mubr.bf16.mxu0 0
      %1804 = vmatmul.mubr.bf16.gmra.mrb[0].mxu0 %v1666
      %v1805 = vpop.f32.mrb[0].mxu0
      %v1806 = vadd.f32 0.0, %v1805
      %v1807 = vpop.f32.mrb[0].mxu0
      %v1808 = vpop.f32.mrb[0].mxu0
      %v1809 = vadd.f32 0.0, %v1808
      %v1810 = vpop.f32.mrb[0].mxu0
      %1811 = vmatprep.mubr.bf16.mxu0 0
      %1812 = vmatmul.mubr.bf16.gmra.mrb[0].mxu0 %v1669
      %v1813 = vpop.f32.mrb[0].mxu0
      %v1814 = vadd.f32 0.0, %v1813
      %v1815 = vpop.f32.mrb[0].mxu0
      %v1816 = vpop.f32.mrb[0].mxu0
      %v1817 = vadd.f32 0.0, %v1816
      %v1818 = vpop.f32.mrb[0].mxu0
      %1819 = vmatprep.mubr.bf16.mxu0 0
      %1820 = vmatmul.mubr.bf16.gmra.mrb[0].mxu0 %v1672
      %v1821 = vpop.f32.mrb[0].mxu0
      %v1822 = vadd.f32 0.0, %v1821
      %v1823 = vpop.f32.mrb[0].mxu0
      %v1824 = vpop.f32.mrb[0].mxu0
      %v1825 = vadd.f32 0.0, %v1824
      %v1826 = vpop.f32.mrb[0].mxu0
      %1827 = vmatprep.mubr.bf16.mxu0 0
      %1828 = vmatmul.mubr.bf16.gmra.mrb[0].mxu0 %v1675
      %v1829 = vpop.f32.mrb[0].mxu0
      %v1830 = vadd.f32 0.0, %v1829
      %v1831 = vpop.f32.mrb[0].mxu0
      %v1832 = vpop.f32.mrb[0].mxu0
      %v1833 = vadd.f32 0.0, %v1832
      %v1834 = vpop.f32.mrb[0].mxu0
      %1835 = vmatprep.mubr.bf16.mxu0 0
      %1836 = vmatmul.mubr.bf16.gmra.mrb[0].mxu0 %v1678
      %v1837 = vpop.f32.mrb[0].mxu0
      %v1838 = vadd.f32 0.0, %v1837
      %v1839 = vpop.f32.mrb[0].mxu0
      %v1840 = vpop.f32.mrb[0].mxu0
      %v1841 = vadd.f32 0.0, %v1840
      %v1842 = vpop.f32.mrb[0].mxu0
      %1843 = vdwg.mxu0
      %v1844 = vadd.f32 %v1544, %v1718
      %v1845 = vadd.f32 %v1545, %v1721
      %v1846 = vadd.f32 %v1546, %v1726
      %v1847 = vadd.f32 %v1547, %v1729
      %v1848 = vadd.f32 %v1548, %v1734
      %v1849 = vadd.f32 %v1549, %v1737
      %v1850 = vadd.f32 %v1550, %v1742
      %v1851 = vadd.f32 %v1551, %v1745
      %v1852 = vadd.f32 %v1552, %v1750
      %v1853 = vadd.f32 %v1553, %v1753
      %v1854 = vadd.f32 %v1554, %v1758
      %v1855 = vadd.f32 %v1555, %v1761
      %v1856 = vadd.f32 %v1556, %v1766
      %v1857 = vadd.f32 %v1557, %v1769
      %v1858 = vadd.f32 %v1558, %v1774
      %v1859 = vadd.f32 %v1559, %v1777
      %v1860 = vadd.f32 %v1560, %v1782
      %v1861 = vadd.f32 %v1561, %v1785
      %v1862 = vadd.f32 %v1562, %v1790
      %v1863 = vadd.f32 %v1563, %v1793
      %v1864 = vadd.f32 %v1564, %v1798
      %v1865 = vadd.f32 %v1565, %v1801
      %v1866 = vadd.f32 %v1566, %v1806
      %v1867 = vadd.f32 %v1567, %v1809
      %v1868 = vadd.f32 %v1568, %v1814
      %v1869 = vadd.f32 %v1569, %v1817
      %v1870 = vadd.f32 %v1570, %v1822
      %v1871 = vadd.f32 %v1571, %v1825
      %v1872 = vadd.f32 %v1572, %v1830
      %v1873 = vadd.f32 %v1573, %v1833
      %v1874 = vadd.f32 %v1574, %v1838
      %v1875 = vadd.f32 %v1575, %v1841
      %v1876 = vld [vmem:[%s404 + $0x2] sm:$0xff]
      %v1877 = vld [vmem:[%s404 + $0xa] sm:$0xff]
      %v1878 = vld [vmem:[%s404 + $0x1a] sm:$0xff]
      %v1879 = vld [vmem:[%s404 + $0x22] sm:$0xff]
      %v1880 = vld [vmem:[%s404 + $0x32] sm:$0xff]
      %v1881 = vld [vmem:[%s404 + $0x3a] sm:$0xff]
      %v1882 = vld [vmem:[%s404 + $0x4a] sm:$0xff]
      %v1883 = vld [vmem:[%s404 + $0x52] sm:$0xff]
      %v1884 = vld [vmem:[%s404 + $0x62] sm:$0xff]
      %v1885 = vld [vmem:[%s404 + $0x6a] sm:$0xff]
      %v1886 = vld [vmem:[%s404 + $0x7a] sm:$0xff]
      %v1887 = vld [vmem:[%s404 + $0x82] sm:$0xff]
      %v1888 = vld [vmem:[%s404 + $0x92] sm:$0xff]
      %v1889 = vld [vmem:[%s404 + $0x9a] sm:$0xff]
      %v1890 = vld [vmem:[%s404 + $0xaa] sm:$0xff]
      %v1891 = vld [vmem:[%s404 + $0xb2] sm:$0xff]
      %v1892 = vld [vmem:[%s404 + $0xc2] sm:$0xff]
      %v1893 = vld [vmem:[%s404 + $0xca] sm:$0xff]
      %v1894 = vld [vmem:[%s404 + $0xda] sm:$0xff]
      %v1895 = vld [vmem:[%s404 + $0xe2] sm:$0xff]
      %v1896 = vld [vmem:[%s404 + $0xf2] sm:$0xff]
      %v1897 = vld [vmem:[%s404 + $0xfa] sm:$0xff]
      %v1898 = vld [vmem:[%s404 + $0x10a] sm:$0xff]
      %v1899 = vld [vmem:[%s404 + $0x112] sm:$0xff]
      %v1900 = vld [vmem:[%s404 + $0x122] sm:$0xff]
      %v1901 = vld [vmem:[%s404 + $0x12a] sm:$0xff]
      %v1902 = vld [vmem:[%s404 + $0x13a] sm:$0xff]
      %v1903 = vld [vmem:[%s404 + $0x142] sm:$0xff]
      %v1904 = vld [vmem:[%s404 + $0x152] sm:$0xff]
      %v1905 = vld [vmem:[%s404 + $0x15a] sm:$0xff]
      %v1906 = vld [vmem:[%s404 + $0x16a] sm:$0xff]
      %v1907 = vld [vmem:[%s404 + $0x172] sm:$0xff]
      %v1908 = vpack.c.bf16 %v1877, %v1876
      %v1909 = vpack.c.bf16 %v1879, %v1878
      %v1910 = vpack.c.bf16 %v1881, %v1880
      %v1911 = vpack.c.bf16 %v1883, %v1882
      %v1912 = vpack.c.bf16 %v1885, %v1884
      %v1913 = vpack.c.bf16 %v1887, %v1886
      %v1914 = vpack.c.bf16 %v1889, %v1888
      %v1915 = vpack.c.bf16 %v1891, %v1890
      %v1916 = vpack.c.bf16 %v1893, %v1892
      %v1917 = vpack.c.bf16 %v1895, %v1894
      %v1918 = vpack.c.bf16 %v1897, %v1896
      %v1919 = vpack.c.bf16 %v1899, %v1898
      %v1920 = vpack.c.bf16 %v1901, %v1900
      %v1921 = vpack.c.bf16 %v1903, %v1902
      %v1922 = vpack.c.bf16 %v1905, %v1904
      %v1923 = vpack.c.bf16 %v1907, %v1906
      %s1924 = scalar_lea.vmem %s1, 40
      %v1925 = vld [vmem:[%s1924] sm:$0xf]
      %v1926 = vld [vmem:[%s1924 + $0x4] sm:$0x3]
      %v1929 = vunpack.c.l.b16 %v1925
      %v1930 = vunpack.c.l.b16 %v1926
      %v1931 = vpack.c.b16 %v1930, %v1929
      %v1933 = vsel %vm280, %v1908, 0
      %v1936 = vsel %vm280, %v1909, 0
      %v1939 = vsel %vm280, %v1910, 0
      %v1942 = vsel %vm280, %v1911, 0
      %v1945 = vsel %vm280, %v1912, 0
      %v1948 = vsel %vm280, %v1913, 0
      %v1951 = vsel %vm280, %v1914, 0
      %v1954 = vsel %vm280, %v1915, 0
      %v1957 = vsel %vm280, %v1916, 0
      %v1960 = vsel %vm280, %v1917, 0
      %v1963 = vsel %vm280, %v1918, 0
      %v1966 = vsel %vm280, %v1919, 0
      %v1969 = vsel %vm280, %v1920, 0
      %v1972 = vsel %vm280, %v1921, 0
      %v1975 = vsel %vm280, %v1922, 0
      %v1978 = vsel %vm280, %v1923, 0
      %v1981 = vsel %vm594, %v1931, 0
      %1983 = vmatprep.subr.bf16.mxu0 0
      %1984 = vmatpush1.bf16.msra.mxu0 %v1981
      %1985 = vmatprep.subr.bf16.mxu0 0
      %1986 = vmatpush1.bf16.msra.mxu0 0
      %1987 = vmatprep.subr.bf16.mxu0 0
      %1988 = vmatpush1.bf16.msra.mxu0 0
      %1989 = vmatprep.subr.bf16.mxu0 0
      %1990 = vmatpush1.bf16.msra.mxu0 0
      %1991 = vmatprep.subr.bf16.mxu0 0
      %1992 = vmatpush1.bf16.msra.mxu0 0
      %1993 = vmatprep.subr.bf16.mxu0 0
      %1994 = vmatpush1.bf16.msra.mxu0 0
      %1995 = vmatprep.subr.bf16.mxu0 0
      %1996 = vmatpush1.bf16.msra.mxu0 0
      %1997 = vmatprep.subr.bf16.mxu0 0
      %1998 = vmatpush1.bf16.msra.mxu0 0
      %1999 = vmatprep.subr.bf16.mxu0 0
      %2000 = vmatpush1.bf16.msra.mxu0 0
      %2001 = vmatprep.subr.bf16.mxu0 0
      %2002 = vmatpush1.bf16.msra.mxu0 0
      %2003 = vmatprep.subr.bf16.mxu0 0
      %2004 = vmatpush1.bf16.msra.mxu0 0
      %2005 = vmatprep.subr.bf16.mxu0 0
      %2006 = vmatpush1.bf16.msra.mxu0 0
      %2007 = vmatprep.subr.bf16.mxu0 0
      %2008 = vmatpush1.bf16.msra.mxu0 0
      %2009 = vmatprep.subr.bf16.mxu0 0
      %2010 = vmatpush1.bf16.msra.mxu0 0
      %2011 = vmatprep.subr.bf16.mxu0 0
      %2012 = vmatpush1.bf16.msra.mxu0 0
      %2013 = vmatprep.subr.bf16.mxu0 0
      %2014 = vmatpush1.bf16.msra.mxu0 0
      %2015 = vmatprep.mubr.bf16.mxu0 0
      %2016 = vmatmul.mubr.bf16.gmra.mrb[0].mxu0 %v1933
      %v2017 = vpop.f32.mrb[0].mxu0
      %v2018 = vadd.f32 0.0, %v2017
      %v2019 = vpop.f32.mrb[0].mxu0
      %v2020 = vpop.f32.mrb[0].mxu0
      %v2021 = vadd.f32 0.0, %v2020
      %v2022 = vpop.f32.mrb[0].mxu0
      %2023 = vmatprep.mubr.bf16.mxu0 0
      %2024 = vmatmul.mubr.bf16.gmra.mrb[0].mxu0 %v1936
      %v2025 = vpop.f32.mrb[0].mxu0
      %v2026 = vadd.f32 0.0, %v2025
      %v2027 = vpop.f32.mrb[0].mxu0
      %v2028 = vpop.f32.mrb[0].mxu0
      %v2029 = vadd.f32 0.0, %v2028
      %v2030 = vpop.f32.mrb[0].mxu0
      %2031 = vmatprep.mubr.bf16.mxu0 0
      %2032 = vmatmul.mubr.bf16.gmra.mrb[0].mxu0 %v1939
      %v2033 = vpop.f32.mrb[0].mxu0
      %v2034 = vadd.f32 0.0, %v2033
      %v2035 = vpop.f32.mrb[0].mxu0
      %v2036 = vpop.f32.mrb[0].mxu0
      %v2037 = vadd.f32 0.0, %v2036
      %v2038 = vpop.f32.mrb[0].mxu0
      %2039 = vmatprep.mubr.bf16.mxu0 0
      %2040 = vmatmul.mubr.bf16.gmra.mrb[0].mxu0 %v1942
      %v2041 = vpop.f32.mrb[0].mxu0
      %v2042 = vadd.f32 0.0, %v2041
      %v2043 = vpop.f32.mrb[0].mxu0
      %v2044 = vpop.f32.mrb[0].mxu0
      %v2045 = vadd.f32 0.0, %v2044
      %v2046 = vpop.f32.mrb[0].mxu0
      %2047 = vmatprep.mubr.bf16.mxu0 0
      %2048 = vmatmul.mubr.bf16.gmra.mrb[0].mxu0 %v1945
      %v2049 = vpop.f32.mrb[0].mxu0
      %v2050 = vadd.f32 0.0, %v2049
      %v2051 = vpop.f32.mrb[0].mxu0
      %v2052 = vpop.f32.mrb[0].mxu0
      %v2053 = vadd.f32 0.0, %v2052
      %v2054 = vpop.f32.mrb[0].mxu0
      %2055 = vmatprep.mubr.bf16.mxu0 0
      %2056 = vmatmul.mubr.bf16.gmra.mrb[0].mxu0 %v1948
      %v2057 = vpop.f32.mrb[0].mxu0
      %v2058 = vadd.f32 0.0, %v2057
      %v2059 = vpop.f32.mrb[0].mxu0
      %v2060 = vpop.f32.mrb[0].mxu0
      %v2061 = vadd.f32 0.0, %v2060
      %v2062 = vpop.f32.mrb[0].mxu0
      %2063 = vmatprep.mubr.bf16.mxu0 0
      %2064 = vmatmul.mubr.bf16.gmra.mrb[0].mxu0 %v1951
      %v2065 = vpop.f32.mrb[0].mxu0
      %v2066 = vadd.f32 0.0, %v2065
      %v2067 = vpop.f32.mrb[0].mxu0
      %v2068 = vpop.f32.mrb[0].mxu0
      %v2069 = vadd.f32 0.0, %v2068
      %v2070 = vpop.f32.mrb[0].mxu0
      %2071 = vmatprep.mubr.bf16.mxu0 0
      %2072 = vmatmul.mubr.bf16.gmra.mrb[0].mxu0 %v1954
      %v2073 = vpop.f32.mrb[0].mxu0
      %v2074 = vadd.f32 0.0, %v2073
      %v2075 = vpop.f32.mrb[0].mxu0
      %v2076 = vpop.f32.mrb[0].mxu0
      %v2077 = vadd.f32 0.0, %v2076
      %v2078 = vpop.f32.mrb[0].mxu0
      %2079 = vmatprep.mubr.bf16.mxu0 0
      %2080 = vmatmul.mubr.bf16.gmra.mrb[0].mxu0 %v1957
      %v2081 = vpop.f32.mrb[0].mxu0
      %v2082 = vadd.f32 0.0, %v2081
      %v2083 = vpop.f32.mrb[0].mxu0
      %v2084 = vpop.f32.mrb[0].mxu0
      %v2085 = vadd.f32 0.0, %v2084
      %v2086 = vpop.f32.mrb[0].mxu0
      %2087 = vmatprep.mubr.bf16.mxu0 0
      %2088 = vmatmul.mubr.bf16.gmra.mrb[0].mxu0 %v1960
      %v2089 = vpop.f32.mrb[0].mxu0
      %v2090 = vadd.f32 0.0, %v2089
      %v2091 = vpop.f32.mrb[0].mxu0
      %v2092 = vpop.f32.mrb[0].mxu0
      %v2093 = vadd.f32 0.0, %v2092
      %v2094 = vpop.f32.mrb[0].mxu0
      %2095 = vmatprep.mubr.bf16.mxu0 0
      %2096 = vmatmul.mubr.bf16.gmra.mrb[0].mxu0 %v1963
      %v2097 = vpop.f32.mrb[0].mxu0
      %v2098 = vadd.f32 0.0, %v2097
      %v2099 = vpop.f32.mrb[0].mxu0
      %v2100 = vpop.f32.mrb[0].mxu0
      %v2101 = vadd.f32 0.0, %v2100
      %v2102 = vpop.f32.mrb[0].mxu0
      %2103 = vmatprep.mubr.bf16.mxu0 0
      %2104 = vmatmul.mubr.bf16.gmra.mrb[0].mxu0 %v1966
      %v2105 = vpop.f32.mrb[0].mxu0
      %v2106 = vadd.f32 0.0, %v2105
      %v2107 = vpop.f32.mrb[0].mxu0
      %v2108 = vpop.f32.mrb[0].mxu0
      %v2109 = vadd.f32 0.0, %v2108
      %v2110 = vpop.f32.mrb[0].mxu0
      %2111 = vmatprep.mubr.bf16.mxu0 0
      %2112 = vmatmul.mubr.bf16.gmra.mrb[0].mxu0 %v1969
      %v2113 = vpop.f32.mrb[0].mxu0
      %v2114 = vadd.f32 0.0, %v2113
      %v2115 = vpop.f32.mrb[0].mxu0
      %v2116 = vpop.f32.mrb[0].mxu0
      %v2117 = vadd.f32 0.0, %v2116
      %v2118 = vpop.f32.mrb[0].mxu0
      %2119 = vmatprep.mubr.bf16.mxu0 0
      %2120 = vmatmul.mubr.bf16.gmra.mrb[0].mxu0 %v1972
      %v2121 = vpop.f32.mrb[0].mxu0
      %v2122 = vadd.f32 0.0, %v2121
      %v2123 = vpop.f32.mrb[0].mxu0
      %v2124 = vpop.f32.mrb[0].mxu0
      %v2125 = vadd.f32 0.0, %v2124
      %v2126 = vpop.f32.mrb[0].mxu0
      %2127 = vmatprep.mubr.bf16.mxu0 0
      %2128 = vmatmul.mubr.bf16.gmra.mrb[0].mxu0 %v1975
      %v2129 = vpop.f32.mrb[0].mxu0
      %v2130 = vadd.f32 0.0, %v2129
      %v2131 = vpop.f32.mrb[0].mxu0
      %v2132 = vpop.f32.mrb[0].mxu0
      %v2133 = vadd.f32 0.0, %v2132
      %v2134 = vpop.f32.mrb[0].mxu0
      %2135 = vmatprep.mubr.bf16.mxu0 0
      %2136 = vmatmul.mubr.bf16.gmra.mrb[0].mxu0 %v1978
      %v2137 = vpop.f32.mrb[0].mxu0
      %v2138 = vadd.f32 0.0, %v2137
      %v2139 = vpop.f32.mrb[0].mxu0
      %v2140 = vpop.f32.mrb[0].mxu0
      %v2141 = vadd.f32 0.0, %v2140
      %v2142 = vpop.f32.mrb[0].mxu0
      %2143 = vdwg.mxu0
      %v2144 = vadd.f32 %v1844, %v2018
      %v2145 = vadd.f32 %v1845, %v2021
      %v2146 = vadd.f32 %v1846, %v2026
      %v2147 = vadd.f32 %v1847, %v2029
      %v2148 = vadd.f32 %v1848, %v2034
      %v2149 = vadd.f32 %v1849, %v2037
      %v2150 = vadd.f32 %v1850, %v2042
      %v2151 = vadd.f32 %v1851, %v2045
      %v2152 = vadd.f32 %v1852, %v2050
      %v2153 = vadd.f32 %v1853, %v2053
      %v2154 = vadd.f32 %v1854, %v2058
      %v2155 = vadd.f32 %v1855, %v2061
      %v2156 = vadd.f32 %v1856, %v2066
      %v2157 = vadd.f32 %v1857, %v2069
      %v2158 = vadd.f32 %v1858, %v2074
      %v2159 = vadd.f32 %v1859, %v2077
      %v2160 = vadd.f32 %v1860, %v2082
      %v2161 = vadd.f32 %v1861, %v2085
      %v2162 = vadd.f32 %v1862, %v2090
      %v2163 = vadd.f32 %v1863, %v2093
      %v2164 = vadd.f32 %v1864, %v2098
      %v2165 = vadd.f32 %v1865, %v2101
      %v2166 = vadd.f32 %v1866, %v2106
      %v2167 = vadd.f32 %v1867, %v2109
      %v2168 = vadd.f32 %v1868, %v2114
      %v2169 = vadd.f32 %v1869, %v2117
      %v2170 = vadd.f32 %v1870, %v2122
      %v2171 = vadd.f32 %v1871, %v2125
      %v2172 = vadd.f32 %v1872, %v2130
      %v2173 = vadd.f32 %v1873, %v2133
      %v2174 = vadd.f32 %v1874, %v2138
      %v2175 = vadd.f32 %v1875, %v2141
      %s2176 = scalar_lea.vmem [#allocation2], 48
      %v2177 = vld [vmem:[%s2176] sm:$0xff]
      %v2178 = vld [vmem:[%s2176 + $0x8] sm:$0xff]
      %v2179 = vld [vmem:[%s2176 + $0x18] sm:$0xff]
      %v2180 = vld [vmem:[%s2176 + $0x20] sm:$0xff]
      %v2181 = vld [vmem:[%s2176 + $0x30] sm:$0xff]
      %v2182 = vld [vmem:[%s2176 + $0x38] sm:$0xff]
      %v2183 = vld [vmem:[%s2176 + $0x48] sm:$0xff]
      %v2184 = vld [vmem:[%s2176 + $0x50] sm:$0xff]
      %v2185 = vld [vmem:[%s2176 + $0x60] sm:$0xff]
      %v2186 = vld [vmem:[%s2176 + $0x68] sm:$0xff]
      %v2187 = vld [vmem:[%s2176 + $0x78] sm:$0xff]
      %v2188 = vld [vmem:[%s2176 + $0x80] sm:$0xff]
      %v2189 = vld [vmem:[%s2176 + $0x90] sm:$0xff]
      %v2190 = vld [vmem:[%s2176 + $0x98] sm:$0xff]
      %v2191 = vld [vmem:[%s2176 + $0xa8] sm:$0xff]
      %v2192 = vld [vmem:[%s2176 + $0xb0] sm:$0xff]
      %v2193 = vld [vmem:[%s2176 + $0xc0] sm:$0xff]
      %v2194 = vld [vmem:[%s2176 + $0xc8] sm:$0xff]
      %v2195 = vld [vmem:[%s2176 + $0xd8] sm:$0xff]
      %v2196 = vld [vmem:[%s2176 + $0xe0] sm:$0xff]
      %v2197 = vld [vmem:[%s2176 + $0xf0] sm:$0xff]
      %v2198 = vld [vmem:[%s2176 + $0xf8] sm:$0xff]
      %v2199 = vld [vmem:[%s2176 + $0x108] sm:$0xff]
      %v2200 = vld [vmem:[%s2176 + $0x110] sm:$0xff]
      %v2201 = vld [vmem:[%s2176 + $0x120] sm:$0xff]
      %v2202 = vld [vmem:[%s2176 + $0x128] sm:$0xff]
      %v2203 = vld [vmem:[%s2176 + $0x138] sm:$0xff]
      %v2204 = vld [vmem:[%s2176 + $0x140] sm:$0xff]
      %v2205 = vld [vmem:[%s2176 + $0x150] sm:$0xff]
      %v2206 = vld [vmem:[%s2176 + $0x158] sm:$0xff]
      %v2207 = vld [vmem:[%s2176 + $0x168] sm:$0xff]
      %v2208 = vld [vmem:[%s2176 + $0x170] sm:$0xff]
      %v2209 = vpack.c.bf16 %v2178, %v2177
      %v2210 = vpack.c.bf16 %v2180, %v2179
      %v2211 = vpack.c.bf16 %v2182, %v2181
      %v2212 = vpack.c.bf16 %v2184, %v2183
      %v2213 = vpack.c.bf16 %v2186, %v2185
      %v2214 = vpack.c.bf16 %v2188, %v2187
      %v2215 = vpack.c.bf16 %v2190, %v2189
      %v2216 = vpack.c.bf16 %v2192, %v2191
      %v2217 = vpack.c.bf16 %v2194, %v2193
      %v2218 = vpack.c.bf16 %v2196, %v2195
      %v2219 = vpack.c.bf16 %v2198, %v2197
      %v2220 = vpack.c.bf16 %v2200, %v2199
      %v2221 = vpack.c.bf16 %v2202, %v2201
      %v2222 = vpack.c.bf16 %v2204, %v2203
      %v2223 = vpack.c.bf16 %v2206, %v2205
      %v2224 = vpack.c.bf16 %v2208, %v2207
      %s2225 = scalar_lea.vmem %s1, 48
      %v2226 = vld [vmem:[%s2225] sm:$0xf]
      %v2227 = vld [vmem:[%s2225 + $0x4] sm:$0x3]
      %v2230 = vunpack.c.l.b16 %v2226
      %v2231 = vunpack.c.l.b16 %v2227
      %v2232 = vpack.c.b16 %v2231, %v2230
      %v2234 = vsel %vm280, %v2209, 0
      %v2237 = vsel %vm280, %v2210, 0
      %v2240 = vsel %vm280, %v2211, 0
      %v2243 = vsel %vm280, %v2212, 0
      %v2246 = vsel %vm280, %v2213, 0
      %v2249 = vsel %vm280, %v2214, 0
      %v2252 = vsel %vm280, %v2215, 0
      %v2255 = vsel %vm280, %v2216, 0
      %v2258 = vsel %vm280, %v2217, 0
      %v2261 = vsel %vm280, %v2218, 0
      %v2264 = vsel %vm280, %v2219, 0
      %v2267 = vsel %vm280, %v2220, 0
      %v2270 = vsel %vm280, %v2221, 0
      %v2273 = vsel %vm280, %v2222, 0
      %v2276 = vsel %vm280, %v2223, 0
      %v2279 = vsel %vm280, %v2224, 0
      %v2282 = vsel %vm594, %v2232, 0
      %2284 = vmatprep.subr.bf16.mxu0 0
      %2285 = vmatpush1.bf16.msra.mxu0 %v2282
      %2286 = vmatprep.subr.bf16.mxu0 0
      %2287 = vmatpush1.bf16.msra.mxu0 0
      %2288 = vmatprep.subr.bf16.mxu0 0
      %2289 = vmatpush1.bf16.msra.mxu0 0
      %2290 = vmatprep.subr.bf16.mxu0 0
      %2291 = vmatpush1.bf16.msra.mxu0 0
      %2292 = vmatprep.subr.bf16.mxu0 0
      %2293 = vmatpush1.bf16.msra.mxu0 0
      %2294 = vmatprep.subr.bf16.mxu0 0
      %2295 = vmatpush1.bf16.msra.mxu0 0
      %2296 = vmatprep.subr.bf16.mxu0 0
      %2297 = vmatpush1.bf16.msra.mxu0 0
      %2298 = vmatprep.subr.bf16.mxu0 0
      %2299 = vmatpush1.bf16.msra.mxu0 0
      %2300 = vmatprep.subr.bf16.mxu0 0
      %2301 = vmatpush1.bf16.msra.mxu0 0
      %2302 = vmatprep.subr.bf16.mxu0 0
      %2303 = vmatpush1.bf16.msra.mxu0 0
      %2304 = vmatprep.subr.bf16.mxu0 0
      %2305 = vmatpush1.bf16.msra.mxu0 0
      %2306 = vmatprep.subr.bf16.mxu0 0
      %2307 = vmatpush1.bf16.msra.mxu0 0
      %2308 = vmatprep.subr.bf16.mxu0 0
      %2309 = vmatpush1.bf16.msra.mxu0 0
      %2310 = vmatprep.subr.bf16.mxu0 0
      %2311 = vmatpush1.bf16.msra.mxu0 0
      %2312 = vmatprep.subr.bf16.mxu0 0
      %2313 = vmatpush1.bf16.msra.mxu0 0
      %2314 = vmatprep.subr.bf16.mxu0 0
      %2315 = vmatpush1.bf16.msra.mxu0 0
      %2316 = vmatprep.mubr.bf16.mxu0 0
      %2317 = vmatmul.mubr.bf16.gmra.mrb[0].mxu0 %v2234
      %v2318 = vpop.f32.mrb[0].mxu0
      %v2319 = vadd.f32 0.0, %v2318
      %v2320 = vpop.f32.mrb[0].mxu0
      %v2321 = vpop.f32.mrb[0].mxu0
      %v2322 = vadd.f32 0.0, %v2321
      %v2323 = vpop.f32.mrb[0].mxu0
      %2324 = vmatprep.mubr.bf16.mxu0 0
      %2325 = vmatmul.mubr.bf16.gmra.mrb[0].mxu0 %v2237
      %v2326 = vpop.f32.mrb[0].mxu0
      %v2327 = vadd.f32 0.0, %v2326
      %v2328 = vpop.f32.mrb[0].mxu0
      %v2329 = vpop.f32.mrb[0].mxu0
      %v2330 = vadd.f32 0.0, %v2329
      %v2331 = vpop.f32.mrb[0].mxu0
      %2332 = vmatprep.mubr.bf16.mxu0 0
      %2333 = vmatmul.mubr.bf16.gmra.mrb[0].mxu0 %v2240
      %v2334 = vpop.f32.mrb[0].mxu0
      %v2335 = vadd.f32 0.0, %v2334
      %v2336 = vpop.f32.mrb[0].mxu0
      %v2337 = vpop.f32.mrb[0].mxu0
      %v2338 = vadd.f32 0.0, %v2337
      %v2339 = vpop.f32.mrb[0].mxu0
      %2340 = vmatprep.mubr.bf16.mxu0 0
      %2341 = vmatmul.mubr.bf16.gmra.mrb[0].mxu0 %v2243
      %v2342 = vpop.f32.mrb[0].mxu0
      %v2343 = vadd.f32 0.0, %v2342
      %v2344 = vpop.f32.mrb[0].mxu0
      %v2345 = vpop.f32.mrb[0].mxu0
      %v2346 = vadd.f32 0.0, %v2345
      %v2347 = vpop.f32.mrb[0].mxu0
      %2348 = vmatprep.mubr.bf16.mxu0 0
      %2349 = vmatmul.mubr.bf16.gmra.mrb[0].mxu0 %v2246
      %v2350 = vpop.f32.mrb[0].mxu0
      %v2351 = vadd.f32 0.0, %v2350
      %v2352 = vpop.f32.mrb[0].mxu0
      %v2353 = vpop.f32.mrb[0].mxu0
      %v2354 = vadd.f32 0.0, %v2353
      %v2355 = vpop.f32.mrb[0].mxu0
      %2356 = vmatprep.mubr.bf16.mxu0 0
      %2357 = vmatmul.mubr.bf16.gmra.mrb[0].mxu0 %v2249
      %v2358 = vpop.f32.mrb[0].mxu0
      %v2359 = vadd.f32 0.0, %v2358
      %v2360 = vpop.f32.mrb[0].mxu0
      %v2361 = vpop.f32.mrb[0].mxu0
      %v2362 = vadd.f32 0.0, %v2361
      %v2363 = vpop.f32.mrb[0].mxu0
      %2364 = vmatprep.mubr.bf16.mxu0 0
      %2365 = vmatmul.mubr.bf16.gmra.mrb[0].mxu0 %v2252
      %v2366 = vpop.f32.mrb[0].mxu0
      %v2367 = vadd.f32 0.0, %v2366
      %v2368 = vpop.f32.mrb[0].mxu0
      %v2369 = vpop.f32.mrb[0].mxu0
      %v2370 = vadd.f32 0.0, %v2369
      %v2371 = vpop.f32.mrb[0].mxu0
      %2372 = vmatprep.mubr.bf16.mxu0 0
      %2373 = vmatmul.mubr.bf16.gmra.mrb[0].mxu0 %v2255
      %v2374 = vpop.f32.mrb[0].mxu0
      %v2375 = vadd.f32 0.0, %v2374
      %v2376 = vpop.f32.mrb[0].mxu0
      %v2377 = vpop.f32.mrb[0].mxu0
      %v2378 = vadd.f32 0.0, %v2377
      %v2379 = vpop.f32.mrb[0].mxu0
      %2380 = vmatprep.mubr.bf16.mxu0 0
      %2381 = vmatmul.mubr.bf16.gmra.mrb[0].mxu0 %v2258
      %v2382 = vpop.f32.mrb[0].mxu0
      %v2383 = vadd.f32 0.0, %v2382
      %v2384 = vpop.f32.mrb[0].mxu0
      %v2385 = vpop.f32.mrb[0].mxu0
      %v2386 = vadd.f32 0.0, %v2385
      %v2387 = vpop.f32.mrb[0].mxu0
      %2388 = vmatprep.mubr.bf16.mxu0 0
      %2389 = vmatmul.mubr.bf16.gmra.mrb[0].mxu0 %v2261
      %v2390 = vpop.f32.mrb[0].mxu0
      %v2391 = vadd.f32 0.0, %v2390
      %v2392 = vpop.f32.mrb[0].mxu0
      %v2393 = vpop.f32.mrb[0].mxu0
      %v2394 = vadd.f32 0.0, %v2393
      %v2395 = vpop.f32.mrb[0].mxu0
      %2396 = vmatprep.mubr.bf16.mxu0 0
      %2397 = vmatmul.mubr.bf16.gmra.mrb[0].mxu0 %v2264
      %v2398 = vpop.f32.mrb[0].mxu0
      %v2399 = vadd.f32 0.0, %v2398
      %v2400 = vpop.f32.mrb[0].mxu0
      %v2401 = vpop.f32.mrb[0].mxu0
      %v2402 = vadd.f32 0.0, %v2401
      %v2403 = vpop.f32.mrb[0].mxu0
      %2404 = vmatprep.mubr.bf16.mxu0 0
      %2405 = vmatmul.mubr.bf16.gmra.mrb[0].mxu0 %v2267
      %v2406 = vpop.f32.mrb[0].mxu0
      %v2407 = vadd.f32 0.0, %v2406
      %v2408 = vpop.f32.mrb[0].mxu0
      %v2409 = vpop.f32.mrb[0].mxu0
      %v2410 = vadd.f32 0.0, %v2409
      %v2411 = vpop.f32.mrb[0].mxu0
      %2412 = vmatprep.mubr.bf16.mxu0 0
      %2413 = vmatmul.mubr.bf16.gmra.mrb[0].mxu0 %v2270
      %v2414 = vpop.f32.mrb[0].mxu0
      %v2415 = vadd.f32 0.0, %v2414
      %v2416 = vpop.f32.mrb[0].mxu0
      %v2417 = vpop.f32.mrb[0].mxu0
      %v2418 = vadd.f32 0.0, %v2417
      %v2419 = vpop.f32.mrb[0].mxu0
      %2420 = vmatprep.mubr.bf16.mxu0 0
      %2421 = vmatmul.mubr.bf16.gmra.mrb[0].mxu0 %v2273
      %v2422 = vpop.f32.mrb[0].mxu0
      %v2423 = vadd.f32 0.0, %v2422
      %v2424 = vpop.f32.mrb[0].mxu0
      %v2425 = vpop.f32.mrb[0].mxu0
      %v2426 = vadd.f32 0.0, %v2425
      %v2427 = vpop.f32.mrb[0].mxu0
      %2428 = vmatprep.mubr.bf16.mxu0 0
      %2429 = vmatmul.mubr.bf16.gmra.mrb[0].mxu0 %v2276
      %v2430 = vpop.f32.mrb[0].mxu0
      %v2431 = vadd.f32 0.0, %v2430
      %v2432 = vpop.f32.mrb[0].mxu0
      %v2433 = vpop.f32.mrb[0].mxu0
      %v2434 = vadd.f32 0.0, %v2433
      %v2435 = vpop.f32.mrb[0].mxu0
      %2436 = vmatprep.mubr.bf16.mxu0 0
      %2437 = vmatmul.mubr.bf16.gmra.mrb[0].mxu0 %v2279
      %v2438 = vpop.f32.mrb[0].mxu0
      %v2439 = vadd.f32 0.0, %v2438
      %v2440 = vpop.f32.mrb[0].mxu0
      %v2441 = vpop.f32.mrb[0].mxu0
      %v2442 = vadd.f32 0.0, %v2441
      %v2443 = vpop.f32.mrb[0].mxu0
      %2444 = vdwg.mxu0
      %v2445 = vadd.f32 %v2144, %v2319
      %v2446 = vadd.f32 %v2145, %v2322
      %v2447 = vadd.f32 %v2146, %v2327
      %v2448 = vadd.f32 %v2147, %v2330
      %v2449 = vadd.f32 %v2148, %v2335
      %v2450 = vadd.f32 %v2149, %v2338
      %v2451 = vadd.f32 %v2150, %v2343
      %v2452 = vadd.f32 %v2151, %v2346
      %v2453 = vadd.f32 %v2152, %v2351
      %v2454 = vadd.f32 %v2153, %v2354
      %v2455 = vadd.f32 %v2154, %v2359
      %v2456 = vadd.f32 %v2155, %v2362
      %v2457 = vadd.f32 %v2156, %v2367
      %v2458 = vadd.f32 %v2157, %v2370
      %v2459 = vadd.f32 %v2158, %v2375
      %v2460 = vadd.f32 %v2159, %v2378
      %v2461 = vadd.f32 %v2160, %v2383
      %v2462 = vadd.f32 %v2161, %v2386
      %v2463 = vadd.f32 %v2162, %v2391
      %v2464 = vadd.f32 %v2163, %v2394
      %v2465 = vadd.f32 %v2164, %v2399
      %v2466 = vadd.f32 %v2165, %v2402
      %v2467 = vadd.f32 %v2166, %v2407
      %v2468 = vadd.f32 %v2167, %v2410
      %v2469 = vadd.f32 %v2168, %v2415
      %v2470 = vadd.f32 %v2169, %v2418
      %v2471 = vadd.f32 %v2170, %v2423
      %v2472 = vadd.f32 %v2171, %v2426
      %v2473 = vadd.f32 %v2172, %v2431
      %v2474 = vadd.f32 %v2173, %v2434
      %v2475 = vadd.f32 %v2174, %v2439
      %v2476 = vadd.f32 %v2175, %v2442
      %v2477 = vld [vmem:[%s2176 + $0x1] sm:$0xff]
      %v2478 = vld [vmem:[%s2176 + $0x9] sm:$0xff]
      %v2479 = vld [vmem:[%s2176 + $0x19] sm:$0xff]
      %v2480 = vld [vmem:[%s2176 + $0x21] sm:$0xff]
      %v2481 = vld [vmem:[%s2176 + $0x31] sm:$0xff]
      %v2482 = vld [vmem:[%s2176 + $0x39] sm:$0xff]
      %v2483 = vld [vmem:[%s2176 + $0x49] sm:$0xff]
      %v2484 = vld [vmem:[%s2176 + $0x51] sm:$0xff]
      %v2485 = vld [vmem:[%s2176 + $0x61] sm:$0xff]
      %v2486 = vld [vmem:[%s2176 + $0x69] sm:$0xff]
      %v2487 = vld [vmem:[%s2176 + $0x79] sm:$0xff]
      %v2488 = vld [vmem:[%s2176 + $0x81] sm:$0xff]
      %v2489 = vld [vmem:[%s2176 + $0x91] sm:$0xff]
      %v2490 = vld [vmem:[%s2176 + $0x99] sm:$0xff]
      %v2491 = vld [vmem:[%s2176 + $0xa9] sm:$0xff]
      %v2492 = vld [vmem:[%s2176 + $0xb1] sm:$0xff]
      %v2493 = vld [vmem:[%s2176 + $0xc1] sm:$0xff]
      %v2494 = vld [vmem:[%s2176 + $0xc9] sm:$0xff]
      %v2495 = vld [vmem:[%s2176 + $0xd9] sm:$0xff]
      %v2496 = vld [vmem:[%s2176 + $0xe1] sm:$0xff]
      %v2497 = vld [vmem:[%s2176 + $0xf1] sm:$0xff]
      %v2498 = vld [vmem:[%s2176 + $0xf9] sm:$0xff]
      %v2499 = vld [vmem:[%s2176 + $0x109] sm:$0xff]
      %v2500 = vld [vmem:[%s2176 + $0x111] sm:$0xff]
      %v2501 = vld [vmem:[%s2176 + $0x121] sm:$0xff]
      %v2502 = vld [vmem:[%s2176 + $0x129] sm:$0xff]
      %v2503 = vld [vmem:[%s2176 + $0x139] sm:$0xff]
      %v2504 = vld [vmem:[%s2176 + $0x141] sm:$0xff]
      %v2505 = vld [vmem:[%s2176 + $0x151] sm:$0xff]
      %v2506 = vld [vmem:[%s2176 + $0x159] sm:$0xff]
      %v2507 = vld [vmem:[%s2176 + $0x169] sm:$0xff]
      %v2508 = vld [vmem:[%s2176 + $0x171] sm:$0xff]
      %v2509 = vpack.c.bf16 %v2478, %v2477
      %v2510 = vpack.c.bf16 %v2480, %v2479
      %v2511 = vpack.c.bf16 %v2482, %v2481
      %v2512 = vpack.c.bf16 %v2484, %v2483
      %v2513 = vpack.c.bf16 %v2486, %v2485
      %v2514 = vpack.c.bf16 %v2488, %v2487
      %v2515 = vpack.c.bf16 %v2490, %v2489
      %v2516 = vpack.c.bf16 %v2492, %v2491
      %v2517 = vpack.c.bf16 %v2494, %v2493
      %v2518 = vpack.c.bf16 %v2496, %v2495
      %v2519 = vpack.c.bf16 %v2498, %v2497
      %v2520 = vpack.c.bf16 %v2500, %v2499
      %v2521 = vpack.c.bf16 %v2502, %v2501
      %v2522 = vpack.c.bf16 %v2504, %v2503
      %v2523 = vpack.c.bf16 %v2506, %v2505
      %v2524 = vpack.c.bf16 %v2508, %v2507
      %s2525 = scalar_lea.vmem %s1, 56
      %v2526 = vld [vmem:[%s2525] sm:$0xf]
      %v2527 = vld [vmem:[%s2525 + $0x4] sm:$0x3]
      %v2530 = vunpack.c.l.b16 %v2526
      %v2531 = vunpack.c.l.b16 %v2527
      %v2532 = vpack.c.b16 %v2531, %v2530
      %v2534 = vsel %vm280, %v2509, 0
      %v2537 = vsel %vm280, %v2510, 0
      %v2540 = vsel %vm280, %v2511, 0
      %v2543 = vsel %vm280, %v2512, 0
      %v2546 = vsel %vm280, %v2513, 0
      %v2549 = vsel %vm280, %v2514, 0
      %v2552 = vsel %vm280, %v2515, 0
      %v2555 = vsel %vm280, %v2516, 0
      %v2558 = vsel %vm280, %v2517, 0
      %v2561 = vsel %vm280, %v2518, 0
      %v2564 = vsel %vm280, %v2519, 0
      %v2567 = vsel %vm280, %v2520, 0
      %v2570 = vsel %vm280, %v2521, 0
      %v2573 = vsel %vm280, %v2522, 0
      %v2576 = vsel %vm280, %v2523, 0
      %v2579 = vsel %vm280, %v2524, 0
      %v2582 = vsel %vm594, %v2532, 0
      %2584 = vmatprep.subr.bf16.mxu0 0
      %2585 = vmatpush1.bf16.msra.mxu0 %v2582
      %2586 = vmatprep.subr.bf16.mxu0 0
      %2587 = vmatpush1.bf16.msra.mxu0 0
      %2588 = vmatprep.subr.bf16.mxu0 0
      %2589 = vmatpush1.bf16.msra.mxu0 0
      %2590 = vmatprep.subr.bf16.mxu0 0
      %2591 = vmatpush1.bf16.msra.mxu0 0
      %2592 = vmatprep.subr.bf16.mxu0 0
      %2593 = vmatpush1.bf16.msra.mxu0 0
      %2594 = vmatprep.subr.bf16.mxu0 0
      %2595 = vmatpush1.bf16.msra.mxu0 0
      %2596 = vmatprep.subr.bf16.mxu0 0
      %2597 = vmatpush1.bf16.msra.mxu0 0
      %2598 = vmatprep.subr.bf16.mxu0 0
      %2599 = vmatpush1.bf16.msra.mxu0 0
      %2600 = vmatprep.subr.bf16.mxu0 0
      %2601 = vmatpush1.bf16.msra.mxu0 0
      %2602 = vmatprep.subr.bf16.mxu0 0
      %2603 = vmatpush1.bf16.msra.mxu0 0
      %2604 = vmatprep.subr.bf16.mxu0 0
      %2605 = vmatpush1.bf16.msra.mxu0 0
      %2606 = vmatprep.subr.bf16.mxu0 0
      %2607 = vmatpush1.bf16.msra.mxu0 0
      %2608 = vmatprep.subr.bf16.mxu0 0
      %2609 = vmatpush1.bf16.msra.mxu0 0
      %2610 = vmatprep.subr.bf16.mxu0 0
      %2611 = vmatpush1.bf16.msra.mxu0 0
      %2612 = vmatprep.subr.bf16.mxu0 0
      %2613 = vmatpush1.bf16.msra.mxu0 0
      %2614 = vmatprep.subr.bf16.mxu0 0
      %2615 = vmatpush1.bf16.msra.mxu0 0
      %2616 = vmatprep.mubr.bf16.mxu0 0
      %2617 = vmatmul.mubr.bf16.gmra.mrb[0].mxu0 %v2534
      %v2618 = vpop.f32.mrb[0].mxu0
      %v2619 = vadd.f32 0.0, %v2618
      %v2620 = vpop.f32.mrb[0].mxu0
      %v2621 = vpop.f32.mrb[0].mxu0
      %v2622 = vadd.f32 0.0, %v2621
      %v2623 = vpop.f32.mrb[0].mxu0
      %2624 = vmatprep.mubr.bf16.mxu0 0
      %2625 = vmatmul.mubr.bf16.gmra.mrb[0].mxu0 %v2537
      %v2626 = vpop.f32.mrb[0].mxu0
      %v2627 = vadd.f32 0.0, %v2626
      %v2628 = vpop.f32.mrb[0].mxu0
      %v2629 = vpop.f32.mrb[0].mxu0
      %v2630 = vadd.f32 0.0, %v2629
      %v2631 = vpop.f32.mrb[0].mxu0
      %2632 = vmatprep.mubr.bf16.mxu0 0
      %2633 = vmatmul.mubr.bf16.gmra.mrb[0].mxu0 %v2540
      %v2634 = vpop.f32.mrb[0].mxu0
      %v2635 = vadd.f32 0.0, %v2634
      %v2636 = vpop.f32.mrb[0].mxu0
      %v2637 = vpop.f32.mrb[0].mxu0
      %v2638 = vadd.f32 0.0, %v2637
      %v2639 = vpop.f32.mrb[0].mxu0
      %2640 = vmatprep.mubr.bf16.mxu0 0
      %2641 = vmatmul.mubr.bf16.gmra.mrb[0].mxu0 %v2543
      %v2642 = vpop.f32.mrb[0].mxu0
      %v2643 = vadd.f32 0.0, %v2642
      %v2644 = vpop.f32.mrb[0].mxu0
      %v2645 = vpop.f32.mrb[0].mxu0
      %v2646 = vadd.f32 0.0, %v2645
      %v2647 = vpop.f32.mrb[0].mxu0
      %2648 = vmatprep.mubr.bf16.mxu0 0
      %2649 = vmatmul.mubr.bf16.gmra.mrb[0].mxu0 %v2546
      %v2650 = vpop.f32.mrb[0].mxu0
      %v2651 = vadd.f32 0.0, %v2650
      %v2652 = vpop.f32.mrb[0].mxu0
      %v2653 = vpop.f32.mrb[0].mxu0
      %v2654 = vadd.f32 0.0, %v2653
      %v2655 = vpop.f32.mrb[0].mxu0
      %2656 = vmatprep.mubr.bf16.mxu0 0
      %2657 = vmatmul.mubr.bf16.gmra.mrb[0].mxu0 %v2549
      %v2658 = vpop.f32.mrb[0].mxu0
      %v2659 = vadd.f32 0.0, %v2658
      %v2660 = vpop.f32.mrb[0].mxu0
      %v2661 = vpop.f32.mrb[0].mxu0
      %v2662 = vadd.f32 0.0, %v2661
      %v2663 = vpop.f32.mrb[0].mxu0
      %2664 = vmatprep.mubr.bf16.mxu0 0
      %2665 = vmatmul.mubr.bf16.gmra.mrb[0].mxu0 %v2552
      %v2666 = vpop.f32.mrb[0].mxu0
      %v2667 = vadd.f32 0.0, %v2666
      %v2668 = vpop.f32.mrb[0].mxu0
      %v2669 = vpop.f32.mrb[0].mxu0
      %v2670 = vadd.f32 0.0, %v2669
      %v2671 = vpop.f32.mrb[0].mxu0
      %2672 = vmatprep.mubr.bf16.mxu0 0
      %2673 = vmatmul.mubr.bf16.gmra.mrb[0].mxu0 %v2555
      %v2674 = vpop.f32.mrb[0].mxu0
      %v2675 = vadd.f32 0.0, %v2674
      %v2676 = vpop.f32.mrb[0].mxu0
      %v2677 = vpop.f32.mrb[0].mxu0
      %v2678 = vadd.f32 0.0, %v2677
      %v2679 = vpop.f32.mrb[0].mxu0
      %2680 = vmatprep.mubr.bf16.mxu0 0
      %2681 = vmatmul.mubr.bf16.gmra.mrb[0].mxu0 %v2558
      %v2682 = vpop.f32.mrb[0].mxu0
      %v2683 = vadd.f32 0.0, %v2682
      %v2684 = vpop.f32.mrb[0].mxu0
      %v2685 = vpop.f32.mrb[0].mxu0
      %v2686 = vadd.f32 0.0, %v2685
      %v2687 = vpop.f32.mrb[0].mxu0
      %2688 = vmatprep.mubr.bf16.mxu0 0
      %2689 = vmatmul.mubr.bf16.gmra.mrb[0].mxu0 %v2561
      %v2690 = vpop.f32.mrb[0].mxu0
      %v2691 = vadd.f32 0.0, %v2690
      %v2692 = vpop.f32.mrb[0].mxu0
      %v2693 = vpop.f32.mrb[0].mxu0
      %v2694 = vadd.f32 0.0, %v2693
      %v2695 = vpop.f32.mrb[0].mxu0
      %2696 = vmatprep.mubr.bf16.mxu0 0
      %2697 = vmatmul.mubr.bf16.gmra.mrb[0].mxu0 %v2564
      %v2698 = vpop.f32.mrb[0].mxu0
      %v2699 = vadd.f32 0.0, %v2698
      %v2700 = vpop.f32.mrb[0].mxu0
      %v2701 = vpop.f32.mrb[0].mxu0
      %v2702 = vadd.f32 0.0, %v2701
      %v2703 = vpop.f32.mrb[0].mxu0
      %2704 = vmatprep.mubr.bf16.mxu0 0
      %2705 = vmatmul.mubr.bf16.gmra.mrb[0].mxu0 %v2567
      %v2706 = vpop.f32.mrb[0].mxu0
      %v2707 = vadd.f32 0.0, %v2706
      %v2708 = vpop.f32.mrb[0].mxu0
      %v2709 = vpop.f32.mrb[0].mxu0
      %v2710 = vadd.f32 0.0, %v2709
      %v2711 = vpop.f32.mrb[0].mxu0
      %2712 = vmatprep.mubr.bf16.mxu0 0
      %2713 = vmatmul.mubr.bf16.gmra.mrb[0].mxu0 %v2570
      %v2714 = vpop.f32.mrb[0].mxu0
      %v2715 = vadd.f32 0.0, %v2714
      %v2716 = vpop.f32.mrb[0].mxu0
      %v2717 = vpop.f32.mrb[0].mxu0
      %v2718 = vadd.f32 0.0, %v2717
      %v2719 = vpop.f32.mrb[0].mxu0
      %2720 = vmatprep.mubr.bf16.mxu0 0
      %2721 = vmatmul.mubr.bf16.gmra.mrb[0].mxu0 %v2573
      %v2722 = vpop.f32.mrb[0].mxu0
      %v2723 = vadd.f32 0.0, %v2722
      %v2724 = vpop.f32.mrb[0].mxu0
      %v2725 = vpop.f32.mrb[0].mxu0
      %v2726 = vadd.f32 0.0, %v2725
      %v2727 = vpop.f32.mrb[0].mxu0
      %2728 = vmatprep.mubr.bf16.mxu0 0
      %2729 = vmatmul.mubr.bf16.gmra.mrb[0].mxu0 %v2576
      %v2730 = vpop.f32.mrb[0].mxu0
      %v2731 = vadd.f32 0.0, %v2730
      %v2732 = vpop.f32.mrb[0].mxu0
      %v2733 = vpop.f32.mrb[0].mxu0
      %v2734 = vadd.f32 0.0, %v2733
      %v2735 = vpop.f32.mrb[0].mxu0
      %2736 = vmatprep.mubr.bf16.mxu0 0
      %2737 = vmatmul.mubr.bf16.gmra.mrb[0].mxu0 %v2579
      %v2738 = vpop.f32.mrb[0].mxu0
      %v2739 = vadd.f32 0.0, %v2738
      %v2740 = vpop.f32.mrb[0].mxu0
      %v2741 = vpop.f32.mrb[0].mxu0
      %v2742 = vadd.f32 0.0, %v2741
      %v2743 = vpop.f32.mrb[0].mxu0
      %2744 = vdwg.mxu0
      %v2745 = vadd.f32 %v2445, %v2619
      %v2746 = vadd.f32 %v2446, %v2622
      %v2747 = vadd.f32 %v2447, %v2627
      %v2748 = vadd.f32 %v2448, %v2630
      %v2749 = vadd.f32 %v2449, %v2635
      %v2750 = vadd.f32 %v2450, %v2638
      %v2751 = vadd.f32 %v2451, %v2643
      %v2752 = vadd.f32 %v2452, %v2646
      %v2753 = vadd.f32 %v2453, %v2651
      %v2754 = vadd.f32 %v2454, %v2654
      %v2755 = vadd.f32 %v2455, %v2659
      %v2756 = vadd.f32 %v2456, %v2662
      %v2757 = vadd.f32 %v2457, %v2667
      %v2758 = vadd.f32 %v2458, %v2670
      %v2759 = vadd.f32 %v2459, %v2675
      %v2760 = vadd.f32 %v2460, %v2678
      %v2761 = vadd.f32 %v2461, %v2683
      %v2762 = vadd.f32 %v2462, %v2686
      %v2763 = vadd.f32 %v2463, %v2691
      %v2764 = vadd.f32 %v2464, %v2694
      %v2765 = vadd.f32 %v2465, %v2699
      %v2766 = vadd.f32 %v2466, %v2702
      %v2767 = vadd.f32 %v2467, %v2707
      %v2768 = vadd.f32 %v2468, %v2710
      %v2769 = vadd.f32 %v2469, %v2715
      %v2770 = vadd.f32 %v2470, %v2718
      %v2771 = vadd.f32 %v2471, %v2723
      %v2772 = vadd.f32 %v2472, %v2726
      %v2773 = vadd.f32 %v2473, %v2731
      %v2774 = vadd.f32 %v2474, %v2734
      %v2775 = vadd.f32 %v2475, %v2739
      %v2776 = vadd.f32 %v2476, %v2742
      %v2777 = vld [vmem:[%s2176 + $0x2] sm:$0xff]
      %v2778 = vld [vmem:[%s2176 + $0xa] sm:$0xff]
      %v2779 = vld [vmem:[%s2176 + $0x1a] sm:$0xff]
      %v2780 = vld [vmem:[%s2176 + $0x22] sm:$0xff]
      %v2781 = vld [vmem:[%s2176 + $0x32] sm:$0xff]
      %v2782 = vld [vmem:[%s2176 + $0x3a] sm:$0xff]
      %v2783 = vld [vmem:[%s2176 + $0x4a] sm:$0xff]
      %v2784 = vld [vmem:[%s2176 + $0x52] sm:$0xff]
      %v2785 = vld [vmem:[%s2176 + $0x62] sm:$0xff]
      %v2786 = vld [vmem:[%s2176 + $0x6a] sm:$0xff]
      %v2787 = vld [vmem:[%s2176 + $0x7a] sm:$0xff]
      %v2788 = vld [vmem:[%s2176 + $0x82] sm:$0xff]
      %v2789 = vld [vmem:[%s2176 + $0x92] sm:$0xff]
      %v2790 = vld [vmem:[%s2176 + $0x9a] sm:$0xff]
      %v2791 = vld [vmem:[%s2176 + $0xaa] sm:$0xff]
      %v2792 = vld [vmem:[%s2176 + $0xb2] sm:$0xff]
      %v2793 = vld [vmem:[%s2176 + $0xc2] sm:$0xff]
      %v2794 = vld [vmem:[%s2176 + $0xca] sm:$0xff]
      %v2795 = vld [vmem:[%s2176 + $0xda] sm:$0xff]
      %v2796 = vld [vmem:[%s2176 + $0xe2] sm:$0xff]
      %v2797 = vld [vmem:[%s2176 + $0xf2] sm:$0xff]
      %v2798 = vld [vmem:[%s2176 + $0xfa] sm:$0xff]
      %v2799 = vld [vmem:[%s2176 + $0x10a] sm:$0xff]
      %v2800 = vld [vmem:[%s2176 + $0x112] sm:$0xff]
      %v2801 = vld [vmem:[%s2176 + $0x122] sm:$0xff]
      %v2802 = vld [vmem:[%s2176 + $0x12a] sm:$0xff]
      %v2803 = vld [vmem:[%s2176 + $0x13a] sm:$0xff]
      %v2804 = vld [vmem:[%s2176 + $0x142] sm:$0xff]
      %v2805 = vld [vmem:[%s2176 + $0x152] sm:$0xff]
      %v2806 = vld [vmem:[%s2176 + $0x15a] sm:$0xff]
      %v2807 = vld [vmem:[%s2176 + $0x16a] sm:$0xff]
      %v2808 = vld [vmem:[%s2176 + $0x172] sm:$0xff]
      %v2809 = vpack.c.bf16 %v2778, %v2777
      %v2810 = vpack.c.bf16 %v2780, %v2779
      %v2811 = vpack.c.bf16 %v2782, %v2781
      %v2812 = vpack.c.bf16 %v2784, %v2783
      %v2813 = vpack.c.bf16 %v2786, %v2785
      %v2814 = vpack.c.bf16 %v2788, %v2787
      %v2815 = vpack.c.bf16 %v2790, %v2789
      %v2816 = vpack.c.bf16 %v2792, %v2791
      %v2817 = vpack.c.bf16 %v2794, %v2793
      %v2818 = vpack.c.bf16 %v2796, %v2795
      %v2819 = vpack.c.bf16 %v2798, %v2797
      %v2820 = vpack.c.bf16 %v2800, %v2799
      %v2821 = vpack.c.bf16 %v2802, %v2801
      %v2822 = vpack.c.bf16 %v2804, %v2803
      %v2823 = vpack.c.bf16 %v2806, %v2805
      %v2824 = vpack.c.bf16 %v2808, %v2807
      %s2825 = scalar_lea.vmem %s1, 64
      %v2826 = vld [vmem:[%s2825] sm:$0xf]
      %v2827 = vld [vmem:[%s2825 + $0x4] sm:$0x3]
      %v2830 = vunpack.c.l.b16 %v2826
      %v2831 = vunpack.c.l.b16 %v2827
      %v2832 = vpack.c.b16 %v2831, %v2830
      %v2834 = vsel %vm280, %v2809, 0
      %v2837 = vsel %vm280, %v2810, 0
      %v2840 = vsel %vm280, %v2811, 0
      %v2843 = vsel %vm280, %v2812, 0
      %v2846 = vsel %vm280, %v2813, 0
      %v2849 = vsel %vm280, %v2814, 0
      %v2852 = vsel %vm280, %v2815, 0
      %v2855 = vsel %vm280, %v2816, 0
      %v2858 = vsel %vm280, %v2817, 0
      %v2861 = vsel %vm280, %v2818, 0
      %v2864 = vsel %vm280, %v2819, 0
      %v2867 = vsel %vm280, %v2820, 0
      %v2870 = vsel %vm280, %v2821, 0
      %v2873 = vsel %vm280, %v2822, 0
      %v2876 = vsel %vm280, %v2823, 0
      %v2879 = vsel %vm280, %v2824, 0
      %v2882 = vsel %vm594, %v2832, 0
      %2884 = vmatprep.subr.bf16.mxu0 0
      %2885 = vmatpush1.bf16.msra.mxu0 %v2882
      %2886 = vmatprep.subr.bf16.mxu0 0
      %2887 = vmatpush1.bf16.msra.mxu0 0
      %2888 = vmatprep.subr.bf16.mxu0 0
      %2889 = vmatpush1.bf16.msra.mxu0 0
      %2890 = vmatprep.subr.bf16.mxu0 0
      %2891 = vmatpush1.bf16.msra.mxu0 0
      %2892 = vmatprep.subr.bf16.mxu0 0
      %2893 = vmatpush1.bf16.msra.mxu0 0
      %2894 = vmatprep.subr.bf16.mxu0 0
      %2895 = vmatpush1.bf16.msra.mxu0 0
      %2896 = vmatprep.subr.bf16.mxu0 0
      %2897 = vmatpush1.bf16.msra.mxu0 0
      %2898 = vmatprep.subr.bf16.mxu0 0
      %2899 = vmatpush1.bf16.msra.mxu0 0
      %2900 = vmatprep.subr.bf16.mxu0 0
      %2901 = vmatpush1.bf16.msra.mxu0 0
      %2902 = vmatprep.subr.bf16.mxu0 0
      %2903 = vmatpush1.bf16.msra.mxu0 0
      %2904 = vmatprep.subr.bf16.mxu0 0
      %2905 = vmatpush1.bf16.msra.mxu0 0
      %2906 = vmatprep.subr.bf16.mxu0 0
      %2907 = vmatpush1.bf16.msra.mxu0 0
      %2908 = vmatprep.subr.bf16.mxu0 0
      %2909 = vmatpush1.bf16.msra.mxu0 0
      %2910 = vmatprep.subr.bf16.mxu0 0
      %2911 = vmatpush1.bf16.msra.mxu0 0
      %2912 = vmatprep.subr.bf16.mxu0 0
      %2913 = vmatpush1.bf16.msra.mxu0 0
      %2914 = vmatprep.subr.bf16.mxu0 0
      %2915 = vmatpush1.bf16.msra.mxu0 0
      %2916 = vmatprep.mubr.bf16.mxu0 0
      %2917 = vmatmul.mubr.bf16.gmra.mrb[0].mxu0 %v2834
      %v2918 = vpop.f32.mrb[0].mxu0
      %v2919 = vadd.f32 0.0, %v2918
      %v2920 = vpop.f32.mrb[0].mxu0
      %v2921 = vpop.f32.mrb[0].mxu0
      %v2922 = vadd.f32 0.0, %v2921
      %v2923 = vpop.f32.mrb[0].mxu0
      %2924 = vmatprep.mubr.bf16.mxu0 0
      %2925 = vmatmul.mubr.bf16.gmra.mrb[0].mxu0 %v2837
      %v2926 = vpop.f32.mrb[0].mxu0
      %v2927 = vadd.f32 0.0, %v2926
      %v2928 = vpop.f32.mrb[0].mxu0
      %v2929 = vpop.f32.mrb[0].mxu0
      %v2930 = vadd.f32 0.0, %v2929
      %v2931 = vpop.f32.mrb[0].mxu0
      %2932 = vmatprep.mubr.bf16.mxu0 0
      %2933 = vmatmul.mubr.bf16.gmra.mrb[0].mxu0 %v2840
      %v2934 = vpop.f32.mrb[0].mxu0
      %v2935 = vadd.f32 0.0, %v2934
      %v2936 = vpop.f32.mrb[0].mxu0
      %v2937 = vpop.f32.mrb[0].mxu0
      %v2938 = vadd.f32 0.0, %v2937
      %v2939 = vpop.f32.mrb[0].mxu0
      %2940 = vmatprep.mubr.bf16.mxu0 0
      %2941 = vmatmul.mubr.bf16.gmra.mrb[0].mxu0 %v2843
      %v2942 = vpop.f32.mrb[0].mxu0
      %v2943 = vadd.f32 0.0, %v2942
      %v2944 = vpop.f32.mrb[0].mxu0
      %v2945 = vpop.f32.mrb[0].mxu0
      %v2946 = vadd.f32 0.0, %v2945
      %v2947 = vpop.f32.mrb[0].mxu0
      %2948 = vmatprep.mubr.bf16.mxu0 0
      %2949 = vmatmul.mubr.bf16.gmra.mrb[0].mxu0 %v2846
      %v2950 = vpop.f32.mrb[0].mxu0
      %v2951 = vadd.f32 0.0, %v2950
      %v2952 = vpop.f32.mrb[0].mxu0
      %v2953 = vpop.f32.mrb[0].mxu0
      %v2954 = vadd.f32 0.0, %v2953
      %v2955 = vpop.f32.mrb[0].mxu0
      %2956 = vmatprep.mubr.bf16.mxu0 0
      %2957 = vmatmul.mubr.bf16.gmra.mrb[0].mxu0 %v2849
      %v2958 = vpop.f32.mrb[0].mxu0
      %v2959 = vadd.f32 0.0, %v2958
      %v2960 = vpop.f32.mrb[0].mxu0
      %v2961 = vpop.f32.mrb[0].mxu0
      %v2962 = vadd.f32 0.0, %v2961
      %v2963 = vpop.f32.mrb[0].mxu0
      %2964 = vmatprep.mubr.bf16.mxu0 0
      %2965 = vmatmul.mubr.bf16.gmra.mrb[0].mxu0 %v2852
      %v2966 = vpop.f32.mrb[0].mxu0
      %v2967 = vadd.f32 0.0, %v2966
      %v2968 = vpop.f32.mrb[0].mxu0
      %v2969 = vpop.f32.mrb[0].mxu0
      %v2970 = vadd.f32 0.0, %v2969
      %v2971 = vpop.f32.mrb[0].mxu0
      %2972 = vmatprep.mubr.bf16.mxu0 0
      %2973 = vmatmul.mubr.bf16.gmra.mrb[0].mxu0 %v2855
      %v2974 = vpop.f32.mrb[0].mxu0
      %v2975 = vadd.f32 0.0, %v2974
      %v2976 = vpop.f32.mrb[0].mxu0
      %v2977 = vpop.f32.mrb[0].mxu0
      %v2978 = vadd.f32 0.0, %v2977
      %v2979 = vpop.f32.mrb[0].mxu0
      %2980 = vmatprep.mubr.bf16.mxu0 0
      %2981 = vmatmul.mubr.bf16.gmra.mrb[0].mxu0 %v2858
      %v2982 = vpop.f32.mrb[0].mxu0
      %v2983 = vadd.f32 0.0, %v2982
      %v2984 = vpop.f32.mrb[0].mxu0
      %v2985 = vpop.f32.mrb[0].mxu0
      %v2986 = vadd.f32 0.0, %v2985
      %v2987 = vpop.f32.mrb[0].mxu0
      %2988 = vmatprep.mubr.bf16.mxu0 0
      %2989 = vmatmul.mubr.bf16.gmra.mrb[0].mxu0 %v2861
      %v2990 = vpop.f32.mrb[0].mxu0
      %v2991 = vadd.f32 0.0, %v2990
      %v2992 = vpop.f32.mrb[0].mxu0
      %v2993 = vpop.f32.mrb[0].mxu0
      %v2994 = vadd.f32 0.0, %v2993
      %v2995 = vpop.f32.mrb[0].mxu0
      %2996 = vmatprep.mubr.bf16.mxu0 0
      %2997 = vmatmul.mubr.bf16.gmra.mrb[0].mxu0 %v2864
      %v2998 = vpop.f32.mrb[0].mxu0
      %v2999 = vadd.f32 0.0, %v2998
      %v3000 = vpop.f32.mrb[0].mxu0
      %v3001 = vpop.f32.mrb[0].mxu0
      %v3002 = vadd.f32 0.0, %v3001
      %v3003 = vpop.f32.mrb[0].mxu0
      %3004 = vmatprep.mubr.bf16.mxu0 0
      %3005 = vmatmul.mubr.bf16.gmra.mrb[0].mxu0 %v2867
      %v3006 = vpop.f32.mrb[0].mxu0
      %v3007 = vadd.f32 0.0, %v3006
      %v3008 = vpop.f32.mrb[0].mxu0
      %v3009 = vpop.f32.mrb[0].mxu0
      %v3010 = vadd.f32 0.0, %v3009
      %v3011 = vpop.f32.mrb[0].mxu0
      %3012 = vmatprep.mubr.bf16.mxu0 0
      %3013 = vmatmul.mubr.bf16.gmra.mrb[0].mxu0 %v2870
      %v3014 = vpop.f32.mrb[0].mxu0
      %v3015 = vadd.f32 0.0, %v3014
      %v3016 = vpop.f32.mrb[0].mxu0
      %v3017 = vpop.f32.mrb[0].mxu0
      %v3018 = vadd.f32 0.0, %v3017
      %v3019 = vpop.f32.mrb[0].mxu0
      %3020 = vmatprep.mubr.bf16.mxu0 0
      %3021 = vmatmul.mubr.bf16.gmra.mrb[0].mxu0 %v2873
      %v3022 = vpop.f32.mrb[0].mxu0
      %v3023 = vadd.f32 0.0, %v3022
      %v3024 = vpop.f32.mrb[0].mxu0
      %v3025 = vpop.f32.mrb[0].mxu0
      %v3026 = vadd.f32 0.0, %v3025
      %v3027 = vpop.f32.mrb[0].mxu0
      %3028 = vmatprep.mubr.bf16.mxu0 0
      %3029 = vmatmul.mubr.bf16.gmra.mrb[0].mxu0 %v2876
      %v3030 = vpop.f32.mrb[0].mxu0
      %v3031 = vadd.f32 0.0, %v3030
      %v3032 = vpop.f32.mrb[0].mxu0
      %v3033 = vpop.f32.mrb[0].mxu0
      %v3034 = vadd.f32 0.0, %v3033
      %v3035 = vpop.f32.mrb[0].mxu0
      %3036 = vmatprep.mubr.bf16.mxu0 0
      %3037 = vmatmul.mubr.bf16.gmra.mrb[0].mxu0 %v2879
      %v3038 = vpop.f32.mrb[0].mxu0
      %v3039 = vadd.f32 0.0, %v3038
      %v3040 = vpop.f32.mrb[0].mxu0
      %v3041 = vpop.f32.mrb[0].mxu0
      %v3042 = vadd.f32 0.0, %v3041
      %v3043 = vpop.f32.mrb[0].mxu0
      %3044 = vdwg.mxu0
      %v3045 = vadd.f32 %v2745, %v2919
      %v3046 = vadd.f32 %v2746, %v2922
      %v3047 = vadd.f32 %v2747, %v2927
      %v3048 = vadd.f32 %v2748, %v2930
      %v3049 = vadd.f32 %v2749, %v2935
      %v3050 = vadd.f32 %v2750, %v2938
      %v3051 = vadd.f32 %v2751, %v2943
      %v3052 = vadd.f32 %v2752, %v2946
      %v3053 = vadd.f32 %v2753, %v2951
      %v3054 = vadd.f32 %v2754, %v2954
      %v3055 = vadd.f32 %v2755, %v2959
      %v3056 = vadd.f32 %v2756, %v2962
      %v3057 = vadd.f32 %v2757, %v2967
      %v3058 = vadd.f32 %v2758, %v2970
      %v3059 = vadd.f32 %v2759, %v2975
      %v3060 = vadd.f32 %v2760, %v2978
      %v3061 = vadd.f32 %v2761, %v2983
      %v3062 = vadd.f32 %v2762, %v2986
      %v3063 = vadd.f32 %v2763, %v2991
      %v3064 = vadd.f32 %v2764, %v2994
      %v3065 = vadd.f32 %v2765, %v2999
      %v3066 = vadd.f32 %v2766, %v3002
      %v3067 = vadd.f32 %v2767, %v3007
      %v3068 = vadd.f32 %v2768, %v3010
      %v3069 = vadd.f32 %v2769, %v3015
      %v3070 = vadd.f32 %v2770, %v3018
      %v3071 = vadd.f32 %v2771, %v3023
      %v3072 = vadd.f32 %v2772, %v3026
      %v3073 = vadd.f32 %v2773, %v3031
      %v3074 = vadd.f32 %v2774, %v3034
      %v3075 = vadd.f32 %v2775, %v3039
      %v3076 = vadd.f32 %v2776, %v3042
      %v3078 = vlaneseq
      %v3079 = vshrl.u32 %v3078, 7
      %v3080 = vsub.s32 0, %v3079
      %v3081 = vrot.slane %v437, %v3080
      %v3083 = vadd.f32 %v3045, %v3081
      %v3084 = vadd.f32 %v3046, %v3081
      %v3085 = vadd.f32 %v3047, %v3081
      %v3086 = vadd.f32 %v3048, %v3081
      %v3087 = vadd.f32 %v3049, %v3081
      %v3088 = vadd.f32 %v3050, %v3081
      %v3089 = vadd.f32 %v3051, %v3081
      %v3090 = vadd.f32 %v3052, %v3081
      %v3091 = vadd.f32 %v3053, %v3081
      %v3092 = vadd.f32 %v3054, %v3081
      %v3093 = vadd.f32 %v3055, %v3081
      %v3094 = vadd.f32 %v3056, %v3081
      %v3095 = vadd.f32 %v3057, %v3081
      %v3096 = vadd.f32 %v3058, %v3081
      %v3097 = vadd.f32 %v3059, %v3081
      %v3098 = vadd.f32 %v3060, %v3081
      %v3099 = vadd.f32 %v3061, %v3081
      %v3100 = vadd.f32 %v3062, %v3081
      %v3101 = vadd.f32 %v3063, %v3081
      %v3102 = vadd.f32 %v3064, %v3081
      %v3103 = vadd.f32 %v3065, %v3081
      %v3104 = vadd.f32 %v3066, %v3081
      %v3105 = vadd.f32 %v3067, %v3081
      %v3106 = vadd.f32 %v3068, %v3081
      %v3107 = vadd.f32 %v3069, %v3081
      %v3108 = vadd.f32 %v3070, %v3081
      %v3109 = vadd.f32 %v3071, %v3081
      %v3110 = vadd.f32 %v3072, %v3081
      %v3111 = vadd.f32 %v3073, %v3081
      %v3112 = vadd.f32 %v3074, %v3081
      %v3113 = vadd.f32 %v3075, %v3081
      %v3114 = vadd.f32 %v3076, %v3081
      %vm3115 = vcmp.gt.f32.partialorder %v3083, 0.0
      %vm3116 = vcmp.gt.f32.partialorder %v3084, 0.0
      %vm3117 = vcmp.gt.f32.partialorder %v3085, 0.0
      %vm3118 = vcmp.gt.f32.partialorder %v3086, 0.0
      %vm3119 = vcmp.gt.f32.partialorder %v3087, 0.0
      %vm3120 = vcmp.gt.f32.partialorder %v3088, 0.0
      %vm3121 = vcmp.gt.f32.partialorder %v3089, 0.0
      %vm3122 = vcmp.gt.f32.partialorder %v3090, 0.0
      %vm3123 = vcmp.gt.f32.partialorder %v3091, 0.0
      %vm3124 = vcmp.gt.f32.partialorder %v3092, 0.0
      %vm3125 = vcmp.gt.f32.partialorder %v3093, 0.0
      %vm3126 = vcmp.gt.f32.partialorder %v3094, 0.0
      %vm3127 = vcmp.gt.f32.partialorder %v3095, 0.0
      %vm3128 = vcmp.gt.f32.partialorder %v3096, 0.0
      %vm3129 = vcmp.gt.f32.partialorder %v3097, 0.0
      %vm3130 = vcmp.gt.f32.partialorder %v3098, 0.0
      %vm3131 = vcmp.gt.f32.partialorder %v3099, 0.0
      %vm3132 = vcmp.gt.f32.partialorder %v3100, 0.0
      %vm3133 = vcmp.gt.f32.partialorder %v3101, 0.0
      %vm3134 = vcmp.gt.f32.partialorder %v3102, 0.0
      %vm3135 = vcmp.gt.f32.partialorder %v3103, 0.0
      %vm3136 = vcmp.gt.f32.partialorder %v3104, 0.0
      %vm3137 = vcmp.gt.f32.partialorder %v3105, 0.0
      %vm3138 = vcmp.gt.f32.partialorder %v3106, 0.0
      %vm3139 = vcmp.gt.f32.partialorder %v3107, 0.0
      %vm3140 = vcmp.gt.f32.partialorder %v3108, 0.0
      %vm3141 = vcmp.gt.f32.partialorder %v3109, 0.0
      %vm3142 = vcmp.gt.f32.partialorder %v3110, 0.0
      %vm3143 = vcmp.gt.f32.partialorder %v3111, 0.0
      %vm3144 = vcmp.gt.f32.partialorder %v3112, 0.0
      %vm3145 = vcmp.gt.f32.partialorder %v3113, 0.0
      %vm3146 = vcmp.gt.f32.partialorder %v3114, 0.0
      %v3147 = vmul.f32 %v3083, 0.2
      %v3148 = vmul.f32 %v3084, 0.2
      %v3149 = vmul.f32 %v3085, 0.2
      %v3150 = vmul.f32 %v3086, 0.2
      %v3151 = vmul.f32 %v3087, 0.2
      %v3152 = vmul.f32 %v3088, 0.2
      %v3153 = vmul.f32 %v3089, 0.2
      %v3154 = vmul.f32 %v3090, 0.2
      %v3155 = vmul.f32 %v3091, 0.2
      %v3156 = vmul.f32 %v3092, 0.2
      %v3157 = vmul.f32 %v3093, 0.2
      %v3158 = vmul.f32 %v3094, 0.2
      %v3159 = vmul.f32 %v3095, 0.2
      %v3160 = vmul.f32 %v3096, 0.2
      %v3161 = vmul.f32 %v3097, 0.2
      %v3162 = vmul.f32 %v3098, 0.2
      %v3163 = vmul.f32 %v3099, 0.2
      %v3164 = vmul.f32 %v3100, 0.2
      %v3165 = vmul.f32 %v3101, 0.2
      %v3166 = vmul.f32 %v3102, 0.2
      %v3167 = vmul.f32 %v3103, 0.2
      %v3168 = vmul.f32 %v3104, 0.2
      %v3169 = vmul.f32 %v3105, 0.2
      %v3170 = vmul.f32 %v3106, 0.2
      %v3171 = vmul.f32 %v3107, 0.2
      %v3172 = vmul.f32 %v3108, 0.2
      %v3173 = vmul.f32 %v3109, 0.2
      %v3174 = vmul.f32 %v3110, 0.2
      %v3175 = vmul.f32 %v3111, 0.2
      %v3176 = vmul.f32 %v3112, 0.2
      %v3177 = vmul.f32 %v3113, 0.2
      %v3178 = vmul.f32 %v3114, 0.2
      %v3179 = vsel %vm3115, %v3083, %v3147
      %v3180 = vsel %vm3116, %v3084, %v3148
      %v3181 = vsel %vm3117, %v3085, %v3149
      %v3182 = vsel %vm3118, %v3086, %v3150
      %v3183 = vsel %vm3119, %v3087, %v3151
      %v3184 = vsel %vm3120, %v3088, %v3152
      %v3185 = vsel %vm3121, %v3089, %v3153
      %v3186 = vsel %vm3122, %v3090, %v3154
      %v3187 = vsel %vm3123, %v3091, %v3155
      %v3188 = vsel %vm3124, %v3092, %v3156
      %v3189 = vsel %vm3125, %v3093, %v3157
      %v3190 = vsel %vm3126, %v3094, %v3158
      %v3191 = vsel %vm3127, %v3095, %v3159
      %v3192 = vsel %vm3128, %v3096, %v3160
      %v3193 = vsel %vm3129, %v3097, %v3161
      %v3194 = vsel %vm3130, %v3098, %v3162
      %v3195 = vsel %vm3131, %v3099, %v3163
      %v3196 = vsel %vm3132, %v3100, %v3164
      %v3197 = vsel %vm3133, %v3101, %v3165
      %v3198 = vsel %vm3134, %v3102, %v3166
      %v3199 = vsel %vm3135, %v3103, %v3167
      %v3200 = vsel %vm3136, %v3104, %v3168
      %v3201 = vsel %vm3137, %v3105, %v3169
      %v3202 = vsel %vm3138, %v3106, %v3170
      %v3203 = vsel %vm3139, %v3107, %v3171
      %v3204 = vsel %vm3140, %v3108, %v3172
      %v3205 = vsel %vm3141, %v3109, %v3173
      %v3206 = vsel %vm3142, %v3110, %v3174
      %v3207 = vsel %vm3143, %v3111, %v3175
      %v3208 = vsel %vm3144, %v3112, %v3176
      %v3209 = vsel %vm3145, %v3113, %v3177
      %v3210 = vsel %vm3146, %v3114, %v3178
      %v3211 = vpack.c.bf16 %v3180, %v3179
      %v3212 = vpack.c.bf16 %v3182, %v3181
      %v3213 = vpack.c.bf16 %v3184, %v3183
      %v3214 = vpack.c.bf16 %v3186, %v3185
      %v3215 = vpack.c.bf16 %v3188, %v3187
      %v3216 = vpack.c.bf16 %v3190, %v3189
      %v3217 = vpack.c.bf16 %v3192, %v3191
      %v3218 = vpack.c.bf16 %v3194, %v3193
      %v3219 = vpack.c.bf16 %v3196, %v3195
      %v3220 = vpack.c.bf16 %v3198, %v3197
      %v3221 = vpack.c.bf16 %v3200, %v3199
      %v3222 = vpack.c.bf16 %v3202, %v3201
      %v3223 = vpack.c.bf16 %v3204, %v3203
      %v3224 = vpack.c.bf16 %v3206, %v3205
      %v3225 = vpack.c.bf16 %v3208, %v3207
      %v3226 = vpack.c.bf16 %v3210, %v3209
      %v3227 = vld [vmem:[%s3] sm:$0xf]
      %v3228 = vld [vmem:[%s3 + $0x4] sm:$0x3]
      %v3230 = vlaneseq
      %v3231 = vshrl.u32 %v3230, 7
      %v3232 = vsub.s32 0, %v3231
      %v3233 = vrot.slane %v438, %v3232
      %v3237 = vunpack.c.l.b16 %v3227
      %v3238 = vunpack.c.l.b16 %v3228
      %v3239 = vpack.c.b16 %v3238, %v3237
      %v3241 = vsel %vm280, %v3211, 0
      %v3244 = vsel %vm280, %v3212, 0
      %v3247 = vsel %vm280, %v3213, 0
      %v3250 = vsel %vm280, %v3214, 0
      %v3253 = vsel %vm280, %v3215, 0
      %v3256 = vsel %vm280, %v3216, 0
      %v3259 = vsel %vm280, %v3217, 0
      %v3262 = vsel %vm280, %v3218, 0
      %v3265 = vsel %vm280, %v3219, 0
      %v3268 = vsel %vm280, %v3220, 0
      %v3271 = vsel %vm280, %v3221, 0
      %v3274 = vsel %vm280, %v3222, 0
      %v3277 = vsel %vm280, %v3223, 0
      %v3280 = vsel %vm280, %v3224, 0
      %v3283 = vsel %vm280, %v3225, 0
      %v3286 = vsel %vm280, %v3226, 0
      %v3289 = vsel %vm594, %v3239, 0
      %3291 = vmatprep.subr.bf16.mxu0 0
      %3292 = vmatpush1.bf16.msra.mxu0 %v3289
      %3293 = vmatprep.subr.bf16.mxu0 0
      %3294 = vmatpush1.bf16.msra.mxu0 0
      %3295 = vmatprep.subr.bf16.mxu0 0
      %3296 = vmatpush1.bf16.msra.mxu0 0
      %3297 = vmatprep.subr.bf16.mxu0 0
      %3298 = vmatpush1.bf16.msra.mxu0 0
      %3299 = vmatprep.subr.bf16.mxu0 0
      %3300 = vmatpush1.bf16.msra.mxu0 0
      %3301 = vmatprep.subr.bf16.mxu0 0
      %3302 = vmatpush1.bf16.msra.mxu0 0
      %3303 = vmatprep.subr.bf16.mxu0 0
      %3304 = vmatpush1.bf16.msra.mxu0 0
      %3305 = vmatprep.subr.bf16.mxu0 0
      %3306 = vmatpush1.bf16.msra.mxu0 0
      %3307 = vmatprep.subr.bf16.mxu0 0
      %3308 = vmatpush1.bf16.msra.mxu0 0
      %3309 = vmatprep.subr.bf16.mxu0 0
      %3310 = vmatpush1.bf16.msra.mxu0 0
      %3311 = vmatprep.subr.bf16.mxu0 0
      %3312 = vmatpush1.bf16.msra.mxu0 0
      %3313 = vmatprep.subr.bf16.mxu0 0
      %3314 = vmatpush1.bf16.msra.mxu0 0
      %3315 = vmatprep.subr.bf16.mxu0 0
      %3316 = vmatpush1.bf16.msra.mxu0 0
      %3317 = vmatprep.subr.bf16.mxu0 0
      %3318 = vmatpush1.bf16.msra.mxu0 0
      %3319 = vmatprep.subr.bf16.mxu0 0
      %3320 = vmatpush1.bf16.msra.mxu0 0
      %3321 = vmatprep.subr.bf16.mxu0 0
      %3322 = vmatpush1.bf16.msra.mxu0 0
      %3323 = vmatprep.mubr.bf16.mxu0 0
      %3324 = vmatmul.mubr.bf16.gmra.mrb[0].mxu0 %v3241
      %v3325 = vpop.f32.mrb[0].mxu0
      %v3326 = vadd.f32 %v3233, %v3325
      %v3327 = vpop.f32.mrb[0].mxu0
      %v3328 = vpop.f32.mrb[0].mxu0
      %v3329 = vadd.f32 %v3233, %v3328
      %v3330 = vpop.f32.mrb[0].mxu0
      %3331 = vmatprep.mubr.bf16.mxu0 0
      %3332 = vmatmul.mubr.bf16.gmra.mrb[0].mxu0 %v3244
      %v3333 = vpop.f32.mrb[0].mxu0
      %v3334 = vadd.f32 %v3233, %v3333
      %v3335 = vpop.f32.mrb[0].mxu0
      %v3336 = vpop.f32.mrb[0].mxu0
      %v3337 = vadd.f32 %v3233, %v3336
      %v3338 = vpop.f32.mrb[0].mxu0
      %3339 = vmatprep.mubr.bf16.mxu0 0
      %3340 = vmatmul.mubr.bf16.gmra.mrb[0].mxu0 %v3247
      %v3341 = vpop.f32.mrb[0].mxu0
      %v3342 = vadd.f32 %v3233, %v3341
      %v3343 = vpop.f32.mrb[0].mxu0
      %v3344 = vpop.f32.mrb[0].mxu0
      %v3345 = vadd.f32 %v3233, %v3344
      %v3346 = vpop.f32.mrb[0].mxu0
      %3347 = vmatprep.mubr.bf16.mxu0 0
      %3348 = vmatmul.mubr.bf16.gmra.mrb[0].mxu0 %v3250
      %v3349 = vpop.f32.mrb[0].mxu0
      %v3350 = vadd.f32 %v3233, %v3349
      %v3351 = vpop.f32.mrb[0].mxu0
      %v3352 = vpop.f32.mrb[0].mxu0
      %v3353 = vadd.f32 %v3233, %v3352
      %v3354 = vpop.f32.mrb[0].mxu0
      %3355 = vmatprep.mubr.bf16.mxu0 0
      %3356 = vmatmul.mubr.bf16.gmra.mrb[0].mxu0 %v3253
      %v3357 = vpop.f32.mrb[0].mxu0
      %v3358 = vadd.f32 %v3233, %v3357
      %v3359 = vpop.f32.mrb[0].mxu0
      %v3360 = vpop.f32.mrb[0].mxu0
      %v3361 = vadd.f32 %v3233, %v3360
      %v3362 = vpop.f32.mrb[0].mxu0
      %3363 = vmatprep.mubr.bf16.mxu0 0
      %3364 = vmatmul.mubr.bf16.gmra.mrb[0].mxu0 %v3256
      %v3365 = vpop.f32.mrb[0].mxu0
      %v3366 = vadd.f32 %v3233, %v3365
      %v3367 = vpop.f32.mrb[0].mxu0
      %v3368 = vpop.f32.mrb[0].mxu0
      %v3369 = vadd.f32 %v3233, %v3368
      %v3370 = vpop.f32.mrb[0].mxu0
      %3371 = vmatprep.mubr.bf16.mxu0 0
      %3372 = vmatmul.mubr.bf16.gmra.mrb[0].mxu0 %v3259
      %v3373 = vpop.f32.mrb[0].mxu0
      %v3374 = vadd.f32 %v3233, %v3373
      %v3375 = vpop.f32.mrb[0].mxu0
      %v3376 = vpop.f32.mrb[0].mxu0
      %v3377 = vadd.f32 %v3233, %v3376
      %v3378 = vpop.f32.mrb[0].mxu0
      %3379 = vmatprep.mubr.bf16.mxu0 0
      %3380 = vmatmul.mubr.bf16.gmra.mrb[0].mxu0 %v3262
      %v3381 = vpop.f32.mrb[0].mxu0
      %v3382 = vadd.f32 %v3233, %v3381
      %v3383 = vpop.f32.mrb[0].mxu0
      %v3384 = vpop.f32.mrb[0].mxu0
      %v3385 = vadd.f32 %v3233, %v3384
      %v3386 = vpop.f32.mrb[0].mxu0
      %3387 = vmatprep.mubr.bf16.mxu0 0
      %3388 = vmatmul.mubr.bf16.gmra.mrb[0].mxu0 %v3265
      %v3389 = vpop.f32.mrb[0].mxu0
      %v3390 = vadd.f32 %v3233, %v3389
      %v3391 = vpop.f32.mrb[0].mxu0
      %v3392 = vpop.f32.mrb[0].mxu0
      %v3393 = vadd.f32 %v3233, %v3392
      %v3394 = vpop.f32.mrb[0].mxu0
      %3395 = vmatprep.mubr.bf16.mxu0 0
      %3396 = vmatmul.mubr.bf16.gmra.mrb[0].mxu0 %v3268
      %v3397 = vpop.f32.mrb[0].mxu0
      %v3398 = vadd.f32 %v3233, %v3397
      %v3399 = vpop.f32.mrb[0].mxu0
      %v3400 = vpop.f32.mrb[0].mxu0
      %v3401 = vadd.f32 %v3233, %v3400
      %v3402 = vpop.f32.mrb[0].mxu0
      %3403 = vmatprep.mubr.bf16.mxu0 0
      %3404 = vmatmul.mubr.bf16.gmra.mrb[0].mxu0 %v3271
      %v3405 = vpop.f32.mrb[0].mxu0
      %v3406 = vadd.f32 %v3233, %v3405
      %v3407 = vpop.f32.mrb[0].mxu0
      %v3408 = vpop.f32.mrb[0].mxu0
      %v3409 = vadd.f32 %v3233, %v3408
      %v3410 = vpop.f32.mrb[0].mxu0
      %3411 = vmatprep.mubr.bf16.mxu0 0
      %3412 = vmatmul.mubr.bf16.gmra.mrb[0].mxu0 %v3274
      %v3413 = vpop.f32.mrb[0].mxu0
      %v3414 = vadd.f32 %v3233, %v3413
      %v3415 = vpop.f32.mrb[0].mxu0
      %v3416 = vpop.f32.mrb[0].mxu0
      %v3417 = vadd.f32 %v3233, %v3416
      %v3418 = vpop.f32.mrb[0].mxu0
      %3419 = vmatprep.mubr.bf16.mxu0 0
      %3420 = vmatmul.mubr.bf16.gmra.mrb[0].mxu0 %v3277
      %v3421 = vpop.f32.mrb[0].mxu0
      %v3422 = vadd.f32 %v3233, %v3421
      %v3423 = vpop.f32.mrb[0].mxu0
      %v3424 = vpop.f32.mrb[0].mxu0
      %v3425 = vadd.f32 %v3233, %v3424
      %v3426 = vpop.f32.mrb[0].mxu0
      %3427 = vmatprep.mubr.bf16.mxu0 0
      %3428 = vmatmul.mubr.bf16.gmra.mrb[0].mxu0 %v3280
      %v3429 = vpop.f32.mrb[0].mxu0
      %v3430 = vadd.f32 %v3233, %v3429
      %v3431 = vpop.f32.mrb[0].mxu0
      %v3432 = vpop.f32.mrb[0].mxu0
      %v3433 = vadd.f32 %v3233, %v3432
      %v3434 = vpop.f32.mrb[0].mxu0
      %3435 = vmatprep.mubr.bf16.mxu0 0
      %3436 = vmatmul.mubr.bf16.gmra.mrb[0].mxu0 %v3283
      %v3437 = vpop.f32.mrb[0].mxu0
      %v3438 = vadd.f32 %v3233, %v3437
      %v3439 = vpop.f32.mrb[0].mxu0
      %v3440 = vpop.f32.mrb[0].mxu0
      %v3441 = vadd.f32 %v3233, %v3440
      %v3442 = vpop.f32.mrb[0].mxu0
      %3443 = vmatprep.mubr.bf16.mxu0 0
      %3444 = vmatmul.mubr.bf16.gmra.mrb[0].mxu0 %v3286
      %v3445 = vpop.f32.mrb[0].mxu0
      %v3446 = vadd.f32 %v3233, %v3445
      %v3447 = vpop.f32.mrb[0].mxu0
      %v3448 = vpop.f32.mrb[0].mxu0
      %v3449 = vadd.f32 %v3233, %v3448
      %v3450 = vpop.f32.mrb[0].mxu0
      %3451 = vdwg.mxu0
      %vm3452 = vcmp.gt.f32.partialorder %v3326, 0.0
      %vm3453 = vcmp.gt.f32.partialorder %v3329, 0.0
      %vm3454 = vcmp.gt.f32.partialorder %v3334, 0.0
      %vm3455 = vcmp.gt.f32.partialorder %v3337, 0.0
      %vm3456 = vcmp.gt.f32.partialorder %v3342, 0.0
      %vm3457 = vcmp.gt.f32.partialorder %v3345, 0.0
      %vm3458 = vcmp.gt.f32.partialorder %v3350, 0.0
      %vm3459 = vcmp.gt.f32.partialorder %v3353, 0.0
      %vm3460 = vcmp.gt.f32.partialorder %v3358, 0.0
      %vm3461 = vcmp.gt.f32.partialorder %v3361, 0.0
      %vm3462 = vcmp.gt.f32.partialorder %v3366, 0.0
      %vm3463 = vcmp.gt.f32.partialorder %v3369, 0.0
      %vm3464 = vcmp.gt.f32.partialorder %v3374, 0.0
      %vm3465 = vcmp.gt.f32.partialorder %v3377, 0.0
      %vm3466 = vcmp.gt.f32.partialorder %v3382, 0.0
      %vm3467 = vcmp.gt.f32.partialorder %v3385, 0.0
      %vm3468 = vcmp.gt.f32.partialorder %v3390, 0.0
      %vm3469 = vcmp.gt.f32.partialorder %v3393, 0.0
      %vm3470 = vcmp.gt.f32.partialorder %v3398, 0.0
      %vm3471 = vcmp.gt.f32.partialorder %v3401, 0.0
      %vm3472 = vcmp.gt.f32.partialorder %v3406, 0.0
      %vm3473 = vcmp.gt.f32.partialorder %v3409, 0.0
      %vm3474 = vcmp.gt.f32.partialorder %v3414, 0.0
      %vm3475 = vcmp.gt.f32.partialorder %v3417, 0.0
      %vm3476 = vcmp.gt.f32.partialorder %v3422, 0.0
      %vm3477 = vcmp.gt.f32.partialorder %v3425, 0.0
      %vm3478 = vcmp.gt.f32.partialorder %v3430, 0.0
      %vm3479 = vcmp.gt.f32.partialorder %v3433, 0.0
      %vm3480 = vcmp.gt.f32.partialorder %v3438, 0.0
      %vm3481 = vcmp.gt.f32.partialorder %v3441, 0.0
      %vm3482 = vcmp.gt.f32.partialorder %v3446, 0.0
      %vm3483 = vcmp.gt.f32.partialorder %v3449, 0.0
      %v3484 = vmul.f32 %v3326, 0.2
      %v3485 = vmul.f32 %v3329, 0.2
      %v3486 = vmul.f32 %v3334, 0.2
      %v3487 = vmul.f32 %v3337, 0.2
      %v3488 = vmul.f32 %v3342, 0.2
      %v3489 = vmul.f32 %v3345, 0.2
      %v3490 = vmul.f32 %v3350, 0.2
      %v3491 = vmul.f32 %v3353, 0.2
      %v3492 = vmul.f32 %v3358, 0.2
      %v3493 = vmul.f32 %v3361, 0.2
      %v3494 = vmul.f32 %v3366, 0.2
      %v3495 = vmul.f32 %v3369, 0.2
      %v3496 = vmul.f32 %v3374, 0.2
      %v3497 = vmul.f32 %v3377, 0.2
      %v3498 = vmul.f32 %v3382, 0.2
      %v3499 = vmul.f32 %v3385, 0.2
      %v3500 = vmul.f32 %v3390, 0.2
      %v3501 = vmul.f32 %v3393, 0.2
      %v3502 = vmul.f32 %v3398, 0.2
      %v3503 = vmul.f32 %v3401, 0.2
      %v3504 = vmul.f32 %v3406, 0.2
      %v3505 = vmul.f32 %v3409, 0.2
      %v3506 = vmul.f32 %v3414, 0.2
      %v3507 = vmul.f32 %v3417, 0.2
      %v3508 = vmul.f32 %v3422, 0.2
      %v3509 = vmul.f32 %v3425, 0.2
      %v3510 = vmul.f32 %v3430, 0.2
      %v3511 = vmul.f32 %v3433, 0.2
      %v3512 = vmul.f32 %v3438, 0.2
      %v3513 = vmul.f32 %v3441, 0.2
      %v3514 = vmul.f32 %v3446, 0.2
      %v3515 = vmul.f32 %v3449, 0.2
      %v3516 = vsel %vm3452, %v3326, %v3484
      %v3517 = vsel %vm3453, %v3329, %v3485
      %v3518 = vsel %vm3454, %v3334, %v3486
      %v3519 = vsel %vm3455, %v3337, %v3487
      %v3520 = vsel %vm3456, %v3342, %v3488
      %v3521 = vsel %vm3457, %v3345, %v3489
      %v3522 = vsel %vm3458, %v3350, %v3490
      %v3523 = vsel %vm3459, %v3353, %v3491
      %v3524 = vsel %vm3460, %v3358, %v3492
      %v3525 = vsel %vm3461, %v3361, %v3493
      %v3526 = vsel %vm3462, %v3366, %v3494
      %v3527 = vsel %vm3463, %v3369, %v3495
      %v3528 = vsel %vm3464, %v3374, %v3496
      %v3529 = vsel %vm3465, %v3377, %v3497
      %v3530 = vsel %vm3466, %v3382, %v3498
      %v3531 = vsel %vm3467, %v3385, %v3499
      %v3532 = vsel %vm3468, %v3390, %v3500
      %v3533 = vsel %vm3469, %v3393, %v3501
      %v3534 = vsel %vm3470, %v3398, %v3502
      %v3535 = vsel %vm3471, %v3401, %v3503
      %v3536 = vsel %vm3472, %v3406, %v3504
      %v3537 = vsel %vm3473, %v3409, %v3505
      %v3538 = vsel %vm3474, %v3414, %v3506
      %v3539 = vsel %vm3475, %v3417, %v3507
      %v3540 = vsel %vm3476, %v3422, %v3508
      %v3541 = vsel %vm3477, %v3425, %v3509
      %v3542 = vsel %vm3478, %v3430, %v3510
      %v3543 = vsel %vm3479, %v3433, %v3511
      %v3544 = vsel %vm3480, %v3438, %v3512
      %v3545 = vsel %vm3481, %v3441, %v3513
      %v3546 = vsel %vm3482, %v3446, %v3514
      %v3547 = vsel %vm3483, %v3449, %v3515
      %s3548 = scalar_lea.vmem [#allocation3], 24
      %3549 = vst.msk [vmem:[%s3548 + $0x1] sm:$0xff] %vm280, %v3179
      %3550 = vst.msk [vmem:[%s3548 + $0x9] sm:$0xff] %vm280, %v3180
      %3551 = vst.msk [vmem:[%s3548 + $0x19] sm:$0xff] %vm280, %v3181
      %3552 = vst.msk [vmem:[%s3548 + $0x21] sm:$0xff] %vm280, %v3182
      %3553 = vst.msk [vmem:[%s3548 + $0x31] sm:$0xff] %vm280, %v3183
      %3554 = vst.msk [vmem:[%s3548 + $0x39] sm:$0xff] %vm280, %v3184
      %3555 = vst.msk [vmem:[%s3548 + $0x49] sm:$0xff] %vm280, %v3185
      %3556 = vst.msk [vmem:[%s3548 + $0x51] sm:$0xff] %vm280, %v3186
      %3557 = vst.msk [vmem:[%s3548 + $0x61] sm:$0xff] %vm280, %v3187
      %3558 = vst.msk [vmem:[%s3548 + $0x69] sm:$0xff] %vm280, %v3188
      %3559 = vst.msk [vmem:[%s3548 + $0x79] sm:$0xff] %vm280, %v3189
      %3560 = vst.msk [vmem:[%s3548 + $0x81] sm:$0xff] %vm280, %v3190
      %3561 = vst.msk [vmem:[%s3548 + $0x91] sm:$0xff] %vm280, %v3191
      %3562 = vst.msk [vmem:[%s3548 + $0x99] sm:$0xff] %vm280, %v3192
      %3563 = vst.msk [vmem:[%s3548 + $0xa9] sm:$0xff] %vm280, %v3193
      %3564 = vst.msk [vmem:[%s3548 + $0xb1] sm:$0xff] %vm280, %v3194
      %3565 = vst.msk [vmem:[%s3548 + $0xc1] sm:$0xff] %vm280, %v3195
      %3566 = vst.msk [vmem:[%s3548 + $0xc9] sm:$0xff] %vm280, %v3196
      %3567 = vst.msk [vmem:[%s3548 + $0xd9] sm:$0xff] %vm280, %v3197
      %3568 = vst.msk [vmem:[%s3548 + $0xe1] sm:$0xff] %vm280, %v3198
      %3569 = vst.msk [vmem:[%s3548 + $0xf1] sm:$0xff] %vm280, %v3199
      %3570 = vst.msk [vmem:[%s3548 + $0xf9] sm:$0xff] %vm280, %v3200
      %3571 = vst.msk [vmem:[%s3548 + $0x109] sm:$0xff] %vm280, %v3201
      %3572 = vst.msk [vmem:[%s3548 + $0x111] sm:$0xff] %vm280, %v3202
      %3573 = vst.msk [vmem:[%s3548 + $0x121] sm:$0xff] %vm280, %v3203
      %3574 = vst.msk [vmem:[%s3548 + $0x129] sm:$0xff] %vm280, %v3204
      %3575 = vst.msk [vmem:[%s3548 + $0x139] sm:$0xff] %vm280, %v3205
      %3576 = vst.msk [vmem:[%s3548 + $0x141] sm:$0xff] %vm280, %v3206
      %3577 = vst.msk [vmem:[%s3548 + $0x151] sm:$0xff] %vm280, %v3207
      %3578 = vst.msk [vmem:[%s3548 + $0x159] sm:$0xff] %vm280, %v3208
      %3579 = vst.msk [vmem:[%s3548 + $0x169] sm:$0xff] %vm280, %v3209
      %3580 = vst.msk [vmem:[%s3548 + $0x171] sm:$0xff] %vm280, %v3210
      %3613 = vrot.lane.b32.xlu0 %v3516, 12
      %v3614 = vpop.permute.xlu0 %3613
      %3615 = vrot.lane.b32.xlu0 %v3517, 12
      %v3616 = vpop.permute.xlu0 %3615
      %3617 = vrot.lane.b32.xlu0 %v3518, 12
      %v3618 = vpop.permute.xlu0 %3617
      %3619 = vrot.lane.b32.xlu0 %v3519, 12
      %v3620 = vpop.permute.xlu0 %3619
      %3621 = vrot.lane.b32.xlu0 %v3520, 12
      %v3622 = vpop.permute.xlu0 %3621
      %3623 = vrot.lane.b32.xlu0 %v3521, 12
      %v3624 = vpop.permute.xlu0 %3623
      %3625 = vrot.lane.b32.xlu0 %v3522, 12
      %v3626 = vpop.permute.xlu0 %3625
      %3627 = vrot.lane.b32.xlu0 %v3523, 12
      %v3628 = vpop.permute.xlu0 %3627
      %3629 = vrot.lane.b32.xlu0 %v3524, 12
      %v3630 = vpop.permute.xlu0 %3629
      %3631 = vrot.lane.b32.xlu0 %v3525, 12
      %v3632 = vpop.permute.xlu0 %3631
      %3633 = vrot.lane.b32.xlu0 %v3526, 12
      %v3634 = vpop.permute.xlu0 %3633
      %3635 = vrot.lane.b32.xlu0 %v3527, 12
      %v3636 = vpop.permute.xlu0 %3635
      %3637 = vrot.lane.b32.xlu0 %v3528, 12
      %v3638 = vpop.permute.xlu0 %3637
      %3639 = vrot.lane.b32.xlu0 %v3529, 12
      %v3640 = vpop.permute.xlu0 %3639
      %3641 = vrot.lane.b32.xlu0 %v3530, 12
      %v3642 = vpop.permute.xlu0 %3641
      %3643 = vrot.lane.b32.xlu0 %v3531, 12
      %v3644 = vpop.permute.xlu0 %3643
      %3645 = vrot.lane.b32.xlu0 %v3532, 12
      %v3646 = vpop.permute.xlu0 %3645
      %3647 = vrot.lane.b32.xlu0 %v3533, 12
      %v3648 = vpop.permute.xlu0 %3647
      %3649 = vrot.lane.b32.xlu0 %v3534, 12
      %v3650 = vpop.permute.xlu0 %3649
      %3651 = vrot.lane.b32.xlu0 %v3535, 12
      %v3652 = vpop.permute.xlu0 %3651
      %3653 = vrot.lane.b32.xlu0 %v3536, 12
      %v3654 = vpop.permute.xlu0 %3653
      %3655 = vrot.lane.b32.xlu0 %v3537, 12
      %v3656 = vpop.permute.xlu0 %3655
      %3657 = vrot.lane.b32.xlu0 %v3538, 12
      %v3658 = vpop.permute.xlu0 %3657
      %3659 = vrot.lane.b32.xlu0 %v3539, 12
      %v3660 = vpop.permute.xlu0 %3659
      %3661 = vrot.lane.b32.xlu0 %v3540, 12
      %v3662 = vpop.permute.xlu0 %3661
      %3663 = vrot.lane.b32.xlu0 %v3541, 12
      %v3664 = vpop.permute.xlu0 %3663
      %3665 = vrot.lane.b32.xlu0 %v3542, 12
      %v3666 = vpop.permute.xlu0 %3665
      %3667 = vrot.lane.b32.xlu0 %v3543, 12
      %v3668 = vpop.permute.xlu0 %3667
      %3669 = vrot.lane.b32.xlu0 %v3544, 12
      %v3670 = vpop.permute.xlu0 %3669
      %3671 = vrot.lane.b32.xlu0 %v3545, 12
      %v3672 = vpop.permute.xlu0 %3671
      %3673 = vrot.lane.b32.xlu0 %v3546, 12
      %v3674 = vpop.permute.xlu0 %3673
      %3675 = vrot.lane.b32.xlu0 %v3547, 12
      %v3676 = vpop.permute.xlu0 %3675
      %vm3709 = vcmask 130144
      %3710 = vst.msk [vmem:[%s3548 + $0x1] sm:$0xff] %vm3709, %v3614
      %3711 = vst.msk [vmem:[%s3548 + $0x9] sm:$0xff] %vm3709, %v3616
      %3712 = vst.msk [vmem:[%s3548 + $0x19] sm:$0xff] %vm3709, %v3618
      %3713 = vst.msk [vmem:[%s3548 + $0x21] sm:$0xff] %vm3709, %v3620
      %3714 = vst.msk [vmem:[%s3548 + $0x31] sm:$0xff] %vm3709, %v3622
      %3715 = vst.msk [vmem:[%s3548 + $0x39] sm:$0xff] %vm3709, %v3624
      %3716 = vst.msk [vmem:[%s3548 + $0x49] sm:$0xff] %vm3709, %v3626
      %3717 = vst.msk [vmem:[%s3548 + $0x51] sm:$0xff] %vm3709, %v3628
      %3718 = vst.msk [vmem:[%s3548 + $0x61] sm:$0xff] %vm3709, %v3630
      %3719 = vst.msk [vmem:[%s3548 + $0x69] sm:$0xff] %vm3709, %v3632
      %3720 = vst.msk [vmem:[%s3548 + $0x79] sm:$0xff] %vm3709, %v3634
      %3721 = vst.msk [vmem:[%s3548 + $0x81] sm:$0xff] %vm3709, %v3636
      %3722 = vst.msk [vmem:[%s3548 + $0x91] sm:$0xff] %vm3709, %v3638
      %3723 = vst.msk [vmem:[%s3548 + $0x99] sm:$0xff] %vm3709, %v3640
      %3724 = vst.msk [vmem:[%s3548 + $0xa9] sm:$0xff] %vm3709, %v3642
      %3725 = vst.msk [vmem:[%s3548 + $0xb1] sm:$0xff] %vm3709, %v3644
      %3726 = vst.msk [vmem:[%s3548 + $0xc1] sm:$0xff] %vm3709, %v3646
      %3727 = vst.msk [vmem:[%s3548 + $0xc9] sm:$0xff] %vm3709, %v3648
      %3728 = vst.msk [vmem:[%s3548 + $0xd9] sm:$0xff] %vm3709, %v3650
      %3729 = vst.msk [vmem:[%s3548 + $0xe1] sm:$0xff] %vm3709, %v3652
      %3730 = vst.msk [vmem:[%s3548 + $0xf1] sm:$0xff] %vm3709, %v3654
      %3731 = vst.msk [vmem:[%s3548 + $0xf9] sm:$0xff] %vm3709, %v3656
      %3732 = vst.msk [vmem:[%s3548 + $0x109] sm:$0xff] %vm3709, %v3658
      %3733 = vst.msk [vmem:[%s3548 + $0x111] sm:$0xff] %vm3709, %v3660
      %3734 = vst.msk [vmem:[%s3548 + $0x121] sm:$0xff] %vm3709, %v3662
      %3735 = vst.msk [vmem:[%s3548 + $0x129] sm:$0xff] %vm3709, %v3664
      %3736 = vst.msk [vmem:[%s3548 + $0x139] sm:$0xff] %vm3709, %v3666
      %3737 = vst.msk [vmem:[%s3548 + $0x141] sm:$0xff] %vm3709, %v3668
      %3738 = vst.msk [vmem:[%s3548 + $0x151] sm:$0xff] %vm3709, %v3670
      %3739 = vst.msk [vmem:[%s3548 + $0x159] sm:$0xff] %vm3709, %v3672
      %3740 = vst.msk [vmem:[%s3548 + $0x169] sm:$0xff] %vm3709, %v3674
      %3741 = vst.msk [vmem:[%s3548 + $0x171] sm:$0xff] %vm3709, %v3676
      %v3742 = vld [vmem:[#allocation3] sm:$0xff]
      %v3743 = vld [vmem:[#allocation3 + $0x8] sm:$0xff]
      %v3744 = vld [vmem:[#allocation3 + $0x18] sm:$0xff]
      %v3745 = vld [vmem:[#allocation3 + $0x20] sm:$0xff]
      %v3746 = vld [vmem:[#allocation3 + $0x30] sm:$0xff]
      %v3747 = vld [vmem:[#allocation3 + $0x38] sm:$0xff]
      %v3748 = vld [vmem:[#allocation3 + $0x48] sm:$0xff]
      %v3749 = vld [vmem:[#allocation3 + $0x50] sm:$0xff]
      %v3750 = vld [vmem:[#allocation3 + $0x60] sm:$0xff]
      %v3751 = vld [vmem:[#allocation3 + $0x68] sm:$0xff]
      %v3752 = vld [vmem:[#allocation3 + $0x78] sm:$0xff]
      %v3753 = vld [vmem:[#allocation3 + $0x80] sm:$0xff]
      %v3754 = vld [vmem:[#allocation3 + $0x90] sm:$0xff]
      %v3755 = vld [vmem:[#allocation3 + $0x98] sm:$0xff]
      %v3756 = vld [vmem:[#allocation3 + $0xa8] sm:$0xff]
      %v3757 = vld [vmem:[#allocation3 + $0xb0] sm:$0xff]
      %v3758 = vld [vmem:[#allocation3 + $0xc0] sm:$0xff]
      %v3759 = vld [vmem:[#allocation3 + $0xc8] sm:$0xff]
      %v3760 = vld [vmem:[#allocation3 + $0xd8] sm:$0xff]
      %v3761 = vld [vmem:[#allocation3 + $0xe0] sm:$0xff]
      %v3762 = vld [vmem:[#allocation3 + $0xf0] sm:$0xff]
      %v3763 = vld [vmem:[#allocation3 + $0xf8] sm:$0xff]
      %v3764 = vld [vmem:[#allocation3 + $0x108] sm:$0xff]
      %v3765 = vld [vmem:[#allocation3 + $0x110] sm:$0xff]
      %v3766 = vld [vmem:[#allocation3 + $0x120] sm:$0xff]
      %v3767 = vld [vmem:[#allocation3 + $0x128] sm:$0xff]
      %v3768 = vld [vmem:[#allocation3 + $0x138] sm:$0xff]
      %v3769 = vld [vmem:[#allocation3 + $0x140] sm:$0xff]
      %v3770 = vld [vmem:[#allocation3 + $0x150] sm:$0xff]
      %v3771 = vld [vmem:[#allocation3 + $0x158] sm:$0xff]
      %v3772 = vld [vmem:[#allocation3 + $0x168] sm:$0xff]
      %v3773 = vld [vmem:[#allocation3 + $0x170] sm:$0xff]
      %v3774 = vpack.c.bf16 %v3743, %v3742
      %v3775 = vpack.c.bf16 %v3745, %v3744
      %v3776 = vpack.c.bf16 %v3747, %v3746
      %v3777 = vpack.c.bf16 %v3749, %v3748
      %v3778 = vpack.c.bf16 %v3751, %v3750
      %v3779 = vpack.c.bf16 %v3753, %v3752
      %v3780 = vpack.c.bf16 %v3755, %v3754
      %v3781 = vpack.c.bf16 %v3757, %v3756
      %v3782 = vpack.c.bf16 %v3759, %v3758
      %v3783 = vpack.c.bf16 %v3761, %v3760
      %v3784 = vpack.c.bf16 %v3763, %v3762
      %v3785 = vpack.c.bf16 %v3765, %v3764
      %v3786 = vpack.c.bf16 %v3767, %v3766
      %v3787 = vpack.c.bf16 %v3769, %v3768
      %v3788 = vpack.c.bf16 %v3771, %v3770
      %v3789 = vpack.c.bf16 %v3773, %v3772
      %v3790 = vld [vmem:[%s5] sm:$0xf]
      %v3791 = vld [vmem:[%s5 + $0x4] sm:$0xf]
      %v3792 = vld [vmem:[#allocation3 + $0x1] sm:$0xff]
      %v3793 = vld [vmem:[#allocation3 + $0x9] sm:$0xff]
      %v3794 = vld [vmem:[#allocation3 + $0x19] sm:$0xff]
      %v3795 = vld [vmem:[#allocation3 + $0x21] sm:$0xff]
      %v3796 = vld [vmem:[#allocation3 + $0x31] sm:$0xff]
      %v3797 = vld [vmem:[#allocation3 + $0x39] sm:$0xff]
      %v3798 = vld [vmem:[#allocation3 + $0x49] sm:$0xff]
      %v3799 = vld [vmem:[#allocation3 + $0x51] sm:$0xff]
      %v3800 = vld [vmem:[#allocation3 + $0x61] sm:$0xff]
      %v3801 = vld [vmem:[#allocation3 + $0x69] sm:$0xff]
      %v3802 = vld [vmem:[#allocation3 + $0x79] sm:$0xff]
      %v3803 = vld [vmem:[#allocation3 + $0x81] sm:$0xff]
      %v3804 = vld [vmem:[#allocation3 + $0x91] sm:$0xff]
      %v3805 = vld [vmem:[#allocation3 + $0x99] sm:$0xff]
      %v3806 = vld [vmem:[#allocation3 + $0xa9] sm:$0xff]
      %v3807 = vld [vmem:[#allocation3 + $0xb1] sm:$0xff]
      %v3808 = vld [vmem:[#allocation3 + $0xc1] sm:$0xff]
      %v3809 = vld [vmem:[#allocation3 + $0xc9] sm:$0xff]
      %v3810 = vld [vmem:[#allocation3 + $0xd9] sm:$0xff]
      %v3811 = vld [vmem:[#allocation3 + $0xe1] sm:$0xff]
      %v3812 = vld [vmem:[#allocation3 + $0xf1] sm:$0xff]
      %v3813 = vld [vmem:[#allocation3 + $0xf9] sm:$0xff]
      %v3814 = vld [vmem:[#allocation3 + $0x109] sm:$0xff]
      %v3815 = vld [vmem:[#allocation3 + $0x111] sm:$0xff]
      %v3816 = vld [vmem:[#allocation3 + $0x121] sm:$0xff]
      %v3817 = vld [vmem:[#allocation3 + $0x129] sm:$0xff]
      %v3818 = vld [vmem:[#allocation3 + $0x139] sm:$0xff]
      %v3819 = vld [vmem:[#allocation3 + $0x141] sm:$0xff]
      %v3820 = vld [vmem:[#allocation3 + $0x151] sm:$0xff]
      %v3821 = vld [vmem:[#allocation3 + $0x159] sm:$0xff]
      %v3822 = vld [vmem:[#allocation3 + $0x169] sm:$0xff]
      %v3823 = vld [vmem:[#allocation3 + $0x171] sm:$0xff]
      %v3824 = vpack.c.bf16 %v3793, %v3792
      %v3825 = vpack.c.bf16 %v3795, %v3794
      %v3826 = vpack.c.bf16 %v3797, %v3796
      %v3827 = vpack.c.bf16 %v3799, %v3798
      %v3828 = vpack.c.bf16 %v3801, %v3800
      %v3829 = vpack.c.bf16 %v3803, %v3802
      %v3830 = vpack.c.bf16 %v3805, %v3804
      %v3831 = vpack.c.bf16 %v3807, %v3806
      %v3832 = vpack.c.bf16 %v3809, %v3808
      %v3833 = vpack.c.bf16 %v3811, %v3810
      %v3834 = vpack.c.bf16 %v3813, %v3812
      %v3835 = vpack.c.bf16 %v3815, %v3814
      %v3836 = vpack.c.bf16 %v3817, %v3816
      %v3837 = vpack.c.bf16 %v3819, %v3818
      %v3838 = vpack.c.bf16 %v3821, %v3820
      %v3839 = vpack.c.bf16 %v3823, %v3822
      %s3840 = scalar_lea.vmem %s5, 8
      %v3841 = vld [vmem:[%s3840] sm:$0xf]
      %v3842 = vld [vmem:[%s3840 + $0x4] sm:$0xf]
      %v3845 = vunpack.c.l.b16 %v3841
      %v3846 = vunpack.c.l.b16 %v3842
      %v3847 = vpack.c.b16 %v3846, %v3845
      %v3850 = vsel %vm326, %v3824, 0
      %v3853 = vsel %vm326, %v3825, 0
      %v3856 = vsel %vm326, %v3826, 0
      %v3859 = vsel %vm326, %v3827, 0
      %v3862 = vsel %vm326, %v3828, 0
      %v3865 = vsel %vm326, %v3829, 0
      %v3868 = vsel %vm326, %v3830, 0
      %v3871 = vsel %vm326, %v3831, 0
      %v3874 = vsel %vm326, %v3832, 0
      %v3877 = vsel %vm326, %v3833, 0
      %v3880 = vsel %vm326, %v3834, 0
      %v3883 = vsel %vm326, %v3835, 0
      %v3886 = vsel %vm326, %v3836, 0
      %v3889 = vsel %vm326, %v3837, 0
      %v3892 = vsel %vm326, %v3838, 0
      %v3895 = vsel %vm326, %v3839, 0
      %3897 = vmatprep.subr.bf16.mxu0 0
      %3898 = vmatpush1.bf16.msra.mxu0 %v3847
      %3899 = vmatprep.subr.bf16.mxu0 0
      %3900 = vmatpush1.bf16.msra.mxu0 0
      %3901 = vmatprep.subr.bf16.mxu0 0
      %3902 = vmatpush1.bf16.msra.mxu0 0
      %3903 = vmatprep.subr.bf16.mxu0 0
      %3904 = vmatpush1.bf16.msra.mxu0 0
      %3905 = vmatprep.subr.bf16.mxu0 0
      %3906 = vmatpush1.bf16.msra.mxu0 0
      %3907 = vmatprep.subr.bf16.mxu0 0
      %3908 = vmatpush1.bf16.msra.mxu0 0
      %3909 = vmatprep.subr.bf16.mxu0 0
      %3910 = vmatpush1.bf16.msra.mxu0 0
      %3911 = vmatprep.subr.bf16.mxu0 0
      %3912 = vmatpush1.bf16.msra.mxu0 0
      %3913 = vmatprep.subr.bf16.mxu0 0
      %3914 = vmatpush1.bf16.msra.mxu0 0
      %3915 = vmatprep.subr.bf16.mxu0 0
      %3916 = vmatpush1.bf16.msra.mxu0 0
      %3917 = vmatprep.subr.bf16.mxu0 0
      %3918 = vmatpush1.bf16.msra.mxu0 0
      %3919 = vmatprep.subr.bf16.mxu0 0
      %3920 = vmatpush1.bf16.msra.mxu0 0
      %3921 = vmatprep.subr.bf16.mxu0 0
      %3922 = vmatpush1.bf16.msra.mxu0 0
      %3923 = vmatprep.subr.bf16.mxu0 0
      %3924 = vmatpush1.bf16.msra.mxu0 0
      %3925 = vmatprep.subr.bf16.mxu0 0
      %3926 = vmatpush1.bf16.msra.mxu0 0
      %3927 = vmatprep.subr.bf16.mxu0 0
      %3928 = vmatpush1.bf16.msra.mxu0 0
      %3929 = vmatprep.mubr.bf16.mxu0 0
      %3930 = vmatmul.mubr.bf16.gmra.mrb[0].mxu0 %v3850
      %v3931 = vpop.f32.mrb[0].mxu0
      %v3932 = vadd.f32 0.0, %v3931
      %v3933 = vpop.f32.mrb[0].mxu0
      %v3934 = vpop.f32.mrb[0].mxu0
      %v3935 = vadd.f32 0.0, %v3934
      %v3936 = vpop.f32.mrb[0].mxu0
      %3937 = vmatprep.mubr.bf16.mxu0 0
      %3938 = vmatmul.mubr.bf16.gmra.mrb[0].mxu0 %v3853
      %v3939 = vpop.f32.mrb[0].mxu0
      %v3940 = vadd.f32 0.0, %v3939
      %v3941 = vpop.f32.mrb[0].mxu0
      %v3942 = vpop.f32.mrb[0].mxu0
      %v3943 = vadd.f32 0.0, %v3942
      %v3944 = vpop.f32.mrb[0].mxu0
      %3945 = vmatprep.mubr.bf16.mxu0 0
      %3946 = vmatmul.mubr.bf16.gmra.mrb[0].mxu0 %v3856
      %v3947 = vpop.f32.mrb[0].mxu0
      %v3948 = vadd.f32 0.0, %v3947
      %v3949 = vpop.f32.mrb[0].mxu0
      %v3950 = vpop.f32.mrb[0].mxu0
      %v3951 = vadd.f32 0.0, %v3950
      %v3952 = vpop.f32.mrb[0].mxu0
      %3953 = vmatprep.mubr.bf16.mxu0 0
      %3954 = vmatmul.mubr.bf16.gmra.mrb[0].mxu0 %v3859
      %v3955 = vpop.f32.mrb[0].mxu0
      %v3956 = vadd.f32 0.0, %v3955
      %v3957 = vpop.f32.mrb[0].mxu0
      %v3958 = vpop.f32.mrb[0].mxu0
      %v3959 = vadd.f32 0.0, %v3958
      %v3960 = vpop.f32.mrb[0].mxu0
      %3961 = vmatprep.mubr.bf16.mxu0 0
      %3962 = vmatmul.mubr.bf16.gmra.mrb[0].mxu0 %v3862
      %v3963 = vpop.f32.mrb[0].mxu0
      %v3964 = vadd.f32 0.0, %v3963
      %v3965 = vpop.f32.mrb[0].mxu0
      %v3966 = vpop.f32.mrb[0].mxu0
      %v3967 = vadd.f32 0.0, %v3966
      %v3968 = vpop.f32.mrb[0].mxu0
      %3969 = vmatprep.mubr.bf16.mxu0 0
      %3970 = vmatmul.mubr.bf16.gmra.mrb[0].mxu0 %v3865
      %v3971 = vpop.f32.mrb[0].mxu0
      %v3972 = vadd.f32 0.0, %v3971
      %v3973 = vpop.f32.mrb[0].mxu0
      %v3974 = vpop.f32.mrb[0].mxu0
      %v3975 = vadd.f32 0.0, %v3974
      %v3976 = vpop.f32.mrb[0].mxu0
      %3977 = vmatprep.mubr.bf16.mxu0 0
      %3978 = vmatmul.mubr.bf16.gmra.mrb[0].mxu0 %v3868
      %v3979 = vpop.f32.mrb[0].mxu0
      %v3980 = vadd.f32 0.0, %v3979
      %v3981 = vpop.f32.mrb[0].mxu0
      %v3982 = vpop.f32.mrb[0].mxu0
      %v3983 = vadd.f32 0.0, %v3982
      %v3984 = vpop.f32.mrb[0].mxu0
      %3985 = vmatprep.mubr.bf16.mxu0 0
      %3986 = vmatmul.mubr.bf16.gmra.mrb[0].mxu0 %v3871
      %v3987 = vpop.f32.mrb[0].mxu0
      %v3988 = vadd.f32 0.0, %v3987
      %v3989 = vpop.f32.mrb[0].mxu0
      %v3990 = vpop.f32.mrb[0].mxu0
      %v3991 = vadd.f32 0.0, %v3990
      %v3992 = vpop.f32.mrb[0].mxu0
      %3993 = vmatprep.mubr.bf16.mxu0 0
      %3994 = vmatmul.mubr.bf16.gmra.mrb[0].mxu0 %v3874
      %v3995 = vpop.f32.mrb[0].mxu0
      %v3996 = vadd.f32 0.0, %v3995
      %v3997 = vpop.f32.mrb[0].mxu0
      %v3998 = vpop.f32.mrb[0].mxu0
      %v3999 = vadd.f32 0.0, %v3998
      %v4000 = vpop.f32.mrb[0].mxu0
      %4001 = vmatprep.mubr.bf16.mxu0 0
      %4002 = vmatmul.mubr.bf16.gmra.mrb[0].mxu0 %v3877
      %v4003 = vpop.f32.mrb[0].mxu0
      %v4004 = vadd.f32 0.0, %v4003
      %v4005 = vpop.f32.mrb[0].mxu0
      %v4006 = vpop.f32.mrb[0].mxu0
      %v4007 = vadd.f32 0.0, %v4006
      %v4008 = vpop.f32.mrb[0].mxu0
      %4009 = vmatprep.mubr.bf16.mxu0 0
      %4010 = vmatmul.mubr.bf16.gmra.mrb[0].mxu0 %v3880
      %v4011 = vpop.f32.mrb[0].mxu0
      %v4012 = vadd.f32 0.0, %v4011
      %v4013 = vpop.f32.mrb[0].mxu0
      %v4014 = vpop.f32.mrb[0].mxu0
      %v4015 = vadd.f32 0.0, %v4014
      %v4016 = vpop.f32.mrb[0].mxu0
      %4017 = vmatprep.mubr.bf16.mxu0 0
      %4018 = vmatmul.mubr.bf16.gmra.mrb[0].mxu0 %v3883
      %v4019 = vpop.f32.mrb[0].mxu0
      %v4020 = vadd.f32 0.0, %v4019
      %v4021 = vpop.f32.mrb[0].mxu0
      %v4022 = vpop.f32.mrb[0].mxu0
      %v4023 = vadd.f32 0.0, %v4022
      %v4024 = vpop.f32.mrb[0].mxu0
      %4025 = vmatprep.mubr.bf16.mxu0 0
      %4026 = vmatmul.mubr.bf16.gmra.mrb[0].mxu0 %v3886
      %v4027 = vpop.f32.mrb[0].mxu0
      %v4028 = vadd.f32 0.0, %v4027
      %v4029 = vpop.f32.mrb[0].mxu0
      %v4030 = vpop.f32.mrb[0].mxu0
      %v4031 = vadd.f32 0.0, %v4030
      %v4032 = vpop.f32.mrb[0].mxu0
      %4033 = vmatprep.mubr.bf16.mxu0 0
      %4034 = vmatmul.mubr.bf16.gmra.mrb[0].mxu0 %v3889
      %v4035 = vpop.f32.mrb[0].mxu0
      %v4036 = vadd.f32 0.0, %v4035
      %v4037 = vpop.f32.mrb[0].mxu0
      %v4038 = vpop.f32.mrb[0].mxu0
      %v4039 = vadd.f32 0.0, %v4038
      %v4040 = vpop.f32.mrb[0].mxu0
      %4041 = vmatprep.mubr.bf16.mxu0 0
      %4042 = vmatmul.mubr.bf16.gmra.mrb[0].mxu0 %v3892
      %v4043 = vpop.f32.mrb[0].mxu0
      %v4044 = vadd.f32 0.0, %v4043
      %v4045 = vpop.f32.mrb[0].mxu0
      %v4046 = vpop.f32.mrb[0].mxu0
      %v4047 = vadd.f32 0.0, %v4046
      %v4048 = vpop.f32.mrb[0].mxu0
      %4049 = vmatprep.mubr.bf16.mxu0 0
      %4050 = vmatmul.mubr.bf16.gmra.mrb[0].mxu0 %v3895
      %v4051 = vpop.f32.mrb[0].mxu0
      %v4052 = vadd.f32 0.0, %v4051
      %v4053 = vpop.f32.mrb[0].mxu0
      %v4054 = vpop.f32.mrb[0].mxu0
      %v4055 = vadd.f32 0.0, %v4054
      %v4056 = vpop.f32.mrb[0].mxu0
      %4057 = vdwg.mxu0
      %v4060 = vunpack.c.l.b16 %v3790
      %v4061 = vunpack.c.l.b16 %v3791
      %v4062 = vpack.c.b16 %v4061, %v4060
      %v4065 = vsel %vm326, %v3774, 0
      %v4068 = vsel %vm326, %v3775, 0
      %v4071 = vsel %vm326, %v3776, 0
      %v4074 = vsel %vm326, %v3777, 0
      %v4077 = vsel %vm326, %v3778, 0
      %v4080 = vsel %vm326, %v3779, 0
      %v4083 = vsel %vm326, %v3780, 0
      %v4086 = vsel %vm326, %v3781, 0
      %v4089 = vsel %vm326, %v3782, 0
      %v4092 = vsel %vm326, %v3783, 0
      %v4095 = vsel %vm326, %v3784, 0
      %v4098 = vsel %vm326, %v3785, 0
      %v4101 = vsel %vm326, %v3786, 0
      %v4104 = vsel %vm326, %v3787, 0
      %v4107 = vsel %vm326, %v3788, 0
      %v4110 = vsel %vm326, %v3789, 0
      %4112 = vmatprep.subr.bf16.mxu0 0
      %4113 = vmatpush1.bf16.msra.mxu0 %v4062
      %4114 = vmatprep.subr.bf16.mxu0 0
      %4115 = vmatpush1.bf16.msra.mxu0 0
      %4116 = vmatprep.subr.bf16.mxu0 0
      %4117 = vmatpush1.bf16.msra.mxu0 0
      %4118 = vmatprep.subr.bf16.mxu0 0
      %4119 = vmatpush1.bf16.msra.mxu0 0
      %4120 = vmatprep.subr.bf16.mxu0 0
      %4121 = vmatpush1.bf16.msra.mxu0 0
      %4122 = vmatprep.subr.bf16.mxu0 0
      %4123 = vmatpush1.bf16.msra.mxu0 0
      %4124 = vmatprep.subr.bf16.mxu0 0
      %4125 = vmatpush1.bf16.msra.mxu0 0
      %4126 = vmatprep.subr.bf16.mxu0 0
      %4127 = vmatpush1.bf16.msra.mxu0 0
      %4128 = vmatprep.subr.bf16.mxu0 0
      %4129 = vmatpush1.bf16.msra.mxu0 0
      %4130 = vmatprep.subr.bf16.mxu0 0
      %4131 = vmatpush1.bf16.msra.mxu0 0
      %4132 = vmatprep.subr.bf16.mxu0 0
      %4133 = vmatpush1.bf16.msra.mxu0 0
      %4134 = vmatprep.subr.bf16.mxu0 0
      %4135 = vmatpush1.bf16.msra.mxu0 0
      %4136 = vmatprep.subr.bf16.mxu0 0
      %4137 = vmatpush1.bf16.msra.mxu0 0
      %4138 = vmatprep.subr.bf16.mxu0 0
      %4139 = vmatpush1.bf16.msra.mxu0 0
      %4140 = vmatprep.subr.bf16.mxu0 0
      %4141 = vmatpush1.bf16.msra.mxu0 0
      %4142 = vmatprep.subr.bf16.mxu0 0
      %4143 = vmatpush1.bf16.msra.mxu0 0
      %4144 = vmatprep.mubr.bf16.mxu0 0
      %4145 = vmatmul.mubr.bf16.gmra.mrb[0].mxu0 %v4065
      %v4146 = vpop.f32.mrb[0].mxu0
      %v4147 = vadd.f32 %v3932, %v4146
      %v4148 = vpop.f32.mrb[0].mxu0
      %v4149 = vpop.f32.mrb[0].mxu0
      %v4150 = vadd.f32 %v3935, %v4149
      %v4151 = vpop.f32.mrb[0].mxu0
      %4152 = vmatprep.mubr.bf16.mxu0 0
      %4153 = vmatmul.mubr.bf16.gmra.mrb[0].mxu0 %v4068
      %v4154 = vpop.f32.mrb[0].mxu0
      %v4155 = vadd.f32 %v3940, %v4154
      %v4156 = vpop.f32.mrb[0].mxu0
      %v4157 = vpop.f32.mrb[0].mxu0
      %v4158 = vadd.f32 %v3943, %v4157
      %v4159 = vpop.f32.mrb[0].mxu0
      %4160 = vmatprep.mubr.bf16.mxu0 0
      %4161 = vmatmul.mubr.bf16.gmra.mrb[0].mxu0 %v4071
      %v4162 = vpop.f32.mrb[0].mxu0
      %v4163 = vadd.f32 %v3948, %v4162
      %v4164 = vpop.f32.mrb[0].mxu0
      %v4165 = vpop.f32.mrb[0].mxu0
      %v4166 = vadd.f32 %v3951, %v4165
      %v4167 = vpop.f32.mrb[0].mxu0
      %4168 = vmatprep.mubr.bf16.mxu0 0
      %4169 = vmatmul.mubr.bf16.gmra.mrb[0].mxu0 %v4074
      %v4170 = vpop.f32.mrb[0].mxu0
      %v4171 = vadd.f32 %v3956, %v4170
      %v4172 = vpop.f32.mrb[0].mxu0
      %v4173 = vpop.f32.mrb[0].mxu0
      %v4174 = vadd.f32 %v3959, %v4173
      %v4175 = vpop.f32.mrb[0].mxu0
      %4176 = vmatprep.mubr.bf16.mxu0 0
      %4177 = vmatmul.mubr.bf16.gmra.mrb[0].mxu0 %v4077
      %v4178 = vpop.f32.mrb[0].mxu0
      %v4179 = vadd.f32 %v3964, %v4178
      %v4180 = vpop.f32.mrb[0].mxu0
      %v4181 = vpop.f32.mrb[0].mxu0
      %v4182 = vadd.f32 %v3967, %v4181
      %v4183 = vpop.f32.mrb[0].mxu0
      %4184 = vmatprep.mubr.bf16.mxu0 0
      %4185 = vmatmul.mubr.bf16.gmra.mrb[0].mxu0 %v4080
      %v4186 = vpop.f32.mrb[0].mxu0
      %v4187 = vadd.f32 %v3972, %v4186
      %v4188 = vpop.f32.mrb[0].mxu0
      %v4189 = vpop.f32.mrb[0].mxu0
      %v4190 = vadd.f32 %v3975, %v4189
      %v4191 = vpop.f32.mrb[0].mxu0
      %4192 = vmatprep.mubr.bf16.mxu0 0
      %4193 = vmatmul.mubr.bf16.gmra.mrb[0].mxu0 %v4083
      %v4194 = vpop.f32.mrb[0].mxu0
      %v4195 = vadd.f32 %v3980, %v4194
      %v4196 = vpop.f32.mrb[0].mxu0
      %v4197 = vpop.f32.mrb[0].mxu0
      %v4198 = vadd.f32 %v3983, %v4197
      %v4199 = vpop.f32.mrb[0].mxu0
      %4200 = vmatprep.mubr.bf16.mxu0 0
      %4201 = vmatmul.mubr.bf16.gmra.mrb[0].mxu0 %v4086
      %v4202 = vpop.f32.mrb[0].mxu0
      %v4203 = vadd.f32 %v3988, %v4202
      %v4204 = vpop.f32.mrb[0].mxu0
      %v4205 = vpop.f32.mrb[0].mxu0
      %v4206 = vadd.f32 %v3991, %v4205
      %v4207 = vpop.f32.mrb[0].mxu0
      %4208 = vmatprep.mubr.bf16.mxu0 0
      %4209 = vmatmul.mubr.bf16.gmra.mrb[0].mxu0 %v4089
      %v4210 = vpop.f32.mrb[0].mxu0
      %v4211 = vadd.f32 %v3996, %v4210
      %v4212 = vpop.f32.mrb[0].mxu0
      %v4213 = vpop.f32.mrb[0].mxu0
      %v4214 = vadd.f32 %v3999, %v4213
      %v4215 = vpop.f32.mrb[0].mxu0
      %4216 = vmatprep.mubr.bf16.mxu0 0
      %4217 = vmatmul.mubr.bf16.gmra.mrb[0].mxu0 %v4092
      %v4218 = vpop.f32.mrb[0].mxu0
      %v4219 = vadd.f32 %v4004, %v4218
      %v4220 = vpop.f32.mrb[0].mxu0
      %v4221 = vpop.f32.mrb[0].mxu0
      %v4222 = vadd.f32 %v4007, %v4221
      %v4223 = vpop.f32.mrb[0].mxu0
      %4224 = vmatprep.mubr.bf16.mxu0 0
      %4225 = vmatmul.mubr.bf16.gmra.mrb[0].mxu0 %v4095
      %v4226 = vpop.f32.mrb[0].mxu0
      %v4227 = vadd.f32 %v4012, %v4226
      %v4228 = vpop.f32.mrb[0].mxu0
      %v4229 = vpop.f32.mrb[0].mxu0
      %v4230 = vadd.f32 %v4015, %v4229
      %v4231 = vpop.f32.mrb[0].mxu0
      %4232 = vmatprep.mubr.bf16.mxu0 0
      %4233 = vmatmul.mubr.bf16.gmra.mrb[0].mxu0 %v4098
      %v4234 = vpop.f32.mrb[0].mxu0
      %v4235 = vadd.f32 %v4020, %v4234
      %v4236 = vpop.f32.mrb[0].mxu0
      %v4237 = vpop.f32.mrb[0].mxu0
      %v4238 = vadd.f32 %v4023, %v4237
      %v4239 = vpop.f32.mrb[0].mxu0
      %4240 = vmatprep.mubr.bf16.mxu0 0
      %4241 = vmatmul.mubr.bf16.gmra.mrb[0].mxu0 %v4101
      %v4242 = vpop.f32.mrb[0].mxu0
      %v4243 = vadd.f32 %v4028, %v4242
      %v4244 = vpop.f32.mrb[0].mxu0
      %v4245 = vpop.f32.mrb[0].mxu0
      %v4246 = vadd.f32 %v4031, %v4245
      %v4247 = vpop.f32.mrb[0].mxu0
      %4248 = vmatprep.mubr.bf16.mxu0 0
      %4249 = vmatmul.mubr.bf16.gmra.mrb[0].mxu0 %v4104
      %v4250 = vpop.f32.mrb[0].mxu0
      %v4251 = vadd.f32 %v4036, %v4250
      %v4252 = vpop.f32.mrb[0].mxu0
      %v4253 = vpop.f32.mrb[0].mxu0
      %v4254 = vadd.f32 %v4039, %v4253
      %v4255 = vpop.f32.mrb[0].mxu0
      %4256 = vmatprep.mubr.bf16.mxu0 0
      %4257 = vmatmul.mubr.bf16.gmra.mrb[0].mxu0 %v4107
      %v4258 = vpop.f32.mrb[0].mxu0
      %v4259 = vadd.f32 %v4044, %v4258
      %v4260 = vpop.f32.mrb[0].mxu0
      %v4261 = vpop.f32.mrb[0].mxu0
      %v4262 = vadd.f32 %v4047, %v4261
      %v4263 = vpop.f32.mrb[0].mxu0
      %4264 = vmatprep.mubr.bf16.mxu0 0
      %4265 = vmatmul.mubr.bf16.gmra.mrb[0].mxu0 %v4110
      %v4266 = vpop.f32.mrb[0].mxu0
      %v4267 = vadd.f32 %v4052, %v4266
      %v4268 = vpop.f32.mrb[0].mxu0
      %v4269 = vpop.f32.mrb[0].mxu0
      %v4270 = vadd.f32 %v4055, %v4269
      %v4271 = vpop.f32.mrb[0].mxu0
      %4272 = vdwg.mxu0
      %v4273 = vld [vmem:[#allocation3 + $0x2] sm:$0xff]
      %v4274 = vld [vmem:[#allocation3 + $0xa] sm:$0xff]
      %v4275 = vld [vmem:[#allocation3 + $0x1a] sm:$0xff]
      %v4276 = vld [vmem:[#allocation3 + $0x22] sm:$0xff]
      %v4277 = vld [vmem:[#allocation3 + $0x32] sm:$0xff]
      %v4278 = vld [vmem:[#allocation3 + $0x3a] sm:$0xff]
      %v4279 = vld [vmem:[#allocation3 + $0x4a] sm:$0xff]
      %v4280 = vld [vmem:[#allocation3 + $0x52] sm:$0xff]
      %v4281 = vld [vmem:[#allocation3 + $0x62] sm:$0xff]
      %v4282 = vld [vmem:[#allocation3 + $0x6a] sm:$0xff]
      %v4283 = vld [vmem:[#allocation3 + $0x7a] sm:$0xff]
      %v4284 = vld [vmem:[#allocation3 + $0x82] sm:$0xff]
      %v4285 = vld [vmem:[#allocation3 + $0x92] sm:$0xff]
      %v4286 = vld [vmem:[#allocation3 + $0x9a] sm:$0xff]
      %v4287 = vld [vmem:[#allocation3 + $0xaa] sm:$0xff]
      %v4288 = vld [vmem:[#allocation3 + $0xb2] sm:$0xff]
      %v4289 = vld [vmem:[#allocation3 + $0xc2] sm:$0xff]
      %v4290 = vld [vmem:[#allocation3 + $0xca] sm:$0xff]
      %v4291 = vld [vmem:[#allocation3 + $0xda] sm:$0xff]
      %v4292 = vld [vmem:[#allocation3 + $0xe2] sm:$0xff]
      %v4293 = vld [vmem:[#allocation3 + $0xf2] sm:$0xff]
      %v4294 = vld [vmem:[#allocation3 + $0xfa] sm:$0xff]
      %v4295 = vld [vmem:[#allocation3 + $0x10a] sm:$0xff]
      %v4296 = vld [vmem:[#allocation3 + $0x112] sm:$0xff]
      %v4297 = vld [vmem:[#allocation3 + $0x122] sm:$0xff]
      %v4298 = vld [vmem:[#allocation3 + $0x12a] sm:$0xff]
      %v4299 = vld [vmem:[#allocation3 + $0x13a] sm:$0xff]
      %v4300 = vld [vmem:[#allocation3 + $0x142] sm:$0xff]
      %v4301 = vld [vmem:[#allocation3 + $0x152] sm:$0xff]
      %v4302 = vld [vmem:[#allocation3 + $0x15a] sm:$0xff]
      %v4303 = vld [vmem:[#allocation3 + $0x16a] sm:$0xff]
      %v4304 = vld [vmem:[#allocation3 + $0x172] sm:$0xff]
      %v4305 = vpack.c.bf16 %v4274, %v4273
      %v4306 = vpack.c.bf16 %v4276, %v4275
      %v4307 = vpack.c.bf16 %v4278, %v4277
      %v4308 = vpack.c.bf16 %v4280, %v4279
      %v4309 = vpack.c.bf16 %v4282, %v4281
      %v4310 = vpack.c.bf16 %v4284, %v4283
      %v4311 = vpack.c.bf16 %v4286, %v4285
      %v4312 = vpack.c.bf16 %v4288, %v4287
      %v4313 = vpack.c.bf16 %v4290, %v4289
      %v4314 = vpack.c.bf16 %v4292, %v4291
      %v4315 = vpack.c.bf16 %v4294, %v4293
      %v4316 = vpack.c.bf16 %v4296, %v4295
      %v4317 = vpack.c.bf16 %v4298, %v4297
      %v4318 = vpack.c.bf16 %v4300, %v4299
      %v4319 = vpack.c.bf16 %v4302, %v4301
      %v4320 = vpack.c.bf16 %v4304, %v4303
      %s4321 = scalar_lea.vmem %s5, 16
      %v4322 = vld [vmem:[%s4321] sm:$0xf]
      %v4323 = vld [vmem:[%s4321 + $0x4] sm:$0xf]
      %v4326 = vunpack.c.l.b16 %v4322
      %v4327 = vunpack.c.l.b16 %v4323
      %v4328 = vpack.c.b16 %v4327, %v4326
      %v4331 = vsel %vm326, %v4305, 0
      %v4334 = vsel %vm326, %v4306, 0
      %v4337 = vsel %vm326, %v4307, 0
      %v4340 = vsel %vm326, %v4308, 0
      %v4343 = vsel %vm326, %v4309, 0
      %v4346 = vsel %vm326, %v4310, 0
      %v4349 = vsel %vm326, %v4311, 0
      %v4352 = vsel %vm326, %v4312, 0
      %v4355 = vsel %vm326, %v4313, 0
      %v4358 = vsel %vm326, %v4314, 0
      %v4361 = vsel %vm326, %v4315, 0
      %v4364 = vsel %vm326, %v4316, 0
      %v4367 = vsel %vm326, %v4317, 0
      %v4370 = vsel %vm326, %v4318, 0
      %v4373 = vsel %vm326, %v4319, 0
      %v4376 = vsel %vm326, %v4320, 0
      %4378 = vmatprep.subr.bf16.mxu0 0
      %4379 = vmatpush1.bf16.msra.mxu0 %v4328
      %4380 = vmatprep.subr.bf16.mxu0 0
      %4381 = vmatpush1.bf16.msra.mxu0 0
      %4382 = vmatprep.subr.bf16.mxu0 0
      %4383 = vmatpush1.bf16.msra.mxu0 0
      %4384 = vmatprep.subr.bf16.mxu0 0
      %4385 = vmatpush1.bf16.msra.mxu0 0
      %4386 = vmatprep.subr.bf16.mxu0 0
      %4387 = vmatpush1.bf16.msra.mxu0 0
      %4388 = vmatprep.subr.bf16.mxu0 0
      %4389 = vmatpush1.bf16.msra.mxu0 0
      %4390 = vmatprep.subr.bf16.mxu0 0
      %4391 = vmatpush1.bf16.msra.mxu0 0
      %4392 = vmatprep.subr.bf16.mxu0 0
      %4393 = vmatpush1.bf16.msra.mxu0 0
      %4394 = vmatprep.subr.bf16.mxu0 0
      %4395 = vmatpush1.bf16.msra.mxu0 0
      %4396 = vmatprep.subr.bf16.mxu0 0
      %4397 = vmatpush1.bf16.msra.mxu0 0
      %4398 = vmatprep.subr.bf16.mxu0 0
      %4399 = vmatpush1.bf16.msra.mxu0 0
      %4400 = vmatprep.subr.bf16.mxu0 0
      %4401 = vmatpush1.bf16.msra.mxu0 0
      %4402 = vmatprep.subr.bf16.mxu0 0
      %4403 = vmatpush1.bf16.msra.mxu0 0
      %4404 = vmatprep.subr.bf16.mxu0 0
      %4405 = vmatpush1.bf16.msra.mxu0 0
      %4406 = vmatprep.subr.bf16.mxu0 0
      %4407 = vmatpush1.bf16.msra.mxu0 0
      %4408 = vmatprep.subr.bf16.mxu0 0
      %4409 = vmatpush1.bf16.msra.mxu0 0
      %4410 = vmatprep.mubr.bf16.mxu0 0
      %4411 = vmatmul.mubr.bf16.gmra.mrb[0].mxu0 %v4331
      %v4412 = vpop.f32.mrb[0].mxu0
      %v4413 = vadd.f32 0.0, %v4412
      %v4414 = vpop.f32.mrb[0].mxu0
      %v4415 = vpop.f32.mrb[0].mxu0
      %v4416 = vadd.f32 0.0, %v4415
      %v4417 = vpop.f32.mrb[0].mxu0
      %4418 = vmatprep.mubr.bf16.mxu0 0
      %4419 = vmatmul.mubr.bf16.gmra.mrb[0].mxu0 %v4334
      %v4420 = vpop.f32.mrb[0].mxu0
      %v4421 = vadd.f32 0.0, %v4420
      %v4422 = vpop.f32.mrb[0].mxu0
      %v4423 = vpop.f32.mrb[0].mxu0
      %v4424 = vadd.f32 0.0, %v4423
      %v4425 = vpop.f32.mrb[0].mxu0
      %4426 = vmatprep.mubr.bf16.mxu0 0
      %4427 = vmatmul.mubr.bf16.gmra.mrb[0].mxu0 %v4337
      %v4428 = vpop.f32.mrb[0].mxu0
      %v4429 = vadd.f32 0.0, %v4428
      %v4430 = vpop.f32.mrb[0].mxu0
      %v4431 = vpop.f32.mrb[0].mxu0
      %v4432 = vadd.f32 0.0, %v4431
      %v4433 = vpop.f32.mrb[0].mxu0
      %4434 = vmatprep.mubr.bf16.mxu0 0
      %4435 = vmatmul.mubr.bf16.gmra.mrb[0].mxu0 %v4340
      %v4436 = vpop.f32.mrb[0].mxu0
      %v4437 = vadd.f32 0.0, %v4436
      %v4438 = vpop.f32.mrb[0].mxu0
      %v4439 = vpop.f32.mrb[0].mxu0
      %v4440 = vadd.f32 0.0, %v4439
      %v4441 = vpop.f32.mrb[0].mxu0
      %4442 = vmatprep.mubr.bf16.mxu0 0
      %4443 = vmatmul.mubr.bf16.gmra.mrb[0].mxu0 %v4343
      %v4444 = vpop.f32.mrb[0].mxu0
      %v4445 = vadd.f32 0.0, %v4444
      %v4446 = vpop.f32.mrb[0].mxu0
      %v4447 = vpop.f32.mrb[0].mxu0
      %v4448 = vadd.f32 0.0, %v4447
      %v4449 = vpop.f32.mrb[0].mxu0
      %4450 = vmatprep.mubr.bf16.mxu0 0
      %4451 = vmatmul.mubr.bf16.gmra.mrb[0].mxu0 %v4346
      %v4452 = vpop.f32.mrb[0].mxu0
      %v4453 = vadd.f32 0.0, %v4452
      %v4454 = vpop.f32.mrb[0].mxu0
      %v4455 = vpop.f32.mrb[0].mxu0
      %v4456 = vadd.f32 0.0, %v4455
      %v4457 = vpop.f32.mrb[0].mxu0
      %4458 = vmatprep.mubr.bf16.mxu0 0
      %4459 = vmatmul.mubr.bf16.gmra.mrb[0].mxu0 %v4349
      %v4460 = vpop.f32.mrb[0].mxu0
      %v4461 = vadd.f32 0.0, %v4460
      %v4462 = vpop.f32.mrb[0].mxu0
      %v4463 = vpop.f32.mrb[0].mxu0
      %v4464 = vadd.f32 0.0, %v4463
      %v4465 = vpop.f32.mrb[0].mxu0
      %4466 = vmatprep.mubr.bf16.mxu0 0
      %4467 = vmatmul.mubr.bf16.gmra.mrb[0].mxu0 %v4352
      %v4468 = vpop.f32.mrb[0].mxu0
      %v4469 = vadd.f32 0.0, %v4468
      %v4470 = vpop.f32.mrb[0].mxu0
      %v4471 = vpop.f32.mrb[0].mxu0
      %v4472 = vadd.f32 0.0, %v4471
      %v4473 = vpop.f32.mrb[0].mxu0
      %4474 = vmatprep.mubr.bf16.mxu0 0
      %4475 = vmatmul.mubr.bf16.gmra.mrb[0].mxu0 %v4355
      %v4476 = vpop.f32.mrb[0].mxu0
      %v4477 = vadd.f32 0.0, %v4476
      %v4478 = vpop.f32.mrb[0].mxu0
      %v4479 = vpop.f32.mrb[0].mxu0
      %v4480 = vadd.f32 0.0, %v4479
      %v4481 = vpop.f32.mrb[0].mxu0
      %4482 = vmatprep.mubr.bf16.mxu0 0
      %4483 = vmatmul.mubr.bf16.gmra.mrb[0].mxu0 %v4358
      %v4484 = vpop.f32.mrb[0].mxu0
      %v4485 = vadd.f32 0.0, %v4484
      %v4486 = vpop.f32.mrb[0].mxu0
      %v4487 = vpop.f32.mrb[0].mxu0
      %v4488 = vadd.f32 0.0, %v4487
      %v4489 = vpop.f32.mrb[0].mxu0
      %4490 = vmatprep.mubr.bf16.mxu0 0
      %4491 = vmatmul.mubr.bf16.gmra.mrb[0].mxu0 %v4361
      %v4492 = vpop.f32.mrb[0].mxu0
      %v4493 = vadd.f32 0.0, %v4492
      %v4494 = vpop.f32.mrb[0].mxu0
      %v4495 = vpop.f32.mrb[0].mxu0
      %v4496 = vadd.f32 0.0, %v4495
      %v4497 = vpop.f32.mrb[0].mxu0
      %4498 = vmatprep.mubr.bf16.mxu0 0
      %4499 = vmatmul.mubr.bf16.gmra.mrb[0].mxu0 %v4364
      %v4500 = vpop.f32.mrb[0].mxu0
      %v4501 = vadd.f32 0.0, %v4500
      %v4502 = vpop.f32.mrb[0].mxu0
      %v4503 = vpop.f32.mrb[0].mxu0
      %v4504 = vadd.f32 0.0, %v4503
      %v4505 = vpop.f32.mrb[0].mxu0
      %4506 = vmatprep.mubr.bf16.mxu0 0
      %4507 = vmatmul.mubr.bf16.gmra.mrb[0].mxu0 %v4367
      %v4508 = vpop.f32.mrb[0].mxu0
      %v4509 = vadd.f32 0.0, %v4508
      %v4510 = vpop.f32.mrb[0].mxu0
      %v4511 = vpop.f32.mrb[0].mxu0
      %v4512 = vadd.f32 0.0, %v4511
      %v4513 = vpop.f32.mrb[0].mxu0
      %4514 = vmatprep.mubr.bf16.mxu0 0
      %4515 = vmatmul.mubr.bf16.gmra.mrb[0].mxu0 %v4370
      %v4516 = vpop.f32.mrb[0].mxu0
      %v4517 = vadd.f32 0.0, %v4516
      %v4518 = vpop.f32.mrb[0].mxu0
      %v4519 = vpop.f32.mrb[0].mxu0
      %v4520 = vadd.f32 0.0, %v4519
      %v4521 = vpop.f32.mrb[0].mxu0
      %4522 = vmatprep.mubr.bf16.mxu0 0
      %4523 = vmatmul.mubr.bf16.gmra.mrb[0].mxu0 %v4373
      %v4524 = vpop.f32.mrb[0].mxu0
      %v4525 = vadd.f32 0.0, %v4524
      %v4526 = vpop.f32.mrb[0].mxu0
      %v4527 = vpop.f32.mrb[0].mxu0
      %v4528 = vadd.f32 0.0, %v4527
      %v4529 = vpop.f32.mrb[0].mxu0
      %4530 = vmatprep.mubr.bf16.mxu0 0
      %4531 = vmatmul.mubr.bf16.gmra.mrb[0].mxu0 %v4376
      %v4532 = vpop.f32.mrb[0].mxu0
      %v4533 = vadd.f32 0.0, %v4532
      %v4534 = vpop.f32.mrb[0].mxu0
      %v4535 = vpop.f32.mrb[0].mxu0
      %v4536 = vadd.f32 0.0, %v4535
      %v4537 = vpop.f32.mrb[0].mxu0
      %4538 = vdwg.mxu0
      %v4539 = vadd.f32 %v4147, %v4413
      %v4540 = vadd.f32 %v4150, %v4416
      %v4541 = vadd.f32 %v4155, %v4421
      %v4542 = vadd.f32 %v4158, %v4424
      %v4543 = vadd.f32 %v4163, %v4429
      %v4544 = vadd.f32 %v4166, %v4432
      %v4545 = vadd.f32 %v4171, %v4437
      %v4546 = vadd.f32 %v4174, %v4440
      %v4547 = vadd.f32 %v4179, %v4445
      %v4548 = vadd.f32 %v4182, %v4448
      %v4549 = vadd.f32 %v4187, %v4453
      %v4550 = vadd.f32 %v4190, %v4456
      %v4551 = vadd.f32 %v4195, %v4461
      %v4552 = vadd.f32 %v4198, %v4464
      %v4553 = vadd.f32 %v4203, %v4469
      %v4554 = vadd.f32 %v4206, %v4472
      %v4555 = vadd.f32 %v4211, %v4477
      %v4556 = vadd.f32 %v4214, %v4480
      %v4557 = vadd.f32 %v4219, %v4485
      %v4558 = vadd.f32 %v4222, %v4488
      %v4559 = vadd.f32 %v4227, %v4493
      %v4560 = vadd.f32 %v4230, %v4496
      %v4561 = vadd.f32 %v4235, %v4501
      %v4562 = vadd.f32 %v4238, %v4504
      %v4563 = vadd.f32 %v4243, %v4509
      %v4564 = vadd.f32 %v4246, %v4512
      %v4565 = vadd.f32 %v4251, %v4517
      %v4566 = vadd.f32 %v4254, %v4520
      %v4567 = vadd.f32 %v4259, %v4525
      %v4568 = vadd.f32 %v4262, %v4528
      %v4569 = vadd.f32 %v4267, %v4533
      %v4570 = vadd.f32 %v4270, %v4536
      %v4571 = vld [vmem:[%s3548] sm:$0xff]
      %v4572 = vld [vmem:[%s3548 + $0x8] sm:$0xff]
      %v4573 = vld [vmem:[%s3548 + $0x18] sm:$0xff]
      %v4574 = vld [vmem:[%s3548 + $0x20] sm:$0xff]
      %v4575 = vld [vmem:[%s3548 + $0x30] sm:$0xff]
      %v4576 = vld [vmem:[%s3548 + $0x38] sm:$0xff]
      %v4577 = vld [vmem:[%s3548 + $0x48] sm:$0xff]
      %v4578 = vld [vmem:[%s3548 + $0x50] sm:$0xff]
      %v4579 = vld [vmem:[%s3548 + $0x60] sm:$0xff]
      %v4580 = vld [vmem:[%s3548 + $0x68] sm:$0xff]
      %v4581 = vld [vmem:[%s3548 + $0x78] sm:$0xff]
      %v4582 = vld [vmem:[%s3548 + $0x80] sm:$0xff]
      %v4583 = vld [vmem:[%s3548 + $0x90] sm:$0xff]
      %v4584 = vld [vmem:[%s3548 + $0x98] sm:$0xff]
      %v4585 = vld [vmem:[%s3548 + $0xa8] sm:$0xff]
      %v4586 = vld [vmem:[%s3548 + $0xb0] sm:$0xff]
      %v4587 = vld [vmem:[%s3548 + $0xc0] sm:$0xff]
      %v4588 = vld [vmem:[%s3548 + $0xc8] sm:$0xff]
      %v4589 = vld [vmem:[%s3548 + $0xd8] sm:$0xff]
      %v4590 = vld [vmem:[%s3548 + $0xe0] sm:$0xff]
      %v4591 = vld [vmem:[%s3548 + $0xf0] sm:$0xff]
      %v4592 = vld [vmem:[%s3548 + $0xf8] sm:$0xff]
      %v4593 = vld [vmem:[%s3548 + $0x108] sm:$0xff]
      %v4594 = vld [vmem:[%s3548 + $0x110] sm:$0xff]
      %v4595 = vld [vmem:[%s3548 + $0x120] sm:$0xff]
      %v4596 = vld [vmem:[%s3548 + $0x128] sm:$0xff]
      %v4597 = vld [vmem:[%s3548 + $0x138] sm:$0xff]
      %v4598 = vld [vmem:[%s3548 + $0x140] sm:$0xff]
      %v4599 = vld [vmem:[%s3548 + $0x150] sm:$0xff]
      %v4600 = vld [vmem:[%s3548 + $0x158] sm:$0xff]
      %v4601 = vld [vmem:[%s3548 + $0x168] sm:$0xff]
      %v4602 = vld [vmem:[%s3548 + $0x170] sm:$0xff]
      %v4603 = vpack.c.bf16 %v4572, %v4571
      %v4604 = vpack.c.bf16 %v4574, %v4573
      %v4605 = vpack.c.bf16 %v4576, %v4575
      %v4606 = vpack.c.bf16 %v4578, %v4577
      %v4607 = vpack.c.bf16 %v4580, %v4579
      %v4608 = vpack.c.bf16 %v4582, %v4581
      %v4609 = vpack.c.bf16 %v4584, %v4583
      %v4610 = vpack.c.bf16 %v4586, %v4585
      %v4611 = vpack.c.bf16 %v4588, %v4587
      %v4612 = vpack.c.bf16 %v4590, %v4589
      %v4613 = vpack.c.bf16 %v4592, %v4591
      %v4614 = vpack.c.bf16 %v4594, %v4593
      %v4615 = vpack.c.bf16 %v4596, %v4595
      %v4616 = vpack.c.bf16 %v4598, %v4597
      %v4617 = vpack.c.bf16 %v4600, %v4599
      %v4618 = vpack.c.bf16 %v4602, %v4601
      %s4619 = scalar_lea.vmem %s5, 24
      %v4620 = vld [vmem:[%s4619] sm:$0xf]
      %v4621 = vld [vmem:[%s4619 + $0x4] sm:$0xf]
      %v4624 = vunpack.c.l.b16 %v4620
      %v4625 = vunpack.c.l.b16 %v4621
      %v4626 = vpack.c.b16 %v4625, %v4624
      %v4629 = vsel %vm326, %v4603, 0
      %v4632 = vsel %vm326, %v4604, 0
      %v4635 = vsel %vm326, %v4605, 0
      %v4638 = vsel %vm326, %v4606, 0
      %v4641 = vsel %vm326, %v4607, 0
      %v4644 = vsel %vm326, %v4608, 0
      %v4647 = vsel %vm326, %v4609, 0
      %v4650 = vsel %vm326, %v4610, 0
      %v4653 = vsel %vm326, %v4611, 0
      %v4656 = vsel %vm326, %v4612, 0
      %v4659 = vsel %vm326, %v4613, 0
      %v4662 = vsel %vm326, %v4614, 0
      %v4665 = vsel %vm326, %v4615, 0
      %v4668 = vsel %vm326, %v4616, 0
      %v4671 = vsel %vm326, %v4617, 0
      %v4674 = vsel %vm326, %v4618, 0
      %4676 = vmatprep.subr.bf16.mxu0 0
      %4677 = vmatpush1.bf16.msra.mxu0 %v4626
      %4678 = vmatprep.subr.bf16.mxu0 0
      %4679 = vmatpush1.bf16.msra.mxu0 0
      %4680 = vmatprep.subr.bf16.mxu0 0
      %4681 = vmatpush1.bf16.msra.mxu0 0
      %4682 = vmatprep.subr.bf16.mxu0 0
      %4683 = vmatpush1.bf16.msra.mxu0 0
      %4684 = vmatprep.subr.bf16.mxu0 0
      %4685 = vmatpush1.bf16.msra.mxu0 0
      %4686 = vmatprep.subr.bf16.mxu0 0
      %4687 = vmatpush1.bf16.msra.mxu0 0
      %4688 = vmatprep.subr.bf16.mxu0 0
      %4689 = vmatpush1.bf16.msra.mxu0 0
      %4690 = vmatprep.subr.bf16.mxu0 0
      %4691 = vmatpush1.bf16.msra.mxu0 0
      %4692 = vmatprep.subr.bf16.mxu0 0
      %4693 = vmatpush1.bf16.msra.mxu0 0
      %4694 = vmatprep.subr.bf16.mxu0 0
      %4695 = vmatpush1.bf16.msra.mxu0 0
      %4696 = vmatprep.subr.bf16.mxu0 0
      %4697 = vmatpush1.bf16.msra.mxu0 0
      %4698 = vmatprep.subr.bf16.mxu0 0
      %4699 = vmatpush1.bf16.msra.mxu0 0
      %4700 = vmatprep.subr.bf16.mxu0 0
      %4701 = vmatpush1.bf16.msra.mxu0 0
      %4702 = vmatprep.subr.bf16.mxu0 0
      %4703 = vmatpush1.bf16.msra.mxu0 0
      %4704 = vmatprep.subr.bf16.mxu0 0
      %4705 = vmatpush1.bf16.msra.mxu0 0
      %4706 = vmatprep.subr.bf16.mxu0 0
      %4707 = vmatpush1.bf16.msra.mxu0 0
      %4708 = vmatprep.mubr.bf16.mxu0 0
      %4709 = vmatmul.mubr.bf16.gmra.mrb[0].mxu0 %v4629
      %v4710 = vpop.f32.mrb[0].mxu0
      %v4711 = vadd.f32 0.0, %v4710
      %v4712 = vpop.f32.mrb[0].mxu0
      %v4713 = vpop.f32.mrb[0].mxu0
      %v4714 = vadd.f32 0.0, %v4713
      %v4715 = vpop.f32.mrb[0].mxu0
      %4716 = vmatprep.mubr.bf16.mxu0 0
      %4717 = vmatmul.mubr.bf16.gmra.mrb[0].mxu0 %v4632
      %v4718 = vpop.f32.mrb[0].mxu0
      %v4719 = vadd.f32 0.0, %v4718
      %v4720 = vpop.f32.mrb[0].mxu0
      %v4721 = vpop.f32.mrb[0].mxu0
      %v4722 = vadd.f32 0.0, %v4721
      %v4723 = vpop.f32.mrb[0].mxu0
      %4724 = vmatprep.mubr.bf16.mxu0 0
      %4725 = vmatmul.mubr.bf16.gmra.mrb[0].mxu0 %v4635
      %v4726 = vpop.f32.mrb[0].mxu0
      %v4727 = vadd.f32 0.0, %v4726
      %v4728 = vpop.f32.mrb[0].mxu0
      %v4729 = vpop.f32.mrb[0].mxu0
      %v4730 = vadd.f32 0.0, %v4729
      %v4731 = vpop.f32.mrb[0].mxu0
      %4732 = vmatprep.mubr.bf16.mxu0 0
      %4733 = vmatmul.mubr.bf16.gmra.mrb[0].mxu0 %v4638
      %v4734 = vpop.f32.mrb[0].mxu0
      %v4735 = vadd.f32 0.0, %v4734
      %v4736 = vpop.f32.mrb[0].mxu0
      %v4737 = vpop.f32.mrb[0].mxu0
      %v4738 = vadd.f32 0.0, %v4737
      %v4739 = vpop.f32.mrb[0].mxu0
      %4740 = vmatprep.mubr.bf16.mxu0 0
      %4741 = vmatmul.mubr.bf16.gmra.mrb[0].mxu0 %v4641
      %v4742 = vpop.f32.mrb[0].mxu0
      %v4743 = vadd.f32 0.0, %v4742
      %v4744 = vpop.f32.mrb[0].mxu0
      %v4745 = vpop.f32.mrb[0].mxu0
      %v4746 = vadd.f32 0.0, %v4745
      %v4747 = vpop.f32.mrb[0].mxu0
      %4748 = vmatprep.mubr.bf16.mxu0 0
      %4749 = vmatmul.mubr.bf16.gmra.mrb[0].mxu0 %v4644
      %v4750 = vpop.f32.mrb[0].mxu0
      %v4751 = vadd.f32 0.0, %v4750
      %v4752 = vpop.f32.mrb[0].mxu0
      %v4753 = vpop.f32.mrb[0].mxu0
      %v4754 = vadd.f32 0.0, %v4753
      %v4755 = vpop.f32.mrb[0].mxu0
      %4756 = vmatprep.mubr.bf16.mxu0 0
      %4757 = vmatmul.mubr.bf16.gmra.mrb[0].mxu0 %v4647
      %v4758 = vpop.f32.mrb[0].mxu0
      %v4759 = vadd.f32 0.0, %v4758
      %v4760 = vpop.f32.mrb[0].mxu0
      %v4761 = vpop.f32.mrb[0].mxu0
      %v4762 = vadd.f32 0.0, %v4761
      %v4763 = vpop.f32.mrb[0].mxu0
      %4764 = vmatprep.mubr.bf16.mxu0 0
      %4765 = vmatmul.mubr.bf16.gmra.mrb[0].mxu0 %v4650
      %v4766 = vpop.f32.mrb[0].mxu0
      %v4767 = vadd.f32 0.0, %v4766
      %v4768 = vpop.f32.mrb[0].mxu0
      %v4769 = vpop.f32.mrb[0].mxu0
      %v4770 = vadd.f32 0.0, %v4769
      %v4771 = vpop.f32.mrb[0].mxu0
      %4772 = vmatprep.mubr.bf16.mxu0 0
      %4773 = vmatmul.mubr.bf16.gmra.mrb[0].mxu0 %v4653
      %v4774 = vpop.f32.mrb[0].mxu0
      %v4775 = vadd.f32 0.0, %v4774
      %v4776 = vpop.f32.mrb[0].mxu0
      %v4777 = vpop.f32.mrb[0].mxu0
      %v4778 = vadd.f32 0.0, %v4777
      %v4779 = vpop.f32.mrb[0].mxu0
      %4780 = vmatprep.mubr.bf16.mxu0 0
      %4781 = vmatmul.mubr.bf16.gmra.mrb[0].mxu0 %v4656
      %v4782 = vpop.f32.mrb[0].mxu0
      %v4783 = vadd.f32 0.0, %v4782
      %v4784 = vpop.f32.mrb[0].mxu0
      %v4785 = vpop.f32.mrb[0].mxu0
      %v4786 = vadd.f32 0.0, %v4785
      %v4787 = vpop.f32.mrb[0].mxu0
      %4788 = vmatprep.mubr.bf16.mxu0 0
      %4789 = vmatmul.mubr.bf16.gmra.mrb[0].mxu0 %v4659
      %v4790 = vpop.f32.mrb[0].mxu0
      %v4791 = vadd.f32 0.0, %v4790
      %v4792 = vpop.f32.mrb[0].mxu0
      %v4793 = vpop.f32.mrb[0].mxu0
      %v4794 = vadd.f32 0.0, %v4793
      %v4795 = vpop.f32.mrb[0].mxu0
      %4796 = vmatprep.mubr.bf16.mxu0 0
      %4797 = vmatmul.mubr.bf16.gmra.mrb[0].mxu0 %v4662
      %v4798 = vpop.f32.mrb[0].mxu0
      %v4799 = vadd.f32 0.0, %v4798
      %v4800 = vpop.f32.mrb[0].mxu0
      %v4801 = vpop.f32.mrb[0].mxu0
      %v4802 = vadd.f32 0.0, %v4801
      %v4803 = vpop.f32.mrb[0].mxu0
      %4804 = vmatprep.mubr.bf16.mxu0 0
      %4805 = vmatmul.mubr.bf16.gmra.mrb[0].mxu0 %v4665
      %v4806 = vpop.f32.mrb[0].mxu0
      %v4807 = vadd.f32 0.0, %v4806
      %v4808 = vpop.f32.mrb[0].mxu0
      %v4809 = vpop.f32.mrb[0].mxu0
      %v4810 = vadd.f32 0.0, %v4809
      %v4811 = vpop.f32.mrb[0].mxu0
      %4812 = vmatprep.mubr.bf16.mxu0 0
      %4813 = vmatmul.mubr.bf16.gmra.mrb[0].mxu0 %v4668
      %v4814 = vpop.f32.mrb[0].mxu0
      %v4815 = vadd.f32 0.0, %v4814
      %v4816 = vpop.f32.mrb[0].mxu0
      %v4817 = vpop.f32.mrb[0].mxu0
      %v4818 = vadd.f32 0.0, %v4817
      %v4819 = vpop.f32.mrb[0].mxu0
      %4820 = vmatprep.mubr.bf16.mxu0 0
      %4821 = vmatmul.mubr.bf16.gmra.mrb[0].mxu0 %v4671
      %v4822 = vpop.f32.mrb[0].mxu0
      %v4823 = vadd.f32 0.0, %v4822
      %v4824 = vpop.f32.mrb[0].mxu0
      %v4825 = vpop.f32.mrb[0].mxu0
      %v4826 = vadd.f32 0.0, %v4825
      %v4827 = vpop.f32.mrb[0].mxu0
      %4828 = vmatprep.mubr.bf16.mxu0 0
      %4829 = vmatmul.mubr.bf16.gmra.mrb[0].mxu0 %v4674
      %v4830 = vpop.f32.mrb[0].mxu0
      %v4831 = vadd.f32 0.0, %v4830
      %v4832 = vpop.f32.mrb[0].mxu0
      %v4833 = vpop.f32.mrb[0].mxu0
      %v4834 = vadd.f32 0.0, %v4833
      %v4835 = vpop.f32.mrb[0].mxu0
      %4836 = vdwg.mxu0
      %v4837 = vadd.f32 %v4539, %v4711
      %v4838 = vadd.f32 %v4540, %v4714
      %v4839 = vadd.f32 %v4541, %v4719
      %v4840 = vadd.f32 %v4542, %v4722
      %v4841 = vadd.f32 %v4543, %v4727
      %v4842 = vadd.f32 %v4544, %v4730
      %v4843 = vadd.f32 %v4545, %v4735
      %v4844 = vadd.f32 %v4546, %v4738
      %v4845 = vadd.f32 %v4547, %v4743
      %v4846 = vadd.f32 %v4548, %v4746
      %v4847 = vadd.f32 %v4549, %v4751
      %v4848 = vadd.f32 %v4550, %v4754
      %v4849 = vadd.f32 %v4551, %v4759
      %v4850 = vadd.f32 %v4552, %v4762
      %v4851 = vadd.f32 %v4553, %v4767
      %v4852 = vadd.f32 %v4554, %v4770
      %v4853 = vadd.f32 %v4555, %v4775
      %v4854 = vadd.f32 %v4556, %v4778
      %v4855 = vadd.f32 %v4557, %v4783
      %v4856 = vadd.f32 %v4558, %v4786
      %v4857 = vadd.f32 %v4559, %v4791
      %v4858 = vadd.f32 %v4560, %v4794
      %v4859 = vadd.f32 %v4561, %v4799
      %v4860 = vadd.f32 %v4562, %v4802
      %v4861 = vadd.f32 %v4563, %v4807
      %v4862 = vadd.f32 %v4564, %v4810
      %v4863 = vadd.f32 %v4565, %v4815
      %v4864 = vadd.f32 %v4566, %v4818
      %v4865 = vadd.f32 %v4567, %v4823
      %v4866 = vadd.f32 %v4568, %v4826
      %v4867 = vadd.f32 %v4569, %v4831
      %v4868 = vadd.f32 %v4570, %v4834
      %v4869 = vld [vmem:[%s3548 + $0x1] sm:$0xff]
      %v4870 = vld [vmem:[%s3548 + $0x9] sm:$0xff]
      %v4871 = vld [vmem:[%s3548 + $0x19] sm:$0xff]
      %v4872 = vld [vmem:[%s3548 + $0x21] sm:$0xff]
      %v4873 = vld [vmem:[%s3548 + $0x31] sm:$0xff]
      %v4874 = vld [vmem:[%s3548 + $0x39] sm:$0xff]
      %v4875 = vld [vmem:[%s3548 + $0x49] sm:$0xff]
      %v4876 = vld [vmem:[%s3548 + $0x51] sm:$0xff]
      %v4877 = vld [vmem:[%s3548 + $0x61] sm:$0xff]
      %v4878 = vld [vmem:[%s3548 + $0x69] sm:$0xff]
      %v4879 = vld [vmem:[%s3548 + $0x79] sm:$0xff]
      %v4880 = vld [vmem:[%s3548 + $0x81] sm:$0xff]
      %v4881 = vld [vmem:[%s3548 + $0x91] sm:$0xff]
      %v4882 = vld [vmem:[%s3548 + $0x99] sm:$0xff]
      %v4883 = vld [vmem:[%s3548 + $0xa9] sm:$0xff]
      %v4884 = vld [vmem:[%s3548 + $0xb1] sm:$0xff]
      %v4885 = vld [vmem:[%s3548 + $0xc1] sm:$0xff]
      %v4886 = vld [vmem:[%s3548 + $0xc9] sm:$0xff]
      %v4887 = vld [vmem:[%s3548 + $0xd9] sm:$0xff]
      %v4888 = vld [vmem:[%s3548 + $0xe1] sm:$0xff]
      %v4889 = vld [vmem:[%s3548 + $0xf1] sm:$0xff]
      %v4890 = vld [vmem:[%s3548 + $0xf9] sm:$0xff]
      %v4891 = vld [vmem:[%s3548 + $0x109] sm:$0xff]
      %v4892 = vld [vmem:[%s3548 + $0x111] sm:$0xff]
      %v4893 = vld [vmem:[%s3548 + $0x121] sm:$0xff]
      %v4894 = vld [vmem:[%s3548 + $0x129] sm:$0xff]
      %v4895 = vld [vmem:[%s3548 + $0x139] sm:$0xff]
      %v4896 = vld [vmem:[%s3548 + $0x141] sm:$0xff]
      %v4897 = vld [vmem:[%s3548 + $0x151] sm:$0xff]
      %v4898 = vld [vmem:[%s3548 + $0x159] sm:$0xff]
      %v4899 = vld [vmem:[%s3548 + $0x169] sm:$0xff]
      %v4900 = vld [vmem:[%s3548 + $0x171] sm:$0xff]
      %v4901 = vpack.c.bf16 %v4870, %v4869
      %v4902 = vpack.c.bf16 %v4872, %v4871
      %v4903 = vpack.c.bf16 %v4874, %v4873
      %v4904 = vpack.c.bf16 %v4876, %v4875
      %v4905 = vpack.c.bf16 %v4878, %v4877
      %v4906 = vpack.c.bf16 %v4880, %v4879
      %v4907 = vpack.c.bf16 %v4882, %v4881
      %v4908 = vpack.c.bf16 %v4884, %v4883
      %v4909 = vpack.c.bf16 %v4886, %v4885
      %v4910 = vpack.c.bf16 %v4888, %v4887
      %v4911 = vpack.c.bf16 %v4890, %v4889
      %v4912 = vpack.c.bf16 %v4892, %v4891
      %v4913 = vpack.c.bf16 %v4894, %v4893
      %v4914 = vpack.c.bf16 %v4896, %v4895
      %v4915 = vpack.c.bf16 %v4898, %v4897
      %v4916 = vpack.c.bf16 %v4900, %v4899
      %s4917 = scalar_lea.vmem %s5, 32
      %v4918 = vld [vmem:[%s4917] sm:$0xf]
      %v4919 = vld [vmem:[%s4917 + $0x4] sm:$0xf]
      %v4922 = vunpack.c.l.b16 %v4918
      %v4923 = vunpack.c.l.b16 %v4919
      %v4924 = vpack.c.b16 %v4923, %v4922
      %v4927 = vsel %vm326, %v4901, 0
      %v4930 = vsel %vm326, %v4902, 0
      %v4933 = vsel %vm326, %v4903, 0
      %v4936 = vsel %vm326, %v4904, 0
      %v4939 = vsel %vm326, %v4905, 0
      %v4942 = vsel %vm326, %v4906, 0
      %v4945 = vsel %vm326, %v4907, 0
      %v4948 = vsel %vm326, %v4908, 0
      %v4951 = vsel %vm326, %v4909, 0
      %v4954 = vsel %vm326, %v4910, 0
      %v4957 = vsel %vm326, %v4911, 0
      %v4960 = vsel %vm326, %v4912, 0
      %v4963 = vsel %vm326, %v4913, 0
      %v4966 = vsel %vm326, %v4914, 0
      %v4969 = vsel %vm326, %v4915, 0
      %v4972 = vsel %vm326, %v4916, 0
      %4974 = vmatprep.subr.bf16.mxu0 0
      %4975 = vmatpush1.bf16.msra.mxu0 %v4924
      %4976 = vmatprep.subr.bf16.mxu0 0
      %4977 = vmatpush1.bf16.msra.mxu0 0
      %4978 = vmatprep.subr.bf16.mxu0 0
      %4979 = vmatpush1.bf16.msra.mxu0 0
      %4980 = vmatprep.subr.bf16.mxu0 0
      %4981 = vmatpush1.bf16.msra.mxu0 0
      %4982 = vmatprep.subr.bf16.mxu0 0
      %4983 = vmatpush1.bf16.msra.mxu0 0
      %4984 = vmatprep.subr.bf16.mxu0 0
      %4985 = vmatpush1.bf16.msra.mxu0 0
      %4986 = vmatprep.subr.bf16.mxu0 0
      %4987 = vmatpush1.bf16.msra.mxu0 0
      %4988 = vmatprep.subr.bf16.mxu0 0
      %4989 = vmatpush1.bf16.msra.mxu0 0
      %4990 = vmatprep.subr.bf16.mxu0 0
      %4991 = vmatpush1.bf16.msra.mxu0 0
      %4992 = vmatprep.subr.bf16.mxu0 0
      %4993 = vmatpush1.bf16.msra.mxu0 0
      %4994 = vmatprep.subr.bf16.mxu0 0
      %4995 = vmatpush1.bf16.msra.mxu0 0
      %4996 = vmatprep.subr.bf16.mxu0 0
      %4997 = vmatpush1.bf16.msra.mxu0 0
      %4998 = vmatprep.subr.bf16.mxu0 0
      %4999 = vmatpush1.bf16.msra.mxu0 0
      %5000 = vmatprep.subr.bf16.mxu0 0
      %5001 = vmatpush1.bf16.msra.mxu0 0
      %5002 = vmatprep.subr.bf16.mxu0 0
      %5003 = vmatpush1.bf16.msra.mxu0 0
      %5004 = vmatprep.subr.bf16.mxu0 0
      %5005 = vmatpush1.bf16.msra.mxu0 0
      %5006 = vmatprep.mubr.bf16.mxu0 0
      %5007 = vmatmul.mubr.bf16.gmra.mrb[0].mxu0 %v4927
      %v5008 = vpop.f32.mrb[0].mxu0
      %v5009 = vadd.f32 0.0, %v5008
      %v5010 = vpop.f32.mrb[0].mxu0
      %v5011 = vpop.f32.mrb[0].mxu0
      %v5012 = vadd.f32 0.0, %v5011
      %v5013 = vpop.f32.mrb[0].mxu0
      %5014 = vmatprep.mubr.bf16.mxu0 0
      %5015 = vmatmul.mubr.bf16.gmra.mrb[0].mxu0 %v4930
      %v5016 = vpop.f32.mrb[0].mxu0
      %v5017 = vadd.f32 0.0, %v5016
      %v5018 = vpop.f32.mrb[0].mxu0
      %v5019 = vpop.f32.mrb[0].mxu0
      %v5020 = vadd.f32 0.0, %v5019
      %v5021 = vpop.f32.mrb[0].mxu0
      %5022 = vmatprep.mubr.bf16.mxu0 0
      %5023 = vmatmul.mubr.bf16.gmra.mrb[0].mxu0 %v4933
      %v5024 = vpop.f32.mrb[0].mxu0
      %v5025 = vadd.f32 0.0, %v5024
      %v5026 = vpop.f32.mrb[0].mxu0
      %v5027 = vpop.f32.mrb[0].mxu0
      %v5028 = vadd.f32 0.0, %v5027
      %v5029 = vpop.f32.mrb[0].mxu0
      %5030 = vmatprep.mubr.bf16.mxu0 0
      %5031 = vmatmul.mubr.bf16.gmra.mrb[0].mxu0 %v4936
      %v5032 = vpop.f32.mrb[0].mxu0
      %v5033 = vadd.f32 0.0, %v5032
      %v5034 = vpop.f32.mrb[0].mxu0
      %v5035 = vpop.f32.mrb[0].mxu0
      %v5036 = vadd.f32 0.0, %v5035
      %v5037 = vpop.f32.mrb[0].mxu0
      %5038 = vmatprep.mubr.bf16.mxu0 0
      %5039 = vmatmul.mubr.bf16.gmra.mrb[0].mxu0 %v4939
      %v5040 = vpop.f32.mrb[0].mxu0
      %v5041 = vadd.f32 0.0, %v5040
      %v5042 = vpop.f32.mrb[0].mxu0
      %v5043 = vpop.f32.mrb[0].mxu0
      %v5044 = vadd.f32 0.0, %v5043
      %v5045 = vpop.f32.mrb[0].mxu0
      %5046 = vmatprep.mubr.bf16.mxu0 0
      %5047 = vmatmul.mubr.bf16.gmra.mrb[0].mxu0 %v4942
      %v5048 = vpop.f32.mrb[0].mxu0
      %v5049 = vadd.f32 0.0, %v5048
      %v5050 = vpop.f32.mrb[0].mxu0
      %v5051 = vpop.f32.mrb[0].mxu0
      %v5052 = vadd.f32 0.0, %v5051
      %v5053 = vpop.f32.mrb[0].mxu0
      %5054 = vmatprep.mubr.bf16.mxu0 0
      %5055 = vmatmul.mubr.bf16.gmra.mrb[0].mxu0 %v4945
      %v5056 = vpop.f32.mrb[0].mxu0
      %v5057 = vadd.f32 0.0, %v5056
      %v5058 = vpop.f32.mrb[0].mxu0
      %v5059 = vpop.f32.mrb[0].mxu0
      %v5060 = vadd.f32 0.0, %v5059
      %v5061 = vpop.f32.mrb[0].mxu0
      %5062 = vmatprep.mubr.bf16.mxu0 0
      %5063 = vmatmul.mubr.bf16.gmra.mrb[0].mxu0 %v4948
      %v5064 = vpop.f32.mrb[0].mxu0
      %v5065 = vadd.f32 0.0, %v5064
      %v5066 = vpop.f32.mrb[0].mxu0
      %v5067 = vpop.f32.mrb[0].mxu0
      %v5068 = vadd.f32 0.0, %v5067
      %v5069 = vpop.f32.mrb[0].mxu0
      %5070 = vmatprep.mubr.bf16.mxu0 0
      %5071 = vmatmul.mubr.bf16.gmra.mrb[0].mxu0 %v4951
      %v5072 = vpop.f32.mrb[0].mxu0
      %v5073 = vadd.f32 0.0, %v5072
      %v5074 = vpop.f32.mrb[0].mxu0
      %v5075 = vpop.f32.mrb[0].mxu0
      %v5076 = vadd.f32 0.0, %v5075
      %v5077 = vpop.f32.mrb[0].mxu0
      %5078 = vmatprep.mubr.bf16.mxu0 0
      %5079 = vmatmul.mubr.bf16.gmra.mrb[0].mxu0 %v4954
      %v5080 = vpop.f32.mrb[0].mxu0
      %v5081 = vadd.f32 0.0, %v5080
      %v5082 = vpop.f32.mrb[0].mxu0
      %v5083 = vpop.f32.mrb[0].mxu0
      %v5084 = vadd.f32 0.0, %v5083
      %v5085 = vpop.f32.mrb[0].mxu0
      %5086 = vmatprep.mubr.bf16.mxu0 0
      %5087 = vmatmul.mubr.bf16.gmra.mrb[0].mxu0 %v4957
      %v5088 = vpop.f32.mrb[0].mxu0
      %v5089 = vadd.f32 0.0, %v5088
      %v5090 = vpop.f32.mrb[0].mxu0
      %v5091 = vpop.f32.mrb[0].mxu0
      %v5092 = vadd.f32 0.0, %v5091
      %v5093 = vpop.f32.mrb[0].mxu0
      %5094 = vmatprep.mubr.bf16.mxu0 0
      %5095 = vmatmul.mubr.bf16.gmra.mrb[0].mxu0 %v4960
      %v5096 = vpop.f32.mrb[0].mxu0
      %v5097 = vadd.f32 0.0, %v5096
      %v5098 = vpop.f32.mrb[0].mxu0
      %v5099 = vpop.f32.mrb[0].mxu0
      %v5100 = vadd.f32 0.0, %v5099
      %v5101 = vpop.f32.mrb[0].mxu0
      %5102 = vmatprep.mubr.bf16.mxu0 0
      %5103 = vmatmul.mubr.bf16.gmra.mrb[0].mxu0 %v4963
      %v5104 = vpop.f32.mrb[0].mxu0
      %v5105 = vadd.f32 0.0, %v5104
      %v5106 = vpop.f32.mrb[0].mxu0
      %v5107 = vpop.f32.mrb[0].mxu0
      %v5108 = vadd.f32 0.0, %v5107
      %v5109 = vpop.f32.mrb[0].mxu0
      %5110 = vmatprep.mubr.bf16.mxu0 0
      %5111 = vmatmul.mubr.bf16.gmra.mrb[0].mxu0 %v4966
      %v5112 = vpop.f32.mrb[0].mxu0
      %v5113 = vadd.f32 0.0, %v5112
      %v5114 = vpop.f32.mrb[0].mxu0
      %v5115 = vpop.f32.mrb[0].mxu0
      %v5116 = vadd.f32 0.0, %v5115
      %v5117 = vpop.f32.mrb[0].mxu0
      %5118 = vmatprep.mubr.bf16.mxu0 0
      %5119 = vmatmul.mubr.bf16.gmra.mrb[0].mxu0 %v4969
      %v5120 = vpop.f32.mrb[0].mxu0
      %v5121 = vadd.f32 0.0, %v5120
      %v5122 = vpop.f32.mrb[0].mxu0
      %v5123 = vpop.f32.mrb[0].mxu0
      %v5124 = vadd.f32 0.0, %v5123
      %v5125 = vpop.f32.mrb[0].mxu0
      %5126 = vmatprep.mubr.bf16.mxu0 0
      %5127 = vmatmul.mubr.bf16.gmra.mrb[0].mxu0 %v4972
      %v5128 = vpop.f32.mrb[0].mxu0
      %v5129 = vadd.f32 0.0, %v5128
      %v5130 = vpop.f32.mrb[0].mxu0
      %v5131 = vpop.f32.mrb[0].mxu0
      %v5132 = vadd.f32 0.0, %v5131
      %v5133 = vpop.f32.mrb[0].mxu0
      %5134 = vdwg.mxu0
      %v5135 = vadd.f32 %v4837, %v5009
      %v5136 = vadd.f32 %v4838, %v5012
      %v5137 = vadd.f32 %v4839, %v5017
      %v5138 = vadd.f32 %v4840, %v5020
      %v5139 = vadd.f32 %v4841, %v5025
      %v5140 = vadd.f32 %v4842, %v5028
      %v5141 = vadd.f32 %v4843, %v5033
      %v5142 = vadd.f32 %v4844, %v5036
      %v5143 = vadd.f32 %v4845, %v5041
      %v5144 = vadd.f32 %v4846, %v5044
      %v5145 = vadd.f32 %v4847, %v5049
      %v5146 = vadd.f32 %v4848, %v5052
      %v5147 = vadd.f32 %v4849, %v5057
      %v5148 = vadd.f32 %v4850, %v5060
      %v5149 = vadd.f32 %v4851, %v5065
      %v5150 = vadd.f32 %v4852, %v5068
      %v5151 = vadd.f32 %v4853, %v5073
      %v5152 = vadd.f32 %v4854, %v5076
      %v5153 = vadd.f32 %v4855, %v5081
      %v5154 = vadd.f32 %v4856, %v5084
      %v5155 = vadd.f32 %v4857, %v5089
      %v5156 = vadd.f32 %v4858, %v5092
      %v5157 = vadd.f32 %v4859, %v5097
      %v5158 = vadd.f32 %v4860, %v5100
      %v5159 = vadd.f32 %v4861, %v5105
      %v5160 = vadd.f32 %v4862, %v5108
      %v5161 = vadd.f32 %v4863, %v5113
      %v5162 = vadd.f32 %v4864, %v5116
      %v5163 = vadd.f32 %v4865, %v5121
      %v5164 = vadd.f32 %v4866, %v5124
      %v5165 = vadd.f32 %v4867, %v5129
      %v5166 = vadd.f32 %v4868, %v5132
      %v5167 = vld [vmem:[%s3548 + $0x2] sm:$0xff]
      %v5168 = vld [vmem:[%s3548 + $0xa] sm:$0xff]
      %v5169 = vld [vmem:[%s3548 + $0x1a] sm:$0xff]
      %v5170 = vld [vmem:[%s3548 + $0x22] sm:$0xff]
      %v5171 = vld [vmem:[%s3548 + $0x32] sm:$0xff]
      %v5172 = vld [vmem:[%s3548 + $0x3a] sm:$0xff]
      %v5173 = vld [vmem:[%s3548 + $0x4a] sm:$0xff]
      %v5174 = vld [vmem:[%s3548 + $0x52] sm:$0xff]
      %v5175 = vld [vmem:[%s3548 + $0x62] sm:$0xff]
      %v5176 = vld [vmem:[%s3548 + $0x6a] sm:$0xff]
      %v5177 = vld [vmem:[%s3548 + $0x7a] sm:$0xff]
      %v5178 = vld [vmem:[%s3548 + $0x82] sm:$0xff]
      %v5179 = vld [vmem:[%s3548 + $0x92] sm:$0xff]
      %v5180 = vld [vmem:[%s3548 + $0x9a] sm:$0xff]
      %v5181 = vld [vmem:[%s3548 + $0xaa] sm:$0xff]
      %v5182 = vld [vmem:[%s3548 + $0xb2] sm:$0xff]
      %v5183 = vld [vmem:[%s3548 + $0xc2] sm:$0xff]
      %v5184 = vld [vmem:[%s3548 + $0xca] sm:$0xff]
      %v5185 = vld [vmem:[%s3548 + $0xda] sm:$0xff]
      %v5186 = vld [vmem:[%s3548 + $0xe2] sm:$0xff]
      %v5187 = vld [vmem:[%s3548 + $0xf2] sm:$0xff]
      %v5188 = vld [vmem:[%s3548 + $0xfa] sm:$0xff]
      %v5189 = vld [vmem:[%s3548 + $0x10a] sm:$0xff]
      %v5190 = vld [vmem:[%s3548 + $0x112] sm:$0xff]
      %v5191 = vld [vmem:[%s3548 + $0x122] sm:$0xff]
      %v5192 = vld [vmem:[%s3548 + $0x12a] sm:$0xff]
      %v5193 = vld [vmem:[%s3548 + $0x13a] sm:$0xff]
      %v5194 = vld [vmem:[%s3548 + $0x142] sm:$0xff]
      %v5195 = vld [vmem:[%s3548 + $0x152] sm:$0xff]
      %v5196 = vld [vmem:[%s3548 + $0x15a] sm:$0xff]
      %v5197 = vld [vmem:[%s3548 + $0x16a] sm:$0xff]
      %v5198 = vld [vmem:[%s3548 + $0x172] sm:$0xff]
      %v5199 = vpack.c.bf16 %v5168, %v5167
      %v5200 = vpack.c.bf16 %v5170, %v5169
      %v5201 = vpack.c.bf16 %v5172, %v5171
      %v5202 = vpack.c.bf16 %v5174, %v5173
      %v5203 = vpack.c.bf16 %v5176, %v5175
      %v5204 = vpack.c.bf16 %v5178, %v5177
      %v5205 = vpack.c.bf16 %v5180, %v5179
      %v5206 = vpack.c.bf16 %v5182, %v5181
      %v5207 = vpack.c.bf16 %v5184, %v5183
      %v5208 = vpack.c.bf16 %v5186, %v5185
      %v5209 = vpack.c.bf16 %v5188, %v5187
      %v5210 = vpack.c.bf16 %v5190, %v5189
      %v5211 = vpack.c.bf16 %v5192, %v5191
      %v5212 = vpack.c.bf16 %v5194, %v5193
      %v5213 = vpack.c.bf16 %v5196, %v5195
      %v5214 = vpack.c.bf16 %v5198, %v5197
      %s5215 = scalar_lea.vmem %s5, 40
      %v5216 = vld [vmem:[%s5215] sm:$0xf]
      %v5217 = vld [vmem:[%s5215 + $0x4] sm:$0xf]
      %v5220 = vunpack.c.l.b16 %v5216
      %v5221 = vunpack.c.l.b16 %v5217
      %v5222 = vpack.c.b16 %v5221, %v5220
      %v5225 = vsel %vm326, %v5199, 0
      %v5228 = vsel %vm326, %v5200, 0
      %v5231 = vsel %vm326, %v5201, 0
      %v5234 = vsel %vm326, %v5202, 0
      %v5237 = vsel %vm326, %v5203, 0
      %v5240 = vsel %vm326, %v5204, 0
      %v5243 = vsel %vm326, %v5205, 0
      %v5246 = vsel %vm326, %v5206, 0
      %v5249 = vsel %vm326, %v5207, 0
      %v5252 = vsel %vm326, %v5208, 0
      %v5255 = vsel %vm326, %v5209, 0
      %v5258 = vsel %vm326, %v5210, 0
      %v5261 = vsel %vm326, %v5211, 0
      %v5264 = vsel %vm326, %v5212, 0
      %v5267 = vsel %vm326, %v5213, 0
      %v5270 = vsel %vm326, %v5214, 0
      %5272 = vmatprep.subr.bf16.mxu0 0
      %5273 = vmatpush1.bf16.msra.mxu0 %v5222
      %5274 = vmatprep.subr.bf16.mxu0 0
      %5275 = vmatpush1.bf16.msra.mxu0 0
      %5276 = vmatprep.subr.bf16.mxu0 0
      %5277 = vmatpush1.bf16.msra.mxu0 0
      %5278 = vmatprep.subr.bf16.mxu0 0
      %5279 = vmatpush1.bf16.msra.mxu0 0
      %5280 = vmatprep.subr.bf16.mxu0 0
      %5281 = vmatpush1.bf16.msra.mxu0 0
      %5282 = vmatprep.subr.bf16.mxu0 0
      %5283 = vmatpush1.bf16.msra.mxu0 0
      %5284 = vmatprep.subr.bf16.mxu0 0
      %5285 = vmatpush1.bf16.msra.mxu0 0
      %5286 = vmatprep.subr.bf16.mxu0 0
      %5287 = vmatpush1.bf16.msra.mxu0 0
      %5288 = vmatprep.subr.bf16.mxu0 0
      %5289 = vmatpush1.bf16.msra.mxu0 0
      %5290 = vmatprep.subr.bf16.mxu0 0
      %5291 = vmatpush1.bf16.msra.mxu0 0
      %5292 = vmatprep.subr.bf16.mxu0 0
      %5293 = vmatpush1.bf16.msra.mxu0 0
      %5294 = vmatprep.subr.bf16.mxu0 0
      %5295 = vmatpush1.bf16.msra.mxu0 0
      %5296 = vmatprep.subr.bf16.mxu0 0
      %5297 = vmatpush1.bf16.msra.mxu0 0
      %5298 = vmatprep.subr.bf16.mxu0 0
      %5299 = vmatpush1.bf16.msra.mxu0 0
      %5300 = vmatprep.subr.bf16.mxu0 0
      %5301 = vmatpush1.bf16.msra.mxu0 0
      %5302 = vmatprep.subr.bf16.mxu0 0
      %5303 = vmatpush1.bf16.msra.mxu0 0
      %5304 = vmatprep.mubr.bf16.mxu0 0
      %5305 = vmatmul.mubr.bf16.gmra.mrb[0].mxu0 %v5225
      %v5306 = vpop.f32.mrb[0].mxu0
      %v5307 = vadd.f32 0.0, %v5306
      %v5308 = vpop.f32.mrb[0].mxu0
      %v5309 = vpop.f32.mrb[0].mxu0
      %v5310 = vadd.f32 0.0, %v5309
      %v5311 = vpop.f32.mrb[0].mxu0
      %5312 = vmatprep.mubr.bf16.mxu0 0
      %5313 = vmatmul.mubr.bf16.gmra.mrb[0].mxu0 %v5228
      %v5314 = vpop.f32.mrb[0].mxu0
      %v5315 = vadd.f32 0.0, %v5314
      %v5316 = vpop.f32.mrb[0].mxu0
      %v5317 = vpop.f32.mrb[0].mxu0
      %v5318 = vadd.f32 0.0, %v5317
      %v5319 = vpop.f32.mrb[0].mxu0
      %5320 = vmatprep.mubr.bf16.mxu0 0
      %5321 = vmatmul.mubr.bf16.gmra.mrb[0].mxu0 %v5231
      %v5322 = vpop.f32.mrb[0].mxu0
      %v5323 = vadd.f32 0.0, %v5322
      %v5324 = vpop.f32.mrb[0].mxu0
      %v5325 = vpop.f32.mrb[0].mxu0
      %v5326 = vadd.f32 0.0, %v5325
      %v5327 = vpop.f32.mrb[0].mxu0
      %5328 = vmatprep.mubr.bf16.mxu0 0
      %5329 = vmatmul.mubr.bf16.gmra.mrb[0].mxu0 %v5234
      %v5330 = vpop.f32.mrb[0].mxu0
      %v5331 = vadd.f32 0.0, %v5330
      %v5332 = vpop.f32.mrb[0].mxu0
      %v5333 = vpop.f32.mrb[0].mxu0
      %v5334 = vadd.f32 0.0, %v5333
      %v5335 = vpop.f32.mrb[0].mxu0
      %5336 = vmatprep.mubr.bf16.mxu0 0
      %5337 = vmatmul.mubr.bf16.gmra.mrb[0].mxu0 %v5237
      %v5338 = vpop.f32.mrb[0].mxu0
      %v5339 = vadd.f32 0.0, %v5338
      %v5340 = vpop.f32.mrb[0].mxu0
      %v5341 = vpop.f32.mrb[0].mxu0
      %v5342 = vadd.f32 0.0, %v5341
      %v5343 = vpop.f32.mrb[0].mxu0
      %5344 = vmatprep.mubr.bf16.mxu0 0
      %5345 = vmatmul.mubr.bf16.gmra.mrb[0].mxu0 %v5240
      %v5346 = vpop.f32.mrb[0].mxu0
      %v5347 = vadd.f32 0.0, %v5346
      %v5348 = vpop.f32.mrb[0].mxu0
      %v5349 = vpop.f32.mrb[0].mxu0
      %v5350 = vadd.f32 0.0, %v5349
      %v5351 = vpop.f32.mrb[0].mxu0
      %5352 = vmatprep.mubr.bf16.mxu0 0
      %5353 = vmatmul.mubr.bf16.gmra.mrb[0].mxu0 %v5243
      %v5354 = vpop.f32.mrb[0].mxu0
      %v5355 = vadd.f32 0.0, %v5354
      %v5356 = vpop.f32.mrb[0].mxu0
      %v5357 = vpop.f32.mrb[0].mxu0
      %v5358 = vadd.f32 0.0, %v5357
      %v5359 = vpop.f32.mrb[0].mxu0
      %5360 = vmatprep.mubr.bf16.mxu0 0
      %5361 = vmatmul.mubr.bf16.gmra.mrb[0].mxu0 %v5246
      %v5362 = vpop.f32.mrb[0].mxu0
      %v5363 = vadd.f32 0.0, %v5362
      %v5364 = vpop.f32.mrb[0].mxu0
      %v5365 = vpop.f32.mrb[0].mxu0
      %v5366 = vadd.f32 0.0, %v5365
      %v5367 = vpop.f32.mrb[0].mxu0
      %5368 = vmatprep.mubr.bf16.mxu0 0
      %5369 = vmatmul.mubr.bf16.gmra.mrb[0].mxu0 %v5249
      %v5370 = vpop.f32.mrb[0].mxu0
      %v5371 = vadd.f32 0.0, %v5370
      %v5372 = vpop.f32.mrb[0].mxu0
      %v5373 = vpop.f32.mrb[0].mxu0
      %v5374 = vadd.f32 0.0, %v5373
      %v5375 = vpop.f32.mrb[0].mxu0
      %5376 = vmatprep.mubr.bf16.mxu0 0
      %5377 = vmatmul.mubr.bf16.gmra.mrb[0].mxu0 %v5252
      %v5378 = vpop.f32.mrb[0].mxu0
      %v5379 = vadd.f32 0.0, %v5378
      %v5380 = vpop.f32.mrb[0].mxu0
      %v5381 = vpop.f32.mrb[0].mxu0
      %v5382 = vadd.f32 0.0, %v5381
      %v5383 = vpop.f32.mrb[0].mxu0
      %5384 = vmatprep.mubr.bf16.mxu0 0
      %5385 = vmatmul.mubr.bf16.gmra.mrb[0].mxu0 %v5255
      %v5386 = vpop.f32.mrb[0].mxu0
      %v5387 = vadd.f32 0.0, %v5386
      %v5388 = vpop.f32.mrb[0].mxu0
      %v5389 = vpop.f32.mrb[0].mxu0
      %v5390 = vadd.f32 0.0, %v5389
      %v5391 = vpop.f32.mrb[0].mxu0
      %5392 = vmatprep.mubr.bf16.mxu0 0
      %5393 = vmatmul.mubr.bf16.gmra.mrb[0].mxu0 %v5258
      %v5394 = vpop.f32.mrb[0].mxu0
      %v5395 = vadd.f32 0.0, %v5394
      %v5396 = vpop.f32.mrb[0].mxu0
      %v5397 = vpop.f32.mrb[0].mxu0
      %v5398 = vadd.f32 0.0, %v5397
      %v5399 = vpop.f32.mrb[0].mxu0
      %5400 = vmatprep.mubr.bf16.mxu0 0
      %5401 = vmatmul.mubr.bf16.gmra.mrb[0].mxu0 %v5261
      %v5402 = vpop.f32.mrb[0].mxu0
      %v5403 = vadd.f32 0.0, %v5402
      %v5404 = vpop.f32.mrb[0].mxu0
      %v5405 = vpop.f32.mrb[0].mxu0
      %v5406 = vadd.f32 0.0, %v5405
      %v5407 = vpop.f32.mrb[0].mxu0
      %5408 = vmatprep.mubr.bf16.mxu0 0
      %5409 = vmatmul.mubr.bf16.gmra.mrb[0].mxu0 %v5264
      %v5410 = vpop.f32.mrb[0].mxu0
      %v5411 = vadd.f32 0.0, %v5410
      %v5412 = vpop.f32.mrb[0].mxu0
      %v5413 = vpop.f32.mrb[0].mxu0
      %v5414 = vadd.f32 0.0, %v5413
      %v5415 = vpop.f32.mrb[0].mxu0
      %5416 = vmatprep.mubr.bf16.mxu0 0
      %5417 = vmatmul.mubr.bf16.gmra.mrb[0].mxu0 %v5267
      %v5418 = vpop.f32.mrb[0].mxu0
      %v5419 = vadd.f32 0.0, %v5418
      %v5420 = vpop.f32.mrb[0].mxu0
      %v5421 = vpop.f32.mrb[0].mxu0
      %v5422 = vadd.f32 0.0, %v5421
      %v5423 = vpop.f32.mrb[0].mxu0
      %5424 = vmatprep.mubr.bf16.mxu0 0
      %5425 = vmatmul.mubr.bf16.gmra.mrb[0].mxu0 %v5270
      %v5426 = vpop.f32.mrb[0].mxu0
      %v5427 = vadd.f32 0.0, %v5426
      %v5428 = vpop.f32.mrb[0].mxu0
      %v5429 = vpop.f32.mrb[0].mxu0
      %v5430 = vadd.f32 0.0, %v5429
      %v5431 = vpop.f32.mrb[0].mxu0
      %5432 = vdwg.mxu0
      %v5433 = vadd.f32 %v5135, %v5307
      %v5434 = vadd.f32 %v5136, %v5310
      %v5435 = vadd.f32 %v5137, %v5315
      %v5436 = vadd.f32 %v5138, %v5318
      %v5437 = vadd.f32 %v5139, %v5323
      %v5438 = vadd.f32 %v5140, %v5326
      %v5439 = vadd.f32 %v5141, %v5331
      %v5440 = vadd.f32 %v5142, %v5334
      %v5441 = vadd.f32 %v5143, %v5339
      %v5442 = vadd.f32 %v5144, %v5342
      %v5443 = vadd.f32 %v5145, %v5347
      %v5444 = vadd.f32 %v5146, %v5350
      %v5445 = vadd.f32 %v5147, %v5355
      %v5446 = vadd.f32 %v5148, %v5358
      %v5447 = vadd.f32 %v5149, %v5363
      %v5448 = vadd.f32 %v5150, %v5366
      %v5449 = vadd.f32 %v5151, %v5371
      %v5450 = vadd.f32 %v5152, %v5374
      %v5451 = vadd.f32 %v5153, %v5379
      %v5452 = vadd.f32 %v5154, %v5382
      %v5453 = vadd.f32 %v5155, %v5387
      %v5454 = vadd.f32 %v5156, %v5390
      %v5455 = vadd.f32 %v5157, %v5395
      %v5456 = vadd.f32 %v5158, %v5398
      %v5457 = vadd.f32 %v5159, %v5403
      %v5458 = vadd.f32 %v5160, %v5406
      %v5459 = vadd.f32 %v5161, %v5411
      %v5460 = vadd.f32 %v5162, %v5414
      %v5461 = vadd.f32 %v5163, %v5419
      %v5462 = vadd.f32 %v5164, %v5422
      %v5463 = vadd.f32 %v5165, %v5427
      %v5464 = vadd.f32 %v5166, %v5430
      %s5465 = scalar_lea.vmem [#allocation3], 48
      %v5466 = vld [vmem:[%s5465] sm:$0xff]
      %v5467 = vld [vmem:[%s5465 + $0x8] sm:$0xff]
      %v5468 = vld [vmem:[%s5465 + $0x18] sm:$0xff]
      %v5469 = vld [vmem:[%s5465 + $0x20] sm:$0xff]
      %v5470 = vld [vmem:[%s5465 + $0x30] sm:$0xff]
      %v5471 = vld [vmem:[%s5465 + $0x38] sm:$0xff]
      %v5472 = vld [vmem:[%s5465 + $0x48] sm:$0xff]
      %v5473 = vld [vmem:[%s5465 + $0x50] sm:$0xff]
      %v5474 = vld [vmem:[%s5465 + $0x60] sm:$0xff]
      %v5475 = vld [vmem:[%s5465 + $0x68] sm:$0xff]
      %v5476 = vld [vmem:[%s5465 + $0x78] sm:$0xff]
      %v5477 = vld [vmem:[%s5465 + $0x80] sm:$0xff]
      %v5478 = vld [vmem:[%s5465 + $0x90] sm:$0xff]
      %v5479 = vld [vmem:[%s5465 + $0x98] sm:$0xff]
      %v5480 = vld [vmem:[%s5465 + $0xa8] sm:$0xff]
      %v5481 = vld [vmem:[%s5465 + $0xb0] sm:$0xff]
      %v5482 = vld [vmem:[%s5465 + $0xc0] sm:$0xff]
      %v5483 = vld [vmem:[%s5465 + $0xc8] sm:$0xff]
      %v5484 = vld [vmem:[%s5465 + $0xd8] sm:$0xff]
      %v5485 = vld [vmem:[%s5465 + $0xe0] sm:$0xff]
      %v5486 = vld [vmem:[%s5465 + $0xf0] sm:$0xff]
      %v5487 = vld [vmem:[%s5465 + $0xf8] sm:$0xff]
      %v5488 = vld [vmem:[%s5465 + $0x108] sm:$0xff]
      %v5489 = vld [vmem:[%s5465 + $0x110] sm:$0xff]
      %v5490 = vld [vmem:[%s5465 + $0x120] sm:$0xff]
      %v5491 = vld [vmem:[%s5465 + $0x128] sm:$0xff]
      %v5492 = vld [vmem:[%s5465 + $0x138] sm:$0xff]
      %v5493 = vld [vmem:[%s5465 + $0x140] sm:$0xff]
      %v5494 = vld [vmem:[%s5465 + $0x150] sm:$0xff]
      %v5495 = vld [vmem:[%s5465 + $0x158] sm:$0xff]
      %v5496 = vld [vmem:[%s5465 + $0x168] sm:$0xff]
      %v5497 = vld [vmem:[%s5465 + $0x170] sm:$0xff]
      %v5498 = vpack.c.bf16 %v5467, %v5466
      %v5499 = vpack.c.bf16 %v5469, %v5468
      %v5500 = vpack.c.bf16 %v5471, %v5470
      %v5501 = vpack.c.bf16 %v5473, %v5472
      %v5502 = vpack.c.bf16 %v5475, %v5474
      %v5503 = vpack.c.bf16 %v5477, %v5476
      %v5504 = vpack.c.bf16 %v5479, %v5478
      %v5505 = vpack.c.bf16 %v5481, %v5480
      %v5506 = vpack.c.bf16 %v5483, %v5482
      %v5507 = vpack.c.bf16 %v5485, %v5484
      %v5508 = vpack.c.bf16 %v5487, %v5486
      %v5509 = vpack.c.bf16 %v5489, %v5488
      %v5510 = vpack.c.bf16 %v5491, %v5490
      %v5511 = vpack.c.bf16 %v5493, %v5492
      %v5512 = vpack.c.bf16 %v5495, %v5494
      %v5513 = vpack.c.bf16 %v5497, %v5496
      %s5514 = scalar_lea.vmem %s5, 48
      %v5515 = vld [vmem:[%s5514] sm:$0xf]
      %v5516 = vld [vmem:[%s5514 + $0x4] sm:$0xf]
      %v5519 = vunpack.c.l.b16 %v5515
      %v5520 = vunpack.c.l.b16 %v5516
      %v5521 = vpack.c.b16 %v5520, %v5519
      %v5524 = vsel %vm326, %v5498, 0
      %v5527 = vsel %vm326, %v5499, 0
      %v5530 = vsel %vm326, %v5500, 0
      %v5533 = vsel %vm326, %v5501, 0
      %v5536 = vsel %vm326, %v5502, 0
      %v5539 = vsel %vm326, %v5503, 0
      %v5542 = vsel %vm326, %v5504, 0
      %v5545 = vsel %vm326, %v5505, 0
      %v5548 = vsel %vm326, %v5506, 0
      %v5551 = vsel %vm326, %v5507, 0
      %v5554 = vsel %vm326, %v5508, 0
      %v5557 = vsel %vm326, %v5509, 0
      %v5560 = vsel %vm326, %v5510, 0
      %v5563 = vsel %vm326, %v5511, 0
      %v5566 = vsel %vm326, %v5512, 0
      %v5569 = vsel %vm326, %v5513, 0
      %5571 = vmatprep.subr.bf16.mxu0 0
      %5572 = vmatpush1.bf16.msra.mxu0 %v5521
      %5573 = vmatprep.subr.bf16.mxu0 0
      %5574 = vmatpush1.bf16.msra.mxu0 0
      %5575 = vmatprep.subr.bf16.mxu0 0
      %5576 = vmatpush1.bf16.msra.mxu0 0
      %5577 = vmatprep.subr.bf16.mxu0 0
      %5578 = vmatpush1.bf16.msra.mxu0 0
      %5579 = vmatprep.subr.bf16.mxu0 0
      %5580 = vmatpush1.bf16.msra.mxu0 0
      %5581 = vmatprep.subr.bf16.mxu0 0
      %5582 = vmatpush1.bf16.msra.mxu0 0
      %5583 = vmatprep.subr.bf16.mxu0 0
      %5584 = vmatpush1.bf16.msra.mxu0 0
      %5585 = vmatprep.subr.bf16.mxu0 0
      %5586 = vmatpush1.bf16.msra.mxu0 0
      %5587 = vmatprep.subr.bf16.mxu0 0
      %5588 = vmatpush1.bf16.msra.mxu0 0
      %5589 = vmatprep.subr.bf16.mxu0 0
      %5590 = vmatpush1.bf16.msra.mxu0 0
      %5591 = vmatprep.subr.bf16.mxu0 0
      %5592 = vmatpush1.bf16.msra.mxu0 0
      %5593 = vmatprep.subr.bf16.mxu0 0
      %5594 = vmatpush1.bf16.msra.mxu0 0
      %5595 = vmatprep.subr.bf16.mxu0 0
      %5596 = vmatpush1.bf16.msra.mxu0 0
      %5597 = vmatprep.subr.bf16.mxu0 0
      %5598 = vmatpush1.bf16.msra.mxu0 0
      %5599 = vmatprep.subr.bf16.mxu0 0
      %5600 = vmatpush1.bf16.msra.mxu0 0
      %5601 = vmatprep.subr.bf16.mxu0 0
      %5602 = vmatpush1.bf16.msra.mxu0 0
      %5603 = vmatprep.mubr.bf16.mxu0 0
      %5604 = vmatmul.mubr.bf16.gmra.mrb[0].mxu0 %v5524
      %v5605 = vpop.f32.mrb[0].mxu0
      %v5606 = vadd.f32 0.0, %v5605
      %v5607 = vpop.f32.mrb[0].mxu0
      %v5608 = vpop.f32.mrb[0].mxu0
      %v5609 = vadd.f32 0.0, %v5608
      %v5610 = vpop.f32.mrb[0].mxu0
      %5611 = vmatprep.mubr.bf16.mxu0 0
      %5612 = vmatmul.mubr.bf16.gmra.mrb[0].mxu0 %v5527
      %v5613 = vpop.f32.mrb[0].mxu0
      %v5614 = vadd.f32 0.0, %v5613
      %v5615 = vpop.f32.mrb[0].mxu0
      %v5616 = vpop.f32.mrb[0].mxu0
      %v5617 = vadd.f32 0.0, %v5616
      %v5618 = vpop.f32.mrb[0].mxu0
      %5619 = vmatprep.mubr.bf16.mxu0 0
      %5620 = vmatmul.mubr.bf16.gmra.mrb[0].mxu0 %v5530
      %v5621 = vpop.f32.mrb[0].mxu0
      %v5622 = vadd.f32 0.0, %v5621
      %v5623 = vpop.f32.mrb[0].mxu0
      %v5624 = vpop.f32.mrb[0].mxu0
      %v5625 = vadd.f32 0.0, %v5624
      %v5626 = vpop.f32.mrb[0].mxu0
      %5627 = vmatprep.mubr.bf16.mxu0 0
      %5628 = vmatmul.mubr.bf16.gmra.mrb[0].mxu0 %v5533
      %v5629 = vpop.f32.mrb[0].mxu0
      %v5630 = vadd.f32 0.0, %v5629
      %v5631 = vpop.f32.mrb[0].mxu0
      %v5632 = vpop.f32.mrb[0].mxu0
      %v5633 = vadd.f32 0.0, %v5632
      %v5634 = vpop.f32.mrb[0].mxu0
      %5635 = vmatprep.mubr.bf16.mxu0 0
      %5636 = vmatmul.mubr.bf16.gmra.mrb[0].mxu0 %v5536
      %v5637 = vpop.f32.mrb[0].mxu0
      %v5638 = vadd.f32 0.0, %v5637
      %v5639 = vpop.f32.mrb[0].mxu0
      %v5640 = vpop.f32.mrb[0].mxu0
      %v5641 = vadd.f32 0.0, %v5640
      %v5642 = vpop.f32.mrb[0].mxu0
      %5643 = vmatprep.mubr.bf16.mxu0 0
      %5644 = vmatmul.mubr.bf16.gmra.mrb[0].mxu0 %v5539
      %v5645 = vpop.f32.mrb[0].mxu0
      %v5646 = vadd.f32 0.0, %v5645
      %v5647 = vpop.f32.mrb[0].mxu0
      %v5648 = vpop.f32.mrb[0].mxu0
      %v5649 = vadd.f32 0.0, %v5648
      %v5650 = vpop.f32.mrb[0].mxu0
      %5651 = vmatprep.mubr.bf16.mxu0 0
      %5652 = vmatmul.mubr.bf16.gmra.mrb[0].mxu0 %v5542
      %v5653 = vpop.f32.mrb[0].mxu0
      %v5654 = vadd.f32 0.0, %v5653
      %v5655 = vpop.f32.mrb[0].mxu0
      %v5656 = vpop.f32.mrb[0].mxu0
      %v5657 = vadd.f32 0.0, %v5656
      %v5658 = vpop.f32.mrb[0].mxu0
      %5659 = vmatprep.mubr.bf16.mxu0 0
      %5660 = vmatmul.mubr.bf16.gmra.mrb[0].mxu0 %v5545
      %v5661 = vpop.f32.mrb[0].mxu0
      %v5662 = vadd.f32 0.0, %v5661
      %v5663 = vpop.f32.mrb[0].mxu0
      %v5664 = vpop.f32.mrb[0].mxu0
      %v5665 = vadd.f32 0.0, %v5664
      %v5666 = vpop.f32.mrb[0].mxu0
      %5667 = vmatprep.mubr.bf16.mxu0 0
      %5668 = vmatmul.mubr.bf16.gmra.mrb[0].mxu0 %v5548
      %v5669 = vpop.f32.mrb[0].mxu0
      %v5670 = vadd.f32 0.0, %v5669
      %v5671 = vpop.f32.mrb[0].mxu0
      %v5672 = vpop.f32.mrb[0].mxu0
      %v5673 = vadd.f32 0.0, %v5672
      %v5674 = vpop.f32.mrb[0].mxu0
      %5675 = vmatprep.mubr.bf16.mxu0 0
      %5676 = vmatmul.mubr.bf16.gmra.mrb[0].mxu0 %v5551
      %v5677 = vpop.f32.mrb[0].mxu0
      %v5678 = vadd.f32 0.0, %v5677
      %v5679 = vpop.f32.mrb[0].mxu0
      %v5680 = vpop.f32.mrb[0].mxu0
      %v5681 = vadd.f32 0.0, %v5680
      %v5682 = vpop.f32.mrb[0].mxu0
      %5683 = vmatprep.mubr.bf16.mxu0 0
      %5684 = vmatmul.mubr.bf16.gmra.mrb[0].mxu0 %v5554
      %v5685 = vpop.f32.mrb[0].mxu0
      %v5686 = vadd.f32 0.0, %v5685
      %v5687 = vpop.f32.mrb[0].mxu0
      %v5688 = vpop.f32.mrb[0].mxu0
      %v5689 = vadd.f32 0.0, %v5688
      %v5690 = vpop.f32.mrb[0].mxu0
      %5691 = vmatprep.mubr.bf16.mxu0 0
      %5692 = vmatmul.mubr.bf16.gmra.mrb[0].mxu0 %v5557
      %v5693 = vpop.f32.mrb[0].mxu0
      %v5694 = vadd.f32 0.0, %v5693
      %v5695 = vpop.f32.mrb[0].mxu0
      %v5696 = vpop.f32.mrb[0].mxu0
      %v5697 = vadd.f32 0.0, %v5696
      %v5698 = vpop.f32.mrb[0].mxu0
      %5699 = vmatprep.mubr.bf16.mxu0 0
      %5700 = vmatmul.mubr.bf16.gmra.mrb[0].mxu0 %v5560
      %v5701 = vpop.f32.mrb[0].mxu0
      %v5702 = vadd.f32 0.0, %v5701
      %v5703 = vpop.f32.mrb[0].mxu0
      %v5704 = vpop.f32.mrb[0].mxu0
      %v5705 = vadd.f32 0.0, %v5704
      %v5706 = vpop.f32.mrb[0].mxu0
      %5707 = vmatprep.mubr.bf16.mxu0 0
      %5708 = vmatmul.mubr.bf16.gmra.mrb[0].mxu0 %v5563
      %v5709 = vpop.f32.mrb[0].mxu0
      %v5710 = vadd.f32 0.0, %v5709
      %v5711 = vpop.f32.mrb[0].mxu0
      %v5712 = vpop.f32.mrb[0].mxu0
      %v5713 = vadd.f32 0.0, %v5712
      %v5714 = vpop.f32.mrb[0].mxu0
      %5715 = vmatprep.mubr.bf16.mxu0 0
      %5716 = vmatmul.mubr.bf16.gmra.mrb[0].mxu0 %v5566
      %v5717 = vpop.f32.mrb[0].mxu0
      %v5718 = vadd.f32 0.0, %v5717
      %v5719 = vpop.f32.mrb[0].mxu0
      %v5720 = vpop.f32.mrb[0].mxu0
      %v5721 = vadd.f32 0.0, %v5720
      %v5722 = vpop.f32.mrb[0].mxu0
      %5723 = vmatprep.mubr.bf16.mxu0 0
      %5724 = vmatmul.mubr.bf16.gmra.mrb[0].mxu0 %v5569
      %v5725 = vpop.f32.mrb[0].mxu0
      %v5726 = vadd.f32 0.0, %v5725
      %v5727 = vpop.f32.mrb[0].mxu0
      %v5728 = vpop.f32.mrb[0].mxu0
      %v5729 = vadd.f32 0.0, %v5728
      %v5730 = vpop.f32.mrb[0].mxu0
      %5731 = vdwg.mxu0
      %v5732 = vadd.f32 %v5433, %v5606
      %v5733 = vadd.f32 %v5434, %v5609
      %v5734 = vadd.f32 %v5435, %v5614
      %v5735 = vadd.f32 %v5436, %v5617
      %v5736 = vadd.f32 %v5437, %v5622
      %v5737 = vadd.f32 %v5438, %v5625
      %v5738 = vadd.f32 %v5439, %v5630
      %v5739 = vadd.f32 %v5440, %v5633
      %v5740 = vadd.f32 %v5441, %v5638
      %v5741 = vadd.f32 %v5442, %v5641
      %v5742 = vadd.f32 %v5443, %v5646
      %v5743 = vadd.f32 %v5444, %v5649
      %v5744 = vadd.f32 %v5445, %v5654
      %v5745 = vadd.f32 %v5446, %v5657
      %v5746 = vadd.f32 %v5447, %v5662
      %v5747 = vadd.f32 %v5448, %v5665
      %v5748 = vadd.f32 %v5449, %v5670
      %v5749 = vadd.f32 %v5450, %v5673
      %v5750 = vadd.f32 %v5451, %v5678
      %v5751 = vadd.f32 %v5452, %v5681
      %v5752 = vadd.f32 %v5453, %v5686
      %v5753 = vadd.f32 %v5454, %v5689
      %v5754 = vadd.f32 %v5455, %v5694
      %v5755 = vadd.f32 %v5456, %v5697
      %v5756 = vadd.f32 %v5457, %v5702
      %v5757 = vadd.f32 %v5458, %v5705
      %v5758 = vadd.f32 %v5459, %v5710
      %v5759 = vadd.f32 %v5460, %v5713
      %v5760 = vadd.f32 %v5461, %v5718
      %v5761 = vadd.f32 %v5462, %v5721
      %v5762 = vadd.f32 %v5463, %v5726
      %v5763 = vadd.f32 %v5464, %v5729
      %v5764 = vld [vmem:[%s5465 + $0x1] sm:$0xff]
      %v5765 = vld [vmem:[%s5465 + $0x9] sm:$0xff]
      %v5766 = vld [vmem:[%s5465 + $0x19] sm:$0xff]
      %v5767 = vld [vmem:[%s5465 + $0x21] sm:$0xff]
      %v5768 = vld [vmem:[%s5465 + $0x31] sm:$0xff]
      %v5769 = vld [vmem:[%s5465 + $0x39] sm:$0xff]
      %v5770 = vld [vmem:[%s5465 + $0x49] sm:$0xff]
      %v5771 = vld [vmem:[%s5465 + $0x51] sm:$0xff]
      %v5772 = vld [vmem:[%s5465 + $0x61] sm:$0xff]
      %v5773 = vld [vmem:[%s5465 + $0x69] sm:$0xff]
      %v5774 = vld [vmem:[%s5465 + $0x79] sm:$0xff]
      %v5775 = vld [vmem:[%s5465 + $0x81] sm:$0xff]
      %v5776 = vld [vmem:[%s5465 + $0x91] sm:$0xff]
      %v5777 = vld [vmem:[%s5465 + $0x99] sm:$0xff]
      %v5778 = vld [vmem:[%s5465 + $0xa9] sm:$0xff]
      %v5779 = vld [vmem:[%s5465 + $0xb1] sm:$0xff]
      %v5780 = vld [vmem:[%s5465 + $0xc1] sm:$0xff]
      %v5781 = vld [vmem:[%s5465 + $0xc9] sm:$0xff]
      %v5782 = vld [vmem:[%s5465 + $0xd9] sm:$0xff]
      %v5783 = vld [vmem:[%s5465 + $0xe1] sm:$0xff]
      %v5784 = vld [vmem:[%s5465 + $0xf1] sm:$0xff]
      %v5785 = vld [vmem:[%s5465 + $0xf9] sm:$0xff]
      %v5786 = vld [vmem:[%s5465 + $0x109] sm:$0xff]
      %v5787 = vld [vmem:[%s5465 + $0x111] sm:$0xff]
      %v5788 = vld [vmem:[%s5465 + $0x121] sm:$0xff]
      %v5789 = vld [vmem:[%s5465 + $0x129] sm:$0xff]
      %v5790 = vld [vmem:[%s5465 + $0x139] sm:$0xff]
      %v5791 = vld [vmem:[%s5465 + $0x141] sm:$0xff]
      %v5792 = vld [vmem:[%s5465 + $0x151] sm:$0xff]
      %v5793 = vld [vmem:[%s5465 + $0x159] sm:$0xff]
      %v5794 = vld [vmem:[%s5465 + $0x169] sm:$0xff]
      %v5795 = vld [vmem:[%s5465 + $0x171] sm:$0xff]
      %v5796 = vpack.c.bf16 %v5765, %v5764
      %v5797 = vpack.c.bf16 %v5767, %v5766
      %v5798 = vpack.c.bf16 %v5769, %v5768
      %v5799 = vpack.c.bf16 %v5771, %v5770
      %v5800 = vpack.c.bf16 %v5773, %v5772
      %v5801 = vpack.c.bf16 %v5775, %v5774
      %v5802 = vpack.c.bf16 %v5777, %v5776
      %v5803 = vpack.c.bf16 %v5779, %v5778
      %v5804 = vpack.c.bf16 %v5781, %v5780
      %v5805 = vpack.c.bf16 %v5783, %v5782
      %v5806 = vpack.c.bf16 %v5785, %v5784
      %v5807 = vpack.c.bf16 %v5787, %v5786
      %v5808 = vpack.c.bf16 %v5789, %v5788
      %v5809 = vpack.c.bf16 %v5791, %v5790
      %v5810 = vpack.c.bf16 %v5793, %v5792
      %v5811 = vpack.c.bf16 %v5795, %v5794
      %s5812 = scalar_lea.vmem %s5, 56
      %v5813 = vld [vmem:[%s5812] sm:$0xf]
      %v5814 = vld [vmem:[%s5812 + $0x4] sm:$0xf]
      %v5817 = vunpack.c.l.b16 %v5813
      %v5818 = vunpack.c.l.b16 %v5814
      %v5819 = vpack.c.b16 %v5818, %v5817
      %v5822 = vsel %vm326, %v5796, 0
      %v5825 = vsel %vm326, %v5797, 0
      %v5828 = vsel %vm326, %v5798, 0
      %v5831 = vsel %vm326, %v5799, 0
      %v5834 = vsel %vm326, %v5800, 0
      %v5837 = vsel %vm326, %v5801, 0
      %v5840 = vsel %vm326, %v5802, 0
      %v5843 = vsel %vm326, %v5803, 0
      %v5846 = vsel %vm326, %v5804, 0
      %v5849 = vsel %vm326, %v5805, 0
      %v5852 = vsel %vm326, %v5806, 0
      %v5855 = vsel %vm326, %v5807, 0
      %v5858 = vsel %vm326, %v5808, 0
      %v5861 = vsel %vm326, %v5809, 0
      %v5864 = vsel %vm326, %v5810, 0
      %v5867 = vsel %vm326, %v5811, 0
      %5869 = vmatprep.subr.bf16.mxu0 0
      %5870 = vmatpush1.bf16.msra.mxu0 %v5819
      %5871 = vmatprep.subr.bf16.mxu0 0
      %5872 = vmatpush1.bf16.msra.mxu0 0
      %5873 = vmatprep.subr.bf16.mxu0 0
      %5874 = vmatpush1.bf16.msra.mxu0 0
      %5875 = vmatprep.subr.bf16.mxu0 0
      %5876 = vmatpush1.bf16.msra.mxu0 0
      %5877 = vmatprep.subr.bf16.mxu0 0
      %5878 = vmatpush1.bf16.msra.mxu0 0
      %5879 = vmatprep.subr.bf16.mxu0 0
      %5880 = vmatpush1.bf16.msra.mxu0 0
      %5881 = vmatprep.subr.bf16.mxu0 0
      %5882 = vmatpush1.bf16.msra.mxu0 0
      %5883 = vmatprep.subr.bf16.mxu0 0
      %5884 = vmatpush1.bf16.msra.mxu0 0
      %5885 = vmatprep.subr.bf16.mxu0 0
      %5886 = vmatpush1.bf16.msra.mxu0 0
      %5887 = vmatprep.subr.bf16.mxu0 0
      %5888 = vmatpush1.bf16.msra.mxu0 0
      %5889 = vmatprep.subr.bf16.mxu0 0
      %5890 = vmatpush1.bf16.msra.mxu0 0
      %5891 = vmatprep.subr.bf16.mxu0 0
      %5892 = vmatpush1.bf16.msra.mxu0 0
      %5893 = vmatprep.subr.bf16.mxu0 0
      %5894 = vmatpush1.bf16.msra.mxu0 0
      %5895 = vmatprep.subr.bf16.mxu0 0
      %5896 = vmatpush1.bf16.msra.mxu0 0
      %5897 = vmatprep.subr.bf16.mxu0 0
      %5898 = vmatpush1.bf16.msra.mxu0 0
      %5899 = vmatprep.subr.bf16.mxu0 0
      %5900 = vmatpush1.bf16.msra.mxu0 0
      %5901 = vmatprep.mubr.bf16.mxu0 0
      %5902 = vmatmul.mubr.bf16.gmra.mrb[0].mxu0 %v5822
      %v5903 = vpop.f32.mrb[0].mxu0
      %v5904 = vadd.f32 0.0, %v5903
      %v5905 = vpop.f32.mrb[0].mxu0
      %v5906 = vpop.f32.mrb[0].mxu0
      %v5907 = vadd.f32 0.0, %v5906
      %v5908 = vpop.f32.mrb[0].mxu0
      %5909 = vmatprep.mubr.bf16.mxu0 0
      %5910 = vmatmul.mubr.bf16.gmra.mrb[0].mxu0 %v5825
      %v5911 = vpop.f32.mrb[0].mxu0
      %v5912 = vadd.f32 0.0, %v5911
      %v5913 = vpop.f32.mrb[0].mxu0
      %v5914 = vpop.f32.mrb[0].mxu0
      %v5915 = vadd.f32 0.0, %v5914
      %v5916 = vpop.f32.mrb[0].mxu0
      %5917 = vmatprep.mubr.bf16.mxu0 0
      %5918 = vmatmul.mubr.bf16.gmra.mrb[0].mxu0 %v5828
      %v5919 = vpop.f32.mrb[0].mxu0
      %v5920 = vadd.f32 0.0, %v5919
      %v5921 = vpop.f32.mrb[0].mxu0
      %v5922 = vpop.f32.mrb[0].mxu0
      %v5923 = vadd.f32 0.0, %v5922
      %v5924 = vpop.f32.mrb[0].mxu0
      %5925 = vmatprep.mubr.bf16.mxu0 0
      %5926 = vmatmul.mubr.bf16.gmra.mrb[0].mxu0 %v5831
      %v5927 = vpop.f32.mrb[0].mxu0
      %v5928 = vadd.f32 0.0, %v5927
      %v5929 = vpop.f32.mrb[0].mxu0
      %v5930 = vpop.f32.mrb[0].mxu0
      %v5931 = vadd.f32 0.0, %v5930
      %v5932 = vpop.f32.mrb[0].mxu0
      %5933 = vmatprep.mubr.bf16.mxu0 0
      %5934 = vmatmul.mubr.bf16.gmra.mrb[0].mxu0 %v5834
      %v5935 = vpop.f32.mrb[0].mxu0
      %v5936 = vadd.f32 0.0, %v5935
      %v5937 = vpop.f32.mrb[0].mxu0
      %v5938 = vpop.f32.mrb[0].mxu0
      %v5939 = vadd.f32 0.0, %v5938
      %v5940 = vpop.f32.mrb[0].mxu0
      %5941 = vmatprep.mubr.bf16.mxu0 0
      %5942 = vmatmul.mubr.bf16.gmra.mrb[0].mxu0 %v5837
      %v5943 = vpop.f32.mrb[0].mxu0
      %v5944 = vadd.f32 0.0, %v5943
      %v5945 = vpop.f32.mrb[0].mxu0
      %v5946 = vpop.f32.mrb[0].mxu0
      %v5947 = vadd.f32 0.0, %v5946
      %v5948 = vpop.f32.mrb[0].mxu0
      %5949 = vmatprep.mubr.bf16.mxu0 0
      %5950 = vmatmul.mubr.bf16.gmra.mrb[0].mxu0 %v5840
      %v5951 = vpop.f32.mrb[0].mxu0
      %v5952 = vadd.f32 0.0, %v5951
      %v5953 = vpop.f32.mrb[0].mxu0
      %v5954 = vpop.f32.mrb[0].mxu0
      %v5955 = vadd.f32 0.0, %v5954
      %v5956 = vpop.f32.mrb[0].mxu0
      %5957 = vmatprep.mubr.bf16.mxu0 0
      %5958 = vmatmul.mubr.bf16.gmra.mrb[0].mxu0 %v5843
      %v5959 = vpop.f32.mrb[0].mxu0
      %v5960 = vadd.f32 0.0, %v5959
      %v5961 = vpop.f32.mrb[0].mxu0
      %v5962 = vpop.f32.mrb[0].mxu0
      %v5963 = vadd.f32 0.0, %v5962
      %v5964 = vpop.f32.mrb[0].mxu0
      %5965 = vmatprep.mubr.bf16.mxu0 0
      %5966 = vmatmul.mubr.bf16.gmra.mrb[0].mxu0 %v5846
      %v5967 = vpop.f32.mrb[0].mxu0
      %v5968 = vadd.f32 0.0, %v5967
      %v5969 = vpop.f32.mrb[0].mxu0
      %v5970 = vpop.f32.mrb[0].mxu0
      %v5971 = vadd.f32 0.0, %v5970
      %v5972 = vpop.f32.mrb[0].mxu0
      %5973 = vmatprep.mubr.bf16.mxu0 0
      %5974 = vmatmul.mubr.bf16.gmra.mrb[0].mxu0 %v5849
      %v5975 = vpop.f32.mrb[0].mxu0
      %v5976 = vadd.f32 0.0, %v5975
      %v5977 = vpop.f32.mrb[0].mxu0
      %v5978 = vpop.f32.mrb[0].mxu0
      %v5979 = vadd.f32 0.0, %v5978
      %v5980 = vpop.f32.mrb[0].mxu0
      %5981 = vmatprep.mubr.bf16.mxu0 0
      %5982 = vmatmul.mubr.bf16.gmra.mrb[0].mxu0 %v5852
      %v5983 = vpop.f32.mrb[0].mxu0
      %v5984 = vadd.f32 0.0, %v5983
      %v5985 = vpop.f32.mrb[0].mxu0
      %v5986 = vpop.f32.mrb[0].mxu0
      %v5987 = vadd.f32 0.0, %v5986
      %v5988 = vpop.f32.mrb[0].mxu0
      %5989 = vmatprep.mubr.bf16.mxu0 0
      %5990 = vmatmul.mubr.bf16.gmra.mrb[0].mxu0 %v5855
      %v5991 = vpop.f32.mrb[0].mxu0
      %v5992 = vadd.f32 0.0, %v5991
      %v5993 = vpop.f32.mrb[0].mxu0
      %v5994 = vpop.f32.mrb[0].mxu0
      %v5995 = vadd.f32 0.0, %v5994
      %v5996 = vpop.f32.mrb[0].mxu0
      %5997 = vmatprep.mubr.bf16.mxu0 0
      %5998 = vmatmul.mubr.bf16.gmra.mrb[0].mxu0 %v5858
      %v5999 = vpop.f32.mrb[0].mxu0
      %v6000 = vadd.f32 0.0, %v5999
      %v6001 = vpop.f32.mrb[0].mxu0
      %v6002 = vpop.f32.mrb[0].mxu0
      %v6003 = vadd.f32 0.0, %v6002
      %v6004 = vpop.f32.mrb[0].mxu0
      %6005 = vmatprep.mubr.bf16.mxu0 0
      %6006 = vmatmul.mubr.bf16.gmra.mrb[0].mxu0 %v5861
      %v6007 = vpop.f32.mrb[0].mxu0
      %v6008 = vadd.f32 0.0, %v6007
      %v6009 = vpop.f32.mrb[0].mxu0
      %v6010 = vpop.f32.mrb[0].mxu0
      %v6011 = vadd.f32 0.0, %v6010
      %v6012 = vpop.f32.mrb[0].mxu0
      %6013 = vmatprep.mubr.bf16.mxu0 0
      %6014 = vmatmul.mubr.bf16.gmra.mrb[0].mxu0 %v5864
      %v6015 = vpop.f32.mrb[0].mxu0
      %v6016 = vadd.f32 0.0, %v6015
      %v6017 = vpop.f32.mrb[0].mxu0
      %v6018 = vpop.f32.mrb[0].mxu0
      %v6019 = vadd.f32 0.0, %v6018
      %v6020 = vpop.f32.mrb[0].mxu0
      %6021 = vmatprep.mubr.bf16.mxu0 0
      %6022 = vmatmul.mubr.bf16.gmra.mrb[0].mxu0 %v5867
      %v6023 = vpop.f32.mrb[0].mxu0
      %v6024 = vadd.f32 0.0, %v6023
      %v6025 = vpop.f32.mrb[0].mxu0
      %v6026 = vpop.f32.mrb[0].mxu0
      %v6027 = vadd.f32 0.0, %v6026
      %v6028 = vpop.f32.mrb[0].mxu0
      %6029 = vdwg.mxu0
      %v6030 = vadd.f32 %v5732, %v5904
      %v6031 = vadd.f32 %v5733, %v5907
      %v6032 = vadd.f32 %v5734, %v5912
      %v6033 = vadd.f32 %v5735, %v5915
      %v6034 = vadd.f32 %v5736, %v5920
      %v6035 = vadd.f32 %v5737, %v5923
      %v6036 = vadd.f32 %v5738, %v5928
      %v6037 = vadd.f32 %v5739, %v5931
      %v6038 = vadd.f32 %v5740, %v5936
      %v6039 = vadd.f32 %v5741, %v5939
      %v6040 = vadd.f32 %v5742, %v5944
      %v6041 = vadd.f32 %v5743, %v5947
      %v6042 = vadd.f32 %v5744, %v5952
      %v6043 = vadd.f32 %v5745, %v5955
      %v6044 = vadd.f32 %v5746, %v5960
      %v6045 = vadd.f32 %v5747, %v5963
      %v6046 = vadd.f32 %v5748, %v5968
      %v6047 = vadd.f32 %v5749, %v5971
      %v6048 = vadd.f32 %v5750, %v5976
      %v6049 = vadd.f32 %v5751, %v5979
      %v6050 = vadd.f32 %v5752, %v5984
      %v6051 = vadd.f32 %v5753, %v5987
      %v6052 = vadd.f32 %v5754, %v5992
      %v6053 = vadd.f32 %v5755, %v5995
      %v6054 = vadd.f32 %v5756, %v6000
      %v6055 = vadd.f32 %v5757, %v6003
      %v6056 = vadd.f32 %v5758, %v6008
      %v6057 = vadd.f32 %v5759, %v6011
      %v6058 = vadd.f32 %v5760, %v6016
      %v6059 = vadd.f32 %v5761, %v6019
      %v6060 = vadd.f32 %v5762, %v6024
      %v6061 = vadd.f32 %v5763, %v6027
      %v6062 = vld [vmem:[%s5465 + $0x2] sm:$0xff]
      %v6063 = vld [vmem:[%s5465 + $0xa] sm:$0xff]
      %v6064 = vld [vmem:[%s5465 + $0x1a] sm:$0xff]
      %v6065 = vld [vmem:[%s5465 + $0x22] sm:$0xff]
      %v6066 = vld [vmem:[%s5465 + $0x32] sm:$0xff]
      %v6067 = vld [vmem:[%s5465 + $0x3a] sm:$0xff]
      %v6068 = vld [vmem:[%s5465 + $0x4a] sm:$0xff]
      %v6069 = vld [vmem:[%s5465 + $0x52] sm:$0xff]
      %v6070 = vld [vmem:[%s5465 + $0x62] sm:$0xff]
      %v6071 = vld [vmem:[%s5465 + $0x6a] sm:$0xff]
      %v6072 = vld [vmem:[%s5465 + $0x7a] sm:$0xff]
      %v6073 = vld [vmem:[%s5465 + $0x82] sm:$0xff]
      %v6074 = vld [vmem:[%s5465 + $0x92] sm:$0xff]
      %v6075 = vld [vmem:[%s5465 + $0x9a] sm:$0xff]
      %v6076 = vld [vmem:[%s5465 + $0xaa] sm:$0xff]
      %v6077 = vld [vmem:[%s5465 + $0xb2] sm:$0xff]
      %v6078 = vld [vmem:[%s5465 + $0xc2] sm:$0xff]
      %v6079 = vld [vmem:[%s5465 + $0xca] sm:$0xff]
      %v6080 = vld [vmem:[%s5465 + $0xda] sm:$0xff]
      %v6081 = vld [vmem:[%s5465 + $0xe2] sm:$0xff]
      %v6082 = vld [vmem:[%s5465 + $0xf2] sm:$0xff]
      %v6083 = vld [vmem:[%s5465 + $0xfa] sm:$0xff]
      %v6084 = vld [vmem:[%s5465 + $0x10a] sm:$0xff]
      %v6085 = vld [vmem:[%s5465 + $0x112] sm:$0xff]
      %v6086 = vld [vmem:[%s5465 + $0x122] sm:$0xff]
      %v6087 = vld [vmem:[%s5465 + $0x12a] sm:$0xff]
      %v6088 = vld [vmem:[%s5465 + $0x13a] sm:$0xff]
      %v6089 = vld [vmem:[%s5465 + $0x142] sm:$0xff]
      %v6090 = vld [vmem:[%s5465 + $0x152] sm:$0xff]
      %v6091 = vld [vmem:[%s5465 + $0x15a] sm:$0xff]
      %v6092 = vld [vmem:[%s5465 + $0x16a] sm:$0xff]
      %v6093 = vld [vmem:[%s5465 + $0x172] sm:$0xff]
      %v6094 = vpack.c.bf16 %v6063, %v6062
      %v6095 = vpack.c.bf16 %v6065, %v6064
      %v6096 = vpack.c.bf16 %v6067, %v6066
      %v6097 = vpack.c.bf16 %v6069, %v6068
      %v6098 = vpack.c.bf16 %v6071, %v6070
      %v6099 = vpack.c.bf16 %v6073, %v6072
      %v6100 = vpack.c.bf16 %v6075, %v6074
      %v6101 = vpack.c.bf16 %v6077, %v6076
      %v6102 = vpack.c.bf16 %v6079, %v6078
      %v6103 = vpack.c.bf16 %v6081, %v6080
      %v6104 = vpack.c.bf16 %v6083, %v6082
      %v6105 = vpack.c.bf16 %v6085, %v6084
      %v6106 = vpack.c.bf16 %v6087, %v6086
      %v6107 = vpack.c.bf16 %v6089, %v6088
      %v6108 = vpack.c.bf16 %v6091, %v6090
      %v6109 = vpack.c.bf16 %v6093, %v6092
      %s6110 = scalar_lea.vmem %s5, 64
      %v6111 = vld [vmem:[%s6110] sm:$0xf]
      %v6112 = vld [vmem:[%s6110 + $0x4] sm:$0xf]
      %v6115 = vunpack.c.l.b16 %v6111
      %v6116 = vunpack.c.l.b16 %v6112
      %v6117 = vpack.c.b16 %v6116, %v6115
      %v6120 = vsel %vm326, %v6094, 0
      %v6123 = vsel %vm326, %v6095, 0
      %v6126 = vsel %vm326, %v6096, 0
      %v6129 = vsel %vm326, %v6097, 0
      %v6132 = vsel %vm326, %v6098, 0
      %v6135 = vsel %vm326, %v6099, 0
      %v6138 = vsel %vm326, %v6100, 0
      %v6141 = vsel %vm326, %v6101, 0
      %v6144 = vsel %vm326, %v6102, 0
      %v6147 = vsel %vm326, %v6103, 0
      %v6150 = vsel %vm326, %v6104, 0
      %v6153 = vsel %vm326, %v6105, 0
      %v6156 = vsel %vm326, %v6106, 0
      %v6159 = vsel %vm326, %v6107, 0
      %v6162 = vsel %vm326, %v6108, 0
      %v6165 = vsel %vm326, %v6109, 0
      %6167 = vmatprep.subr.bf16.mxu0 0
      %6168 = vmatpush1.bf16.msra.mxu0 %v6117
      %6169 = vmatprep.subr.bf16.mxu0 0
      %6170 = vmatpush1.bf16.msra.mxu0 0
      %6171 = vmatprep.subr.bf16.mxu0 0
      %6172 = vmatpush1.bf16.msra.mxu0 0
      %6173 = vmatprep.subr.bf16.mxu0 0
      %6174 = vmatpush1.bf16.msra.mxu0 0
      %6175 = vmatprep.subr.bf16.mxu0 0
      %6176 = vmatpush1.bf16.msra.mxu0 0
      %6177 = vmatprep.subr.bf16.mxu0 0
      %6178 = vmatpush1.bf16.msra.mxu0 0
      %6179 = vmatprep.subr.bf16.mxu0 0
      %6180 = vmatpush1.bf16.msra.mxu0 0
      %6181 = vmatprep.subr.bf16.mxu0 0
      %6182 = vmatpush1.bf16.msra.mxu0 0
      %6183 = vmatprep.subr.bf16.mxu0 0
      %6184 = vmatpush1.bf16.msra.mxu0 0
      %6185 = vmatprep.subr.bf16.mxu0 0
      %6186 = vmatpush1.bf16.msra.mxu0 0
      %6187 = vmatprep.subr.bf16.mxu0 0
      %6188 = vmatpush1.bf16.msra.mxu0 0
      %6189 = vmatprep.subr.bf16.mxu0 0
      %6190 = vmatpush1.bf16.msra.mxu0 0
      %6191 = vmatprep.subr.bf16.mxu0 0
      %6192 = vmatpush1.bf16.msra.mxu0 0
      %6193 = vmatprep.subr.bf16.mxu0 0
      %6194 = vmatpush1.bf16.msra.mxu0 0
      %6195 = vmatprep.subr.bf16.mxu0 0
      %6196 = vmatpush1.bf16.msra.mxu0 0
      %6197 = vmatprep.subr.bf16.mxu0 0
      %6198 = vmatpush1.bf16.msra.mxu0 0
      %6199 = vmatprep.mubr.bf16.mxu0 0
      %6200 = vmatmul.mubr.bf16.gmra.mrb[0].mxu0 %v6120
      %v6201 = vpop.f32.mrb[0].mxu0
      %v6202 = vadd.f32 0.0, %v6201
      %v6203 = vpop.f32.mrb[0].mxu0
      %v6204 = vpop.f32.mrb[0].mxu0
      %v6205 = vadd.f32 0.0, %v6204
      %v6206 = vpop.f32.mrb[0].mxu0
      %6207 = vmatprep.mubr.bf16.mxu0 0
      %6208 = vmatmul.mubr.bf16.gmra.mrb[0].mxu0 %v6123
      %v6209 = vpop.f32.mrb[0].mxu0
      %v6210 = vadd.f32 0.0, %v6209
      %v6211 = vpop.f32.mrb[0].mxu0
      %v6212 = vpop.f32.mrb[0].mxu0
      %v6213 = vadd.f32 0.0, %v6212
      %v6214 = vpop.f32.mrb[0].mxu0
      %6215 = vmatprep.mubr.bf16.mxu0 0
      %6216 = vmatmul.mubr.bf16.gmra.mrb[0].mxu0 %v6126
      %v6217 = vpop.f32.mrb[0].mxu0
      %v6218 = vadd.f32 0.0, %v6217
      %v6219 = vpop.f32.mrb[0].mxu0
      %v6220 = vpop.f32.mrb[0].mxu0
      %v6221 = vadd.f32 0.0, %v6220
      %v6222 = vpop.f32.mrb[0].mxu0
      %6223 = vmatprep.mubr.bf16.mxu0 0
      %6224 = vmatmul.mubr.bf16.gmra.mrb[0].mxu0 %v6129
      %v6225 = vpop.f32.mrb[0].mxu0
      %v6226 = vadd.f32 0.0, %v6225
      %v6227 = vpop.f32.mrb[0].mxu0
      %v6228 = vpop.f32.mrb[0].mxu0
      %v6229 = vadd.f32 0.0, %v6228
      %v6230 = vpop.f32.mrb[0].mxu0
      %6231 = vmatprep.mubr.bf16.mxu0 0
      %6232 = vmatmul.mubr.bf16.gmra.mrb[0].mxu0 %v6132
      %v6233 = vpop.f32.mrb[0].mxu0
      %v6234 = vadd.f32 0.0, %v6233
      %v6235 = vpop.f32.mrb[0].mxu0
      %v6236 = vpop.f32.mrb[0].mxu0
      %v6237 = vadd.f32 0.0, %v6236
      %v6238 = vpop.f32.mrb[0].mxu0
      %6239 = vmatprep.mubr.bf16.mxu0 0
      %6240 = vmatmul.mubr.bf16.gmra.mrb[0].mxu0 %v6135
      %v6241 = vpop.f32.mrb[0].mxu0
      %v6242 = vadd.f32 0.0, %v6241
      %v6243 = vpop.f32.mrb[0].mxu0
      %v6244 = vpop.f32.mrb[0].mxu0
      %v6245 = vadd.f32 0.0, %v6244
      %v6246 = vpop.f32.mrb[0].mxu0
      %6247 = vmatprep.mubr.bf16.mxu0 0
      %6248 = vmatmul.mubr.bf16.gmra.mrb[0].mxu0 %v6138
      %v6249 = vpop.f32.mrb[0].mxu0
      %v6250 = vadd.f32 0.0, %v6249
      %v6251 = vpop.f32.mrb[0].mxu0
      %v6252 = vpop.f32.mrb[0].mxu0
      %v6253 = vadd.f32 0.0, %v6252
      %v6254 = vpop.f32.mrb[0].mxu0
      %6255 = vmatprep.mubr.bf16.mxu0 0
      %6256 = vmatmul.mubr.bf16.gmra.mrb[0].mxu0 %v6141
      %v6257 = vpop.f32.mrb[0].mxu0
      %v6258 = vadd.f32 0.0, %v6257
      %v6259 = vpop.f32.mrb[0].mxu0
      %v6260 = vpop.f32.mrb[0].mxu0
      %v6261 = vadd.f32 0.0, %v6260
      %v6262 = vpop.f32.mrb[0].mxu0
      %6263 = vmatprep.mubr.bf16.mxu0 0
      %6264 = vmatmul.mubr.bf16.gmra.mrb[0].mxu0 %v6144
      %v6265 = vpop.f32.mrb[0].mxu0
      %v6266 = vadd.f32 0.0, %v6265
      %v6267 = vpop.f32.mrb[0].mxu0
      %v6268 = vpop.f32.mrb[0].mxu0
      %v6269 = vadd.f32 0.0, %v6268
      %v6270 = vpop.f32.mrb[0].mxu0
      %6271 = vmatprep.mubr.bf16.mxu0 0
      %6272 = vmatmul.mubr.bf16.gmra.mrb[0].mxu0 %v6147
      %v6273 = vpop.f32.mrb[0].mxu0
      %v6274 = vadd.f32 0.0, %v6273
      %v6275 = vpop.f32.mrb[0].mxu0
      %v6276 = vpop.f32.mrb[0].mxu0
      %v6277 = vadd.f32 0.0, %v6276
      %v6278 = vpop.f32.mrb[0].mxu0
      %6279 = vmatprep.mubr.bf16.mxu0 0
      %6280 = vmatmul.mubr.bf16.gmra.mrb[0].mxu0 %v6150
      %v6281 = vpop.f32.mrb[0].mxu0
      %v6282 = vadd.f32 0.0, %v6281
      %v6283 = vpop.f32.mrb[0].mxu0
      %v6284 = vpop.f32.mrb[0].mxu0
      %v6285 = vadd.f32 0.0, %v6284
      %v6286 = vpop.f32.mrb[0].mxu0
      %6287 = vmatprep.mubr.bf16.mxu0 0
      %6288 = vmatmul.mubr.bf16.gmra.mrb[0].mxu0 %v6153
      %v6289 = vpop.f32.mrb[0].mxu0
      %v6290 = vadd.f32 0.0, %v6289
      %v6291 = vpop.f32.mrb[0].mxu0
      %v6292 = vpop.f32.mrb[0].mxu0
      %v6293 = vadd.f32 0.0, %v6292
      %v6294 = vpop.f32.mrb[0].mxu0
      %6295 = vmatprep.mubr.bf16.mxu0 0
      %6296 = vmatmul.mubr.bf16.gmra.mrb[0].mxu0 %v6156
      %v6297 = vpop.f32.mrb[0].mxu0
      %v6298 = vadd.f32 0.0, %v6297
      %v6299 = vpop.f32.mrb[0].mxu0
      %v6300 = vpop.f32.mrb[0].mxu0
      %v6301 = vadd.f32 0.0, %v6300
      %v6302 = vpop.f32.mrb[0].mxu0
      %6303 = vmatprep.mubr.bf16.mxu0 0
      %6304 = vmatmul.mubr.bf16.gmra.mrb[0].mxu0 %v6159
      %v6305 = vpop.f32.mrb[0].mxu0
      %v6306 = vadd.f32 0.0, %v6305
      %v6307 = vpop.f32.mrb[0].mxu0
      %v6308 = vpop.f32.mrb[0].mxu0
      %v6309 = vadd.f32 0.0, %v6308
      %v6310 = vpop.f32.mrb[0].mxu0
      %6311 = vmatprep.mubr.bf16.mxu0 0
      %6312 = vmatmul.mubr.bf16.gmra.mrb[0].mxu0 %v6162
      %v6313 = vpop.f32.mrb[0].mxu0
      %v6314 = vadd.f32 0.0, %v6313
      %v6315 = vpop.f32.mrb[0].mxu0
      %v6316 = vpop.f32.mrb[0].mxu0
      %v6317 = vadd.f32 0.0, %v6316
      %v6318 = vpop.f32.mrb[0].mxu0
      %6319 = vmatprep.mubr.bf16.mxu0 0
      %6320 = vmatmul.mubr.bf16.gmra.mrb[0].mxu0 %v6165
      %v6321 = vpop.f32.mrb[0].mxu0
      %v6322 = vadd.f32 0.0, %v6321
      %v6323 = vpop.f32.mrb[0].mxu0
      %v6324 = vpop.f32.mrb[0].mxu0
      %v6325 = vadd.f32 0.0, %v6324
      %v6326 = vpop.f32.mrb[0].mxu0
      %6327 = vdwg.mxu0
      %v6328 = vadd.f32 %v6030, %v6202
      %v6329 = vadd.f32 %v6031, %v6205
      %v6330 = vadd.f32 %v6032, %v6210
      %v6331 = vadd.f32 %v6033, %v6213
      %v6332 = vadd.f32 %v6034, %v6218
      %v6333 = vadd.f32 %v6035, %v6221
      %v6334 = vadd.f32 %v6036, %v6226
      %v6335 = vadd.f32 %v6037, %v6229
      %v6336 = vadd.f32 %v6038, %v6234
      %v6337 = vadd.f32 %v6039, %v6237
      %v6338 = vadd.f32 %v6040, %v6242
      %v6339 = vadd.f32 %v6041, %v6245
      %v6340 = vadd.f32 %v6042, %v6250
      %v6341 = vadd.f32 %v6043, %v6253
      %v6342 = vadd.f32 %v6044, %v6258
      %v6343 = vadd.f32 %v6045, %v6261
      %v6344 = vadd.f32 %v6046, %v6266
      %v6345 = vadd.f32 %v6047, %v6269
      %v6346 = vadd.f32 %v6048, %v6274
      %v6347 = vadd.f32 %v6049, %v6277
      %v6348 = vadd.f32 %v6050, %v6282
      %v6349 = vadd.f32 %v6051, %v6285
      %v6350 = vadd.f32 %v6052, %v6290
      %v6351 = vadd.f32 %v6053, %v6293
      %v6352 = vadd.f32 %v6054, %v6298
      %v6353 = vadd.f32 %v6055, %v6301
      %v6354 = vadd.f32 %v6056, %v6306
      %v6355 = vadd.f32 %v6057, %v6309
      %v6356 = vadd.f32 %v6058, %v6314
      %v6357 = vadd.f32 %v6059, %v6317
      %v6358 = vadd.f32 %v6060, %v6322
      %v6359 = vadd.f32 %v6061, %v6325
      %v6361 = vlaneseq
      %v6362 = vshrl.u32 %v6361, 7
      %v6363 = vsub.s32 0, %v6362
      %v6364 = vrot.slane %v439, %v6363
      %v6366 = vadd.f32 %v6328, %v6364
      %v6367 = vadd.f32 %v6329, %v6364
      %v6368 = vadd.f32 %v6330, %v6364
      %v6369 = vadd.f32 %v6331, %v6364
      %v6370 = vadd.f32 %v6332, %v6364
      %v6371 = vadd.f32 %v6333, %v6364
      %v6372 = vadd.f32 %v6334, %v6364
      %v6373 = vadd.f32 %v6335, %v6364
      %v6374 = vadd.f32 %v6336, %v6364
      %v6375 = vadd.f32 %v6337, %v6364
      %v6376 = vadd.f32 %v6338, %v6364
      %v6377 = vadd.f32 %v6339, %v6364
      %v6378 = vadd.f32 %v6340, %v6364
      %v6379 = vadd.f32 %v6341, %v6364
      %v6380 = vadd.f32 %v6342, %v6364
      %v6381 = vadd.f32 %v6343, %v6364
      %v6382 = vadd.f32 %v6344, %v6364
      %v6383 = vadd.f32 %v6345, %v6364
      %v6384 = vadd.f32 %v6346, %v6364
      %v6385 = vadd.f32 %v6347, %v6364
      %v6386 = vadd.f32 %v6348, %v6364
      %v6387 = vadd.f32 %v6349, %v6364
      %v6388 = vadd.f32 %v6350, %v6364
      %v6389 = vadd.f32 %v6351, %v6364
      %v6390 = vadd.f32 %v6352, %v6364
      %v6391 = vadd.f32 %v6353, %v6364
      %v6392 = vadd.f32 %v6354, %v6364
      %v6393 = vadd.f32 %v6355, %v6364
      %v6394 = vadd.f32 %v6356, %v6364
      %v6395 = vadd.f32 %v6357, %v6364
      %v6396 = vadd.f32 %v6358, %v6364
      %v6397 = vadd.f32 %v6359, %v6364
      %vm6398 = vcmp.gt.f32.partialorder %v6366, 0.0
      %vm6399 = vcmp.gt.f32.partialorder %v6367, 0.0
      %vm6400 = vcmp.gt.f32.partialorder %v6368, 0.0
      %vm6401 = vcmp.gt.f32.partialorder %v6369, 0.0
      %vm6402 = vcmp.gt.f32.partialorder %v6370, 0.0
      %vm6403 = vcmp.gt.f32.partialorder %v6371, 0.0
      %vm6404 = vcmp.gt.f32.partialorder %v6372, 0.0
      %vm6405 = vcmp.gt.f32.partialorder %v6373, 0.0
      %vm6406 = vcmp.gt.f32.partialorder %v6374, 0.0
      %vm6407 = vcmp.gt.f32.partialorder %v6375, 0.0
      %vm6408 = vcmp.gt.f32.partialorder %v6376, 0.0
      %vm6409 = vcmp.gt.f32.partialorder %v6377, 0.0
      %vm6410 = vcmp.gt.f32.partialorder %v6378, 0.0
      %vm6411 = vcmp.gt.f32.partialorder %v6379, 0.0
      %vm6412 = vcmp.gt.f32.partialorder %v6380, 0.0
      %vm6413 = vcmp.gt.f32.partialorder %v6381, 0.0
      %vm6414 = vcmp.gt.f32.partialorder %v6382, 0.0
      %vm6415 = vcmp.gt.f32.partialorder %v6383, 0.0
      %vm6416 = vcmp.gt.f32.partialorder %v6384, 0.0
      %vm6417 = vcmp.gt.f32.partialorder %v6385, 0.0
      %vm6418 = vcmp.gt.f32.partialorder %v6386, 0.0
      %vm6419 = vcmp.gt.f32.partialorder %v6387, 0.0
      %vm6420 = vcmp.gt.f32.partialorder %v6388, 0.0
      %vm6421 = vcmp.gt.f32.partialorder %v6389, 0.0
      %vm6422 = vcmp.gt.f32.partialorder %v6390, 0.0
      %vm6423 = vcmp.gt.f32.partialorder %v6391, 0.0
      %vm6424 = vcmp.gt.f32.partialorder %v6392, 0.0
      %vm6425 = vcmp.gt.f32.partialorder %v6393, 0.0
      %vm6426 = vcmp.gt.f32.partialorder %v6394, 0.0
      %vm6427 = vcmp.gt.f32.partialorder %v6395, 0.0
      %vm6428 = vcmp.gt.f32.partialorder %v6396, 0.0
      %vm6429 = vcmp.gt.f32.partialorder %v6397, 0.0
      %v6430 = vmul.f32 %v6366, 0.2
      %v6431 = vmul.f32 %v6367, 0.2
      %v6432 = vmul.f32 %v6368, 0.2
      %v6433 = vmul.f32 %v6369, 0.2
      %v6434 = vmul.f32 %v6370, 0.2
      %v6435 = vmul.f32 %v6371, 0.2
      %v6436 = vmul.f32 %v6372, 0.2
      %v6437 = vmul.f32 %v6373, 0.2
      %v6438 = vmul.f32 %v6374, 0.2
      %v6439 = vmul.f32 %v6375, 0.2
      %v6440 = vmul.f32 %v6376, 0.2
      %v6441 = vmul.f32 %v6377, 0.2
      %v6442 = vmul.f32 %v6378, 0.2
      %v6443 = vmul.f32 %v6379, 0.2
      %v6444 = vmul.f32 %v6380, 0.2
      %v6445 = vmul.f32 %v6381, 0.2
      %v6446 = vmul.f32 %v6382, 0.2
      %v6447 = vmul.f32 %v6383, 0.2
      %v6448 = vmul.f32 %v6384, 0.2
      %v6449 = vmul.f32 %v6385, 0.2
      %v6450 = vmul.f32 %v6386, 0.2
      %v6451 = vmul.f32 %v6387, 0.2
      %v6452 = vmul.f32 %v6388, 0.2
      %v6453 = vmul.f32 %v6389, 0.2
      %v6454 = vmul.f32 %v6390, 0.2
      %v6455 = vmul.f32 %v6391, 0.2
      %v6456 = vmul.f32 %v6392, 0.2
      %v6457 = vmul.f32 %v6393, 0.2
      %v6458 = vmul.f32 %v6394, 0.2
      %v6459 = vmul.f32 %v6395, 0.2
      %v6460 = vmul.f32 %v6396, 0.2
      %v6461 = vmul.f32 %v6397, 0.2
      %v6462 = vsel %vm6398, %v6366, %v6430
      %v6463 = vsel %vm6399, %v6367, %v6431
      %v6464 = vsel %vm6400, %v6368, %v6432
      %v6465 = vsel %vm6401, %v6369, %v6433
      %v6466 = vsel %vm6402, %v6370, %v6434
      %v6467 = vsel %vm6403, %v6371, %v6435
      %v6468 = vsel %vm6404, %v6372, %v6436
      %v6469 = vsel %vm6405, %v6373, %v6437
      %v6470 = vsel %vm6406, %v6374, %v6438
      %v6471 = vsel %vm6407, %v6375, %v6439
      %v6472 = vsel %vm6408, %v6376, %v6440
      %v6473 = vsel %vm6409, %v6377, %v6441
      %v6474 = vsel %vm6410, %v6378, %v6442
      %v6475 = vsel %vm6411, %v6379, %v6443
      %v6476 = vsel %vm6412, %v6380, %v6444
      %v6477 = vsel %vm6413, %v6381, %v6445
      %v6478 = vsel %vm6414, %v6382, %v6446
      %v6479 = vsel %vm6415, %v6383, %v6447
      %v6480 = vsel %vm6416, %v6384, %v6448
      %v6481 = vsel %vm6417, %v6385, %v6449
      %v6482 = vsel %vm6418, %v6386, %v6450
      %v6483 = vsel %vm6419, %v6387, %v6451
      %v6484 = vsel %vm6420, %v6388, %v6452
      %v6485 = vsel %vm6421, %v6389, %v6453
      %v6486 = vsel %vm6422, %v6390, %v6454
      %v6487 = vsel %vm6423, %v6391, %v6455
      %v6488 = vsel %vm6424, %v6392, %v6456
      %v6489 = vsel %vm6425, %v6393, %v6457
      %v6490 = vsel %vm6426, %v6394, %v6458
      %v6491 = vsel %vm6427, %v6395, %v6459
      %v6492 = vsel %vm6428, %v6396, %v6460
      %v6493 = vsel %vm6429, %v6397, %v6461
      %v6494 = vld [vmem:[%s273] sm:$0xff]
      %v6495 = vld [vmem:[%s273 + $0x8] sm:$0xff]
      %v6496 = vld [vmem:[%s273 + $0x10] sm:$0xff]
      %v6497 = vld [vmem:[%s273 + $0x18] sm:$0xff]
      %v6498 = vld [vmem:[%s273 + $0x20] sm:$0xff]
      %v6499 = vld [vmem:[%s273 + $0x28] sm:$0xff]
      %v6500 = vld [vmem:[%s273 + $0x30] sm:$0xff]
      %v6501 = vld [vmem:[%s273 + $0x38] sm:$0xff]
      %v6502 = vld [vmem:[%s273 + $0x40] sm:$0xff]
      %v6503 = vld [vmem:[%s273 + $0x48] sm:$0xff]
      %v6504 = vld [vmem:[%s273 + $0x50] sm:$0xff]
      %v6505 = vld [vmem:[%s273 + $0x58] sm:$0xff]
      %v6506 = vld [vmem:[%s273 + $0x60] sm:$0xff]
      %v6507 = vld [vmem:[%s273 + $0x68] sm:$0xff]
      %v6508 = vld [vmem:[%s273 + $0x70] sm:$0xff]
      %v6509 = vld [vmem:[%s273 + $0x78] sm:$0xff]
      %v6510 = vld [vmem:[%s273 + $0x80] sm:$0xff]
      %v6511 = vld [vmem:[%s273 + $0x88] sm:$0xff]
      %v6512 = vld [vmem:[%s273 + $0x90] sm:$0xff]
      %v6513 = vld [vmem:[%s273 + $0x98] sm:$0xff]
      %v6514 = vld [vmem:[%s273 + $0xa0] sm:$0xff]
      %v6515 = vld [vmem:[%s273 + $0xa8] sm:$0xff]
      %v6516 = vld [vmem:[%s273 + $0xb0] sm:$0xff]
      %v6517 = vld [vmem:[%s273 + $0xb8] sm:$0xff]
      %v6518 = vld [vmem:[%s273 + $0xc0] sm:$0xff]
      %v6519 = vld [vmem:[%s273 + $0xc8] sm:$0xff]
      %v6520 = vld [vmem:[%s273 + $0xd0] sm:$0xff]
      %v6521 = vld [vmem:[%s273 + $0xd8] sm:$0xff]
      %v6522 = vld [vmem:[%s273 + $0xe0] sm:$0xff]
      %v6523 = vld [vmem:[%s273 + $0xe8] sm:$0xff]
      %v6524 = vld [vmem:[%s273 + $0xf0] sm:$0xff]
      %v6525 = vld [vmem:[%s273 + $0xf8] sm:$0xff]
      %v6526 = vadd.f32 %v6494, %v6462
      %v6527 = vadd.f32 %v6495, %v6463
      %v6528 = vadd.f32 %v6496, %v6464
      %v6529 = vadd.f32 %v6497, %v6465
      %v6530 = vadd.f32 %v6498, %v6466
      %v6531 = vadd.f32 %v6499, %v6467
      %v6532 = vadd.f32 %v6500, %v6468
      %v6533 = vadd.f32 %v6501, %v6469
      %v6534 = vadd.f32 %v6502, %v6470
      %v6535 = vadd.f32 %v6503, %v6471
      %v6536 = vadd.f32 %v6504, %v6472
      %v6537 = vadd.f32 %v6505, %v6473
      %v6538 = vadd.f32 %v6506, %v6474
      %v6539 = vadd.f32 %v6507, %v6475
      %v6540 = vadd.f32 %v6508, %v6476
      %v6541 = vadd.f32 %v6509, %v6477
      %v6542 = vadd.f32 %v6510, %v6478
      %v6543 = vadd.f32 %v6511, %v6479
      %v6544 = vadd.f32 %v6512, %v6480
      %v6545 = vadd.f32 %v6513, %v6481
      %v6546 = vadd.f32 %v6514, %v6482
      %v6547 = vadd.f32 %v6515, %v6483
      %v6548 = vadd.f32 %v6516, %v6484
      %v6549 = vadd.f32 %v6517, %v6485
      %v6550 = vadd.f32 %v6518, %v6486
      %v6551 = vadd.f32 %v6519, %v6487
      %v6552 = vadd.f32 %v6520, %v6488
      %v6553 = vadd.f32 %v6521, %v6489
      %v6554 = vadd.f32 %v6522, %v6490
      %v6555 = vadd.f32 %v6523, %v6491
      %v6556 = vadd.f32 %v6524, %v6492
      %v6557 = vadd.f32 %v6525, %v6493
      %6558 = vst.msk [vmem:[%s278] sm:$0xff] %vm280, %v6526
      %6559 = vst.msk [vmem:[%s278 + $0x8] sm:$0xff] %vm280, %v6527
      %6560 = vst.msk [vmem:[%s278 + $0x10] sm:$0xff] %vm280, %v6528
      %6561 = vst.msk [vmem:[%s278 + $0x18] sm:$0xff] %vm280, %v6529
      %6562 = vst.msk [vmem:[%s278 + $0x20] sm:$0xff] %vm280, %v6530
      %6563 = vst.msk [vmem:[%s278 + $0x28] sm:$0xff] %vm280, %v6531
      %6564 = vst.msk [vmem:[%s278 + $0x30] sm:$0xff] %vm280, %v6532
      %6565 = vst.msk [vmem:[%s278 + $0x38] sm:$0xff] %vm280, %v6533
      %6566 = vst.msk [vmem:[%s278 + $0x40] sm:$0xff] %vm280, %v6534
      %6567 = vst.msk [vmem:[%s278 + $0x48] sm:$0xff] %vm280, %v6535
      %6568 = vst.msk [vmem:[%s278 + $0x50] sm:$0xff] %vm280, %v6536
      %6569 = vst.msk [vmem:[%s278 + $0x58] sm:$0xff] %vm280, %v6537
      %6570 = vst.msk [vmem:[%s278 + $0x60] sm:$0xff] %vm280, %v6538
      %6571 = vst.msk [vmem:[%s278 + $0x68] sm:$0xff] %vm280, %v6539
      %6572 = vst.msk [vmem:[%s278 + $0x70] sm:$0xff] %vm280, %v6540
      %6573 = vst.msk [vmem:[%s278 + $0x78] sm:$0xff] %vm280, %v6541
      %6574 = vst.msk [vmem:[%s278 + $0x80] sm:$0xff] %vm280, %v6542
      %6575 = vst.msk [vmem:[%s278 + $0x88] sm:$0xff] %vm280, %v6543
      %6576 = vst.msk [vmem:[%s278 + $0x90] sm:$0xff] %vm280, %v6544
      %6577 = vst.msk [vmem:[%s278 + $0x98] sm:$0xff] %vm280, %v6545
      %6578 = vst.msk [vmem:[%s278 + $0xa0] sm:$0xff] %vm280, %v6546
      %6579 = vst.msk [vmem:[%s278 + $0xa8] sm:$0xff] %vm280, %v6547
      %6580 = vst.msk [vmem:[%s278 + $0xb0] sm:$0xff] %vm280, %v6548
      %6581 = vst.msk [vmem:[%s278 + $0xb8] sm:$0xff] %vm280, %v6549
      %6582 = vst.msk [vmem:[%s278 + $0xc0] sm:$0xff] %vm280, %v6550
      %6583 = vst.msk [vmem:[%s278 + $0xc8] sm:$0xff] %vm280, %v6551
      %6584 = vst.msk [vmem:[%s278 + $0xd0] sm:$0xff] %vm280, %v6552
      %6585 = vst.msk [vmem:[%s278 + $0xd8] sm:$0xff] %vm280, %v6553
      %6586 = vst.msk [vmem:[%s278 + $0xe0] sm:$0xff] %vm280, %v6554
      %6587 = vst.msk [vmem:[%s278 + $0xe8] sm:$0xff] %vm280, %v6555
      %6588 = vst.msk [vmem:[%s278 + $0xf0] sm:$0xff] %vm280, %v6556
      %6589 = vst.msk [vmem:[%s278 + $0xf8] sm:$0xff] %vm280, %v6557
      %p6590 = scmp.lt.s32.totalorder %s18, 1
      %s6591 = scalar_select %p6590, %s18, 1
      %s6592 = smul.addr %s6591, 32
      %s6593 = smul.addr %s6592, 8
      %s6594 = scalar_lea.vmem %s7, %s6593
      // Predicated region
      $region49: #{tpu_custom_call.1} parent=47 // pred_check
        %p6595 = pneg %p188
      $region50: #{tpu_custom_call.1} parent=47 // pred_check_branch
        %6597 = sbr.rel (%p6595) target = $region52
      $region51: #{tpu_custom_call.1} parent=47 // pred_region
        _
      $region52: #{tpu_custom_call.1} parent=47 // pred_fallthru
        _
    $region48: #{tpu_custom_call.1} parent=5 // pred_fallthru
      _
    %p6598 = scmp.le.s32.totalorder 2, %s13
    // Predicated region
    $region53: #{tpu_custom_call.1} parent=5 // pred_check
      %p6599 = pneg %p6598
    $region54: #{tpu_custom_call.1} parent=5 // pred_check_branch
      %6601 = sbr.rel (%p6599) target = $region56
    $region55: #{tpu_custom_call.1} parent=5 // pred_region
      %s6602 = ssub.s32 %s13, 2
      // Predicated region
      $region57: #{tpu_custom_call.1} parent=55 // pred_check
        %p6603 = pneg %p194
      $region58: #{tpu_custom_call.1} parent=55 // pred_check_branch
        %6605 = sbr.rel (%p6603) target = $region60
      $region59: #{tpu_custom_call.1} parent=55 // pred_region
        %p6606 = scmp.lt.s32.totalorder %s19, 1
        %s6607 = scalar_select %p6606, %s19, 1
        %s6608 = smul.addr %s6607, 32
        %s6609 = smul.addr %s6608, 8
        %s6610 = scalar_lea.vmem %s7, %s6609
      $region60: #{tpu_custom_call.1} parent=55 // pred_fallthru
        _
    $region56: #{tpu_custom_call.1} parent=5 // pred_fallthru
      _
  $region6: #{tpu_custom_call.1} parent=0 // loop_footer
    %s17 = sadd.s32 1, %s13
  $region7: #{tpu_custom_call.1} parent=0 // loop_footer_branch
    %12 = sbr.rel target = $region3
  $region8: #{tpu_custom_call.1} parent=0 // loop_exit
    _

</llo_original>
